<compile_context>
chip_gen: v5e
topology: v5e:2x2
jax: 0.10.0
libtpu: 0.0.40
codegen_flags: <defaults>
</compile_context>

<pallas_src>
import functools
from typing import NamedTuple

import jax
import jax.numpy as jnp
from jax.experimental import pallas as pl
from jax.experimental.pallas import tpu as pltpu

_TM = 128   # M tile (rows of the im2col matrix)
_TN = 128   # N tile (output channels) -- lane-dense; also the v5e sweet spot
_TK = 512   # K tile (reduction)


def _round_up(x, m):
    return (x + m - 1) // m * m


# ------------------------------ Pallas kernels ------------------------------ #

def _matmul_bias_act_kernel(x_ref, w_ref, b_ref, o_ref, acc_ref, *, apply_relu):
    """One (tm, tn) output tile; K is the innermost ("arbitrary") grid axis."""
    k = pl.program_id(2)

    @pl.when(k == 0)
    def _init():
        acc_ref[...] = jnp.zeros(acc_ref.shape, jnp.float32)

    acc_ref[...] += jnp.dot(x_ref[...], w_ref[...],
                            preferred_element_type=jnp.float32)

    @pl.when(k == pl.num_programs(2) - 1)
    def _finalize():
        out = acc_ref[...] + b_ref[...]          # bias add in f32
        if apply_relu:
            out = jnp.maximum(out, 0.0)
        o_ref[...] = out.astype(o_ref.dtype)


def matmul_bias_act(x, w_p, b_p, *, apply_relu=True, out_dtype=jnp.bfloat16):
    """x: (M, K); w_p: (Kp, Np) bf16 zero-padded; b_p: (1, Np) f32 zero-padded."""
    M, K = x.shape
    Kp, Np = w_p.shape
    assert K <= Kp and Np % _TN == 0

    if M >= _TM:
        tm, Mp = _TM, _round_up(M, _TM)
    else:
        tm = _round_up(M, 16)                    # bf16 sublane packing
        Mp = tm
    tn = _TN
    tk = _TK if Kp > _TK else Kp
    assert Kp % tk == 0

    x = x.astype(jnp.bfloat16)
    if (Mp, Kp) != (M, K):
        x = jnp.pad(x, ((0, Mp - M), (0, Kp - K)))

    grid = (Mp // tm, Np // tn, Kp // tk)
    out = pl.pallas_call(
        functools.partial(_matmul_bias_act_kernel, apply_relu=apply_relu),
        out_shape=jax.ShapeDtypeStruct((Mp, Np), out_dtype),
        grid_spec=pltpu.PrefetchScalarGridSpec(
            num_scalar_prefetch=0,
            grid=grid,
            in_specs=[
                pl.BlockSpec((tm, tk), lambda i, j, k: (i, k)),
                pl.BlockSpec((tk, tn), lambda i, j, k: (k, j)),
                pl.BlockSpec((1, tn), lambda i, j, k: (0, j)),
            ],
            out_specs=pl.BlockSpec((tm, tn), lambda i, j, k: (i, j)),
            scratch_shapes=[pltpu.VMEM((tm, tn), jnp.float32)],
        ),
        compiler_params=pltpu.CompilerParams(
            dimension_semantics=("parallel", "parallel", "arbitrary"),
            vmem_limit_bytes=32 * 1024 * 1024,
        ),
    )(x, w_p, b_p)
    return out[:M] if Mp != M else out


def _maxpool3x3s2_kernel(x_ref, o_ref):
    """3x3 / stride-2 max pool for one batch element, reduced in-register."""
    x = x_ref[0]                                  # (H, W, C)
    w_in = x.shape[1]
    h_out, w_out = o_ref.shape[1], o_ref.shape[2]
    for r in range(h_out):                        # small static unroll
        rows = x[2 * r:2 * r + 3]                 # (3, W, C)
        rmax = jnp.maximum(jnp.maximum(rows[0], rows[1]), rows[2])       # (W, C)
        hmax = jnp.maximum(jnp.maximum(rmax[0:w_in - 2], rmax[1:w_in - 1]),
                           rmax[2:w_in])          # (W-2, C)
        out_row = jnp.concatenate(
            [hmax[2 * c:2 * c + 1] for c in range(w_out)], axis=0)       # (Wo, C)
        o_ref[0, r, :, :] = out_row


def maxpool3x3s2(x):
    """x: (B, H, W, C) with C a multiple of 128 -> (B, Ho, Wo, C)."""
    B, H, W, C = x.shape
    Ho = (H - 3) // 2 + 1
    Wo = (W - 3) // 2 + 1
    return pl.pallas_call(
        _maxpool3x3s2_kernel,
        out_shape=jax.ShapeDtypeStruct((B, Ho, Wo, C), x.dtype),
        grid_spec=pltpu.PrefetchScalarGridSpec(
            num_scalar_prefetch=0,
            grid=(B,),
            in_specs=[pl.BlockSpec((1, H, W, C), lambda b: (b, 0, 0, 0))],
            out_specs=pl.BlockSpec((1, Ho, Wo, C), lambda b: (b, 0, 0, 0)),
        ),
        compiler_params=pltpu.CompilerParams(
            dimension_semantics=("parallel",)),
    )(x)


# ------------------------------ parameters --------------------------------- #

class ConvLayer(NamedTuple):
    w_p: jax.Array      # (Kp, Np) bf16, zero-padded flattened (kh*kw*cin, cout)
    b_p: jax.Array      # (1, Np) f32, zero-padded bias
    w_raw: jax.Array    # (kh, kw, cin, cout) f32 (reference only)
    b_raw: jax.Array    # (cout,) f32 (reference only)
    kh: int
    kw: int
    cin: int
    cout: int
    stride: int
    pad: int


_CONV_SPECS = [
    # (kh, kw, cin, cout, stride, pad) -- torchvision alexnet.features convs
    (11, 11, 3, 64, 4, 2),
    (5, 5, 64, 192, 1, 2),
    (3, 3, 192, 384, 1, 1),
    (3, 3, 384, 256, 1, 1),
    (3, 3, 256, 256, 1, 1),
]


def _pad_kn(K, N):
    Np = _round_up(N, _TN)
    Kp = _round_up(K, _TK) if K > _TK else _round_up(K, 128)
    return Kp, Np


def prepare_layer(w, b, *, stride, pad):
    """Pad/flatten weights once, outside the per-call hot path."""
    kh, kw, cin, cout = w.shape
    K = kh * kw * cin
    Kp, Np = _pad_kn(K, cout)
    w_flat = w.reshape(K, cout).astype(jnp.bfloat16)
    w_p = jnp.zeros((Kp, Np), jnp.bfloat16).at[:K, :cout].set(w_flat)
    b_p = jnp.zeros((1, Np), jnp.float32).at[0, :cout].set(b.astype(jnp.float32))
    return ConvLayer(w_p=w_p, b_p=b_p, w_raw=w, b_raw=b, kh=kh, kw=kw,
                     cin=cin, cout=cout, stride=stride, pad=pad)


def init_params(key):
    layers = []
    for i, (kh, kw, cin, cout, stride, pad) in enumerate(_CONV_SPECS):
        wkey, bkey = jax.random.split(jax.random.fold_in(key, i))
        scale = (2.0 / (kh * kw * cin)) ** 0.5
        w = scale * jax.random.normal(wkey, (kh, kw, cin, cout), jnp.float32)
        b = 0.01 * jax.random.normal(bkey, (cout,), jnp.float32)
        layers.append(prepare_layer(w, b, stride=stride, pad=pad))
    return layers


# ------------------------------- JAX glue ----------------------------------- #

def _im2col(x, kh, kw, stride, pad):
    """(B, H, W, Cin) -> (B*Ho*Wo, kh*kw*Cin), matching w.reshape(kh*kw*Cin, Cout)."""
    B, H, W, Cin = x.shape
    Ho = (H + 2 * pad - kh) // stride + 1
    Wo = (W + 2 * pad - kw) // stride + 1
    xp = jnp.pad(x, ((0, 0), (pad, pad), (pad, pad), (0, 0)))
    cols = []
    for ki in range(kh):
        for kj in range(kw):
            cols.append(xp[:, ki:ki + stride * (Ho - 1) + 1:stride,
                           kj:kj + stride * (Wo - 1) + 1:stride, :])
    patches = jnp.stack(cols, axis=3)             # (B, Ho, Wo, kh*kw, Cin)
    return patches.reshape(B * Ho * Wo, kh * kw * Cin), Ho, Wo


def conv2d_relu(x, layer: ConvLayer):
    """x: (B, H, W, cin) bf16 -> (B, Ho, Wo, Np) bf16 (channels zero-padded)."""
    B = x.shape[0]
    patches, Ho, Wo = _im2col(x, layer.kh, layer.kw, layer.stride, layer.pad)
    out = matmul_bias_act(patches, layer.w_p, layer.b_p, apply_relu=True)
    return out.reshape(B, Ho, Wo, layer.w_p.shape[1])


def alexnet_pre_forward(x, params):
    """x: (1, B, 3, H, W) as in the PyTorch module (torch.squeeze(x1, dim=0))."""
    l1, l2, l3, l4, l5 = params
    x = jnp.squeeze(x, axis=0)                                   # (B, 3, H, W)
    x = jnp.transpose(x, (0, 2, 3, 1)).astype(jnp.bfloat16)      # NHWC, bf16
    # alexnet.features
    x = conv2d_relu(x, l1)                                       # (B, 15, 15, 128)
    x = maxpool3x3s2(x)[..., :l1.cout]                           # (B, 7, 7, 64)
    x = conv2d_relu(x, l2)                                       # (B, 7, 7, 256)
    x = maxpool3x3s2(x)[..., :l2.cout]                           # (B, 3, 3, 192)
    x = conv2d_relu(x, l3)                                       # (B, 3, 3, 384)
    x = conv2d_relu(x, l4)                                       # (B, 3, 3, 256)
    x = conv2d_relu(x, l5)                                       # (B, 3, 3, 256)
    x = maxpool3x3s2(x)                                          # (B, 1, 1, 256)
    # AdaptiveAvgPool2d(1) + flatten + max over batch (keepdim) + sigmoid.
    pooled = jnp.mean(x.astype(jnp.float32), axis=(1, 2))        # (B, 256)
    return jax.nn.sigmoid(jnp.max(pooled, axis=0, keepdims=True))  # (1, 256)


def reference_forward(x, params):
    """Pure-JAX f32 reference of the same forward (for validation)."""
    x = jnp.squeeze(x, axis=0)
    x = jnp.transpose(x, (0, 2, 3, 1)).astype(jnp.float32)

    def conv(h, layer):
        y = jax.lax.conv_general_dilated(
            h, layer.w_raw, window_strides=(layer.stride, layer.stride),
            padding=[(layer.pad, layer.pad), (layer.pad, layer.pad)],
            dimension_numbers=("NHWC", "HWIO", "NHWC"),
            precision=jax.lax.Precision.HIGHEST)
        return jax.nn.relu(y + layer.b_raw)

    def pool(h):
        return jax.lax.reduce_window(h, -jnp.inf, jax.lax.max,
                                     (1, 3, 3, 1), (1, 2, 2, 1), "VALID")

    l1, l2, l3, l4, l5 = params
    h = pool(conv(x, l1))
    h = pool(conv(h, l2))
    h = pool(conv(conv(conv(h, l3), l4), l5))
    pooled = jnp.mean(h, axis=(1, 2))
    return jax.nn.sigmoid(jnp.max(pooled, axis=0, keepdims=True))


if __name__ == "__main__":
    key = jax.random.PRNGKey(0)
    params = init_params(jax.random.fold_in(key, 123))
    # 63x63 is the smallest spatial size the AlexNet feature stack supports.
    x = jax.random.normal(jax.random.fold_in(key, 7), (1, 2, 3, 63, 63),
                          jnp.float32)

    fwd = jax.jit(functools.partial(alexnet_pre_forward, params=params))
    out = jax.block_until_ready(fwd(x))
    assert out.shape == (1, 256) and out.dtype == jnp.float32
    assert bool(jnp.all(jnp.isfinite(out)))

    # Validate the bf16 Pallas path against the pure-JAX f32 reference.
    ref = jax.jit(functools.partial(reference_forward, params=params))(x)
    max_err = float(jnp.max(jnp.abs(out - ref.astype(jnp.float32))))
    assert max_err < 1e-1, f"mismatch vs reference: {max_err}"
    print("KERNEL_OK")
</pallas_src>

<mosaic_0001>
module attributes {stable_mosaic.version = 11 : i64} {
  func.func @_matmul_bias_act_kernel(%arg0: i32, %arg1: i32, %arg2: i32, %arg3: memref<128x384xbf16, #tpu.memory_space<vmem>>, %arg4: memref<384x128xbf16, #tpu.memory_space<vmem>>, %arg5: memref<1x128xf32, #tpu.memory_space<vmem>>, %arg6: memref<128x128xbf16, #tpu.memory_space<vmem>>, %arg7: memref<128x128xf32, #tpu.memory_space<vmem>>) attributes {dimension_semantics = [#tpu.dimension_semantics<parallel>, #tpu.dimension_semantics<parallel>, #tpu.dimension_semantics<arbitrary>], iteration_bounds = array<i64: 4, 1, 1>, scalar_prefetch = 0 : i64, scratch_operands = 1 : i64, tpu.core_type = #tpu.core_type<tc>, window_params = [{transform_indices = @transform_0, window_bounds = array<i64: 128, 384>}, {transform_indices = @transform_1, window_bounds = array<i64: 384, 128>}, {transform_indices = @transform_2, window_bounds = array<i64: 1, 128>}, {transform_indices = @transform_3, window_bounds = array<i64: 128, 128>}]} {
    %c0_i32 = arith.constant 0 : i32
    %0 = arith.cmpi eq, %arg2, %c0_i32 : i32
    %1 = arith.extui %0 : i1 to i32
    %c0_i32_0 = arith.constant 0 : i32
    %2 = arith.cmpi ne, %1, %c0_i32_0 : i32
    scf.if %2 {
      %cst_10 = arith.constant 0.000000e+00 : f32
      %12 = vector.broadcast %cst_10 : f32 to vector<128x128xf32>
      %c0_11 = arith.constant 0 : index
      %c0_12 = arith.constant 0 : index
      %13 = vector.load %arg7[%c0_11, %c0_12] : memref<128x128xf32, #tpu.memory_space<vmem>>, vector<128x128xf32>
      tpu.vector_store %arg7[%c0_11, %c0_12], %12 {strides = array<i32>} : memref<128x128xf32, #tpu.memory_space<vmem>>, vector<128x128xf32>,
    } else {
    }
    %c0 = arith.constant 0 : index
    %c0_1 = arith.constant 0 : index
    %3 = vector.load %arg7[%c0, %c0_1] : memref<128x128xf32, #tpu.memory_space<vmem>>, vector<128x128xf32>
    %c0_2 = arith.constant 0 : index
    %c0_3 = arith.constant 0 : index
    %4 = vector.load %arg3[%c0_2, %c0_3] : memref<128x384xbf16, #tpu.memory_space<vmem>>, vector<128x384xbf16>
    %c0_4 = arith.constant 0 : index
    %c0_5 = arith.constant 0 : index
    %5 = vector.load %arg4[%c0_4, %c0_5] : memref<384x128xbf16, #tpu.memory_space<vmem>>, vector<384x128xbf16>
    %cst = arith.constant dense<0.000000e+00> : vector<128x128xf32>
    %6 = tpu.matmul %4, %5, %cst {dimension_numbers = #tpu.dot_dimension_numbers<[1], [0], [0], [1], [0, 0, 1, 1], [], []>} : vector<128x384xbf16>, vector<384x128xbf16>, vector<128x128xf32> -> vector<128x128xf32>
    %7 = arith.addf %3, %6 : vector<128x128xf32>
    %c0_6 = arith.constant 0 : index
    %c0_7 = arith.constant 0 : index
    %8 = vector.load %arg7[%c0_6, %c0_7] : memref<128x128xf32, #tpu.memory_space<vmem>>, vector<128x128xf32>
    tpu.vector_store %arg7[%c0_6, %c0_7], %7 {strides = array<i32>} : memref<128x128xf32, #tpu.memory_space<vmem>>, vector<128x128xf32>,
    %c0_i32_8 = arith.constant 0 : i32
    %9 = arith.cmpi eq, %arg2, %c0_i32_8 : i32
    %10 = arith.extui %9 : i1 to i32
    %c0_i32_9 = arith.constant 0 : i32
    %11 = arith.cmpi ne, %10, %c0_i32_9 : i32
    scf.if %11 {
      %c0_10 = arith.constant 0 : index
      %c0_11 = arith.constant 0 : index
      %12 = vector.load %arg7[%c0_10, %c0_11] : memref<128x128xf32, #tpu.memory_space<vmem>>, vector<128x128xf32>
      %c0_12 = arith.constant 0 : index
      %c0_13 = arith.constant 0 : index
      %13 = vector.load %arg5[%c0_12, %c0_13] : memref<1x128xf32, #tpu.memory_space<vmem>>, vector<1x128xf32>
      %14 = vector.broadcast %13 : vector<1x128xf32> to vector<128x128xf32>
      %15 = arith.addf %12, %14 : vector<128x128xf32>
      %cst_14 = arith.constant 0.000000e+00 : f32
      %16 = vector.broadcast %cst_14 : f32 to vector<128x128xf32>
      %17 = arith.maximumf %15, %16 : vector<128x128xf32>
      %18 = arith.truncf %17 : vector<128x128xf32> to vector<128x128xbf16>
      %c0_15 = arith.constant 0 : index
      %c0_16 = arith.constant 0 : index
      %19 = vector.load %arg6[%c0_15, %c0_16] : memref<128x128xbf16, #tpu.memory_space<vmem>>, vector<128x128xbf16>
      tpu.vector_store %arg6[%c0_15, %c0_16], %18 {strides = array<i32>} : memref<128x128xbf16, #tpu.memory_space<vmem>>, vector<128x128xbf16>,
    } else {
    }
    return
  }
  func.func @transform_0(%arg0: i32, %arg1: i32, %arg2: i32) -> (i32, i32) {
    %c0_i32 = arith.constant 0 : i32
    return %arg0, %arg2 : i32, i32
  }
  func.func @transform_1(%arg0: i32, %arg1: i32, %arg2: i32) -> (i32, i32) {
    %c0_i32 = arith.constant 0 : i32
    return %arg2, %arg1 : i32, i32
  }
  func.func @transform_2(%arg0: i32, %arg1: i32, %arg2: i32) -> (i32, i32) {
    %c0_i32 = arith.constant 0 : i32
    %c0_i32_0 = arith.constant 0 : i32
    return %c0_i32, %arg1 : i32, i32
  }
  func.func @transform_3(%arg0: i32, %arg1: i32, %arg2: i32) -> (i32, i32) {
    %c0_i32 = arith.constant 0 : i32
    return %arg0, %arg1 : i32, i32
  }
}

module attributes {stable_mosaic.version = 11 : i64} {
  func.func @_maxpool3x3s2_kernel(%arg0: i32, %arg1: memref<1x15x15x128xbf16, #tpu.memory_space<vmem>>, %arg2: memref<1x7x7x128xbf16, #tpu.memory_space<vmem>>) attributes {dimension_semantics = [#tpu.dimension_semantics<parallel>], iteration_bounds = array<i64: 2>, scalar_prefetch = 0 : i64, scratch_operands = 0 : i64, tpu.core_type = #tpu.core_type<tc>, window_params = [{transform_indices = @transform_0, window_bounds = array<i64: 1, 15, 15, 128>}, {transform_indices = @transform_1, window_bounds = array<i64: 1, 7, 7, 128>}]} {
    %c0 = arith.constant 0 : index
    %c0_0 = arith.constant 0 : index
    %c0_1 = arith.constant 0 : index
    %c0_2 = arith.constant 0 : index
    %0 = vector.load %arg1[%c0, %c0_0, %c0_1, %c0_2] : memref<1x15x15x128xbf16, #tpu.memory_space<vmem>>, vector<1x15x15x128xbf16>
    %1 = vector.shape_cast %0 : vector<1x15x15x128xbf16> to vector<15x15x128xbf16>
    %2 = vector.extract_strided_slice %1 {offsets = [0, 0, 0], sizes = [3, 15, 128], strides = [1, 1, 1]} : vector<15x15x128xbf16> to vector<3x15x128xbf16>
    %3 = vector.extract_strided_slice %2 {offsets = [0, 0, 0], sizes = [1, 15, 128], strides = [1, 1, 1]} : vector<3x15x128xbf16> to vector<1x15x128xbf16>
    %4 = vector.shape_cast %3 : vector<1x15x128xbf16> to vector<15x128xbf16>
    %5 = vector.extract_strided_slice %2 {offsets = [1, 0, 0], sizes = [1, 15, 128], strides = [1, 1, 1]} : vector<3x15x128xbf16> to vector<1x15x128xbf16>
    %6 = vector.shape_cast %5 : vector<1x15x128xbf16> to vector<15x128xbf16>
    %7 = arith.maximumf %4, %6 : vector<15x128xbf16>
    %8 = vector.extract_strided_slice %2 {offsets = [2, 0, 0], sizes = [1, 15, 128], strides = [1, 1, 1]} : vector<3x15x128xbf16> to vector<1x15x128xbf16>
    %9 = vector.shape_cast %8 : vector<1x15x128xbf16> to vector<15x128xbf16>
    %10 = arith.maximumf %7, %9 : vector<15x128xbf16>
    %11 = vector.extract_strided_slice %10 {offsets = [0, 0], sizes = [13, 128], strides = [1, 1]} : vector<15x128xbf16> to vector<13x128xbf16>
    %12 = vector.extract_strided_slice %10 {offsets = [1, 0], sizes = [13, 128], strides = [1, 1]} : vector<15x128xbf16> to vector<13x128xbf16>
    %13 = arith.maximumf %11, %12 : vector<13x128xbf16>
    %14 = vector.extract_strided_slice %10 {offsets = [2, 0], sizes = [13, 128], strides = [1, 1]} : vector<15x128xbf16> to vector<13x128xbf16>
    %15 = arith.maximumf %13, %14 : vector<13x128xbf16>
    %16 = vector.extract_strided_slice %15 {offsets = [0, 0], sizes = [1, 128], strides = [1, 1]} : vector<13x128xbf16> to vector<1x128xbf16>
    %17 = vector.extract_strided_slice %15 {offsets = [2, 0], sizes = [1, 128], strides = [1, 1]} : vector<13x128xbf16> to vector<1x128xbf16>
    %18 = vector.extract_strided_slice %15 {offsets = [4, 0], sizes = [1, 128], strides = [1, 1]} : vector<13x128xbf16> to vector<1x128xbf16>
    %19 = vector.extract_strided_slice %15 {offsets = [6, 0], sizes = [1, 128], strides = [1, 1]} : vector<13x128xbf16> to vector<1x128xbf16>
    %20 = vector.extract_strided_slice %15 {offsets = [8, 0], sizes = [1, 128], strides = [1, 1]} : vector<13x128xbf16> to vector<1x128xbf16>
    %21 = vector.extract_strided_slice %15 {offsets = [10, 0], sizes = [1, 128], strides = [1, 1]} : vector<13x128xbf16> to vector<1x128xbf16>
    %22 = vector.extract_strided_slice %15 {offsets = [12, 0], sizes = [1, 128], strides = [1, 1]} : vector<13x128xbf16> to vector<1x128xbf16>
    %23 = tpu.concatenate %16, %17, %18, %19, %20, %21, %22 in 0 : vector<1x128xbf16>, vector<1x128xbf16>, vector<1x128xbf16>, vector<1x128xbf16>, vector<1x128xbf16>, vector<1x128xbf16>, vector<1x128xbf16> -> vector<7x128xbf16>
    %c0_3 = arith.constant 0 : index
    %c0_4 = arith.constant 0 : index
    %c0_5 = arith.constant 0 : index
    %c0_6 = arith.constant 0 : index
    %24 = vector.load %arg2[%c0_3, %c0_4, %c0_5, %c0_6] : memref<1x7x7x128xbf16, #tpu.memory_space<vmem>>, vector<1x1x7x128xbf16>
    %25 = vector.shape_cast %24 : vector<1x1x7x128xbf16> to vector<7x128xbf16>
    %26 = vector.shape_cast %23 : vector<7x128xbf16> to vector<1x1x7x128xbf16>
    tpu.vector_store %arg2[%c0_3, %c0_4, %c0_5, %c0_6], %26 {strides = array<i32>} : memref<1x7x7x128xbf16, #tpu.memory_space<vmem>>, vector<1x1x7x128xbf16>,
    %27 = vector.extract_strided_slice %1 {offsets = [2, 0, 0], sizes = [3, 15, 128], strides = [1, 1, 1]} : vector<15x15x128xbf16> to vector<3x15x128xbf16>
    %28 = vector.extract_strided_slice %27 {offsets = [0, 0, 0], sizes = [1, 15, 128], strides = [1, 1, 1]} : vector<3x15x128xbf16> to vector<1x15x128xbf16>
    %29 = vector.shape_cast %28 : vector<1x15x128xbf16> to vector<15x128xbf16>
    %30 = vector.extract_strided_slice %27 {offsets = [1, 0, 0], sizes = [1, 15, 128], strides = [1, 1, 1]} : vector<3x15x128xbf16> to vector<1x15x128xbf16>
    %31 = vector.shape_cast %30 : vector<1x15x128xbf16> to vector<15x128xbf16>
    %32 = arith.maximumf %29, %31 : vector<15x128xbf16>
    %33 = vector.extract_strided_slice %27 {offsets = [2, 0, 0], sizes = [1, 15, 128], strides = [1, 1, 1]} : vector<3x15x128xbf16> to vector<1x15x128xbf16>
    %34 = vector.shape_cast %33 : vector<1x15x128xbf16> to vector<15x128xbf16>
    %35 = arith.maximumf %32, %34 : vector<15x128xbf16>
    %36 = vector.extract_strided_slice %35 {offsets = [0, 0], sizes = [13, 128], strides = [1, 1]} : vector<15x128xbf16> to vector<13x128xbf16>
    %37 = vector.extract_strided_slice %35 {offsets = [1, 0], sizes = [13, 128], strides = [1, 1]} : vector<15x128xbf16> to vector<13x128xbf16>
    %38 = arith.maximumf %36, %37 : vector<13x128xbf16>
    %39 = vector.extract_strided_slice %35 {offsets = [2, 0], sizes = [13, 128], strides = [1, 1]} : vector<15x128xbf16> to vector<13x128xbf16>
    %40 = arith.maximumf %38, %39 : vector<13x128xbf16>
    %41 = vector.extract_strided_slice %40 {offsets = [0, 0], sizes = [1, 128], strides = [1, 1]} : vector<13x128xbf16> to vector<1x128xbf16>
    %42 = vector.extract_strided_slice %40 {offsets = [2, 0], sizes = [1, 128], strides = [1, 1]} : vector<13x128xbf16> to vector<1x128xbf16>
    %43 = vector.extract_strided_slice %40 {offsets = [4, 0], sizes = [1, 128], strides = [1, 1]} : vector<13x128xbf16> to vector<1x128xbf16>
    %44 = vector.extract_strided_slice %40 {offsets = [6, 0], sizes = [1, 128], strides = [1, 1]} : vector<13x128xbf16> to vector<1x128xbf16>
    %45 = vector.extract_strided_slice %40 {offsets = [8, 0], sizes = [1, 128], strides = [1, 1]} : vector<13x128xbf16> to vector<1x128xbf16>
    %46 = vector.extract_strided_slice %40 {offsets = [10, 0], sizes = [1, 128], strides = [1, 1]} : vector<13x128xbf16> to vector<1x128xbf16>
    %47 = vector.extract_strided_slice %40 {offsets = [12, 0], sizes = [1, 128], strides = [1, 1]} : vector<13x128xbf16> to vector<1x128xbf16>
    %48 = tpu.concatenate %41, %42, %43, %44, %45, %46, %47 in 0 : vector<1x128xbf16>, vector<1x128xbf16>, vector<1x128xbf16>, vector<1x128xbf16>, vector<1x128xbf16>, vector<1x128xbf16>, vector<1x128xbf16> -> vector<7x128xbf16>
    %c0_7 = arith.constant 0 : index
    %c1 = arith.constant 1 : index
    %c0_8 = arith.constant 0 : index
    %c0_9 = arith.constant 0 : index
    %49 = vector.load %arg2[%c0_7, %c1, %c0_8, %c0_9] : memref<1x7x7x128xbf16, #tpu.memory_space<vmem>>, vector<1x1x7x128xbf16>
    %50 = vector.shape_cast %49 : vector<1x1x7x128xbf16> to vector<7x128xbf16>
    %51 = vector.shape_cast %48 : vector<7x128xbf16> to vector<1x1x7x128xbf16>
    tpu.vector_store %arg2[%c0_7, %c1, %c0_8, %c0_9], %51 {strides = array<i32>} : memref<1x7x7x128xbf16, #tpu.memory_space<vmem>>, vector<1x1x7x128xbf16>,
    %52 = vector.extract_strided_slice %1 {offsets = [4, 0, 0], sizes = [3, 15, 128], strides = [1, 1, 1]} : vector<15x15x128xbf16> to vector<3x15x128xbf16>
    %53 = vector.extract_strided_slice %52 {offsets = [0, 0, 0], sizes = [1, 15, 128], strides = [1, 1, 1]} : vector<3x15x128xbf16> to vector<1x15x128xbf16>
    %54 = vector.shape_cast %53 : vector<1x15x128xbf16> to vector<15x128xbf16>
    %55 = vector.extract_strided_slice %52 {offsets = [1, 0, 0], sizes = [1, 15, 128], strides = [1, 1, 1]} : vector<3x15x128xbf16> to vector<1x15x128xbf16>
    %56 = vector.shape_cast %55 : vector<1x15x128xbf16> to vector<15x128xbf16>
    %57 = arith.maximumf %54, %56 : vector<15x128xbf16>
    %58 = vector.extract_strided_slice %52 {offsets = [2, 0, 0], sizes = [1, 15, 128], strides = [1, 1, 1]} : vector<3x15x128xbf16> to vector<1x15x128xbf16>
    %59 = vector.shape_cast %58 : vector<1x15x128xbf16> to vector<15x128xbf16>
    %60 = arith.maximumf %57, %59 : vector<15x128xbf16>
    %61 = vector.extract_strided_slice %60 {offsets = [0, 0], sizes = [13, 128], strides = [1, 1]} : vector<15x128xbf16> to vector<13x128xbf16>
    %62 = vector.extract_strided_slice %60 {offsets = [1, 0], sizes = [13, 128], strides = [1, 1]} : vector<15x128xbf16> to vector<13x128xbf16>
    %63 = arith.maximumf %61, %62 : vector<13x128xbf16>
    %64 = vector.extract_strided_slice %60 {offsets = [2, 0], sizes = [13, 128], strides = [1, 1]} : vector<15x128xbf16> to vector<13x128xbf16>
    %65 = arith.maximumf %63, %64 : vector<13x128xbf16>
    %66 = vector.extract_strided_slice %65 {offsets = [0, 0], sizes = [1, 128], strides = [1, 1]} : vector<13x128xbf16> to vector<1x128xbf16>
    %67 = vector.extract_strided_slice %65 {offsets = [2, 0], sizes = [1, 128], strides = [1, 1]} : vector<13x128xbf16> to vector<1x128xbf16>
    %68 = vector.extract_strided_slice %65 {offsets = [4, 0], sizes = [1, 128], strides = [1, 1]} : vector<13x128xbf16> to vector<1x128xbf16>
    %69 = vector.extract_strided_slice %65 {offsets = [6, 0], sizes = [1, 128], strides = [1, 1]} : vector<13x128xbf16> to vector<1x128xbf16>
    %70 = vector.extract_strided_slice %65 {offsets = [8, 0], sizes = [1, 128], strides = [1, 1]} : vector<13x128xbf16> to vector<1x128xbf16>
    %71 = vector.extract_strided_slice %65 {offsets = [10, 0], sizes = [1, 128], strides = [1, 1]} : vector<13x128xbf16> to vector<1x128xbf16>
    %72 = vector.extract_strided_slice %65 {offsets = [12, 0], sizes = [1, 128], strides = [1, 1]} : vector<13x128xbf16> to vector<1x128xbf16>
    %73 = tpu.concatenate %66, %67, %68, %69, %70, %71, %72 in 0 : vector<1x128xbf16>, vector<1x128xbf16>, vector<1x128xbf16>, vector<1x128xbf16>, vector<1x128xbf16>, vector<1x128xbf16>, vector<1x128xbf16> -> vector<7x128xbf16>
    %c0_10 = arith.constant 0 : index
    %c2 = arith.constant 2 : index
    %c0_11 = arith.constant 0 : index
    %c0_12 = arith.constant 0 : index
    %74 = vector.load %arg2[%c0_10, %c2, %c0_11, %c0_12] : memref<1x7x7x128xbf16, #tpu.memory_space<vmem>>, vector<1x1x7x128xbf16>
    %75 = vector.shape_cast %74 : vector<1x1x7x128xbf16> to vector<7x128xbf16>
    %76 = vector.shape_cast %73 : vector<7x128xbf16> to vector<1x1x7x128xbf16>
    tpu.vector_store %arg2[%c0_10, %c2, %c0_11, %c0_12], %76 {strides = array<i32>} : memref<1x7x7x128xbf16, #tpu.memory_space<vmem>>, vector<1x1x7x128xbf16>,
    %77 = vector.extract_strided_slice %1 {offsets = [6, 0, 0], sizes = [3, 15, 128], strides = [1, 1, 1]} : vector<15x15x128xbf16> to vector<3x15x128xbf16>
    %78 = vector.extract_strided_slice %77 {offsets = [0, 0, 0], sizes = [1, 15, 128], strides = [1, 1, 1]} : vector<3x15x128xbf16> to vector<1x15x128xbf16>
    %79 = vector.shape_cast %78 : vector<1x15x128xbf16> to vector<15x128xbf16>
    %80 = vector.extract_strided_slice %77 {offsets = [1, 0, 0], sizes = [1, 15, 128], strides = [1, 1, 1]} : vector<3x15x128xbf16> to vector<1x15x128xbf16>
    %81 = vector.shape_cast %80 : vector<1x15x128xbf16> to vector<15x128xbf16>
    %82 = arith.maximumf %79, %81 : vector<15x128xbf16>
    %83 = vector.extract_strided_slice %77 {offsets = [2, 0, 0], sizes = [1, 15, 128], strides = [1, 1, 1]} : vector<3x15x128xbf16> to vector<1x15x128xbf16>
    %84 = vector.shape_cast %83 : vector<1x15x128xbf16> to vector<15x128xbf16>
    %85 = arith.maximumf %82, %84 : vector<15x128xbf16>
    %86 = vector.extract_strided_slice %85 {offsets = [0, 0], sizes = [13, 128], strides = [1, 1]} : vector<15x128xbf16> to vector<13x128xbf16>
    %87 = vector.extract_strided_slice %85 {offsets = [1, 0], sizes = [13, 128], strides = [1, 1]} : vector<15x128xbf16> to vector<13x128xbf16>
    %88 = arith.maximumf %86, %87 : vector<13x128xbf16>
    %89 = vector.extract_strided_slice %85 {offsets = [2, 0], sizes = [13, 128], strides = [1, 1]} : vector<15x128xbf16> to vector<13x128xbf16>
    %90 = arith.maximumf %88, %89 : vector<13x128xbf16>
    %91 = vector.extract_strided_slice %90 {offsets = [0, 0], sizes = [1, 128], strides = [1, 1]} : vector<13x128xbf16> to vector<1x128xbf16>
    %92 = vector.extract_strided_slice %90 {offsets = [2, 0], sizes = [1, 128], strides = [1, 1]} : vector<13x128xbf16> to vector<1x128xbf16>
    %93 = vector.extract_strided_slice %90 {offsets = [4, 0], sizes = [1, 128], strides = [1, 1]} : vector<13x128xbf16> to vector<1x128xbf16>
    %94 = vector.extract_strided_slice %90 {offsets = [6, 0], sizes = [1, 128], strides = [1, 1]} : vector<13x128xbf16> to vector<1x128xbf16>
    %95 = vector.extract_strided_slice %90 {offsets = [8, 0], sizes = [1, 128], strides = [1, 1]} : vector<13x128xbf16> to vector<1x128xbf16>
    %96 = vector.extract_strided_slice %90 {offsets = [10, 0], sizes = [1, 128], strides = [1, 1]} : vector<13x128xbf16> to vector<1x128xbf16>
    %97 = vector.extract_strided_slice %90 {offsets = [12, 0], sizes = [1, 128], strides = [1, 1]} : vector<13x128xbf16> to vector<1x128xbf16>
    %98 = tpu.concatenate %91, %92, %93, %94, %95, %96, %97 in 0 : vector<1x128xbf16>, vector<1x128xbf16>, vector<1x128xbf16>, vector<1x128xbf16>, vector<1x128xbf16>, vector<1x128xbf16>, vector<1x128xbf16> -> vector<7x128xbf16>
    %c0_13 = arith.constant 0 : index
    %c3 = arith.constant 3 : index
    %c0_14 = arith.constant 0 : index
    %c0_15 = arith.constant 0 : index
    %99 = vector.load %arg2[%c0_13, %c3, %c0_14, %c0_15] : memref<1x7x7x128xbf16, #tpu.memory_space<vmem>>, vector<1x1x7x128xbf16>
    %100 = vector.shape_cast %99 : vector<1x1x7x128xbf16> to vector<7x128xbf16>
    %101 = vector.shape_cast %98 : vector<7x128xbf16> to vector<1x1x7x128xbf16>
    tpu.vector_store %arg2[%c0_13, %c3, %c0_14, %c0_15], %101 {strides = array<i32>} : memref<1x7x7x128xbf16, #tpu.memory_space<vmem>>, vector<1x1x7x128xbf16>,
    %102 = vector.extract_strided_slice %1 {offsets = [8, 0, 0], sizes = [3, 15, 128], strides = [1, 1, 1]} : vector<15x15x128xbf16> to vector<3x15x128xbf16>
    %103 = vector.extract_strided_slice %102 {offsets = [0, 0, 0], sizes = [1, 15, 128], strides = [1, 1, 1]} : vector<3x15x128xbf16> to vector<1x15x128xbf16>
    %104 = vector.shape_cast %103 : vector<1x15x128xbf16> to vector<15x128xbf16>
    %105 = vector.extract_strided_slice %102 {offsets = [1, 0, 0], sizes = [1, 15, 128], strides = [1, 1, 1]} : vector<3x15x128xbf16> to vector<1x15x128xbf16>
    %106 = vector.shape_cast %105 : vector<1x15x128xbf16> to vector<15x128xbf16>
    %107 = arith.maximumf %104, %106 : vector<15x128xbf16>
    %108 = vector.extract_strided_slice %102 {offsets = [2, 0, 0], sizes = [1, 15, 128], strides = [1, 1, 1]} : vector<3x15x128xbf16> to vector<1x15x128xbf16>
    %109 = vector.shape_cast %108 : vector<1x15x128xbf16> to vector<15x128xbf16>
    %110 = arith.maximumf %107, %109 : vector<15x128xbf16>
    %111 = vector.extract_strided_slice %110 {offsets = [0, 0], sizes = [13, 128], strides = [1, 1]} : vector<15x128xbf16> to vector<13x128xbf16>
    %112 = vector.extract_strided_slice %110 {offsets = [1, 0], sizes = [13, 128], strides = [1, 1]} : vector<15x128xbf16> to vector<13x128xbf16>
    %113 = arith.maximumf %111, %112 : vector<13x128xbf16>
    %114 = vector.extract_strided_slice %110 {offsets = [2, 0], sizes = [13, 128], strides = [1, 1]} : vector<15x128xbf16> to vector<13x128xbf16>
    %115 = arith.maximumf %113, %114 : vector<13x128xbf16>
    %116 = vector.extract_strided_slice %115 {offsets = [0, 0], sizes = [1, 128], strides = [1, 1]} : vector<13x128xbf16> to vector<1x128xbf16>
    %117 = vector.extract_strided_slice %115 {offsets = [2, 0], sizes = [1, 128], strides = [1, 1]} : vector<13x128xbf16> to vector<1x128xbf16>
    %118 = vector.extract_strided_slice %115 {offsets = [4, 0], sizes = [1, 128], strides = [1, 1]} : vector<13x128xbf16> to vector<1x128xbf16>
    %119 = vector.extract_strided_slice %115 {offsets = [6, 0], sizes = [1, 128], strides = [1, 1]} : vector<13x128xbf16> to vector<1x128xbf16>
    %120 = vector.extract_strided_slice %115 {offsets = [8, 0], sizes = [1, 128], strides = [1, 1]} : vector<13x128xbf16> to vector<1x128xbf16>
    %121 = vector.extract_strided_slice %115 {offsets = [10, 0], sizes = [1, 128], strides = [1, 1]} : vector<13x128xbf16> to vector<1x128xbf16>
    %122 = vector.extract_strided_slice %115 {offsets = [12, 0], sizes = [1, 128], strides = [1, 1]} : vector<13x128xbf16> to vector<1x128xbf16>
    %123 = tpu.concatenate %116, %117, %118, %119, %120, %121, %122 in 0 : vector<1x128xbf16>, vector<1x128xbf16>, vector<1x128xbf16>, vector<1x128xbf16>, vector<1x128xbf16>, vector<1x128xbf16>, vector<1x128xbf16> -> vector<7x128xbf16>
    %c0_16 = arith.constant 0 : index
    %c4 = arith.constant 4 : index
    %c0_17 = arith.constant 0 : index
    %c0_18 = arith.constant 0 : index
    %124 = vector.load %arg2[%c0_16, %c4, %c0_17, %c0_18] : memref<1x7x7x128xbf16, #tpu.memory_space<vmem>>, vector<1x1x7x128xbf16>
    %125 = vector.shape_cast %124 : vector<1x1x7x128xbf16> to vector<7x128xbf16>
    %126 = vector.shape_cast %123 : vector<7x128xbf16> to vector<1x1x7x128xbf16>
    tpu.vector_store %arg2[%c0_16, %c4, %c0_17, %c0_18], %126 {strides = array<i32>} : memref<1x7x7x128xbf16, #tpu.memory_space<vmem>>, vector<1x1x7x128xbf16>,
    %127 = vector.extract_strided_slice %1 {offsets = [10, 0, 0], sizes = [3, 15, 128], strides = [1, 1, 1]} : vector<15x15x128xbf16> to vector<3x15x128xbf16>
    %128 = vector.extract_strided_slice %127 {offsets = [0, 0, 0], sizes = [1, 15, 128], strides = [1, 1, 1]} : vector<3x15x128xbf16> to vector<1x15x128xbf16>
    %129 = vector.shape_cast %128 : vector<1x15x128xbf16> to vector<15x128xbf16>
    %130 = vector.extract_strided_slice %127 {offsets = [1, 0, 0], sizes = [1, 15, 128], strides = [1, 1, 1]} : vector<3x15x128xbf16> to vector<1x15x128xbf16>
    %131 = vector.shape_cast %130 : vector<1x15x128xbf16> to vector<15x128xbf16>
    %132 = arith.maximumf %129, %131 : vector<15x128xbf16>
    %133 = vector.extract_strided_slice %127 {offsets = [2, 0, 0], sizes = [1, 15, 128], strides = [1, 1, 1]} : vector<3x15x128xbf16> to vector<1x15x128xbf16>
    %134 = vector.shape_cast %133 : vector<1x15x128xbf16> to vector<15x128xbf16>
    %135 = arith.maximumf %132, %134 : vector<15x128xbf16>
    %136 = vector.extract_strided_slice %135 {offsets = [0, 0], sizes = [13, 128], strides = [1, 1]} : vector<15x128xbf16> to vector<13x128xbf16>
    %137 = vector.extract_strided_slice %135 {offsets = [1, 0], sizes = [13, 128], strides = [1, 1]} : vector<15x128xbf16> to vector<13x128xbf16>
    %138 = arith.maximumf %136, %137 : vector<13x128xbf16>
    %139 = vector.extract_strided_slice %135 {offsets = [2, 0], sizes = [13, 128], strides = [1, 1]} : vector<15x128xbf16> to vector<13x128xbf16>
    %140 = arith.maximumf %138, %139 : vector<13x128xbf16>
    %141 = vector.extract_strided_slice %140 {offsets = [0, 0], sizes = [1, 128], strides = [1, 1]} : vector<13x128xbf16> to vector<1x128xbf16>
    %142 = vector.extract_strided_slice %140 {offsets = [2, 0], sizes = [1, 128], strides = [1, 1]} : vector<13x128xbf16> to vector<1x128xbf16>
    %143 = vector.extract_strided_slice %140 {offsets = [4, 0], sizes = [1, 128], strides = [1, 1]} : vector<13x128xbf16> to vector<1x128xbf16>
    %144 = vector.extract_strided_slice %140 {offsets = [6, 0], sizes = [1, 128], strides = [1, 1]} : vector<13x128xbf16> to vector<1x128xbf16>
    %145 = vector.extract_strided_slice %140 {offsets = [8, 0], sizes = [1, 128], strides = [1, 1]} : vector<13x128xbf16> to vector<1x128xbf16>
    %146 = vector.extract_strided_slice %140 {offsets = [10, 0], sizes = [1, 128], strides = [1, 1]} : vector<13x128xbf16> to vector<1x128xbf16>
    %147 = vector.extract_strided_slice %140 {offsets = [12, 0], sizes = [1, 128], strides = [1, 1]} : vector<13x128xbf16> to vector<1x128xbf16>
    %148 = tpu.concatenate %141, %142, %143, %144, %145, %146, %147 in 0 : vector<1x128xbf16>, vector<1x128xbf16>, vector<1x128xbf16>, vector<1x128xbf16>, vector<1x128xbf16>, vector<1x128xbf16>, vector<1x128xbf16> -> vector<7x128xbf16>
    %c0_19 = arith.constant 0 : index
    %c5 = arith.constant 5 : index
    %c0_20 = arith.constant 0 : index
    %c0_21 = arith.constant 0 : index
    %149 = vector.load %arg2[%c0_19, %c5, %c0_20, %c0_21] : memref<1x7x7x128xbf16, #tpu.memory_space<vmem>>, vector<1x1x7x128xbf16>
    %150 = vector.shape_cast %149 : vector<1x1x7x128xbf16> to vector<7x128xbf16>
    %151 = vector.shape_cast %148 : vector<7x128xbf16> to vector<1x1x7x128xbf16>
    tpu.vector_store %arg2[%c0_19, %c5, %c0_20, %c0_21], %151 {strides = array<i32>} : memref<1x7x7x128xbf16, #tpu.memory_space<vmem>>, vector<1x1x7x128xbf16>,
    %152 = vector.extract_strided_slice %1 {offsets = [12, 0, 0], sizes = [3, 15, 128], strides = [1, 1, 1]} : vector<15x15x128xbf16> to vector<3x15x128xbf16>
    %153 = vector.extract_strided_slice %152 {offsets = [0, 0, 0], sizes = [1, 15, 128], strides = [1, 1, 1]} : vector<3x15x128xbf16> to vector<1x15x128xbf16>
    %154 = vector.shape_cast %153 : vector<1x15x128xbf16> to vector<15x128xbf16>
    %155 = vector.extract_strided_slice %152 {offsets = [1, 0, 0], sizes = [1, 15, 128], strides = [1, 1, 1]} : vector<3x15x128xbf16> to vector<1x15x128xbf16>
    %156 = vector.shape_cast %155 : vector<1x15x128xbf16> to vector<15x128xbf16>
    %157 = arith.maximumf %154, %156 : vector<15x128xbf16>
    %158 = vector.extract_strided_slice %152 {offsets = [2, 0, 0], sizes = [1, 15, 128], strides = [1, 1, 1]} : vector<3x15x128xbf16> to vector<1x15x128xbf16>
    %159 = vector.shape_cast %158 : vector<1x15x128xbf16> to vector<15x128xbf16>
    %160 = arith.maximumf %157, %159 : vector<15x128xbf16>
    %161 = vector.extract_strided_slice %160 {offsets = [0, 0], sizes = [13, 128], strides = [1, 1]} : vector<15x128xbf16> to vector<13x128xbf16>
    %162 = vector.extract_strided_slice %160 {offsets = [1, 0], sizes = [13, 128], strides = [1, 1]} : vector<15x128xbf16> to vector<13x128xbf16>
    %163 = arith.maximumf %161, %162 : vector<13x128xbf16>
    %164 = vector.extract_strided_slice %160 {offsets = [2, 0], sizes = [13, 128], strides = [1, 1]} : vector<15x128xbf16> to vector<13x128xbf16>
    %165 = arith.maximumf %163, %164 : vector<13x128xbf16>
    %166 = vector.extract_strided_slice %165 {offsets = [0, 0], sizes = [1, 128], strides = [1, 1]} : vector<13x128xbf16> to vector<1x128xbf16>
    %167 = vector.extract_strided_slice %165 {offsets = [2, 0], sizes = [1, 128], strides = [1, 1]} : vector<13x128xbf16> to vector<1x128xbf16>
    %168 = vector.extract_strided_slice %165 {offsets = [4, 0], sizes = [1, 128], strides = [1, 1]} : vector<13x128xbf16> to vector<1x128xbf16>
    %169 = vector.extract_strided_slice %165 {offsets = [6, 0], sizes = [1, 128], strides = [1, 1]} : vector<13x128xbf16> to vector<1x128xbf16>
    %170 = vector.extract_strided_slice %165 {offsets = [8, 0], sizes = [1, 128], strides = [1, 1]} : vector<13x128xbf16> to vector<1x128xbf16>
    %171 = vector.extract_strided_slice %165 {offsets = [10, 0], sizes = [1, 128], strides = [1, 1]} : vector<13x128xbf16> to vector<1x128xbf16>
    %172 = vector.extract_strided_slice %165 {offsets = [12, 0], sizes = [1, 128], strides = [1, 1]} : vector<13x128xbf16> to vector<1x128xbf16>
    %173 = tpu.concatenate %166, %167, %168, %169, %170, %171, %172 in 0 : vector<1x128xbf16>, vector<1x128xbf16>, vector<1x128xbf16>, vector<1x128xbf16>, vector<1x128xbf16>, vector<1x128xbf16>, vector<1x128xbf16> -> vector<7x128xbf16>
    %c0_22 = arith.constant 0 : index
    %c6 = arith.constant 6 : index
    %c0_23 = arith.constant 0 : index
    %c0_24 = arith.constant 0 : index
    %174 = vector.load %arg2[%c0_22, %c6, %c0_23, %c0_24] : memref<1x7x7x128xbf16, #tpu.memory_space<vmem>>, vector<1x1x7x128xbf16>
    %175 = vector.shape_cast %174 : vector<1x1x7x128xbf16> to vector<7x128xbf16>
    %176 = vector.shape_cast %173 : vector<7x128xbf16> to vector<1x1x7x128xbf16>
    tpu.vector_store %arg2[%c0_22, %c6, %c0_23, %c0_24], %176 {strides = array<i32>} : memref<1x7x7x128xbf16, #tpu.memory_space<vmem>>, vector<1x1x7x128xbf16>,
    return
  }
  func.func @transform_0(%arg0: i32) -> (i32, i32, i32, i32) {
    %c0_i32 = arith.constant 0 : i32
    %c0_i32_0 = arith.constant 0 : i32
    %c0_i32_1 = arith.constant 0 : i32
    %c0_i32_2 = arith.constant 0 : i32
    return %arg0, %c0_i32, %c0_i32_0, %c0_i32_1 : i32, i32, i32, i32
  }
  func.func @transform_1(%arg0: i32) -> (i32, i32, i32, i32) {
    %c0_i32 = arith.constant 0 : i32
    %c0_i32_0 = arith.constant 0 : i32
    %c0_i32_1 = arith.constant 0 : i32
    %c0_i32_2 = arith.constant 0 : i32
    return %arg0, %c0_i32, %c0_i32_0, %c0_i32_1 : i32, i32, i32, i32
  }
}

module attributes {stable_mosaic.version = 11 : i64} {
  func.func @_matmul_bias_act_kernel(%arg0: i32, %arg1: i32, %arg2: i32, %arg3: memref<112x512xbf16, #tpu.memory_space<vmem>>, %arg4: memref<512x128xbf16, #tpu.memory_space<vmem>>, %arg5: memref<1x128xf32, #tpu.memory_space<vmem>>, %arg6: memref<112x128xbf16, #tpu.memory_space<vmem>>, %arg7: memref<112x128xf32, #tpu.memory_space<vmem>>) attributes {dimension_semantics = [#tpu.dimension_semantics<parallel>, #tpu.dimension_semantics<parallel>, #tpu.dimension_semantics<arbitrary>], iteration_bounds = array<i64: 1, 2, 4>, scalar_prefetch = 0 : i64, scratch_operands = 1 : i64, tpu.core_type = #tpu.core_type<tc>, window_params = [{transform_indices = @transform_0, window_bounds = array<i64: 112, 512>}, {transform_indices = @transform_1, window_bounds = array<i64: 512, 128>}, {transform_indices = @transform_2, window_bounds = array<i64: 1, 128>}, {transform_indices = @transform_3, window_bounds = array<i64: 112, 128>}]} {
    %c0_i32 = arith.constant 0 : i32
    %0 = arith.cmpi eq, %arg2, %c0_i32 : i32
    %1 = arith.extui %0 : i1 to i32
    %c0_i32_0 = arith.constant 0 : i32
    %2 = arith.cmpi ne, %1, %c0_i32_0 : i32
    scf.if %2 {
      %cst_9 = arith.constant 0.000000e+00 : f32
      %12 = vector.broadcast %cst_9 : f32 to vector<112x128xf32>
      %c0_10 = arith.constant 0 : index
      %c0_11 = arith.constant 0 : index
      %13 = vector.load %arg7[%c0_10, %c0_11] : memref<112x128xf32, #tpu.memory_space<vmem>>, vector<112x128xf32>
      tpu.vector_store %arg7[%c0_10, %c0_11], %12 {strides = array<i32>} : memref<112x128xf32, #tpu.memory_space<vmem>>, vector<112x128xf32>,
    } else {
    }
    %c0 = arith.constant 0 : index
    %c0_1 = arith.constant 0 : index
    %3 = vector.load %arg7[%c0, %c0_1] : memref<112x128xf32, #tpu.memory_space<vmem>>, vector<112x128xf32>
    %c0_2 = arith.constant 0 : index
    %c0_3 = arith.constant 0 : index
    %4 = vector.load %arg3[%c0_2, %c0_3] : memref<112x512xbf16, #tpu.memory_space<vmem>>, vector<112x512xbf16>
    %c0_4 = arith.constant 0 : index
    %c0_5 = arith.constant 0 : index
    %5 = vector.load %arg4[%c0_4, %c0_5] : memref<512x128xbf16, #tpu.memory_space<vmem>>, vector<512x128xbf16>
    %cst = arith.constant dense<0.000000e+00> : vector<112x128xf32>
    %6 = tpu.matmul %4, %5, %cst {dimension_numbers = #tpu.dot_dimension_numbers<[1], [0], [0], [1], [0, 0, 1, 1], [], []>} : vector<112x512xbf16>, vector<512x128xbf16>, vector<112x128xf32> -> vector<112x128xf32>
    %7 = arith.addf %3, %6 : vector<112x128xf32>
    %c0_6 = arith.constant 0 : index
    %c0_7 = arith.constant 0 : index
    %8 = vector.load %arg7[%c0_6, %c0_7] : memref<112x128xf32, #tpu.memory_space<vmem>>, vector<112x128xf32>
    tpu.vector_store %arg7[%c0_6, %c0_7], %7 {strides = array<i32>} : memref<112x128xf32, #tpu.memory_space<vmem>>, vector<112x128xf32>,
    %c3_i32 = arith.constant 3 : i32
    %9 = arith.cmpi eq, %arg2, %c3_i32 : i32
    %10 = arith.extui %9 : i1 to i32
    %c0_i32_8 = arith.constant 0 : i32
    %11 = arith.cmpi ne, %10, %c0_i32_8 : i32
    scf.if %11 {
      %c0_9 = arith.constant 0 : index
      %c0_10 = arith.constant 0 : index
      %12 = vector.load %arg7[%c0_9, %c0_10] : memref<112x128xf32, #tpu.memory_space<vmem>>, vector<112x128xf32>
      %c0_11 = arith.constant 0 : index
      %c0_12 = arith.constant 0 : index
      %13 = vector.load %arg5[%c0_11, %c0_12] : memref<1x128xf32, #tpu.memory_space<vmem>>, vector<1x128xf32>
      %14 = vector.broadcast %13 : vector<1x128xf32> to vector<112x128xf32>
      %15 = arith.addf %12, %14 : vector<112x128xf32>
      %cst_13 = arith.constant 0.000000e+00 : f32
      %16 = vector.broadcast %cst_13 : f32 to vector<112x128xf32>
      %17 = arith.maximumf %15, %16 : vector<112x128xf32>
      %18 = arith.truncf %17 : vector<112x128xf32> to vector<112x128xbf16>
      %c0_14 = arith.constant 0 : index
      %c0_15 = arith.constant 0 : index
      %19 = vector.load %arg6[%c0_14, %c0_15] : memref<112x128xbf16, #tpu.memory_space<vmem>>, vector<112x128xbf16>
      tpu.vector_store %arg6[%c0_14, %c0_15], %18 {strides = array<i32>} : memref<112x128xbf16, #tpu.memory_space<vmem>>, vector<112x128xbf16>,
    } else {
    }
    return
  }
  func.func @transform_0(%arg0: i32, %arg1: i32, %arg2: i32) -> (i32, i32) {
    %c0_i32 = arith.constant 0 : i32
    return %arg0, %arg2 : i32, i32
  }
  func.func @transform_1(%arg0: i32, %arg1: i32, %arg2: i32) -> (i32, i32) {
    %c0_i32 = arith.constant 0 : i32
    return %arg2, %arg1 : i32, i32
  }
  func.func @transform_2(%arg0: i32, %arg1: i32, %arg2: i32) -> (i32, i32) {
    %c0_i32 = arith.constant 0 : i32
    %c0_i32_0 = arith.constant 0 : i32
    return %c0_i32, %arg1 : i32, i32
  }
  func.func @transform_3(%arg0: i32, %arg1: i32, %arg2: i32) -> (i32, i32) {
    %c0_i32 = arith.constant 0 : i32
    return %arg0, %arg1 : i32, i32
  }
}

module attributes {stable_mosaic.version = 11 : i64} {
  func.func @_maxpool3x3s2_kernel(%arg0: i32, %arg1: memref<1x7x7x256xbf16, #tpu.memory_space<vmem>>, %arg2: memref<1x3x3x256xbf16, #tpu.memory_space<vmem>>) attributes {dimension_semantics = [#tpu.dimension_semantics<parallel>], iteration_bounds = array<i64: 2>, scalar_prefetch = 0 : i64, scratch_operands = 0 : i64, tpu.core_type = #tpu.core_type<tc>, window_params = [{transform_indices = @transform_0, window_bounds = array<i64: 1, 7, 7, 256>}, {transform_indices = @transform_1, window_bounds = array<i64: 1, 3, 3, 256>}]} {
    %c0 = arith.constant 0 : index
    %c0_0 = arith.constant 0 : index
    %c0_1 = arith.constant 0 : index
    %c0_2 = arith.constant 0 : index
    %0 = vector.load %arg1[%c0, %c0_0, %c0_1, %c0_2] : memref<1x7x7x256xbf16, #tpu.memory_space<vmem>>, vector<1x7x7x256xbf16>
    %1 = vector.shape_cast %0 : vector<1x7x7x256xbf16> to vector<7x7x256xbf16>
    %2 = vector.extract_strided_slice %1 {offsets = [0, 0, 0], sizes = [3, 7, 256], strides = [1, 1, 1]} : vector<7x7x256xbf16> to vector<3x7x256xbf16>
    %3 = vector.extract_strided_slice %2 {offsets = [0, 0, 0], sizes = [1, 7, 256], strides = [1, 1, 1]} : vector<3x7x256xbf16> to vector<1x7x256xbf16>
    %4 = vector.shape_cast %3 : vector<1x7x256xbf16> to vector<7x256xbf16>
    %5 = vector.extract_strided_slice %2 {offsets = [1, 0, 0], sizes = [1, 7, 256], strides = [1, 1, 1]} : vector<3x7x256xbf16> to vector<1x7x256xbf16>
    %6 = vector.shape_cast %5 : vector<1x7x256xbf16> to vector<7x256xbf16>
    %7 = arith.maximumf %4, %6 : vector<7x256xbf16>
    %8 = vector.extract_strided_slice %2 {offsets = [2, 0, 0], sizes = [1, 7, 256], strides = [1, 1, 1]} : vector<3x7x256xbf16> to vector<1x7x256xbf16>
    %9 = vector.shape_cast %8 : vector<1x7x256xbf16> to vector<7x256xbf16>
    %10 = arith.maximumf %7, %9 : vector<7x256xbf16>
    %11 = vector.extract_strided_slice %10 {offsets = [0, 0], sizes = [5, 256], strides = [1, 1]} : vector<7x256xbf16> to vector<5x256xbf16>
    %12 = vector.extract_strided_slice %10 {offsets = [1, 0], sizes = [5, 256], strides = [1, 1]} : vector<7x256xbf16> to vector<5x256xbf16>
    %13 = arith.maximumf %11, %12 : vector<5x256xbf16>
    %14 = vector.extract_strided_slice %10 {offsets = [2, 0], sizes = [5, 256], strides = [1, 1]} : vector<7x256xbf16> to vector<5x256xbf16>
    %15 = arith.maximumf %13, %14 : vector<5x256xbf16>
    %16 = vector.extract_strided_slice %15 {offsets = [0, 0], sizes = [1, 256], strides = [1, 1]} : vector<5x256xbf16> to vector<1x256xbf16>
    %17 = vector.extract_strided_slice %15 {offsets = [2, 0], sizes = [1, 256], strides = [1, 1]} : vector<5x256xbf16> to vector<1x256xbf16>
    %18 = vector.extract_strided_slice %15 {offsets = [4, 0], sizes = [1, 256], strides = [1, 1]} : vector<5x256xbf16> to vector<1x256xbf16>
    %19 = tpu.concatenate %16, %17, %18 in 0 : vector<1x256xbf16>, vector<1x256xbf16>, vector<1x256xbf16> -> vector<3x256xbf16>
    %c0_3 = arith.constant 0 : index
    %c0_4 = arith.constant 0 : index
    %c0_5 = arith.constant 0 : index
    %c0_6 = arith.constant 0 : index
    %20 = vector.load %arg2[%c0_3, %c0_4, %c0_5, %c0_6] : memref<1x3x3x256xbf16, #tpu.memory_space<vmem>>, vector<1x1x3x256xbf16>
    %21 = vector.shape_cast %20 : vector<1x1x3x256xbf16> to vector<3x256xbf16>
    %22 = vector.shape_cast %19 : vector<3x256xbf16> to vector<1x1x3x256xbf16>
    tpu.vector_store %arg2[%c0_3, %c0_4, %c0_5, %c0_6], %22 {strides = array<i32>} : memref<1x3x3x256xbf16, #tpu.memory_space<vmem>>, vector<1x1x3x256xbf16>,
    %23 = vector.extract_strided_slice %1 {offsets = [2, 0, 0], sizes = [3, 7, 256], strides = [1, 1, 1]} : vector<7x7x256xbf16> to vector<3x7x256xbf16>
    %24 = vector.extract_strided_slice %23 {offsets = [0, 0, 0], sizes = [1, 7, 256], strides = [1, 1, 1]} : vector<3x7x256xbf16> to vector<1x7x256xbf16>
    %25 = vector.shape_cast %24 : vector<1x7x256xbf16> to vector<7x256xbf16>
    %26 = vector.extract_strided_slice %23 {offsets = [1, 0, 0], sizes = [1, 7, 256], strides = [1, 1, 1]} : vector<3x7x256xbf16> to vector<1x7x256xbf16>
    %27 = vector.shape_cast %26 : vector<1x7x256xbf16> to vector<7x256xbf16>
    %28 = arith.maximumf %25, %27 : vector<7x256xbf16>
    %29 = vector.extract_strided_slice %23 {offsets = [2, 0, 0], sizes = [1, 7, 256], strides = [1, 1, 1]} : vector<3x7x256xbf16> to vector<1x7x256xbf16>
    %30 = vector.shape_cast %29 : vector<1x7x256xbf16> to vector<7x256xbf16>
    %31 = arith.maximumf %28, %30 : vector<7x256xbf16>
    %32 = vector.extract_strided_slice %31 {offsets = [0, 0], sizes = [5, 256], strides = [1, 1]} : vector<7x256xbf16> to vector<5x256xbf16>
    %33 = vector.extract_strided_slice %31 {offsets = [1, 0], sizes = [5, 256], strides = [1, 1]} : vector<7x256xbf16> to vector<5x256xbf16>
    %34 = arith.maximumf %32, %33 : vector<5x256xbf16>
    %35 = vector.extract_strided_slice %31 {offsets = [2, 0], sizes = [5, 256], strides = [1, 1]} : vector<7x256xbf16> to vector<5x256xbf16>
    %36 = arith.maximumf %34, %35 : vector<5x256xbf16>
    %37 = vector.extract_strided_slice %36 {offsets = [0, 0], sizes = [1, 256], strides = [1, 1]} : vector<5x256xbf16> to vector<1x256xbf16>
    %38 = vector.extract_strided_slice %36 {offsets = [2, 0], sizes = [1, 256], strides = [1, 1]} : vector<5x256xbf16> to vector<1x256xbf16>
    %39 = vector.extract_strided_slice %36 {offsets = [4, 0], sizes = [1, 256], strides = [1, 1]} : vector<5x256xbf16> to vector<1x256xbf16>
    %40 = tpu.concatenate %37, %38, %39 in 0 : vector<1x256xbf16>, vector<1x256xbf16>, vector<1x256xbf16> -> vector<3x256xbf16>
    %c0_7 = arith.constant 0 : index
    %c1 = arith.constant 1 : index
    %c0_8 = arith.constant 0 : index
    %c0_9 = arith.constant 0 : index
    %41 = vector.load %arg2[%c0_7, %c1, %c0_8, %c0_9] : memref<1x3x3x256xbf16, #tpu.memory_space<vmem>>, vector<1x1x3x256xbf16>
    %42 = vector.shape_cast %41 : vector<1x1x3x256xbf16> to vector<3x256xbf16>
    %43 = vector.shape_cast %40 : vector<3x256xbf16> to vector<1x1x3x256xbf16>
    tpu.vector_store %arg2[%c0_7, %c1, %c0_8, %c0_9], %43 {strides = array<i32>} : memref<1x3x3x256xbf16, #tpu.memory_space<vmem>>, vector<1x1x3x256xbf16>,
    %44 = vector.extract_strided_slice %1 {offsets = [4, 0, 0], sizes = [3, 7, 256], strides = [1, 1, 1]} : vector<7x7x256xbf16> to vector<3x7x256xbf16>
    %45 = vector.extract_strided_slice %44 {offsets = [0, 0, 0], sizes = [1, 7, 256], strides = [1, 1, 1]} : vector<3x7x256xbf16> to vector<1x7x256xbf16>
    %46 = vector.shape_cast %45 : vector<1x7x256xbf16> to vector<7x256xbf16>
    %47 = vector.extract_strided_slice %44 {offsets = [1, 0, 0], sizes = [1, 7, 256], strides = [1, 1, 1]} : vector<3x7x256xbf16> to vector<1x7x256xbf16>
    %48 = vector.shape_cast %47 : vector<1x7x256xbf16> to vector<7x256xbf16>
    %49 = arith.maximumf %46, %48 : vector<7x256xbf16>
    %50 = vector.extract_strided_slice %44 {offsets = [2, 0, 0], sizes = [1, 7, 256], strides = [1, 1, 1]} : vector<3x7x256xbf16> to vector<1x7x256xbf16>
    %51 = vector.shape_cast %50 : vector<1x7x256xbf16> to vector<7x256xbf16>
    %52 = arith.maximumf %49, %51 : vector<7x256xbf16>
    %53 = vector.extract_strided_slice %52 {offsets = [0, 0], sizes = [5, 256], strides = [1, 1]} : vector<7x256xbf16> to vector<5x256xbf16>
    %54 = vector.extract_strided_slice %52 {offsets = [1, 0], sizes = [5, 256], strides = [1, 1]} : vector<7x256xbf16> to vector<5x256xbf16>
    %55 = arith.maximumf %53, %54 : vector<5x256xbf16>
    %56 = vector.extract_strided_slice %52 {offsets = [2, 0], sizes = [5, 256], strides = [1, 1]} : vector<7x256xbf16> to vector<5x256xbf16>
    %57 = arith.maximumf %55, %56 : vector<5x256xbf16>
    %58 = vector.extract_strided_slice %57 {offsets = [0, 0], sizes = [1, 256], strides = [1, 1]} : vector<5x256xbf16> to vector<1x256xbf16>
    %59 = vector.extract_strided_slice %57 {offsets = [2, 0], sizes = [1, 256], strides = [1, 1]} : vector<5x256xbf16> to vector<1x256xbf16>
    %60 = vector.extract_strided_slice %57 {offsets = [4, 0], sizes = [1, 256], strides = [1, 1]} : vector<5x256xbf16> to vector<1x256xbf16>
    %61 = tpu.concatenate %58, %59, %60 in 0 : vector<1x256xbf16>, vector<1x256xbf16>, vector<1x256xbf16> -> vector<3x256xbf16>
    %c0_10 = arith.constant 0 : index
    %c2 = arith.constant 2 : index
    %c0_11 = arith.constant 0 : index
    %c0_12 = arith.constant 0 : index
    %62 = vector.load %arg2[%c0_10, %c2, %c0_11, %c0_12] : memref<1x3x3x256xbf16, #tpu.memory_space<vmem>>, vector<1x1x3x256xbf16>
    %63 = vector.shape_cast %62 : vector<1x1x3x256xbf16> to vector<3x256xbf16>
    %64 = vector.shape_cast %61 : vector<3x256xbf16> to vector<1x1x3x256xbf16>
    tpu.vector_store %arg2[%c0_10, %c2, %c0_11, %c0_12], %64 {strides = array<i32>} : memref<1x3x3x256xbf16, #tpu.memory_space<vmem>>, vector<1x1x3x256xbf16>,
    return
  }
  func.func @transform_0(%arg0: i32) -> (i32, i32, i32, i32) {
    %c0_i32 = arith.constant 0 : i32
    %c0_i32_0 = arith.constant 0 : i32
    %c0_i32_1 = arith.constant 0 : i32
    %c0_i32_2 = arith.constant 0 : i32
    return %arg0, %c0_i32, %c0_i32_0, %c0_i32_1 : i32, i32, i32, i32
  }
  func.func @transform_1(%arg0: i32) -> (i32, i32, i32, i32) {
    %c0_i32 = arith.constant 0 : i32
    %c0_i32_0 = arith.constant 0 : i32
    %c0_i32_1 = arith.constant 0 : i32
    %c0_i32_2 = arith.constant 0 : i32
    return %arg0, %c0_i32, %c0_i32_0, %c0_i32_1 : i32, i32, i32, i32
  }
}

module attributes {stable_mosaic.version = 11 : i64} {
  func.func @_matmul_bias_act_kernel(%arg0: i32, %arg1: i32, %arg2: i32, %arg3: memref<32x512xbf16, #tpu.memory_space<vmem>>, %arg4: memref<512x128xbf16, #tpu.memory_space<vmem>>, %arg5: memref<1x128xf32, #tpu.memory_space<vmem>>, %arg6: memref<32x128xbf16, #tpu.memory_space<vmem>>, %arg7: memref<32x128xf32, #tpu.memory_space<vmem>>) attributes {dimension_semantics = [#tpu.dimension_semantics<parallel>, #tpu.dimension_semantics<parallel>, #tpu.dimension_semantics<arbitrary>], iteration_bounds = array<i64: 1, 3, 4>, scalar_prefetch = 0 : i64, scratch_operands = 1 : i64, tpu.core_type = #tpu.core_type<tc>, window_params = [{transform_indices = @transform_0, window_bounds = array<i64: 32, 512>}, {transform_indices = @transform_1, window_bounds = array<i64: 512, 128>}, {transform_indices = @transform_2, window_bounds = array<i64: 1, 128>}, {transform_indices = @transform_3, window_bounds = array<i64: 32, 128>}]} {
    %c0_i32 = arith.constant 0 : i32
    %0 = arith.cmpi eq, %arg2, %c0_i32 : i32
    %1 = arith.extui %0 : i1 to i32
    %c0_i32_0 = arith.constant 0 : i32
    %2 = arith.cmpi ne, %1, %c0_i32_0 : i32
    scf.if %2 {
      %cst_9 = arith.constant 0.000000e+00 : f32
      %12 = vector.broadcast %cst_9 : f32 to vector<32x128xf32>
      %c0_10 = arith.constant 0 : index
      %c0_11 = arith.constant 0 : index
      %13 = vector.load %arg7[%c0_10, %c0_11] : memref<32x128xf32, #tpu.memory_space<vmem>>, vector<32x128xf32>
      tpu.vector_store %arg7[%c0_10, %c0_11], %12 {strides = array<i32>} : memref<32x128xf32, #tpu.memory_space<vmem>>, vector<32x128xf32>,
    } else {
    }
    %c0 = arith.constant 0 : index
    %c0_1 = arith.constant 0 : index
    %3 = vector.load %arg7[%c0, %c0_1] : memref<32x128xf32, #tpu.memory_space<vmem>>, vector<32x128xf32>
    %c0_2 = arith.constant 0 : index
    %c0_3 = arith.constant 0 : index
    %4 = vector.load %arg3[%c0_2, %c0_3] : memref<32x512xbf16, #tpu.memory_space<vmem>>, vector<32x512xbf16>
    %c0_4 = arith.constant 0 : index
    %c0_5 = arith.constant 0 : index
    %5 = vector.load %arg4[%c0_4, %c0_5] : memref<512x128xbf16, #tpu.memory_space<vmem>>, vector<512x128xbf16>
    %cst = arith.constant dense<0.000000e+00> : vector<32x128xf32>
    %6 = tpu.matmul %4, %5, %cst {dimension_numbers = #tpu.dot_dimension_numbers<[1], [0], [0], [1], [0, 0, 1, 1], [], []>} : vector<32x512xbf16>, vector<512x128xbf16>, vector<32x128xf32> -> vector<32x128xf32>
    %7 = arith.addf %3, %6 : vector<32x128xf32>
    %c0_6 = arith.constant 0 : index
    %c0_7 = arith.constant 0 : index
    %8 = vector.load %arg7[%c0_6, %c0_7] : memref<32x128xf32, #tpu.memory_space<vmem>>, vector<32x128xf32>
    tpu.vector_store %arg7[%c0_6, %c0_7], %7 {strides = array<i32>} : memref<32x128xf32, #tpu.memory_space<vmem>>, vector<32x128xf32>,
    %c3_i32 = arith.constant 3 : i32
    %9 = arith.cmpi eq, %arg2, %c3_i32 : i32
    %10 = arith.extui %9 : i1 to i32
    %c0_i32_8 = arith.constant 0 : i32
    %11 = arith.cmpi ne, %10, %c0_i32_8 : i32
    scf.if %11 {
      %c0_9 = arith.constant 0 : index
      %c0_10 = arith.constant 0 : index
      %12 = vector.load %arg7[%c0_9, %c0_10] : memref<32x128xf32, #tpu.memory_space<vmem>>, vector<32x128xf32>
      %c0_11 = arith.constant 0 : index
      %c0_12 = arith.constant 0 : index
      %13 = vector.load %arg5[%c0_11, %c0_12] : memref<1x128xf32, #tpu.memory_space<vmem>>, vector<1x128xf32>
      %14 = vector.broadcast %13 : vector<1x128xf32> to vector<32x128xf32>
      %15 = arith.addf %12, %14 : vector<32x128xf32>
      %cst_13 = arith.constant 0.000000e+00 : f32
      %16 = vector.broadcast %cst_13 : f32 to vector<32x128xf32>
      %17 = arith.maximumf %15, %16 : vector<32x128xf32>
      %18 = arith.truncf %17 : vector<32x128xf32> to vector<32x128xbf16>
      %c0_14 = arith.constant 0 : index
      %c0_15 = arith.constant 0 : index
      %19 = vector.load %arg6[%c0_14, %c0_15] : memref<32x128xbf16, #tpu.memory_space<vmem>>, vector<32x128xbf16>
      tpu.vector_store %arg6[%c0_14, %c0_15], %18 {strides = array<i32>} : memref<32x128xbf16, #tpu.memory_space<vmem>>, vector<32x128xbf16>,
    } else {
    }
    return
  }
  func.func @transform_0(%arg0: i32, %arg1: i32, %arg2: i32) -> (i32, i32) {
    %c0_i32 = arith.constant 0 : i32
    return %arg0, %arg2 : i32, i32
  }
  func.func @transform_1(%arg0: i32, %arg1: i32, %arg2: i32) -> (i32, i32) {
    %c0_i32 = arith.constant 0 : i32
    return %arg2, %arg1 : i32, i32
  }
  func.func @transform_2(%arg0: i32, %arg1: i32, %arg2: i32) -> (i32, i32) {
    %c0_i32 = arith.constant 0 : i32
    %c0_i32_0 = arith.constant 0 : i32
    return %c0_i32, %arg1 : i32, i32
  }
  func.func @transform_3(%arg0: i32, %arg1: i32, %arg2: i32) -> (i32, i32) {
    %c0_i32 = arith.constant 0 : i32
    return %arg0, %arg1 : i32, i32
  }
}

module attributes {stable_mosaic.version = 11 : i64} {
  func.func @_matmul_bias_act_kernel(%arg0: i32, %arg1: i32, %arg2: i32, %arg3: memref<32x512xbf16, #tpu.memory_space<vmem>>, %arg4: memref<512x128xbf16, #tpu.memory_space<vmem>>, %arg5: memref<1x128xf32, #tpu.memory_space<vmem>>, %arg6: memref<32x128xbf16, #tpu.memory_space<vmem>>, %arg7: memref<32x128xf32, #tpu.memory_space<vmem>>) attributes {dimension_semantics = [#tpu.dimension_semantics<parallel>, #tpu.dimension_semantics<parallel>, #tpu.dimension_semantics<arbitrary>], iteration_bounds = array<i64: 1, 2, 7>, scalar_prefetch = 0 : i64, scratch_operands = 1 : i64, tpu.core_type = #tpu.core_type<tc>, window_params = [{transform_indices = @transform_0, window_bounds = array<i64: 32, 512>}, {transform_indices = @transform_1, window_bounds = array<i64: 512, 128>}, {transform_indices = @transform_2, window_bounds = array<i64: 1, 128>}, {transform_indices = @transform_3, window_bounds = array<i64: 32, 128>}]} {
    %c0_i32 = arith.constant 0 : i32
    %0 = arith.cmpi eq, %arg2, %c0_i32 : i32
    %1 = arith.extui %0 : i1 to i32
    %c0_i32_0 = arith.constant 0 : i32
    %2 = arith.cmpi ne, %1, %c0_i32_0 : i32
    scf.if %2 {
      %cst_9 = arith.constant 0.000000e+00 : f32
      %12 = vector.broadcast %cst_9 : f32 to vector<32x128xf32>
      %c0_10 = arith.constant 0 : index
      %c0_11 = arith.constant 0 : index
      %13 = vector.load %arg7[%c0_10, %c0_11] : memref<32x128xf32, #tpu.memory_space<vmem>>, vector<32x128xf32>
      tpu.vector_store %arg7[%c0_10, %c0_11], %12 {strides = array<i32>} : memref<32x128xf32, #tpu.memory_space<vmem>>, vector<32x128xf32>,
    } else {
    }
    %c0 = arith.constant 0 : index
    %c0_1 = arith.constant 0 : index
    %3 = vector.load %arg7[%c0, %c0_1] : memref<32x128xf32, #tpu.memory_space<vmem>>, vector<32x128xf32>
    %c0_2 = arith.constant 0 : index
    %c0_3 = arith.constant 0 : index
    %4 = vector.load %arg3[%c0_2, %c0_3] : memref<32x512xbf16, #tpu.memory_space<vmem>>, vector<32x512xbf16>
    %c0_4 = arith.constant 0 : index
    %c0_5 = arith.constant 0 : index
    %5 = vector.load %arg4[%c0_4, %c0_5] : memref<512x128xbf16, #tpu.memory_space<vmem>>, vector<512x128xbf16>
    %cst = arith.constant dense<0.000000e+00> : vector<32x128xf32>
    %6 = tpu.matmul %4, %5, %cst {dimension_numbers = #tpu.dot_dimension_numbers<[1], [0], [0], [1], [0, 0, 1, 1], [], []>} : vector<32x512xbf16>, vector<512x128xbf16>, vector<32x128xf32> -> vector<32x128xf32>
    %7 = arith.addf %3, %6 : vector<32x128xf32>
    %c0_6 = arith.constant 0 : index
    %c0_7 = arith.constant 0 : index
    %8 = vector.load %arg7[%c0_6, %c0_7] : memref<32x128xf32, #tpu.memory_space<vmem>>, vector<32x128xf32>
    tpu.vector_store %arg7[%c0_6, %c0_7], %7 {strides = array<i32>} : memref<32x128xf32, #tpu.memory_space<vmem>>, vector<32x128xf32>,
    %c6_i32 = arith.constant 6 : i32
    %9 = arith.cmpi eq, %arg2, %c6_i32 : i32
    %10 = arith.extui %9 : i1 to i32
    %c0_i32_8 = arith.constant 0 : i32
    %11 = arith.cmpi ne, %10, %c0_i32_8 : i32
    scf.if %11 {
      %c0_9 = arith.constant 0 : index
      %c0_10 = arith.constant 0 : index
      %12 = vector.load %arg7[%c0_9, %c0_10] : memref<32x128xf32, #tpu.memory_space<vmem>>, vector<32x128xf32>
      %c0_11 = arith.constant 0 : index
      %c0_12 = arith.constant 0 : index
      %13 = vector.load %arg5[%c0_11, %c0_12] : memref<1x128xf32, #tpu.memory_space<vmem>>, vector<1x128xf32>
      %14 = vector.broadcast %13 : vector<1x128xf32> to vector<32x128xf32>
      %15 = arith.addf %12, %14 : vector<32x128xf32>
      %cst_13 = arith.constant 0.000000e+00 : f32
      %16 = vector.broadcast %cst_13 : f32 to vector<32x128xf32>
      %17 = arith.maximumf %15, %16 : vector<32x128xf32>
      %18 = arith.truncf %17 : vector<32x128xf32> to vector<32x128xbf16>
      %c0_14 = arith.constant 0 : index
      %c0_15 = arith.constant 0 : index
      %19 = vector.load %arg6[%c0_14, %c0_15] : memref<32x128xbf16, #tpu.memory_space<vmem>>, vector<32x128xbf16>
      tpu.vector_store %arg6[%c0_14, %c0_15], %18 {strides = array<i32>} : memref<32x128xbf16, #tpu.memory_space<vmem>>, vector<32x128xbf16>,
    } else {
    }
    return
  }
  func.func @transform_0(%arg0: i32, %arg1: i32, %arg2: i32) -> (i32, i32) {
    %c0_i32 = arith.constant 0 : i32
    return %arg0, %arg2 : i32, i32
  }
  func.func @transform_1(%arg0: i32, %arg1: i32, %arg2: i32) -> (i32, i32) {
    %c0_i32 = arith.constant 0 : i32
    return %arg2, %arg1 : i32, i32
  }
  func.func @transform_2(%arg0: i32, %arg1: i32, %arg2: i32) -> (i32, i32) {
    %c0_i32 = arith.constant 0 : i32
    %c0_i32_0 = arith.constant 0 : i32
    return %c0_i32, %arg1 : i32, i32
  }
  func.func @transform_3(%arg0: i32, %arg1: i32, %arg2: i32) -> (i32, i32) {
    %c0_i32 = arith.constant 0 : i32
    return %arg0, %arg1 : i32, i32
  }
}

module attributes {stable_mosaic.version = 11 : i64} {
  func.func @_matmul_bias_act_kernel(%arg0: i32, %arg1: i32, %arg2: i32, %arg3: memref<32x512xbf16, #tpu.memory_space<vmem>>, %arg4: memref<512x128xbf16, #tpu.memory_space<vmem>>, %arg5: memref<1x128xf32, #tpu.memory_space<vmem>>, %arg6: memref<32x128xbf16, #tpu.memory_space<vmem>>, %arg7: memref<32x128xf32, #tpu.memory_space<vmem>>) attributes {dimension_semantics = [#tpu.dimension_semantics<parallel>, #tpu.dimension_semantics<parallel>, #tpu.dimension_semantics<arbitrary>], iteration_bounds = array<i64: 1, 2, 5>, scalar_prefetch = 0 : i64, scratch_operands = 1 : i64, tpu.core_type = #tpu.core_type<tc>, window_params = [{transform_indices = @transform_0, window_bounds = array<i64: 32, 512>}, {transform_indices = @transform_1, window_bounds = array<i64: 512, 128>}, {transform_indices = @transform_2, window_bounds = array<i64: 1, 128>}, {transform_indices = @transform_3, window_bounds = array<i64: 32, 128>}]} {
    %c0_i32 = arith.constant 0 : i32
    %0 = arith.cmpi eq, %arg2, %c0_i32 : i32
    %1 = arith.extui %0 : i1 to i32
    %c0_i32_0 = arith.constant 0 : i32
    %2 = arith.cmpi ne, %1, %c0_i32_0 : i32
    scf.if %2 {
      %cst_9 = arith.constant 0.000000e+00 : f32
      %12 = vector.broadcast %cst_9 : f32 to vector<32x128xf32>
      %c0_10 = arith.constant 0 : index
      %c0_11 = arith.constant 0 : index
      %13 = vector.load %arg7[%c0_10, %c0_11] : memref<32x128xf32, #tpu.memory_space<vmem>>, vector<32x128xf32>
      tpu.vector_store %arg7[%c0_10, %c0_11], %12 {strides = array<i32>} : memref<32x128xf32, #tpu.memory_space<vmem>>, vector<32x128xf32>,
    } else {
    }
    %c0 = arith.constant 0 : index
    %c0_1 = arith.constant 0 : index
    %3 = vector.load %arg7[%c0, %c0_1] : memref<32x128xf32, #tpu.memory_space<vmem>>, vector<32x128xf32>
    %c0_2 = arith.constant 0 : index
    %c0_3 = arith.constant 0 : index
    %4 = vector.load %arg3[%c0_2, %c0_3] : memref<32x512xbf16, #tpu.memory_space<vmem>>, vector<32x512xbf16>
    %c0_4 = arith.constant 0 : index
    %c0_5 = arith.constant 0 : index
    %5 = vector.load %arg4[%c0_4, %c0_5] : memref<512x128xbf16, #tpu.memory_space<vmem>>, vector<512x128xbf16>
    %cst = arith.constant dense<0.000000e+00> : vector<32x128xf32>
    %6 = tpu.matmul %4, %5, %cst {dimension_numbers = #tpu.dot_dimension_numbers<[1], [0], [0], [1], [0, 0, 1, 1], [], []>} : vector<32x512xbf16>, vector<512x128xbf16>, vector<32x128xf32> -> vector<32x128xf32>
    %7 = arith.addf %3, %6 : vector<32x128xf32>
    %c0_6 = arith.constant 0 : index
    %c0_7 = arith.constant 0 : index
    %8 = vector.load %arg7[%c0_6, %c0_7] : memref<32x128xf32, #tpu.memory_space<vmem>>, vector<32x128xf32>
    tpu.vector_store %arg7[%c0_6, %c0_7], %7 {strides = array<i32>} : memref<32x128xf32, #tpu.memory_space<vmem>>, vector<32x128xf32>,
    %c4_i32 = arith.constant 4 : i32
    %9 = arith.cmpi eq, %arg2, %c4_i32 : i32
    %10 = arith.extui %9 : i1 to i32
    %c0_i32_8 = arith.constant 0 : i32
    %11 = arith.cmpi ne, %10, %c0_i32_8 : i32
    scf.if %11 {
      %c0_9 = arith.constant 0 : index
      %c0_10 = arith.constant 0 : index
      %12 = vector.load %arg7[%c0_9, %c0_10] : memref<32x128xf32, #tpu.memory_space<vmem>>, vector<32x128xf32>
      %c0_11 = arith.constant 0 : index
      %c0_12 = arith.constant 0 : index
      %13 = vector.load %arg5[%c0_11, %c0_12] : memref<1x128xf32, #tpu.memory_space<vmem>>, vector<1x128xf32>
      %14 = vector.broadcast %13 : vector<1x128xf32> to vector<32x128xf32>
      %15 = arith.addf %12, %14 : vector<32x128xf32>
      %cst_13 = arith.constant 0.000000e+00 : f32
      %16 = vector.broadcast %cst_13 : f32 to vector<32x128xf32>
      %17 = arith.maximumf %15, %16 : vector<32x128xf32>
      %18 = arith.truncf %17 : vector<32x128xf32> to vector<32x128xbf16>
      %c0_14 = arith.constant 0 : index
      %c0_15 = arith.constant 0 : index
      %19 = vector.load %arg6[%c0_14, %c0_15] : memref<32x128xbf16, #tpu.memory_space<vmem>>, vector<32x128xbf16>
      tpu.vector_store %arg6[%c0_14, %c0_15], %18 {strides = array<i32>} : memref<32x128xbf16, #tpu.memory_space<vmem>>, vector<32x128xbf16>,
    } else {
    }
    return
  }
  func.func @transform_0(%arg0: i32, %arg1: i32, %arg2: i32) -> (i32, i32) {
    %c0_i32 = arith.constant 0 : i32
    return %arg0, %arg2 : i32, i32
  }
  func.func @transform_1(%arg0: i32, %arg1: i32, %arg2: i32) -> (i32, i32) {
    %c0_i32 = arith.constant 0 : i32
    return %arg2, %arg1 : i32, i32
  }
  func.func @transform_2(%arg0: i32, %arg1: i32, %arg2: i32) -> (i32, i32) {
    %c0_i32 = arith.constant 0 : i32
    %c0_i32_0 = arith.constant 0 : i32
    return %c0_i32, %arg1 : i32, i32
  }
  func.func @transform_3(%arg0: i32, %arg1: i32, %arg2: i32) -> (i32, i32) {
    %c0_i32 = arith.constant 0 : i32
    return %arg0, %arg1 : i32, i32
  }
}

module attributes {stable_mosaic.version = 11 : i64} {
  func.func @_maxpool3x3s2_kernel(%arg0: i32, %arg1: memref<1x3x3x256xbf16, #tpu.memory_space<vmem>>, %arg2: memref<1x1x1x256xbf16, #tpu.memory_space<vmem>>) attributes {dimension_semantics = [#tpu.dimension_semantics<parallel>], iteration_bounds = array<i64: 2>, scalar_prefetch = 0 : i64, scratch_operands = 0 : i64, tpu.core_type = #tpu.core_type<tc>, window_params = [{transform_indices = @transform_0, window_bounds = array<i64: 1, 3, 3, 256>}, {transform_indices = @transform_1, window_bounds = array<i64: 1, 1, 1, 256>}]} {
    %c0 = arith.constant 0 : index
    %c0_0 = arith.constant 0 : index
    %c0_1 = arith.constant 0 : index
    %c0_2 = arith.constant 0 : index
    %0 = vector.load %arg1[%c0, %c0_0, %c0_1, %c0_2] : memref<1x3x3x256xbf16, #tpu.memory_space<vmem>>, vector<1x3x3x256xbf16>
    %1 = vector.shape_cast %0 : vector<1x3x3x256xbf16> to vector<3x3x256xbf16>
    %2 = vector.extract_strided_slice %1 {offsets = [0, 0, 0], sizes = [1, 3, 256], strides = [1, 1, 1]} : vector<3x3x256xbf16> to vector<1x3x256xbf16>
    %3 = vector.shape_cast %2 : vector<1x3x256xbf16> to vector<3x256xbf16>
    %4 = vector.extract_strided_slice %1 {offsets = [1, 0, 0], sizes = [1, 3, 256], strides = [1, 1, 1]} : vector<3x3x256xbf16> to vector<1x3x256xbf16>
    %5 = vector.shape_cast %4 : vector<1x3x256xbf16> to vector<3x256xbf16>
    %6 = arith.maximumf %3, %5 : vector<3x256xbf16>
    %7 = vector.extract_strided_slice %1 {offsets = [2, 0, 0], sizes = [1, 3, 256], strides = [1, 1, 1]} : vector<3x3x256xbf16> to vector<1x3x256xbf16>
    %8 = vector.shape_cast %7 : vector<1x3x256xbf16> to vector<3x256xbf16>
    %9 = arith.maximumf %6, %8 : vector<3x256xbf16>
    %10 = vector.extract_strided_slice %9 {offsets = [0, 0], sizes = [1, 256], strides = [1, 1]} : vector<3x256xbf16> to vector<1x256xbf16>
    %11 = vector.extract_strided_slice %9 {offsets = [1, 0], sizes = [1, 256], strides = [1, 1]} : vector<3x256xbf16> to vector<1x256xbf16>
    %12 = arith.maximumf %10, %11 : vector<1x256xbf16>
    %13 = vector.extract_strided_slice %9 {offsets = [2, 0], sizes = [1, 256], strides = [1, 1]} : vector<3x256xbf16> to vector<1x256xbf16>
    %14 = arith.maximumf %12, %13 : vector<1x256xbf16>
    %c0_3 = arith.constant 0 : index
    %c0_4 = arith.constant 0 : index
    %c0_5 = arith.constant 0 : index
    %c0_6 = arith.constant 0 : index
    %15 = vector.load %arg2[%c0_3, %c0_4, %c0_5, %c0_6] : memref<1x1x1x256xbf16, #tpu.memory_space<vmem>>, vector<1x1x1x256xbf16>
    %16 = vector.shape_cast %15 : vector<1x1x1x256xbf16> to vector<1x256xbf16>
    %17 = vector.shape_cast %14 : vector<1x256xbf16> to vector<1x1x1x256xbf16>
    tpu.vector_store %arg2[%c0_3, %c0_4, %c0_5, %c0_6], %17 {strides = array<i32>} : memref<1x1x1x256xbf16, #tpu.memory_space<vmem>>, vector<1x1x1x256xbf16>,
    return
  }
  func.func @transform_0(%arg0: i32) -> (i32, i32, i32, i32) {
    %c0_i32 = arith.constant 0 : i32
    %c0_i32_0 = arith.constant 0 : i32
    %c0_i32_1 = arith.constant 0 : i32
    %c0_i32_2 = arith.constant 0 : i32
    return %arg0, %c0_i32, %c0_i32_0, %c0_i32_1 : i32, i32, i32, i32
  }
  func.func @transform_1(%arg0: i32) -> (i32, i32, i32, i32) {
    %c0_i32 = arith.constant 0 : i32
    %c0_i32_0 = arith.constant 0 : i32
    %c0_i32_1 = arith.constant 0 : i32
    %c0_i32_2 = arith.constant 0 : i32
    return %arg0, %c0_i32, %c0_i32_0, %c0_i32_1 : i32, i32, i32, i32
  }
}

</mosaic_0001>

<llo_original>
// kernel: alexnet_pre_forward.8
$region0: #{alexnet_pre_forward.8}
  #allocation0 [shape = 'u32[]', space=smem, size = 0x4, offset = 0x4, fixed_abs, tag = 'smem constant byte address 0x4 - core index']
  #allocation1 [shape = 'u32[72,128]{1,0:T(1,128)}', space=vmem, size = 0x9000, scoped, tag = 'internal scratch']
  #allocation2 [shape = 'f32[128,128]{1,0:T(8,128)}', space=vmem, size = 0x10000, scoped, tag = 'scratch operand']
  %s0 = inlined_call_operand.vmem [shape: bf16[512,384], index: 0, kind: input, shape index: {}]
  %s1 = inlined_call_operand.vmem [shape: bf16[384,128], index: 1, kind: input, shape index: {}]
  %s2 = inlined_call_operand.vmem [shape: f32[1,128], index: 2, kind: input, shape index: {}]
  %s3 = inlined_call_operand.vmem [shape: bf16[512,128], index: 3, kind: output, shape index: {}]
  %s4 = sld [smem:[#allocation0]]
  $region53: #{alexnet_pre_forward.8} parent=0
    _
  %s6 = ssub.s32 1, %s4
  %s7 = scalar_select 0, %s6, %s4
  loop: start=0, step=1, limit=6
  $region2: #{alexnet_pre_forward.8} parent=0 // loop_pre_header
    _
  $region3: #{alexnet_pre_forward.8} parent=0 // loop_header
    %s9 = sphi 0, %s13
    %p10 = scmp.ge.s32.totalorder %s9, 6
    %s16 = sphi 0, %s35
    %s17 = sphi 0, %s31
    %s18 = sphi 0, %s27
    %s19 = sphi 0, %s16
    %s20 = sphi 0, %s17
    %s21 = sphi 0, %s18
    %s22 = sphi 0, %s19
    %s23 = sphi 0, %s20
    %s24 = sphi 0, %s21
    %s40 = sphi 0, %s42
    %s43 = sphi 0, %s40
    %s44 = sphi 0, %s43
    %s60 = sphi 0, %s44
    %s68 = sphi 0, %s70
    %s71 = sphi 0, %s68
    %s72 = sphi 0, %s71
    %s88 = sphi 0, %s72
    %s94 = sphi 0, %s96
    %s97 = sphi 0, %s94
    %s98 = sphi 0, %s97
    %s114 = sphi 0, %s98
    %s122 = sphi 0, %s124
    %s125 = sphi 0, %s122
    %s126 = sphi 0, %s125
    %s142 = sphi 0, %s126
  $region4: #{alexnet_pre_forward.8} parent=0 // loop_header_branch
    %12 = sbr.rel (%p10) target = $region8
  $region5: #{alexnet_pre_forward.8} parent=0 // loop_body
    %s14 = ssub.s32 %s9, 1
    %s15 = ssub.s32 %s9, 2
    %s25 = sadd.s32 1, %s18
    %p26 = scmp.ge.s32.totalorder %s25, 1
    %s27 = scalar_select %p26, 0, %s25
    %s28 = sadd.s32 1, %s17
    %s29 = scalar_select %p26, %s28, %s17
    %p30 = scmp.ge.s32.totalorder %s29, 1
    %s31 = scalar_select %p30, 0, %s29
    %s32 = sadd.s32 1, %s16
    %s33 = scalar_select %p30, %s32, %s16
    %p34 = scmp.ge.s32.totalorder %s33, 4
    %s35 = scalar_select %p34, 0, %s33
    %s36 = ssub.s32 %s16, %s35
    %s37 = ssub.s32 %s18, %s27
    %s38 = sor.u32 %s36, %s37
    %p39 = scmp.eq.s32.totalorder %s38, 0
    %s41 = sadd.s32 %s40, 1
    %s42 = scalar_select %p39, %s40, %s41
    %p45 = pneg %p39
    %p46 = scmp.eq.s32.totalorder %s9, 3
    %p47 = por %p45, %p46
    %p48 = scmp.ne.s32.totalorder %s40, %s43
    %p49 = scmp.eq.s32.totalorder %s9, 0
    %p50 = por %p48, %p49
    %p51 = scmp.ne.s32.totalorder %s40, %s43
    %p52 = scmp.eq.s32.totalorder %s14, 3
    %p53 = por %p51, %p52
    %p54 = scmp.ne.s32.totalorder %s43, %s44
    %p55 = scmp.eq.s32.totalorder %s14, 0
    %p56 = por %p54, %p55
    %p57 = scmp.ne.s32.totalorder %s43, %s44
    %p58 = scmp.eq.s32.totalorder %s15, 3
    %p59 = por %p57, %p58
    %p61 = scmp.ne.s32.totalorder %s44, %s60
    %p62 = scmp.eq.s32.totalorder %s15, 0
    %p63 = por %p61, %p62
    %s64 = ssub.s32 %s18, %s27
    %s65 = ssub.s32 %s17, %s31
    %s66 = sor.u32 %s64, %s65
    %p67 = scmp.eq.s32.totalorder %s66, 0
    %s69 = sadd.s32 %s68, 1
    %s70 = scalar_select %p67, %s68, %s69
    %p73 = pneg %p67
    %p74 = scmp.eq.s32.totalorder %s9, 3
    %p75 = por %p73, %p74
    %p76 = scmp.ne.s32.totalorder %s68, %s71
    %p77 = scmp.eq.s32.totalorder %s9, 0
    %p78 = por %p76, %p77
    %p79 = scmp.ne.s32.totalorder %s68, %s71
    %p80 = scmp.eq.s32.totalorder %s14, 3
    %p81 = por %p79, %p80
    %p82 = scmp.ne.s32.totalorder %s71, %s72
    %p83 = scmp.eq.s32.totalorder %s14, 0
    %p84 = por %p82, %p83
    %p85 = scmp.ne.s32.totalorder %s71, %s72
    %p86 = scmp.eq.s32.totalorder %s15, 3
    %p87 = por %p85, %p86
    %p89 = scmp.ne.s32.totalorder %s72, %s88
    %p90 = scmp.eq.s32.totalorder %s15, 0
    %p91 = por %p89, %p90
    %s92 = ssub.s32 %s17, %s31
    %p93 = scmp.eq.s32.totalorder %s92, 0
    %s95 = sadd.s32 %s94, 1
    %s96 = scalar_select %p93, %s94, %s95
    %p99 = pneg %p93
    %p100 = scmp.eq.s32.totalorder %s9, 3
    %p101 = por %p99, %p100
    %p102 = scmp.ne.s32.totalorder %s94, %s97
    %p103 = scmp.eq.s32.totalorder %s9, 0
    %p104 = por %p102, %p103
    %p105 = scmp.ne.s32.totalorder %s94, %s97
    %p106 = scmp.eq.s32.totalorder %s14, 3
    %p107 = por %p105, %p106
    %p108 = scmp.ne.s32.totalorder %s97, %s98
    %p109 = scmp.eq.s32.totalorder %s14, 0
    %p110 = por %p108, %p109
    %p111 = scmp.ne.s32.totalorder %s97, %s98
    %p112 = scmp.eq.s32.totalorder %s15, 3
    %p113 = por %p111, %p112
    %p115 = scmp.ne.s32.totalorder %s98, %s114
    %p116 = scmp.eq.s32.totalorder %s15, 0
    %p117 = por %p115, %p116
    %s118 = ssub.s32 %s16, %s35
    %s119 = ssub.s32 %s17, %s31
    %s120 = sor.u32 %s118, %s119
    %p121 = scmp.eq.s32.totalorder %s120, 0
    %s123 = sadd.s32 %s122, 1
    %s124 = scalar_select %p121, %s122, %s123
    %p127 = pneg %p121
    %p128 = scmp.eq.s32.totalorder %s9, 3
    %p129 = por %p127, %p128
    %p130 = scmp.ne.s32.totalorder %s122, %s125
    %p131 = scmp.eq.s32.totalorder %s9, 0
    %p132 = por %p130, %p131
    %p133 = scmp.ne.s32.totalorder %s122, %s125
    %p134 = scmp.eq.s32.totalorder %s14, 3
    %p135 = por %p133, %p134
    %p136 = scmp.ne.s32.totalorder %s125, %s126
    %p137 = scmp.eq.s32.totalorder %s14, 0
    %p138 = por %p136, %p137
    %p139 = scmp.ne.s32.totalorder %s125, %s126
    %p140 = scmp.eq.s32.totalorder %s15, 3
    %p141 = por %p139, %p140
    %p143 = scmp.ne.s32.totalorder %s126, %s142
    %p144 = scmp.eq.s32.totalorder %s15, 0
    %p145 = por %p143, %p144
    %p146 = scmp.le.s32.totalorder 1, %s9
    %p147 = scmp.lt.s32.totalorder %s9, 5
    %p148 = pnand %p146, %p147
    %p149 = pneg %p148
    // Predicated region
    $region9: #{alexnet_pre_forward.8} parent=5 // pred_check
      _
    $region10: #{alexnet_pre_forward.8} parent=5 // pred_check_branch
      %151 = sbr.rel (%p148) target = $region12
    $region11: #{alexnet_pre_forward.8} parent=5 // pred_region
      %s152 = ssub.s32 %s9, 1
      // Predicated region
      $region13: #{alexnet_pre_forward.8} parent=11 // pred_check
        %p153 = pneg %p84
      $region14: #{alexnet_pre_forward.8} parent=11 // pred_check_branch
        %155 = sbr.rel (%p153) target = $region16
      $region15: #{alexnet_pre_forward.8} parent=11 // pred_region
        %s156 = smul.u32 48, %s21
        %p157 = scmp.lt.s32.totalorder %s156, 47
        %s158 = scalar_select %p157, %s156, 47
        %p159 = scmp.lt.s32.totalorder %s20, 0
        %s160 = scalar_select %p159, %s20, 0
        %s161 = sadd.s32 %s160, %s158
        %s162 = smul.addr %s161, 4
        %s163 = scalar_lea.vmem %s1, %s162
        %s164 = smul.u32 48, %s21
      $region16: #{alexnet_pre_forward.8} parent=11 // pred_fallthru
        _
      // Predicated region
      $region17: #{alexnet_pre_forward.8} parent=11 // pred_check
        %p165 = pneg %p110
      $region18: #{alexnet_pre_forward.8} parent=11 // pred_check_branch
        %167 = sbr.rel (%p165) target = $region20
      $region19: #{alexnet_pre_forward.8} parent=11 // pred_region
        %p168 = scmp.lt.s32.totalorder %s20, 0
        %s169 = scalar_select %p168, %s20, 0
        %s170 = scalar_lea.vmem %s2, %s169
      $region20: #{alexnet_pre_forward.8} parent=11 // pred_fallthru
        _
    $region12: #{alexnet_pre_forward.8} parent=5 // pred_fallthru
      _
    %p171 = scmp.lt.s32.totalorder %s9, 4
    // Predicated region
    $region21: #{alexnet_pre_forward.8} parent=5 // pred_check
      %p172 = pneg %p171
    $region22: #{alexnet_pre_forward.8} parent=5 // pred_check_branch
      %174 = sbr.rel (%p172) target = $region24
    $region23: #{alexnet_pre_forward.8} parent=5 // pred_region
      // Predicated region
      $region25: #{alexnet_pre_forward.8} parent=23 // pred_check
        %p175 = pneg %p50
      $region26: #{alexnet_pre_forward.8} parent=23 // pred_check_branch
        %177 = sbr.rel (%p175) target = $region28
      $region27: #{alexnet_pre_forward.8} parent=23 // pred_region
        %s178 = smul.u32 16, %s16
        %s179 = smul.u32 3, %s18
        %p180 = scmp.lt.s32.totalorder %s178, 63
        %s181 = scalar_select %p180, %s178, 63
        %p182 = scmp.lt.s32.totalorder %s179, 2
        %s183 = scalar_select %p182, %s179, 2
        %s184 = smul.addr %s181, 3
        %s185 = sadd.s32 %s183, %s184
        %s186 = smul.addr %s185, 4
        %s187 = scalar_lea.vmem %s0, %s186
        %s188 = smul.u32 16, %s16
        %s189 = smul.u32 3, %s18
      $region28: #{alexnet_pre_forward.8} parent=23 // pred_fallthru
        _
    $region24: #{alexnet_pre_forward.8} parent=5 // pred_fallthru
      _
    %p190 = scmp.le.s32.totalorder 1, %s9
    %p191 = scmp.lt.s32.totalorder %s9, 5
    %p192 = pnand %p190, %p191
    %p193 = pneg %p192
    // Predicated region
    $region29: #{alexnet_pre_forward.8} parent=5 // pred_check
      _
    $region30: #{alexnet_pre_forward.8} parent=5 // pred_check_branch
      %195 = sbr.rel (%p192) target = $region32
    $region31: #{alexnet_pre_forward.8} parent=5 // pred_region
      %s196 = ssub.s32 %s9, 1
      %s197 = smul.u32 16, %s19
      %s198 = smul.u32 3, %s21
      %p199 = scmp.lt.s32.totalorder %s197, 63
      %s200 = scalar_select %p199, %s197, 63
      %p201 = scmp.lt.s32.totalorder %s198, 2
      %s202 = scalar_select %p201, %s198, 2
      %s203 = smul.addr %s200, 3
      %s204 = sadd.s32 %s202, %s203
      %s205 = smul.addr %s204, 4
      %s206 = scalar_lea.vmem %s0, %s205
      %p207 = pneg %p56
      %p208 = pneg %p53
      %s209 = smul.u32 48, %s21
      %p210 = scmp.lt.s32.totalorder %s209, 47
      %s211 = scalar_select %p210, %s209, 47
      %p212 = scmp.lt.s32.totalorder %s20, 0
      %s213 = scalar_select %p212, %s20, 0
      %s214 = sadd.s32 %s213, %s211
      %s215 = smul.addr %s214, 4
      %s216 = scalar_lea.vmem %s1, %s215
      %p217 = pneg %p84
      %p218 = pneg %p81
      %p219 = scmp.lt.s32.totalorder %s20, 0
      %s220 = scalar_select %p219, %s20, 0
      %s221 = scalar_lea.vmem %s2, %s220
      %p222 = pneg %p110
      %p223 = pneg %p107
      %p224 = pneg %p138
      %p225 = pneg %p135
      %s226 = smul.u32 16, %s19
      %p227 = scmp.lt.s32.totalorder %s226, 63
      %s228 = scalar_select %p227, %s226, 63
      %p229 = scmp.lt.s32.totalorder %s20, 0
      %s230 = scalar_select %p229, %s20, 0
      %s231 = sadd.s32 %s230, %s228
      %s232 = smul.addr %s231, 4
      %s233 = scalar_lea.vmem %s3, %s232
      %s234 = smul.u32 16, %s19
      %s235 = smul.u32 3, %s21
      %p236 = scmp.lt.s32.totalorder %s234, 63
      %s237 = scalar_select %p236, %s234, 63
      %p238 = scmp.lt.s32.totalorder %s235, 2
      %s239 = scalar_select %p238, %s235, 2
      %s240 = smul.addr %s237, 3
      %s241 = sadd.s32 %s239, %s240
      %s242 = smul.addr %s241, 4
      %s243 = scalar_lea.vmem %s0, %s242
      %s244 = smul.u32 16, %s19
      %s245 = smul.u32 3, %s21
      %s246 = smul.u32 48, %s21
      %p247 = scmp.lt.s32.totalorder %s246, 47
      %s248 = scalar_select %p247, %s246, 47
      %p249 = scmp.lt.s32.totalorder %s20, 0
      %s250 = scalar_select %p249, %s20, 0
      %s251 = sadd.s32 %s250, %s248
      %s252 = smul.addr %s251, 4
      %s253 = scalar_lea.vmem %s1, %s252
      %s254 = smul.u32 48, %s21
      %p255 = scmp.lt.s32.totalorder %s20, 0
      %s256 = scalar_select %p255, %s20, 0
      %s257 = scalar_lea.vmem %s2, %s256
      %s258 = smul.u32 16, %s19
      %p259 = scmp.lt.s32.totalorder %s258, 63
      %s260 = scalar_select %p259, %s258, 63
      %p261 = scmp.lt.s32.totalorder %s20, 0
      %s262 = scalar_select %p261, %s20, 0
      %s263 = sadd.s32 %s262, %s260
      %s264 = smul.addr %s263, 4
      %s265 = scalar_lea.vmem %s3, %s264
      %s266 = smul.u32 16, %s19
      %p267 = scmp.eq.s32.totalorder %s21, 0
      // Predicated region
      $region33: #{alexnet_pre_forward.8} parent=31 // pred_check
        %p268 = pneg %p267
      $region34: #{alexnet_pre_forward.8} parent=31 // pred_check_branch
        %270 = sbr.rel (%p268) target = $region36
      $region35: #{alexnet_pre_forward.8} parent=31 // pred_region
        %271 = vst [vmem:[#allocation2] sm:$0xff] 0.0
        %272 = vst [vmem:[#allocation2 + $0x8] sm:$0xff] 0.0
        %273 = vst [vmem:[#allocation2 + $0x10] sm:$0xff] 0.0
        %274 = vst [vmem:[#allocation2 + $0x18] sm:$0xff] 0.0
        %275 = vst [vmem:[#allocation2 + $0x20] sm:$0xff] 0.0
        %276 = vst [vmem:[#allocation2 + $0x28] sm:$0xff] 0.0
        %277 = vst [vmem:[#allocation2 + $0x30] sm:$0xff] 0.0
        %278 = vst [vmem:[#allocation2 + $0x38] sm:$0xff] 0.0
        %279 = vst [vmem:[#allocation2 + $0x40] sm:$0xff] 0.0
        %280 = vst [vmem:[#allocation2 + $0x48] sm:$0xff] 0.0
        %281 = vst [vmem:[#allocation2 + $0x50] sm:$0xff] 0.0
        %282 = vst [vmem:[#allocation2 + $0x58] sm:$0xff] 0.0
        %283 = vst [vmem:[#allocation2 + $0x60] sm:$0xff] 0.0
        %284 = vst [vmem:[#allocation2 + $0x68] sm:$0xff] 0.0
        %285 = vst [vmem:[#allocation2 + $0x70] sm:$0xff] 0.0
        %286 = vst [vmem:[#allocation2 + $0x78] sm:$0xff] 0.0
      $region36: #{alexnet_pre_forward.8} parent=31 // pred_fallthru
        _
      %v287 = vld [vmem:[#allocation2] sm:$0xff]
      %v288 = vld [vmem:[#allocation2 + $0x8] sm:$0xff]
      %v289 = vld [vmem:[#allocation2 + $0x10] sm:$0xff]
      %v290 = vld [vmem:[#allocation2 + $0x18] sm:$0xff]
      %v291 = vld [vmem:[#allocation2 + $0x20] sm:$0xff]
      %v292 = vld [vmem:[#allocation2 + $0x28] sm:$0xff]
      %v293 = vld [vmem:[#allocation2 + $0x30] sm:$0xff]
      %v294 = vld [vmem:[#allocation2 + $0x38] sm:$0xff]
      %v295 = vld [vmem:[#allocation2 + $0x40] sm:$0xff]
      %v296 = vld [vmem:[#allocation2 + $0x48] sm:$0xff]
      %v297 = vld [vmem:[#allocation2 + $0x50] sm:$0xff]
      %v298 = vld [vmem:[#allocation2 + $0x58] sm:$0xff]
      %v299 = vld [vmem:[#allocation2 + $0x60] sm:$0xff]
      %v300 = vld [vmem:[#allocation2 + $0x68] sm:$0xff]
      %v301 = vld [vmem:[#allocation2 + $0x70] sm:$0xff]
      %v302 = vld [vmem:[#allocation2 + $0x78] sm:$0xff]
      %v303 = vld [vmem:[%s243] sm:$0xff]
      %v304 = vld [vmem:[%s243 + $0x8] sm:$0xf]
      %v305 = vld [vmem:[%s243 + $0xc] sm:$0xff]
      %v306 = vld [vmem:[%s243 + $0x14] sm:$0xf]
      %v307 = vld [vmem:[%s243 + $0x18] sm:$0xff]
      %v308 = vld [vmem:[%s243 + $0x20] sm:$0xf]
      %v309 = vld [vmem:[%s243 + $0x24] sm:$0xff]
      %v310 = vld [vmem:[%s243 + $0x2c] sm:$0xf]
      %v311 = vld [vmem:[%s243 + $0x30] sm:$0xff]
      %v312 = vld [vmem:[%s243 + $0x38] sm:$0xf]
      %v313 = vld [vmem:[%s243 + $0x3c] sm:$0xff]
      %v314 = vld [vmem:[%s243 + $0x44] sm:$0xf]
      %v315 = vld [vmem:[%s243 + $0x48] sm:$0xff]
      %v316 = vld [vmem:[%s243 + $0x50] sm:$0xf]
      %v317 = vld [vmem:[%s243 + $0x54] sm:$0xff]
      %v318 = vld [vmem:[%s243 + $0x5c] sm:$0xf]
      %v319 = vld [vmem:[%s243 + $0x60] sm:$0xff]
      %v320 = vld [vmem:[%s243 + $0x68] sm:$0xf]
      %v321 = vld [vmem:[%s243 + $0x6c] sm:$0xff]
      %v322 = vld [vmem:[%s243 + $0x74] sm:$0xf]
      %v323 = vld [vmem:[%s243 + $0x78] sm:$0xff]
      %v324 = vld [vmem:[%s243 + $0x80] sm:$0xf]
      %v325 = vld [vmem:[%s243 + $0x84] sm:$0xff]
      %v326 = vld [vmem:[%s243 + $0x8c] sm:$0xf]
      %v327 = vld [vmem:[%s243 + $0x90] sm:$0xff]
      %v328 = vld [vmem:[%s243 + $0x98] sm:$0xf]
      %v329 = vld [vmem:[%s243 + $0x9c] sm:$0xff]
      %v330 = vld [vmem:[%s243 + $0xa4] sm:$0xf]
      %v331 = vld [vmem:[%s243 + $0xa8] sm:$0xff]
      %v332 = vld [vmem:[%s243 + $0xb0] sm:$0xf]
      %v333 = vld [vmem:[%s243 + $0xb4] sm:$0xff]
      %v334 = vld [vmem:[%s243 + $0xbc] sm:$0xf]
      %v335 = vld [vmem:[%s253] sm:$0xf]
      %v336 = vld [vmem:[%s253 + $0x4] sm:$0xf]
      %v337 = vld [vmem:[%s253 + $0x8] sm:$0xf]
      %v338 = vld [vmem:[%s253 + $0xc] sm:$0xf]
      %v339 = vld [vmem:[%s253 + $0x10] sm:$0xf]
      %v340 = vld [vmem:[%s253 + $0x14] sm:$0xf]
      %v341 = vld [vmem:[%s253 + $0x18] sm:$0xf]
      %v342 = vld [vmem:[%s253 + $0x1c] sm:$0xf]
      %v343 = vld [vmem:[%s253 + $0x20] sm:$0xf]
      %v344 = vld [vmem:[%s253 + $0x24] sm:$0xf]
      %v345 = vld [vmem:[%s253 + $0x28] sm:$0xf]
      %v346 = vld [vmem:[%s253 + $0x2c] sm:$0xf]
      %v347 = vld [vmem:[%s253 + $0x30] sm:$0xf]
      %v348 = vld [vmem:[%s253 + $0x34] sm:$0xf]
      %v349 = vld [vmem:[%s253 + $0x38] sm:$0xf]
      %v350 = vld [vmem:[%s253 + $0x3c] sm:$0xf]
      %v351 = vld [vmem:[%s253 + $0x40] sm:$0xf]
      %v352 = vld [vmem:[%s253 + $0x44] sm:$0xf]
      %v353 = vld [vmem:[%s253 + $0x48] sm:$0xf]
      %v354 = vld [vmem:[%s253 + $0x4c] sm:$0xf]
      %v355 = vld [vmem:[%s253 + $0x50] sm:$0xf]
      %v356 = vld [vmem:[%s253 + $0x54] sm:$0xf]
      %v357 = vld [vmem:[%s253 + $0x58] sm:$0xf]
      %v358 = vld [vmem:[%s253 + $0x5c] sm:$0xf]
      %v359 = vld [vmem:[%s253 + $0x60] sm:$0xf]
      %v360 = vld [vmem:[%s253 + $0x64] sm:$0xf]
      %v361 = vld [vmem:[%s253 + $0x68] sm:$0xf]
      %v362 = vld [vmem:[%s253 + $0x6c] sm:$0xf]
      %v363 = vld [vmem:[%s253 + $0x70] sm:$0xf]
      %v364 = vld [vmem:[%s253 + $0x74] sm:$0xf]
      %v365 = vld [vmem:[%s253 + $0x78] sm:$0xf]
      %v366 = vld [vmem:[%s253 + $0x7c] sm:$0xf]
      %v367 = vld [vmem:[%s253 + $0x80] sm:$0xf]
      %v368 = vld [vmem:[%s253 + $0x84] sm:$0xf]
      %v369 = vld [vmem:[%s253 + $0x88] sm:$0xf]
      %v370 = vld [vmem:[%s253 + $0x8c] sm:$0xf]
      %v371 = vld [vmem:[%s253 + $0x90] sm:$0xf]
      %v372 = vld [vmem:[%s253 + $0x94] sm:$0xf]
      %v373 = vld [vmem:[%s253 + $0x98] sm:$0xf]
      %v374 = vld [vmem:[%s253 + $0x9c] sm:$0xf]
      %v375 = vld [vmem:[%s253 + $0xa0] sm:$0xf]
      %v376 = vld [vmem:[%s253 + $0xa4] sm:$0xf]
      %v377 = vld [vmem:[%s253 + $0xa8] sm:$0xf]
      %v378 = vld [vmem:[%s253 + $0xac] sm:$0xf]
      %v379 = vld [vmem:[%s253 + $0xb0] sm:$0xf]
      %v380 = vld [vmem:[%s253 + $0xb4] sm:$0xf]
      %v381 = vld [vmem:[%s253 + $0xb8] sm:$0xf]
      %v382 = vld [vmem:[%s253 + $0xbc] sm:$0xf]
      %v415 = vunpack.c.l.b16 %v303
      %v416 = vunpack.c.h.b16 %v303
      %v417 = vunpack.c.l.b16 %v304
      %v418 = vunpack.c.l.b16 %v305
      %v419 = vunpack.c.h.b16 %v305
      %v420 = vunpack.c.l.b16 %v306
      %v421 = vunpack.c.l.b16 %v307
      %v422 = vunpack.c.h.b16 %v307
      %v423 = vunpack.c.l.b16 %v308
      %v424 = vunpack.c.l.b16 %v309
      %v425 = vunpack.c.h.b16 %v309
      %v426 = vunpack.c.l.b16 %v310
      %v427 = vunpack.c.l.b16 %v311
      %v428 = vunpack.c.h.b16 %v311
      %v429 = vunpack.c.l.b16 %v312
      %v430 = vunpack.c.l.b16 %v313
      %v431 = vunpack.c.h.b16 %v313
      %v432 = vunpack.c.l.b16 %v314
      %v433 = vunpack.c.l.b16 %v315
      %v434 = vunpack.c.h.b16 %v315
      %v435 = vunpack.c.l.b16 %v316
      %v436 = vunpack.c.l.b16 %v317
      %v437 = vunpack.c.h.b16 %v317
      %v438 = vunpack.c.l.b16 %v318
      %v439 = vunpack.c.l.b16 %v319
      %v440 = vunpack.c.h.b16 %v319
      %v441 = vunpack.c.l.b16 %v320
      %v442 = vunpack.c.l.b16 %v321
      %v443 = vunpack.c.h.b16 %v321
      %v444 = vunpack.c.l.b16 %v322
      %v445 = vunpack.c.l.b16 %v323
      %v446 = vunpack.c.h.b16 %v323
      %v447 = vunpack.c.l.b16 %v324
      %v448 = vunpack.c.l.b16 %v325
      %v449 = vunpack.c.h.b16 %v325
      %v450 = vunpack.c.l.b16 %v326
      %v451 = vunpack.c.l.b16 %v327
      %v452 = vunpack.c.h.b16 %v327
      %v453 = vunpack.c.l.b16 %v328
      %v454 = vunpack.c.l.b16 %v329
      %v455 = vunpack.c.h.b16 %v329
      %v456 = vunpack.c.l.b16 %v330
      %v457 = vunpack.c.l.b16 %v331
      %v458 = vunpack.c.h.b16 %v331
      %v459 = vunpack.c.l.b16 %v332
      %v460 = vunpack.c.l.b16 %v333
      %v461 = vunpack.c.h.b16 %v333
      %v462 = vunpack.c.l.b16 %v334
      %v463 = vpack.c.b16 %v418, %v415
      %v464 = vpack.c.b16 %v419, %v416
      %v465 = vpack.c.b16 %v420, %v417
      %v466 = vpack.c.b16 %v424, %v421
      %v467 = vpack.c.b16 %v425, %v422
      %v468 = vpack.c.b16 %v426, %v423
      %v469 = vpack.c.b16 %v430, %v427
      %v470 = vpack.c.b16 %v431, %v428
      %v471 = vpack.c.b16 %v432, %v429
      %v472 = vpack.c.b16 %v436, %v433
      %v473 = vpack.c.b16 %v437, %v434
      %v474 = vpack.c.b16 %v438, %v435
      %v475 = vpack.c.b16 %v442, %v439
      %v476 = vpack.c.b16 %v443, %v440
      %v477 = vpack.c.b16 %v444, %v441
      %v478 = vpack.c.b16 %v448, %v445
      %v479 = vpack.c.b16 %v449, %v446
      %v480 = vpack.c.b16 %v450, %v447
      %v481 = vpack.c.b16 %v454, %v451
      %v482 = vpack.c.b16 %v455, %v452
      %v483 = vpack.c.b16 %v456, %v453
      %v484 = vpack.c.b16 %v460, %v457
      %v485 = vpack.c.b16 %v461, %v458
      %v486 = vpack.c.b16 %v462, %v459
      %v559 = vunpack.c.l.b16 %v335
      %v560 = vunpack.c.l.b16 %v336
      %v561 = vunpack.c.l.b16 %v337
      %v562 = vunpack.c.l.b16 %v338
      %v563 = vunpack.c.l.b16 %v339
      %v564 = vunpack.c.l.b16 %v340
      %v565 = vunpack.c.l.b16 %v341
      %v566 = vunpack.c.l.b16 %v342
      %v567 = vunpack.c.l.b16 %v343
      %v568 = vunpack.c.l.b16 %v344
      %v569 = vunpack.c.l.b16 %v345
      %v570 = vunpack.c.l.b16 %v346
      %v571 = vunpack.c.l.b16 %v347
      %v572 = vunpack.c.l.b16 %v348
      %v573 = vunpack.c.l.b16 %v349
      %v574 = vunpack.c.l.b16 %v350
      %v575 = vunpack.c.l.b16 %v351
      %v576 = vunpack.c.l.b16 %v352
      %v577 = vunpack.c.l.b16 %v353
      %v578 = vunpack.c.l.b16 %v354
      %v579 = vunpack.c.l.b16 %v355
      %v580 = vunpack.c.l.b16 %v356
      %v581 = vunpack.c.l.b16 %v357
      %v582 = vunpack.c.l.b16 %v358
      %v583 = vunpack.c.l.b16 %v359
      %v584 = vunpack.c.l.b16 %v360
      %v585 = vunpack.c.l.b16 %v361
      %v586 = vunpack.c.l.b16 %v362
      %v587 = vunpack.c.l.b16 %v363
      %v588 = vunpack.c.l.b16 %v364
      %v589 = vunpack.c.l.b16 %v365
      %v590 = vunpack.c.l.b16 %v366
      %v591 = vunpack.c.l.b16 %v367
      %v592 = vunpack.c.l.b16 %v368
      %v593 = vunpack.c.l.b16 %v369
      %v594 = vunpack.c.l.b16 %v370
      %v595 = vunpack.c.l.b16 %v371
      %v596 = vunpack.c.l.b16 %v372
      %v597 = vunpack.c.l.b16 %v373
      %v598 = vunpack.c.l.b16 %v374
      %v599 = vunpack.c.l.b16 %v375
      %v600 = vunpack.c.l.b16 %v376
      %v601 = vunpack.c.l.b16 %v377
      %v602 = vunpack.c.l.b16 %v378
      %v603 = vunpack.c.l.b16 %v379
      %v604 = vunpack.c.l.b16 %v380
      %v605 = vunpack.c.l.b16 %v381
      %v606 = vunpack.c.l.b16 %v382
      %v607 = vpack.c.b16 %v560, %v559
      %v608 = vpack.c.b16 %v562, %v561
      %v609 = vpack.c.b16 %v564, %v563
      %v610 = vpack.c.b16 %v566, %v565
      %v611 = vpack.c.b16 %v568, %v567
      %v612 = vpack.c.b16 %v570, %v569
      %v613 = vpack.c.b16 %v572, %v571
      %v614 = vpack.c.b16 %v574, %v573
      %v615 = vpack.c.b16 %v576, %v575
      %v616 = vpack.c.b16 %v578, %v577
      %v617 = vpack.c.b16 %v580, %v579
      %v618 = vpack.c.b16 %v582, %v581
      %v619 = vpack.c.b16 %v584, %v583
      %v620 = vpack.c.b16 %v586, %v585
      %v621 = vpack.c.b16 %v588, %v587
      %v622 = vpack.c.b16 %v590, %v589
      %v623 = vpack.c.b16 %v592, %v591
      %v624 = vpack.c.b16 %v594, %v593
      %v625 = vpack.c.b16 %v596, %v595
      %v626 = vpack.c.b16 %v598, %v597
      %v627 = vpack.c.b16 %v600, %v599
      %v628 = vpack.c.b16 %v602, %v601
      %v629 = vpack.c.b16 %v604, %v603
      %v630 = vpack.c.b16 %v606, %v605
      %655 = vmatpush.bf16.msra.mxu0 %v614
      %656 = vmatpush.bf16.msra.mxu0 %v613
      %657 = vmatpush.bf16.msra.mxu0 %v612
      %658 = vmatpush.bf16.msra.mxu0 %v611
      %659 = vmatpush.bf16.msra.mxu0 %v610
      %660 = vmatpush.bf16.msra.mxu0 %v609
      %661 = vmatpush.bf16.msra.mxu0 %v608
      %662 = vmatpush.bf16.msra.mxu0 %v607
      %663 = vmatmul.bf16.gmra.mxu0 %v463
      %v664 = vpop.f32.mrf.mxu0
      %v665 = vadd.f32 0.0, %v664
      %v666 = vpop.f32.mrf.mxu0
      %v667 = vadd.f32 0.0, %v666
      %668 = vmatmul.bf16.gmra.mxu0 %v466
      %v669 = vpop.f32.mrf.mxu0
      %v670 = vadd.f32 0.0, %v669
      %v671 = vpop.f32.mrf.mxu0
      %v672 = vadd.f32 0.0, %v671
      %673 = vmatmul.bf16.gmra.mxu0 %v469
      %v674 = vpop.f32.mrf.mxu0
      %v675 = vadd.f32 0.0, %v674
      %v676 = vpop.f32.mrf.mxu0
      %v677 = vadd.f32 0.0, %v676
      %678 = vmatmul.bf16.gmra.mxu0 %v472
      %v679 = vpop.f32.mrf.mxu0
      %v680 = vadd.f32 0.0, %v679
      %v681 = vpop.f32.mrf.mxu0
      %v682 = vadd.f32 0.0, %v681
      %683 = vmatmul.bf16.gmra.mxu0 %v475
      %v684 = vpop.f32.mrf.mxu0
      %v685 = vadd.f32 0.0, %v684
      %v686 = vpop.f32.mrf.mxu0
      %v687 = vadd.f32 0.0, %v686
      %688 = vmatmul.bf16.gmra.mxu0 %v478
      %v689 = vpop.f32.mrf.mxu0
      %v690 = vadd.f32 0.0, %v689
      %v691 = vpop.f32.mrf.mxu0
      %v692 = vadd.f32 0.0, %v691
      %693 = vmatmul.bf16.gmra.mxu0 %v481
      %v694 = vpop.f32.mrf.mxu0
      %v695 = vadd.f32 0.0, %v694
      %v696 = vpop.f32.mrf.mxu0
      %v697 = vadd.f32 0.0, %v696
      %698 = vmatmul.bf16.gmra.mxu0 %v484
      %v699 = vpop.f32.mrf.mxu0
      %v700 = vadd.f32 0.0, %v699
      %v701 = vpop.f32.mrf.mxu0
      %v702 = vadd.f32 0.0, %v701
      %703 = vdwg.mxu0
      %704 = vmatpush.bf16.msra.mxu0 %v622
      %705 = vmatpush.bf16.msra.mxu0 %v621
      %706 = vmatpush.bf16.msra.mxu0 %v620
      %707 = vmatpush.bf16.msra.mxu0 %v619
      %708 = vmatpush.bf16.msra.mxu0 %v618
      %709 = vmatpush.bf16.msra.mxu0 %v617
      %710 = vmatpush.bf16.msra.mxu0 %v616
      %711 = vmatpush.bf16.msra.mxu0 %v615
      %712 = vmatmul.bf16.gmra.mxu0 %v464
      %v713 = vpop.f32.mrf.mxu0
      %v714 = vadd.f32 %v665, %v713
      %v715 = vpop.f32.mrf.mxu0
      %v716 = vadd.f32 %v667, %v715
      %717 = vmatmul.bf16.gmra.mxu0 %v467
      %v718 = vpop.f32.mrf.mxu0
      %v719 = vadd.f32 %v670, %v718
      %v720 = vpop.f32.mrf.mxu0
      %v721 = vadd.f32 %v672, %v720
      %722 = vmatmul.bf16.gmra.mxu0 %v470
      %v723 = vpop.f32.mrf.mxu0
      %v724 = vadd.f32 %v675, %v723
      %v725 = vpop.f32.mrf.mxu0
      %v726 = vadd.f32 %v677, %v725
      %727 = vmatmul.bf16.gmra.mxu0 %v473
      %v728 = vpop.f32.mrf.mxu0
      %v729 = vadd.f32 %v680, %v728
      %v730 = vpop.f32.mrf.mxu0
      %v731 = vadd.f32 %v682, %v730
      %732 = vmatmul.bf16.gmra.mxu0 %v476
      %v733 = vpop.f32.mrf.mxu0
      %v734 = vadd.f32 %v685, %v733
      %v735 = vpop.f32.mrf.mxu0
      %v736 = vadd.f32 %v687, %v735
      %737 = vmatmul.bf16.gmra.mxu0 %v479
      %v738 = vpop.f32.mrf.mxu0
      %v739 = vadd.f32 %v690, %v738
      %v740 = vpop.f32.mrf.mxu0
      %v741 = vadd.f32 %v692, %v740
      %742 = vmatmul.bf16.gmra.mxu0 %v482
      %v743 = vpop.f32.mrf.mxu0
      %v744 = vadd.f32 %v695, %v743
      %v745 = vpop.f32.mrf.mxu0
      %v746 = vadd.f32 %v697, %v745
      %747 = vmatmul.bf16.gmra.mxu0 %v485
      %v748 = vpop.f32.mrf.mxu0
      %v749 = vadd.f32 %v700, %v748
      %v750 = vpop.f32.mrf.mxu0
      %v751 = vadd.f32 %v702, %v750
      %752 = vdwg.mxu0
      %753 = vmatpush.bf16.msra.mxu0 %v630
      %754 = vmatpush.bf16.msra.mxu0 %v629
      %755 = vmatpush.bf16.msra.mxu0 %v628
      %756 = vmatpush.bf16.msra.mxu0 %v627
      %757 = vmatpush.bf16.msra.mxu0 %v626
      %758 = vmatpush.bf16.msra.mxu0 %v625
      %759 = vmatpush.bf16.msra.mxu0 %v624
      %760 = vmatpush.bf16.msra.mxu0 %v623
      %761 = vmatmul.bf16.gmra.mxu0 %v465
      %v762 = vpop.f32.mrf.mxu0
      %v763 = vadd.f32 %v714, %v762
      %v764 = vpop.f32.mrf.mxu0
      %v765 = vadd.f32 %v716, %v764
      %766 = vmatmul.bf16.gmra.mxu0 %v468
      %v767 = vpop.f32.mrf.mxu0
      %v768 = vadd.f32 %v719, %v767
      %v769 = vpop.f32.mrf.mxu0
      %v770 = vadd.f32 %v721, %v769
      %771 = vmatmul.bf16.gmra.mxu0 %v471
      %v772 = vpop.f32.mrf.mxu0
      %v773 = vadd.f32 %v724, %v772
      %v774 = vpop.f32.mrf.mxu0
      %v775 = vadd.f32 %v726, %v774
      %776 = vmatmul.bf16.gmra.mxu0 %v474
      %v777 = vpop.f32.mrf.mxu0
      %v778 = vadd.f32 %v729, %v777
      %v779 = vpop.f32.mrf.mxu0
      %v780 = vadd.f32 %v731, %v779
      %781 = vmatmul.bf16.gmra.mxu0 %v477
      %v782 = vpop.f32.mrf.mxu0
      %v783 = vadd.f32 %v734, %v782
      %v784 = vpop.f32.mrf.mxu0
      %v785 = vadd.f32 %v736, %v784
      %786 = vmatmul.bf16.gmra.mxu0 %v480
      %v787 = vpop.f32.mrf.mxu0
      %v788 = vadd.f32 %v739, %v787
      %v789 = vpop.f32.mrf.mxu0
      %v790 = vadd.f32 %v741, %v789
      %791 = vmatmul.bf16.gmra.mxu0 %v483
      %v792 = vpop.f32.mrf.mxu0
      %v793 = vadd.f32 %v744, %v792
      %v794 = vpop.f32.mrf.mxu0
      %v795 = vadd.f32 %v746, %v794
      %796 = vmatmul.bf16.gmra.mxu0 %v486
      %v797 = vpop.f32.mrf.mxu0
      %v798 = vadd.f32 %v749, %v797
      %v799 = vpop.f32.mrf.mxu0
      %v800 = vadd.f32 %v751, %v799
      %801 = vdwg.mxu0
      %v802 = vadd.f32 %v287, %v763
      %v803 = vadd.f32 %v288, %v765
      %v804 = vadd.f32 %v289, %v768
      %v805 = vadd.f32 %v290, %v770
      %v806 = vadd.f32 %v291, %v773
      %v807 = vadd.f32 %v292, %v775
      %v808 = vadd.f32 %v293, %v778
      %v809 = vadd.f32 %v294, %v780
      %v810 = vadd.f32 %v295, %v783
      %v811 = vadd.f32 %v296, %v785
      %v812 = vadd.f32 %v297, %v788
      %v813 = vadd.f32 %v298, %v790
      %v814 = vadd.f32 %v299, %v793
      %v815 = vadd.f32 %v300, %v795
      %v816 = vadd.f32 %v301, %v798
      %v817 = vadd.f32 %v302, %v800
      %818 = vst [vmem:[#allocation2] sm:$0xff] %v802
      %819 = vst [vmem:[#allocation2 + $0x8] sm:$0xff] %v803
      %820 = vst [vmem:[#allocation2 + $0x10] sm:$0xff] %v804
      %821 = vst [vmem:[#allocation2 + $0x18] sm:$0xff] %v805
      %822 = vst [vmem:[#allocation2 + $0x20] sm:$0xff] %v806
      %823 = vst [vmem:[#allocation2 + $0x28] sm:$0xff] %v807
      %824 = vst [vmem:[#allocation2 + $0x30] sm:$0xff] %v808
      %825 = vst [vmem:[#allocation2 + $0x38] sm:$0xff] %v809
      %826 = vst [vmem:[#allocation2 + $0x40] sm:$0xff] %v810
      %827 = vst [vmem:[#allocation2 + $0x48] sm:$0xff] %v811
      %828 = vst [vmem:[#allocation2 + $0x50] sm:$0xff] %v812
      %829 = vst [vmem:[#allocation2 + $0x58] sm:$0xff] %v813
      %830 = vst [vmem:[#allocation2 + $0x60] sm:$0xff] %v814
      %831 = vst [vmem:[#allocation2 + $0x68] sm:$0xff] %v815
      %832 = vst [vmem:[#allocation2 + $0x70] sm:$0xff] %v816
      %833 = vst [vmem:[#allocation2 + $0x78] sm:$0xff] %v817
      // Predicated region
      $region37: #{alexnet_pre_forward.8} parent=31 // pred_check
        %p834 = pneg %p267
      $region38: #{alexnet_pre_forward.8} parent=31 // pred_check_branch
        %836 = sbr.rel (%p834) target = $region40
      $region39: #{alexnet_pre_forward.8} parent=31 // pred_region
        %v837 = vld [vmem:[#allocation2] sm:$0xff]
        %v838 = vld [vmem:[#allocation2 + $0x8] sm:$0xff]
        %v839 = vld [vmem:[#allocation2 + $0x10] sm:$0xff]
        %v840 = vld [vmem:[#allocation2 + $0x18] sm:$0xff]
        %v841 = vld [vmem:[#allocation2 + $0x20] sm:$0xff]
        %v842 = vld [vmem:[#allocation2 + $0x28] sm:$0xff]
        %v843 = vld [vmem:[#allocation2 + $0x30] sm:$0xff]
        %v844 = vld [vmem:[#allocation2 + $0x38] sm:$0xff]
        %v845 = vld [vmem:[#allocation2 + $0x40] sm:$0xff]
        %v846 = vld [vmem:[#allocation2 + $0x48] sm:$0xff]
        %v847 = vld [vmem:[#allocation2 + $0x50] sm:$0xff]
        %v848 = vld [vmem:[#allocation2 + $0x58] sm:$0xff]
        %v849 = vld [vmem:[#allocation2 + $0x60] sm:$0xff]
        %v850 = vld [vmem:[#allocation2 + $0x68] sm:$0xff]
        %v851 = vld [vmem:[#allocation2 + $0x70] sm:$0xff]
        %v852 = vld [vmem:[#allocation2 + $0x78] sm:$0xff]
        %v853 = vld [vmem:[%s257] sm:$0x1]
        %v855 = vperm.slane %v853, 0
        %v857 = vadd.f32 %v837, %v855
        %v858 = vadd.f32 %v838, %v855
        %v859 = vadd.f32 %v839, %v855
        %v860 = vadd.f32 %v840, %v855
        %v861 = vadd.f32 %v841, %v855
        %v862 = vadd.f32 %v842, %v855
        %v863 = vadd.f32 %v843, %v855
        %v864 = vadd.f32 %v844, %v855
        %v865 = vadd.f32 %v845, %v855
        %v866 = vadd.f32 %v846, %v855
        %v867 = vadd.f32 %v847, %v855
        %v868 = vadd.f32 %v848, %v855
        %v869 = vadd.f32 %v849, %v855
        %v870 = vadd.f32 %v850, %v855
        %v871 = vadd.f32 %v851, %v855
        %v872 = vadd.f32 %v852, %v855
        %v873 = vmax.f32 %v857, 0.0
        %v874 = vmax.f32 %v858, 0.0
        %v875 = vmax.f32 %v859, 0.0
        %v876 = vmax.f32 %v860, 0.0
        %v877 = vmax.f32 %v861, 0.0
        %v878 = vmax.f32 %v862, 0.0
        %v879 = vmax.f32 %v863, 0.0
        %v880 = vmax.f32 %v864, 0.0
        %v881 = vmax.f32 %v865, 0.0
        %v882 = vmax.f32 %v866, 0.0
        %v883 = vmax.f32 %v867, 0.0
        %v884 = vmax.f32 %v868, 0.0
        %v885 = vmax.f32 %v869, 0.0
        %v886 = vmax.f32 %v870, 0.0
        %v887 = vmax.f32 %v871, 0.0
        %v888 = vmax.f32 %v872, 0.0
        %v889 = vpack.c.bf16 %v873, %v873
        %v890 = vpack.c.bf16 %v874, %v874
        %v891 = vpack.c.bf16 %v875, %v875
        %v892 = vpack.c.bf16 %v876, %v876
        %v893 = vpack.c.bf16 %v877, %v877
        %v894 = vpack.c.bf16 %v878, %v878
        %v895 = vpack.c.bf16 %v879, %v879
        %v896 = vpack.c.bf16 %v880, %v880
        %v897 = vpack.c.bf16 %v881, %v881
        %v898 = vpack.c.bf16 %v882, %v882
        %v899 = vpack.c.bf16 %v883, %v883
        %v900 = vpack.c.bf16 %v884, %v884
        %v901 = vpack.c.bf16 %v885, %v885
        %v902 = vpack.c.bf16 %v886, %v886
        %v903 = vpack.c.bf16 %v887, %v887
        %v904 = vpack.c.bf16 %v888, %v888
        %905 = vst [vmem:[%s265] sm:$0xf] %v889
        %906 = vst [vmem:[%s265 + $0x4] sm:$0xf] %v890
        %907 = vst [vmem:[%s265 + $0x8] sm:$0xf] %v891
        %908 = vst [vmem:[%s265 + $0xc] sm:$0xf] %v892
        %909 = vst [vmem:[%s265 + $0x10] sm:$0xf] %v893
        %910 = vst [vmem:[%s265 + $0x14] sm:$0xf] %v894
        %911 = vst [vmem:[%s265 + $0x18] sm:$0xf] %v895
        %912 = vst [vmem:[%s265 + $0x1c] sm:$0xf] %v896
        %913 = vst [vmem:[%s265 + $0x20] sm:$0xf] %v897
        %914 = vst [vmem:[%s265 + $0x24] sm:$0xf] %v898
        %915 = vst [vmem:[%s265 + $0x28] sm:$0xf] %v899
        %916 = vst [vmem:[%s265 + $0x2c] sm:$0xf] %v900
        %917 = vst [vmem:[%s265 + $0x30] sm:$0xf] %v901
        %918 = vst [vmem:[%s265 + $0x34] sm:$0xf] %v902
        %919 = vst [vmem:[%s265 + $0x38] sm:$0xf] %v903
        %920 = vst [vmem:[%s265 + $0x3c] sm:$0xf] %v904
      $region40: #{alexnet_pre_forward.8} parent=31 // pred_fallthru
        _
      %s921 = smul.u32 16, %s19
      %p922 = scmp.lt.s32.totalorder %s921, 63
      %s923 = scalar_select %p922, %s921, 63
      %p924 = scmp.lt.s32.totalorder %s20, 0
      %s925 = scalar_select %p924, %s20, 0
      %s926 = sadd.s32 %s925, %s923
      %s927 = smul.addr %s926, 4
      %s928 = scalar_lea.vmem %s3, %s927
      // Predicated region
      $region41: #{alexnet_pre_forward.8} parent=31 // pred_check
        %p929 = pneg %p135
      $region42: #{alexnet_pre_forward.8} parent=31 // pred_check_branch
        %931 = sbr.rel (%p929) target = $region44
      $region43: #{alexnet_pre_forward.8} parent=31 // pred_region
        %s932 = smul.u32 16, %s19
      $region44: #{alexnet_pre_forward.8} parent=31 // pred_fallthru
        _
    $region32: #{alexnet_pre_forward.8} parent=5 // pred_fallthru
      _
    %p933 = scmp.le.s32.totalorder 2, %s9
    // Predicated region
    $region45: #{alexnet_pre_forward.8} parent=5 // pred_check
      %p934 = pneg %p933
    $region46: #{alexnet_pre_forward.8} parent=5 // pred_check_branch
      %936 = sbr.rel (%p934) target = $region48
    $region47: #{alexnet_pre_forward.8} parent=5 // pred_region
      %s937 = ssub.s32 %s9, 2
      // Predicated region
      $region49: #{alexnet_pre_forward.8} parent=47 // pred_check
        %p938 = pneg %p141
      $region50: #{alexnet_pre_forward.8} parent=47 // pred_check_branch
        %940 = sbr.rel (%p938) target = $region52
      $region51: #{alexnet_pre_forward.8} parent=47 // pred_region
        %s941 = smul.u32 16, %s22
        %p942 = scmp.lt.s32.totalorder %s941, 63
        %s943 = scalar_select %p942, %s941, 63
        %p944 = scmp.lt.s32.totalorder %s23, 0
        %s945 = scalar_select %p944, %s23, 0
        %s946 = sadd.s32 %s945, %s943
        %s947 = smul.addr %s946, 4
        %s948 = scalar_lea.vmem %s3, %s947
      $region52: #{alexnet_pre_forward.8} parent=47 // pred_fallthru
        _
    $region48: #{alexnet_pre_forward.8} parent=5 // pred_fallthru
      _
  $region6: #{alexnet_pre_forward.8} parent=0 // loop_footer
    %s13 = sadd.s32 1, %s9
  $region7: #{alexnet_pre_forward.8} parent=0 // loop_footer_branch
    %8 = sbr.rel target = $region3
  $region8: #{alexnet_pre_forward.8} parent=0 // loop_exit
    _

// kernel: alexnet_pre_forward.9
$region0: #{alexnet_pre_forward.9}
  #allocation0 [shape = 'u32[]', space=smem, size = 0x4, offset = 0x4, fixed_abs, tag = 'smem constant byte address 0x4 - core index']
  #allocation1 [shape = 'u32[72,128]{1,0:T(1,128)}', space=vmem, size = 0x9000, scoped, tag = 'internal scratch']
  %s0 = inlined_call_operand.vmem [shape: bf16[2,15,15,128], index: 0, kind: input, shape index: {}]
  %s1 = inlined_call_operand.vmem [shape: bf16[2,7,7,128], index: 1, kind: output, shape index: {}]
  %s2 = sld [smem:[#allocation0]]
  $region37: #{alexnet_pre_forward.9} parent=0
    _
  %s4 = ssub.s32 1, %s2
  %s5 = scalar_select 0, %s4, %s2
  loop: start=0, step=1, limit=4
  $region2: #{alexnet_pre_forward.9} parent=0 // loop_pre_header
    _
  $region3: #{alexnet_pre_forward.9} parent=0 // loop_header
    %s7 = sphi 0, %s11
    %p8 = scmp.ge.s32.totalorder %s7, 4
    %s17 = sphi 0, %s19
    %s20 = sphi 0, %s17
    %s21 = sphi 0, %s20
    %s37 = sphi 0, %s21
    %s43 = sphi 0, %s45
    %s46 = sphi 0, %s43
    %s47 = sphi 0, %s46
    %s63 = sphi 0, %s47
  $region4: #{alexnet_pre_forward.9} parent=0 // loop_header_branch
    %10 = sbr.rel (%p8) target = $region8
  $region5: #{alexnet_pre_forward.9} parent=0 // loop_body
    %s12 = ssub.s32 %s7, 1
    %s13 = ssub.s32 %s7, 2
    %s14 = sadd.s32 %s7, 1
    %s15 = ssub.s32 %s7, %s14
    %p16 = scmp.eq.s32.totalorder %s15, 0
    %s18 = sadd.s32 %s17, 1
    %s19 = scalar_select %p16, %s17, %s18
    %p22 = pneg %p16
    %p23 = scmp.eq.s32.totalorder %s7, 1
    %p24 = por %p22, %p23
    %p25 = scmp.ne.s32.totalorder %s17, %s20
    %p26 = scmp.eq.s32.totalorder %s7, 0
    %p27 = por %p25, %p26
    %p28 = scmp.ne.s32.totalorder %s17, %s20
    %p29 = scmp.eq.s32.totalorder %s12, 1
    %p30 = por %p28, %p29
    %p31 = scmp.ne.s32.totalorder %s20, %s21
    %p32 = scmp.eq.s32.totalorder %s12, 0
    %p33 = por %p31, %p32
    %p34 = scmp.ne.s32.totalorder %s20, %s21
    %p35 = scmp.eq.s32.totalorder %s13, 1
    %p36 = por %p34, %p35
    %p38 = scmp.ne.s32.totalorder %s21, %s37
    %p39 = scmp.eq.s32.totalorder %s13, 0
    %p40 = por %p38, %p39
    %s41 = ssub.s32 %s7, %s14
    %p42 = scmp.eq.s32.totalorder %s41, 0
    %s44 = sadd.s32 %s43, 1
    %s45 = scalar_select %p42, %s43, %s44
    %p48 = pneg %p42
    %p49 = scmp.eq.s32.totalorder %s7, 1
    %p50 = por %p48, %p49
    %p51 = scmp.ne.s32.totalorder %s43, %s46
    %p52 = scmp.eq.s32.totalorder %s7, 0
    %p53 = por %p51, %p52
    %p54 = scmp.ne.s32.totalorder %s43, %s46
    %p55 = scmp.eq.s32.totalorder %s12, 1
    %p56 = por %p54, %p55
    %p57 = scmp.ne.s32.totalorder %s46, %s47
    %p58 = scmp.eq.s32.totalorder %s12, 0
    %p59 = por %p57, %p58
    %p60 = scmp.ne.s32.totalorder %s46, %s47
    %p61 = scmp.eq.s32.totalorder %s13, 1
    %p62 = por %p60, %p61
    %p64 = scmp.ne.s32.totalorder %s47, %s63
    %p65 = scmp.eq.s32.totalorder %s13, 0
    %p66 = por %p64, %p65
    %p67 = scmp.le.s32.totalorder 1, %s7
    %p68 = scmp.lt.s32.totalorder %s7, 3
    %p69 = pnand %p67, %p68
    %p70 = pneg %p69
    // Predicated region
    $region9: #{alexnet_pre_forward.9} parent=5 // pred_check
      _
    $region10: #{alexnet_pre_forward.9} parent=5 // pred_check_branch
      %72 = sbr.rel (%p69) target = $region12
    $region11: #{alexnet_pre_forward.9} parent=5 // pred_region
      %s73 = ssub.s32 %s7, 1
    $region12: #{alexnet_pre_forward.9} parent=5 // pred_fallthru
      _
    %p74 = scmp.lt.s32.totalorder %s7, 2
    // Predicated region
    $region13: #{alexnet_pre_forward.9} parent=5 // pred_check
      %p75 = pneg %p74
    $region14: #{alexnet_pre_forward.9} parent=5 // pred_check_branch
      %77 = sbr.rel (%p75) target = $region16
    $region15: #{alexnet_pre_forward.9} parent=5 // pred_region
      // Predicated region
      $region17: #{alexnet_pre_forward.9} parent=15 // pred_check
        %p78 = pneg %p27
      $region18: #{alexnet_pre_forward.9} parent=15 // pred_check_branch
        %80 = sbr.rel (%p78) target = $region20
      $region19: #{alexnet_pre_forward.9} parent=15 // pred_region
        %p81 = scmp.lt.s32.totalorder %s7, 1
        %s82 = scalar_select %p81, %s7, 1
        %s83 = smul.addr %s82, 30
        %s84 = smul.addr %s83, 4
        %s85 = scalar_lea.vmem %s0, %s84
      $region20: #{alexnet_pre_forward.9} parent=15 // pred_fallthru
        _
    $region16: #{alexnet_pre_forward.9} parent=5 // pred_fallthru
      _
    %p86 = scmp.le.s32.totalorder 1, %s7
    %p87 = scmp.lt.s32.totalorder %s7, 3
    %p88 = pnand %p86, %p87
    %p89 = pneg %p88
    // Predicated region
    $region21: #{alexnet_pre_forward.9} parent=5 // pred_check
      _
    $region22: #{alexnet_pre_forward.9} parent=5 // pred_check_branch
      %91 = sbr.rel (%p88) target = $region24
    $region23: #{alexnet_pre_forward.9} parent=5 // pred_region
      %s92 = ssub.s32 %s7, 1
      %p93 = scmp.lt.s32.totalorder %s12, 1
      %s94 = scalar_select %p93, %s12, 1
      %s95 = smul.addr %s94, 30
      %s96 = smul.addr %s95, 4
      %s97 = scalar_lea.vmem %s0, %s96
      %p98 = pneg %p33
      %p99 = pneg %p30
      %p100 = pneg %p59
      %p101 = pneg %p56
      %p102 = scmp.lt.s32.totalorder %s12, 1
      %s103 = scalar_select %p102, %s12, 1
      %s104 = smul.addr %s103, 7
      %s105 = smul.addr %s104, 4
      %s106 = scalar_lea.vmem %s1, %s105
      %p107 = scmp.lt.s32.totalorder %s12, 1
      %s108 = scalar_select %p107, %s12, 1
      %s109 = smul.addr %s108, 30
      %s110 = smul.addr %s109, 4
      %s111 = scalar_lea.vmem %s0, %s110
      %p112 = scmp.lt.s32.totalorder %s12, 1
      %s113 = scalar_select %p112, %s12, 1
      %s114 = smul.addr %s113, 7
      %s115 = smul.addr %s114, 4
      %s116 = scalar_lea.vmem %s1, %s115
      %v117 = vld [vmem:[%s111] sm:$0xf]
      %v118 = vld [vmem:[%s111 + $0x4] sm:$0xf]
      %v119 = vld [vmem:[%s111 + $0x8] sm:$0xf]
      %v120 = vld [vmem:[%s111 + $0xc] sm:$0xf]
      %v121 = vld [vmem:[%s111 + $0x10] sm:$0xf]
      %v122 = vld [vmem:[%s111 + $0x14] sm:$0xf]
      %v123 = vld [vmem:[%s111 + $0x18] sm:$0xf]
      %v124 = vld [vmem:[%s111 + $0x1c] sm:$0xf]
      %v125 = vld [vmem:[%s111 + $0x20] sm:$0xf]
      %v126 = vld [vmem:[%s111 + $0x24] sm:$0xf]
      %v127 = vld [vmem:[%s111 + $0x28] sm:$0xf]
      %v128 = vld [vmem:[%s111 + $0x2c] sm:$0xf]
      %v129 = vld [vmem:[%s111 + $0x30] sm:$0xf]
      %v130 = vld [vmem:[%s111 + $0x34] sm:$0xf]
      %v131 = vld [vmem:[%s111 + $0x38] sm:$0xf]
      %v132 = vld [vmem:[%s111 + $0x3c] sm:$0xf]
      %v133 = vld [vmem:[%s111 + $0x40] sm:$0xf]
      %v134 = vld [vmem:[%s111 + $0x44] sm:$0xf]
      %v135 = vld [vmem:[%s111 + $0x48] sm:$0xf]
      %v136 = vld [vmem:[%s111 + $0x4c] sm:$0xf]
      %v137 = vld [vmem:[%s111 + $0x50] sm:$0xf]
      %v138 = vld [vmem:[%s111 + $0x54] sm:$0xf]
      %v139 = vld [vmem:[%s111 + $0x58] sm:$0xf]
      %v140 = vld [vmem:[%s111 + $0x5c] sm:$0xf]
      %v141 = vld [vmem:[%s111 + $0x60] sm:$0xf]
      %v142 = vld [vmem:[%s111 + $0x64] sm:$0xf]
      %v143 = vld [vmem:[%s111 + $0x68] sm:$0xf]
      %v144 = vld [vmem:[%s111 + $0x6c] sm:$0xf]
      %v145 = vld [vmem:[%s111 + $0x70] sm:$0xf]
      %v146 = vld [vmem:[%s111 + $0x74] sm:$0xf]
      %v147 = vunpack.c.l.bf16 %v117
      %v148 = vunpack.c.l.bf16 %v118
      %v149 = vunpack.c.l.bf16 %v119
      %v150 = vunpack.c.l.bf16 %v120
      %v151 = vmax.f32 %v147, %v149
      %v152 = vmax.f32 %v148, %v150
      %v153 = vpack.c.bf16 %v151, %v151
      %v154 = vpack.c.bf16 %v152, %v152
      %v155 = vunpack.c.l.bf16 %v153
      %v156 = vunpack.c.l.bf16 %v154
      %v157 = vunpack.c.l.bf16 %v121
      %v158 = vunpack.c.l.bf16 %v122
      %v159 = vmax.f32 %v155, %v157
      %v160 = vmax.f32 %v156, %v158
      %v161 = vpack.c.bf16 %v159, %v159
      %v162 = vpack.c.bf16 %v160, %v160
      %v163 = vunpack.c.l.bf16 %v161
      %v164 = vunpack.c.l.bf16 %v162
      %vm167 = vcmask 1046528
      %v168 = vrot.slane %v163, 1
      %v169 = vrot.slane %v164, 1
      %v170 = vsel %vm167, %v168, %v169
      %v173 = vmax.f32 %v163, %v170
      %v174 = vmax.f32 %v164, %v169
      %v175 = vpack.c.bf16 %v173, %v173
      %v176 = vpack.c.bf16 %v174, %v174
      %v177 = vunpack.c.l.bf16 %v175
      %v178 = vunpack.c.l.bf16 %v176
      %vm179 = vcmask 1045504
      %v180 = vrot.slane %v163, 2
      %v181 = vrot.slane %v164, 2
      %v182 = vsel %vm179, %v180, %v181
      %v185 = vmax.f32 %v177, %v182
      %v186 = vmax.f32 %v178, %v181
      %v187 = vpack.c.bf16 %v185, %v185
      %v188 = vpack.c.bf16 %v186, %v186
      %v190 = vunpack.c.l.b16 %v187
      %v191 = vpack.c.b16 %v190, %v190
      %v193 = vshll.u32 %v191, 16
      %v195 = vrot.slane %v193, 1
      %v197 = vrot.slane %v191, 1
      %v198 = vrot.slane %v193, 2
      %v201 = vunpack.c.l.b16 %v188
      %v202 = vpack.c.b16 %v201, %v201
      %v203 = vrot.slane %v202, 6
      %v205 = vshll.u32 %v202, 16
      %v207 = vrot.slane %v205, 7
      %v209 = vrot.slane %v202, 7
      %vm210 = vcmask 1040384
      %vm211 = vsmask.f32 256
      %vm212 = vmand %vm210, %vm211
      %v213 = vsel %vm212, %v187, %v195
      %vm214 = vcmask 1040384
      %v217 = vsel %vm214, %v213, %v197
      %vm219 = vcmask 1041408
      %vm220 = vsmask.f32 1280
      %vm221 = vmand %vm219, %vm220
      %v222 = vsel %vm221, %v217, %v198
      %vm223 = vcmask 1041408
      %v226 = vsel %vm223, %v222, %v203
      %vm228 = vcmask 1042432
      %vm229 = vsmask.f32 2304
      %vm230 = vmand %vm228, %vm229
      %v231 = vsel %vm230, %v226, %v207
      %vm232 = vcmask 1042432
      %v235 = vsel %vm232, %v231, %v209
      %vm237 = vcmask 1043456
      %vm238 = vsmask.f32 3328
      %vm239 = vmand %vm237, %vm238
      %v240 = vld [vmem:[%s116] sm:$0xf]
      %v241 = vsel %vm239, %v235, %v240
      %242 = vst [vmem:[%s116] sm:$0xf] %v241
      %v243 = vunpack.c.l.bf16 %v123
      %v244 = vunpack.c.l.bf16 %v124
      %v245 = vmax.f32 %v157, %v243
      %v246 = vmax.f32 %v158, %v244
      %v247 = vpack.c.bf16 %v245, %v245
      %v248 = vpack.c.bf16 %v246, %v246
      %v249 = vunpack.c.l.bf16 %v247
      %v250 = vunpack.c.l.bf16 %v248
      %v251 = vunpack.c.l.bf16 %v125
      %v252 = vunpack.c.l.bf16 %v126
      %v253 = vmax.f32 %v249, %v251
      %v254 = vmax.f32 %v250, %v252
      %v255 = vpack.c.bf16 %v253, %v253
      %v256 = vpack.c.bf16 %v254, %v254
      %v257 = vunpack.c.l.bf16 %v255
      %v258 = vunpack.c.l.bf16 %v256
      %v261 = vrot.slane %v257, 1
      %v262 = vrot.slane %v258, 1
      %v263 = vsel %vm167, %v261, %v262
      %v266 = vmax.f32 %v257, %v263
      %v267 = vmax.f32 %v258, %v262
      %v268 = vpack.c.bf16 %v266, %v266
      %v269 = vpack.c.bf16 %v267, %v267
      %v270 = vunpack.c.l.bf16 %v268
      %v271 = vunpack.c.l.bf16 %v269
      %v272 = vrot.slane %v257, 2
      %v273 = vrot.slane %v258, 2
      %v274 = vsel %vm179, %v272, %v273
      %v277 = vmax.f32 %v270, %v274
      %v278 = vmax.f32 %v271, %v273
      %v279 = vpack.c.bf16 %v277, %v277
      %v280 = vpack.c.bf16 %v278, %v278
      %v282 = vunpack.c.l.b16 %v279
      %v283 = vpack.c.b16 %v282, %v282
      %v285 = vshll.u32 %v283, 16
      %v287 = vrot.slane %v285, 1
      %v289 = vrot.slane %v283, 1
      %v290 = vrot.slane %v285, 2
      %v293 = vunpack.c.l.b16 %v280
      %v294 = vpack.c.b16 %v293, %v293
      %v295 = vrot.slane %v294, 6
      %v297 = vshll.u32 %v294, 16
      %v299 = vrot.slane %v297, 7
      %v301 = vrot.slane %v294, 7
      %v302 = vsel %vm212, %v279, %v287
      %v305 = vsel %vm214, %v302, %v289
      %v307 = vsel %vm221, %v305, %v290
      %v310 = vsel %vm223, %v307, %v295
      %v312 = vsel %vm230, %v310, %v299
      %v315 = vsel %vm232, %v312, %v301
      %s317 = scalar_lea.vmem %s116, 4
      %v318 = vld [vmem:[%s317] sm:$0xf]
      %v319 = vsel %vm239, %v315, %v318
      %320 = vst [vmem:[%s317] sm:$0xf] %v319
      %v321 = vunpack.c.l.bf16 %v127
      %v322 = vunpack.c.l.bf16 %v128
      %v323 = vmax.f32 %v251, %v321
      %v324 = vmax.f32 %v252, %v322
      %v325 = vpack.c.bf16 %v323, %v323
      %v326 = vpack.c.bf16 %v324, %v324
      %v327 = vunpack.c.l.bf16 %v325
      %v328 = vunpack.c.l.bf16 %v326
      %v329 = vunpack.c.l.bf16 %v129
      %v330 = vunpack.c.l.bf16 %v130
      %v331 = vmax.f32 %v327, %v329
      %v332 = vmax.f32 %v328, %v330
      %v333 = vpack.c.bf16 %v331, %v331
      %v334 = vpack.c.bf16 %v332, %v332
      %v335 = vunpack.c.l.bf16 %v333
      %v336 = vunpack.c.l.bf16 %v334
      %v339 = vrot.slane %v335, 1
      %v340 = vrot.slane %v336, 1
      %v341 = vsel %vm167, %v339, %v340
      %v344 = vmax.f32 %v335, %v341
      %v345 = vmax.f32 %v336, %v340
      %v346 = vpack.c.bf16 %v344, %v344
      %v347 = vpack.c.bf16 %v345, %v345
      %v348 = vunpack.c.l.bf16 %v346
      %v349 = vunpack.c.l.bf16 %v347
      %v350 = vrot.slane %v335, 2
      %v351 = vrot.slane %v336, 2
      %v352 = vsel %vm179, %v350, %v351
      %v355 = vmax.f32 %v348, %v352
      %v356 = vmax.f32 %v349, %v351
      %v357 = vpack.c.bf16 %v355, %v355
      %v358 = vpack.c.bf16 %v356, %v356
      %v360 = vunpack.c.l.b16 %v357
      %v361 = vpack.c.b16 %v360, %v360
      %v363 = vshll.u32 %v361, 16
      %v365 = vrot.slane %v363, 1
      %v367 = vrot.slane %v361, 1
      %v368 = vrot.slane %v363, 2
      %v371 = vunpack.c.l.b16 %v358
      %v372 = vpack.c.b16 %v371, %v371
      %v373 = vrot.slane %v372, 6
      %v375 = vshll.u32 %v372, 16
      %v377 = vrot.slane %v375, 7
      %v379 = vrot.slane %v372, 7
      %v380 = vsel %vm212, %v357, %v365
      %v383 = vsel %vm214, %v380, %v367
      %v385 = vsel %vm221, %v383, %v368
      %v388 = vsel %vm223, %v385, %v373
      %v390 = vsel %vm230, %v388, %v377
      %v393 = vsel %vm232, %v390, %v379
      %s395 = scalar_lea.vmem %s116, 8
      %v396 = vld [vmem:[%s395] sm:$0xf]
      %v397 = vsel %vm239, %v393, %v396
      %398 = vst [vmem:[%s395] sm:$0xf] %v397
      %v399 = vunpack.c.l.bf16 %v131
      %v400 = vunpack.c.l.bf16 %v132
      %v401 = vmax.f32 %v329, %v399
      %v402 = vmax.f32 %v330, %v400
      %v403 = vpack.c.bf16 %v401, %v401
      %v404 = vpack.c.bf16 %v402, %v402
      %v405 = vunpack.c.l.bf16 %v403
      %v406 = vunpack.c.l.bf16 %v404
      %v407 = vunpack.c.l.bf16 %v133
      %v408 = vunpack.c.l.bf16 %v134
      %v409 = vmax.f32 %v405, %v407
      %v410 = vmax.f32 %v406, %v408
      %v411 = vpack.c.bf16 %v409, %v409
      %v412 = vpack.c.bf16 %v410, %v410
      %v413 = vunpack.c.l.bf16 %v411
      %v414 = vunpack.c.l.bf16 %v412
      %v417 = vrot.slane %v413, 1
      %v418 = vrot.slane %v414, 1
      %v419 = vsel %vm167, %v417, %v418
      %v422 = vmax.f32 %v413, %v419
      %v423 = vmax.f32 %v414, %v418
      %v424 = vpack.c.bf16 %v422, %v422
      %v425 = vpack.c.bf16 %v423, %v423
      %v426 = vunpack.c.l.bf16 %v424
      %v427 = vunpack.c.l.bf16 %v425
      %v428 = vrot.slane %v413, 2
      %v429 = vrot.slane %v414, 2
      %v430 = vsel %vm179, %v428, %v429
      %v433 = vmax.f32 %v426, %v430
      %v434 = vmax.f32 %v427, %v429
      %v435 = vpack.c.bf16 %v433, %v433
      %v436 = vpack.c.bf16 %v434, %v434
      %v438 = vunpack.c.l.b16 %v435
      %v439 = vpack.c.b16 %v438, %v438
      %v441 = vshll.u32 %v439, 16
      %v443 = vrot.slane %v441, 1
      %v445 = vrot.slane %v439, 1
      %v446 = vrot.slane %v441, 2
      %v449 = vunpack.c.l.b16 %v436
      %v450 = vpack.c.b16 %v449, %v449
      %v451 = vrot.slane %v450, 6
      %v453 = vshll.u32 %v450, 16
      %v455 = vrot.slane %v453, 7
      %v457 = vrot.slane %v450, 7
      %v458 = vsel %vm212, %v435, %v443
      %v461 = vsel %vm214, %v458, %v445
      %v463 = vsel %vm221, %v461, %v446
      %v466 = vsel %vm223, %v463, %v451
      %v468 = vsel %vm230, %v466, %v455
      %v471 = vsel %vm232, %v468, %v457
      %s473 = scalar_lea.vmem %s116, 12
      %v474 = vld [vmem:[%s473] sm:$0xf]
      %v475 = vsel %vm239, %v471, %v474
      %476 = vst [vmem:[%s473] sm:$0xf] %v475
      %v477 = vunpack.c.l.bf16 %v135
      %v478 = vunpack.c.l.bf16 %v136
      %v479 = vmax.f32 %v407, %v477
      %v480 = vmax.f32 %v408, %v478
      %v481 = vpack.c.bf16 %v479, %v479
      %v482 = vpack.c.bf16 %v480, %v480
      %v483 = vunpack.c.l.bf16 %v481
      %v484 = vunpack.c.l.bf16 %v482
      %v485 = vunpack.c.l.bf16 %v137
      %v486 = vunpack.c.l.bf16 %v138
      %v487 = vmax.f32 %v483, %v485
      %v488 = vmax.f32 %v484, %v486
      %v489 = vpack.c.bf16 %v487, %v487
      %v490 = vpack.c.bf16 %v488, %v488
      %v491 = vunpack.c.l.bf16 %v489
      %v492 = vunpack.c.l.bf16 %v490
      %v495 = vrot.slane %v491, 1
      %v496 = vrot.slane %v492, 1
      %v497 = vsel %vm167, %v495, %v496
      %v500 = vmax.f32 %v491, %v497
      %v501 = vmax.f32 %v492, %v496
      %v502 = vpack.c.bf16 %v500, %v500
      %v503 = vpack.c.bf16 %v501, %v501
      %v504 = vunpack.c.l.bf16 %v502
      %v505 = vunpack.c.l.bf16 %v503
      %v506 = vrot.slane %v491, 2
      %v507 = vrot.slane %v492, 2
      %v508 = vsel %vm179, %v506, %v507
      %v511 = vmax.f32 %v504, %v508
      %v512 = vmax.f32 %v505, %v507
      %v513 = vpack.c.bf16 %v511, %v511
      %v514 = vpack.c.bf16 %v512, %v512
      %v516 = vunpack.c.l.b16 %v513
      %v517 = vpack.c.b16 %v516, %v516
      %v519 = vshll.u32 %v517, 16
      %v521 = vrot.slane %v519, 1
      %v523 = vrot.slane %v517, 1
      %v524 = vrot.slane %v519, 2
      %v527 = vunpack.c.l.b16 %v514
      %v528 = vpack.c.b16 %v527, %v527
      %v529 = vrot.slane %v528, 6
      %v531 = vshll.u32 %v528, 16
      %v533 = vrot.slane %v531, 7
      %v535 = vrot.slane %v528, 7
      %v536 = vsel %vm212, %v513, %v521
      %v539 = vsel %vm214, %v536, %v523
      %v541 = vsel %vm221, %v539, %v524
      %v544 = vsel %vm223, %v541, %v529
      %v546 = vsel %vm230, %v544, %v533
      %v549 = vsel %vm232, %v546, %v535
      %s551 = scalar_lea.vmem %s116, 16
      %v552 = vld [vmem:[%s551] sm:$0xf]
      %v553 = vsel %vm239, %v549, %v552
      %554 = vst [vmem:[%s551] sm:$0xf] %v553
      %v555 = vunpack.c.l.bf16 %v139
      %v556 = vunpack.c.l.bf16 %v140
      %v557 = vmax.f32 %v485, %v555
      %v558 = vmax.f32 %v486, %v556
      %v559 = vpack.c.bf16 %v557, %v557
      %v560 = vpack.c.bf16 %v558, %v558
      %v561 = vunpack.c.l.bf16 %v559
      %v562 = vunpack.c.l.bf16 %v560
      %v563 = vunpack.c.l.bf16 %v141
      %v564 = vunpack.c.l.bf16 %v142
      %v565 = vmax.f32 %v561, %v563
      %v566 = vmax.f32 %v562, %v564
      %v567 = vpack.c.bf16 %v565, %v565
      %v568 = vpack.c.bf16 %v566, %v566
      %v569 = vunpack.c.l.bf16 %v567
      %v570 = vunpack.c.l.bf16 %v568
      %v573 = vrot.slane %v569, 1
      %v574 = vrot.slane %v570, 1
      %v575 = vsel %vm167, %v573, %v574
      %v578 = vmax.f32 %v569, %v575
      %v579 = vmax.f32 %v570, %v574
      %v580 = vpack.c.bf16 %v578, %v578
      %v581 = vpack.c.bf16 %v579, %v579
      %v582 = vunpack.c.l.bf16 %v580
      %v583 = vunpack.c.l.bf16 %v581
      %v584 = vrot.slane %v569, 2
      %v585 = vrot.slane %v570, 2
      %v586 = vsel %vm179, %v584, %v585
      %v589 = vmax.f32 %v582, %v586
      %v590 = vmax.f32 %v583, %v585
      %v591 = vpack.c.bf16 %v589, %v589
      %v592 = vpack.c.bf16 %v590, %v590
      %v594 = vunpack.c.l.b16 %v591
      %v595 = vpack.c.b16 %v594, %v594
      %v597 = vshll.u32 %v595, 16
      %v599 = vrot.slane %v597, 1
      %v601 = vrot.slane %v595, 1
      %v602 = vrot.slane %v597, 2
      %v605 = vunpack.c.l.b16 %v592
      %v606 = vpack.c.b16 %v605, %v605
      %v607 = vrot.slane %v606, 6
      %v609 = vshll.u32 %v606, 16
      %v611 = vrot.slane %v609, 7
      %v613 = vrot.slane %v606, 7
      %v614 = vsel %vm212, %v591, %v599
      %v617 = vsel %vm214, %v614, %v601
      %v619 = vsel %vm221, %v617, %v602
      %v622 = vsel %vm223, %v619, %v607
      %v624 = vsel %vm230, %v622, %v611
      %v627 = vsel %vm232, %v624, %v613
      %s629 = scalar_lea.vmem %s116, 20
      %v630 = vld [vmem:[%s629] sm:$0xf]
      %v631 = vsel %vm239, %v627, %v630
      %632 = vst [vmem:[%s629] sm:$0xf] %v631
      %v633 = vunpack.c.l.bf16 %v143
      %v634 = vunpack.c.l.bf16 %v144
      %v635 = vmax.f32 %v563, %v633
      %v636 = vmax.f32 %v564, %v634
      %v637 = vpack.c.bf16 %v635, %v635
      %v638 = vpack.c.bf16 %v636, %v636
      %v639 = vunpack.c.l.bf16 %v637
      %v640 = vunpack.c.l.bf16 %v638
      %v641 = vunpack.c.l.bf16 %v145
      %v642 = vunpack.c.l.bf16 %v146
      %v643 = vmax.f32 %v639, %v641
      %v644 = vmax.f32 %v640, %v642
      %v645 = vpack.c.bf16 %v643, %v643
      %v646 = vpack.c.bf16 %v644, %v644
      %v647 = vunpack.c.l.bf16 %v645
      %v648 = vunpack.c.l.bf16 %v646
      %v651 = vrot.slane %v647, 1
      %v652 = vrot.slane %v648, 1
      %v653 = vsel %vm167, %v651, %v652
      %v656 = vmax.f32 %v647, %v653
      %v657 = vmax.f32 %v648, %v652
      %v658 = vpack.c.bf16 %v656, %v656
      %v659 = vpack.c.bf16 %v657, %v657
      %v660 = vunpack.c.l.bf16 %v658
      %v661 = vunpack.c.l.bf16 %v659
      %v662 = vrot.slane %v647, 2
      %v663 = vrot.slane %v648, 2
      %v664 = vsel %vm179, %v662, %v663
      %v667 = vmax.f32 %v660, %v664
      %v668 = vmax.f32 %v661, %v663
      %v669 = vpack.c.bf16 %v667, %v667
      %v670 = vpack.c.bf16 %v668, %v668
      %v672 = vunpack.c.l.b16 %v669
      %v673 = vpack.c.b16 %v672, %v672
      %v675 = vshll.u32 %v673, 16
      %v677 = vrot.slane %v675, 1
      %v679 = vrot.slane %v673, 1
      %v680 = vrot.slane %v675, 2
      %v683 = vunpack.c.l.b16 %v670
      %v684 = vpack.c.b16 %v683, %v683
      %v685 = vrot.slane %v684, 6
      %v687 = vshll.u32 %v684, 16
      %v689 = vrot.slane %v687, 7
      %v691 = vrot.slane %v684, 7
      %v692 = vsel %vm212, %v669, %v677
      %v695 = vsel %vm214, %v692, %v679
      %v697 = vsel %vm221, %v695, %v680
      %v700 = vsel %vm223, %v697, %v685
      %v702 = vsel %vm230, %v700, %v689
      %v705 = vsel %vm232, %v702, %v691
      %s707 = scalar_lea.vmem %s116, 24
      %v708 = vld [vmem:[%s707] sm:$0xf]
      %v709 = vsel %vm239, %v705, %v708
      %710 = vst [vmem:[%s707] sm:$0xf] %v709
      %p711 = scmp.lt.s32.totalorder %s12, 1
      %s712 = scalar_select %p711, %s12, 1
      %s713 = smul.addr %s712, 7
      %s714 = smul.addr %s713, 4
      %s715 = scalar_lea.vmem %s1, %s714
      // Predicated region
      $region25: #{alexnet_pre_forward.9} parent=23 // pred_check
        %p716 = pneg %p56
      $region26: #{alexnet_pre_forward.9} parent=23 // pred_check_branch
        %718 = sbr.rel (%p716) target = $region28
      $region27: #{alexnet_pre_forward.9} parent=23 // pred_region
        _
      $region28: #{alexnet_pre_forward.9} parent=23 // pred_fallthru
        _
    $region24: #{alexnet_pre_forward.9} parent=5 // pred_fallthru
      _
    %p719 = scmp.le.s32.totalorder 2, %s7
    // Predicated region
    $region29: #{alexnet_pre_forward.9} parent=5 // pred_check
      %p720 = pneg %p719
    $region30: #{alexnet_pre_forward.9} parent=5 // pred_check_branch
      %722 = sbr.rel (%p720) target = $region32
    $region31: #{alexnet_pre_forward.9} parent=5 // pred_region
      %s723 = ssub.s32 %s7, 2
      // Predicated region
      $region33: #{alexnet_pre_forward.9} parent=31 // pred_check
        %p724 = pneg %p62
      $region34: #{alexnet_pre_forward.9} parent=31 // pred_check_branch
        %726 = sbr.rel (%p724) target = $region36
      $region35: #{alexnet_pre_forward.9} parent=31 // pred_region
        %p727 = scmp.lt.s32.totalorder %s13, 1
        %s728 = scalar_select %p727, %s13, 1
        %s729 = smul.addr %s728, 7
        %s730 = smul.addr %s729, 4
        %s731 = scalar_lea.vmem %s1, %s730
      $region36: #{alexnet_pre_forward.9} parent=31 // pred_fallthru
        _
    $region32: #{alexnet_pre_forward.9} parent=5 // pred_fallthru
      _
  $region6: #{alexnet_pre_forward.9} parent=0 // loop_footer
    %s11 = sadd.s32 1, %s7
  $region7: #{alexnet_pre_forward.9} parent=0 // loop_footer_branch
    %6 = sbr.rel target = $region3
  $region8: #{alexnet_pre_forward.9} parent=0 // loop_exit
    _

// kernel: alexnet_pre_forward.11
$region0: #{alexnet_pre_forward.11}
  #allocation0 [shape = 'u32[]', space=smem, size = 0x4, offset = 0x4, fixed_abs, tag = 'smem constant byte address 0x4 - core index']
  #allocation1 [shape = 'u32[72,128]{1,0:T(1,128)}', space=vmem, size = 0x9000, scoped, tag = 'internal scratch']
  %s0 = inlined_call_operand.vmem [shape: bf16[2,7,7,256], index: 0, kind: input, shape index: {}]
  %s1 = inlined_call_operand.vmem [shape: bf16[2,3,3,256], index: 1, kind: output, shape index: {}]
  %s2 = sld [smem:[#allocation0]]
  $region37: #{alexnet_pre_forward.11} parent=0
    _
  %s4 = ssub.s32 1, %s2
  %s5 = scalar_select 0, %s4, %s2
  loop: start=0, step=1, limit=4
  $region2: #{alexnet_pre_forward.11} parent=0 // loop_pre_header
    _
  $region3: #{alexnet_pre_forward.11} parent=0 // loop_header
    %s7 = sphi 0, %s11
    %p8 = scmp.ge.s32.totalorder %s7, 4
    %s17 = sphi 0, %s19
    %s20 = sphi 0, %s17
    %s21 = sphi 0, %s20
    %s37 = sphi 0, %s21
    %s43 = sphi 0, %s45
    %s46 = sphi 0, %s43
    %s47 = sphi 0, %s46
    %s63 = sphi 0, %s47
  $region4: #{alexnet_pre_forward.11} parent=0 // loop_header_branch
    %10 = sbr.rel (%p8) target = $region8
  $region5: #{alexnet_pre_forward.11} parent=0 // loop_body
    %s12 = ssub.s32 %s7, 1
    %s13 = ssub.s32 %s7, 2
    %s14 = sadd.s32 %s7, 1
    %s15 = ssub.s32 %s7, %s14
    %p16 = scmp.eq.s32.totalorder %s15, 0
    %s18 = sadd.s32 %s17, 1
    %s19 = scalar_select %p16, %s17, %s18
    %p22 = pneg %p16
    %p23 = scmp.eq.s32.totalorder %s7, 1
    %p24 = por %p22, %p23
    %p25 = scmp.ne.s32.totalorder %s17, %s20
    %p26 = scmp.eq.s32.totalorder %s7, 0
    %p27 = por %p25, %p26
    %p28 = scmp.ne.s32.totalorder %s17, %s20
    %p29 = scmp.eq.s32.totalorder %s12, 1
    %p30 = por %p28, %p29
    %p31 = scmp.ne.s32.totalorder %s20, %s21
    %p32 = scmp.eq.s32.totalorder %s12, 0
    %p33 = por %p31, %p32
    %p34 = scmp.ne.s32.totalorder %s20, %s21
    %p35 = scmp.eq.s32.totalorder %s13, 1
    %p36 = por %p34, %p35
    %p38 = scmp.ne.s32.totalorder %s21, %s37
    %p39 = scmp.eq.s32.totalorder %s13, 0
    %p40 = por %p38, %p39
    %s41 = ssub.s32 %s7, %s14
    %p42 = scmp.eq.s32.totalorder %s41, 0
    %s44 = sadd.s32 %s43, 1
    %s45 = scalar_select %p42, %s43, %s44
    %p48 = pneg %p42
    %p49 = scmp.eq.s32.totalorder %s7, 1
    %p50 = por %p48, %p49
    %p51 = scmp.ne.s32.totalorder %s43, %s46
    %p52 = scmp.eq.s32.totalorder %s7, 0
    %p53 = por %p51, %p52
    %p54 = scmp.ne.s32.totalorder %s43, %s46
    %p55 = scmp.eq.s32.totalorder %s12, 1
    %p56 = por %p54, %p55
    %p57 = scmp.ne.s32.totalorder %s46, %s47
    %p58 = scmp.eq.s32.totalorder %s12, 0
    %p59 = por %p57, %p58
    %p60 = scmp.ne.s32.totalorder %s46, %s47
    %p61 = scmp.eq.s32.totalorder %s13, 1
    %p62 = por %p60, %p61
    %p64 = scmp.ne.s32.totalorder %s47, %s63
    %p65 = scmp.eq.s32.totalorder %s13, 0
    %p66 = por %p64, %p65
    %p67 = scmp.le.s32.totalorder 1, %s7
    %p68 = scmp.lt.s32.totalorder %s7, 3
    %p69 = pnand %p67, %p68
    %p70 = pneg %p69
    // Predicated region
    $region9: #{alexnet_pre_forward.11} parent=5 // pred_check
      _
    $region10: #{alexnet_pre_forward.11} parent=5 // pred_check_branch
      %72 = sbr.rel (%p69) target = $region12
    $region11: #{alexnet_pre_forward.11} parent=5 // pred_region
      %s73 = ssub.s32 %s7, 1
    $region12: #{alexnet_pre_forward.11} parent=5 // pred_fallthru
      _
    %p74 = scmp.lt.s32.totalorder %s7, 2
    // Predicated region
    $region13: #{alexnet_pre_forward.11} parent=5 // pred_check
      %p75 = pneg %p74
    $region14: #{alexnet_pre_forward.11} parent=5 // pred_check_branch
      %77 = sbr.rel (%p75) target = $region16
    $region15: #{alexnet_pre_forward.11} parent=5 // pred_region
      // Predicated region
      $region17: #{alexnet_pre_forward.11} parent=15 // pred_check
        %p78 = pneg %p27
      $region18: #{alexnet_pre_forward.11} parent=15 // pred_check_branch
        %80 = sbr.rel (%p78) target = $region20
      $region19: #{alexnet_pre_forward.11} parent=15 // pred_region
        %p81 = scmp.lt.s32.totalorder %s7, 1
        %s82 = scalar_select %p81, %s7, 1
        %s83 = smul.addr %s82, 14
        %s84 = smul.addr %s83, 4
        %s85 = scalar_lea.vmem %s0, %s84
      $region20: #{alexnet_pre_forward.11} parent=15 // pred_fallthru
        _
    $region16: #{alexnet_pre_forward.11} parent=5 // pred_fallthru
      _
    %p86 = scmp.le.s32.totalorder 1, %s7
    %p87 = scmp.lt.s32.totalorder %s7, 3
    %p88 = pnand %p86, %p87
    %p89 = pneg %p88
    // Predicated region
    $region21: #{alexnet_pre_forward.11} parent=5 // pred_check
      _
    $region22: #{alexnet_pre_forward.11} parent=5 // pred_check_branch
      %91 = sbr.rel (%p88) target = $region24
    $region23: #{alexnet_pre_forward.11} parent=5 // pred_region
      %s92 = ssub.s32 %s7, 1
      %p93 = scmp.lt.s32.totalorder %s12, 1
      %s94 = scalar_select %p93, %s12, 1
      %s95 = smul.addr %s94, 14
      %s96 = smul.addr %s95, 4
      %s97 = scalar_lea.vmem %s0, %s96
      %p98 = pneg %p33
      %p99 = pneg %p30
      %p100 = pneg %p59
      %p101 = pneg %p56
      %p102 = scmp.lt.s32.totalorder %s12, 1
      %s103 = scalar_select %p102, %s12, 1
      %s104 = smul.addr %s103, 6
      %s105 = smul.addr %s104, 2
      %s106 = scalar_lea.vmem %s1, %s105
      %p107 = scmp.lt.s32.totalorder %s12, 1
      %s108 = scalar_select %p107, %s12, 1
      %s109 = smul.addr %s108, 14
      %s110 = smul.addr %s109, 4
      %s111 = scalar_lea.vmem %s0, %s110
      %p112 = scmp.lt.s32.totalorder %s12, 1
      %s113 = scalar_select %p112, %s12, 1
      %s114 = smul.addr %s113, 6
      %s115 = smul.addr %s114, 2
      %s116 = scalar_lea.vmem %s1, %s115
      %v117 = vld [vmem:[%s111] sm:$0xff]
      %v118 = vld [vmem:[%s111 + $0x8] sm:$0xff]
      %v119 = vld [vmem:[%s111 + $0x10] sm:$0xff]
      %v120 = vld [vmem:[%s111 + $0x18] sm:$0xff]
      %v121 = vld [vmem:[%s111 + $0x20] sm:$0xff]
      %v122 = vld [vmem:[%s111 + $0x28] sm:$0xff]
      %v123 = vld [vmem:[%s111 + $0x30] sm:$0xff]
      %v124 = vunpack.c.l.bf16 %v117
      %v125 = vunpack.c.h.bf16 %v117
      %v126 = vunpack.c.l.bf16 %v118
      %v127 = vunpack.c.h.bf16 %v118
      %v128 = vmax.f32 %v124, %v126
      %v129 = vmax.f32 %v125, %v127
      %v130 = vpack.c.bf16 %v129, %v128
      %v131 = vunpack.c.l.bf16 %v130
      %v132 = vunpack.c.h.bf16 %v130
      %v133 = vunpack.c.l.bf16 %v119
      %v134 = vunpack.c.h.bf16 %v119
      %v135 = vmax.f32 %v131, %v133
      %v136 = vmax.f32 %v132, %v134
      %v137 = vpack.c.bf16 %v136, %v135
      %v138 = vunpack.c.l.bf16 %v137
      %v139 = vunpack.c.h.bf16 %v137
      %v142 = vrot.slane %v138, 1
      %v143 = vrot.slane %v139, 1
      %v146 = vmax.f32 %v138, %v142
      %v147 = vmax.f32 %v139, %v143
      %v148 = vpack.c.bf16 %v147, %v146
      %v149 = vunpack.c.l.bf16 %v148
      %v150 = vunpack.c.h.bf16 %v148
      %v151 = vrot.slane %v138, 2
      %v152 = vrot.slane %v139, 2
      %v155 = vmax.f32 %v149, %v151
      %v156 = vmax.f32 %v150, %v152
      %v157 = vpack.c.bf16 %v156, %v155
      %v159 = vunpack.c.l.b16 %v157
      %v160 = vunpack.c.h.b16 %v157
      %v161 = vpack.c.b16 %v159, %v159
      %v162 = vpack.c.b16 %v160, %v160
      %v166 = vshll.u32 %v161, 16
      %v168 = vrot.slane %v166, 1
      %v170 = vshll.u32 %v162, 16
      %v172 = vrot.slane %v170, 1
      %v175 = vrot.slane %v161, 1
      %v176 = vrot.slane %v162, 1
      %vm177 = vcmask 1040384
      %vm178 = vsmask.f32 256
      %vm179 = vmand %vm177, %vm178
      %v180 = vsel %vm179, %v161, %v168
      %v181 = vsel %vm179, %v162, %v172
      %vm182 = vcmask 1040384
      %v185 = vsel %vm182, %v180, %v175
      %v188 = vsel %vm182, %v181, %v176
      %v190 = vrot.slane %v188, 6
      %vm191 = vcmask 1041408
      %v193 = vsel %vm191, %v185, %v190
      %vm195 = vcmask 1041408
      %vm196 = vsmask.f32 1280
      %vm197 = vmand %vm195, %vm196
      %vm198 = vcmask 1043458
      %vm199 = vsmask.f32 3328
      %vm200 = vmand %vm198, %vm199
      %vm201 = vmor %vm200, %vm197
      %v202 = vld [vmem:[%s116] sm:$0xf]
      %v203 = vsel %vm201, %v193, %v202
      %204 = vst [vmem:[%s116] sm:$0xf] %v203
      %v205 = vunpack.c.l.bf16 %v120
      %v206 = vunpack.c.h.bf16 %v120
      %v207 = vmax.f32 %v133, %v205
      %v208 = vmax.f32 %v134, %v206
      %v209 = vpack.c.bf16 %v208, %v207
      %v210 = vunpack.c.l.bf16 %v209
      %v211 = vunpack.c.h.bf16 %v209
      %v212 = vunpack.c.l.bf16 %v121
      %v213 = vunpack.c.h.bf16 %v121
      %v214 = vmax.f32 %v210, %v212
      %v215 = vmax.f32 %v211, %v213
      %v216 = vpack.c.bf16 %v215, %v214
      %v217 = vunpack.c.l.bf16 %v216
      %v218 = vunpack.c.h.bf16 %v216
      %v221 = vrot.slane %v217, 1
      %v222 = vrot.slane %v218, 1
      %v225 = vmax.f32 %v217, %v221
      %v226 = vmax.f32 %v218, %v222
      %v227 = vpack.c.bf16 %v226, %v225
      %v228 = vunpack.c.l.bf16 %v227
      %v229 = vunpack.c.h.bf16 %v227
      %v230 = vrot.slane %v217, 2
      %v231 = vrot.slane %v218, 2
      %v234 = vmax.f32 %v228, %v230
      %v235 = vmax.f32 %v229, %v231
      %v236 = vpack.c.bf16 %v235, %v234
      %v238 = vunpack.c.l.b16 %v236
      %v239 = vunpack.c.h.b16 %v236
      %v240 = vpack.c.b16 %v238, %v238
      %v241 = vpack.c.b16 %v239, %v239
      %v245 = vshll.u32 %v240, 16
      %v247 = vrot.slane %v245, 1
      %v249 = vshll.u32 %v241, 16
      %v251 = vrot.slane %v249, 1
      %v254 = vrot.slane %v240, 1
      %v255 = vrot.slane %v241, 1
      %v256 = vsel %vm179, %v240, %v247
      %v257 = vsel %vm179, %v241, %v251
      %v260 = vsel %vm182, %v256, %v254
      %v263 = vsel %vm182, %v257, %v255
      %v265 = vrot.slane %v263, 6
      %v267 = vsel %vm191, %v260, %v265
      %s269 = scalar_lea.vmem %s116, 4
      %v270 = vld [vmem:[%s269] sm:$0xf]
      %v271 = vsel %vm201, %v267, %v270
      %272 = vst [vmem:[%s269] sm:$0xf] %v271
      %v273 = vunpack.c.l.bf16 %v122
      %v274 = vunpack.c.h.bf16 %v122
      %v275 = vmax.f32 %v212, %v273
      %v276 = vmax.f32 %v213, %v274
      %v277 = vpack.c.bf16 %v276, %v275
      %v278 = vunpack.c.l.bf16 %v277
      %v279 = vunpack.c.h.bf16 %v277
      %v280 = vunpack.c.l.bf16 %v123
      %v281 = vunpack.c.h.bf16 %v123
      %v282 = vmax.f32 %v278, %v280
      %v283 = vmax.f32 %v279, %v281
      %v284 = vpack.c.bf16 %v283, %v282
      %v285 = vunpack.c.l.bf16 %v284
      %v286 = vunpack.c.h.bf16 %v284
      %v289 = vrot.slane %v285, 1
      %v290 = vrot.slane %v286, 1
      %v293 = vmax.f32 %v285, %v289
      %v294 = vmax.f32 %v286, %v290
      %v295 = vpack.c.bf16 %v294, %v293
      %v296 = vunpack.c.l.bf16 %v295
      %v297 = vunpack.c.h.bf16 %v295
      %v298 = vrot.slane %v285, 2
      %v299 = vrot.slane %v286, 2
      %v302 = vmax.f32 %v296, %v298
      %v303 = vmax.f32 %v297, %v299
      %v304 = vpack.c.bf16 %v303, %v302
      %v306 = vunpack.c.l.b16 %v304
      %v307 = vunpack.c.h.b16 %v304
      %v308 = vpack.c.b16 %v306, %v306
      %v309 = vpack.c.b16 %v307, %v307
      %v313 = vshll.u32 %v308, 16
      %v315 = vrot.slane %v313, 1
      %v317 = vshll.u32 %v309, 16
      %v319 = vrot.slane %v317, 1
      %v322 = vrot.slane %v308, 1
      %v323 = vrot.slane %v309, 1
      %v324 = vsel %vm179, %v308, %v315
      %v325 = vsel %vm179, %v309, %v319
      %v328 = vsel %vm182, %v324, %v322
      %v331 = vsel %vm182, %v325, %v323
      %v333 = vrot.slane %v331, 6
      %v335 = vsel %vm191, %v328, %v333
      %s337 = scalar_lea.vmem %s116, 8
      %v338 = vld [vmem:[%s337] sm:$0xf]
      %v339 = vsel %vm201, %v335, %v338
      %340 = vst [vmem:[%s337] sm:$0xf] %v339
      %p341 = scmp.lt.s32.totalorder %s12, 1
      %s342 = scalar_select %p341, %s12, 1
      %s343 = smul.addr %s342, 6
      %s344 = smul.addr %s343, 2
      %s345 = scalar_lea.vmem %s1, %s344
      // Predicated region
      $region25: #{alexnet_pre_forward.11} parent=23 // pred_check
        %p346 = pneg %p56
      $region26: #{alexnet_pre_forward.11} parent=23 // pred_check_branch
        %348 = sbr.rel (%p346) target = $region28
      $region27: #{alexnet_pre_forward.11} parent=23 // pred_region
        _
      $region28: #{alexnet_pre_forward.11} parent=23 // pred_fallthru
        _
    $region24: #{alexnet_pre_forward.11} parent=5 // pred_fallthru
      _
    %p349 = scmp.le.s32.totalorder 2, %s7
    // Predicated region
    $region29: #{alexnet_pre_forward.11} parent=5 // pred_check
      %p350 = pneg %p349
    $region30: #{alexnet_pre_forward.11} parent=5 // pred_check_branch
      %352 = sbr.rel (%p350) target = $region32
    $region31: #{alexnet_pre_forward.11} parent=5 // pred_region
      %s353 = ssub.s32 %s7, 2
      // Predicated region
      $region33: #{alexnet_pre_forward.11} parent=31 // pred_check
        %p354 = pneg %p62
      $region34: #{alexnet_pre_forward.11} parent=31 // pred_check_branch
        %356 = sbr.rel (%p354) target = $region36
      $region35: #{alexnet_pre_forward.11} parent=31 // pred_region
        %p357 = scmp.lt.s32.totalorder %s13, 1
        %s358 = scalar_select %p357, %s13, 1
        %s359 = smul.addr %s358, 6
        %s360 = smul.addr %s359, 2
        %s361 = scalar_lea.vmem %s1, %s360
      $region36: #{alexnet_pre_forward.11} parent=31 // pred_fallthru
        _
    $region32: #{alexnet_pre_forward.11} parent=5 // pred_fallthru
      _
  $region6: #{alexnet_pre_forward.11} parent=0 // loop_footer
    %s11 = sadd.s32 1, %s7
  $region7: #{alexnet_pre_forward.11} parent=0 // loop_footer_branch
    %6 = sbr.rel target = $region3
  $region8: #{alexnet_pre_forward.11} parent=0 // loop_exit
    _

// kernel: alexnet_pre_forward.10
$region0: #{alexnet_pre_forward.10}
  #allocation0 [shape = 'u32[]', space=smem, size = 0x4, offset = 0x4, fixed_abs, tag = 'smem constant byte address 0x4 - core index']
  #allocation1 [shape = 'u32[72,128]{1,0:T(1,128)}', space=vmem, size = 0x9000, scoped, tag = 'internal scratch']
  #allocation2 [shape = 'f32[112,128]{1,0:T(8,128)}', space=vmem, size = 0xe000, scoped, tag = 'scratch operand']
  %s0 = inlined_call_operand.vmem [shape: bf16[112,2048], index: 0, kind: input, shape index: {}]
  %s1 = inlined_call_operand.vmem [shape: bf16[2048,256], index: 1, kind: input, shape index: {}]
  %s2 = inlined_call_operand.vmem [shape: f32[1,256], index: 2, kind: input, shape index: {}]
  %s3 = inlined_call_operand.vmem [shape: bf16[112,256], index: 3, kind: output, shape index: {}]
  %s4 = sld [smem:[#allocation0]]
  $region154: #{alexnet_pre_forward.10} parent=0
    _
  %s6 = ssub.s32 1, %s4
  %s7 = scalar_select 0, %s6, %s4
  $region1: #{alexnet_pre_forward.10} parent=0
    #allocation3 [shape = 'u8[229376]{0}', space=vmem, size = 0x38000, scoped, tag = 'input window, operand 0']
    #allocation4 [shape = 'u8[262144]{0}', space=vmem, size = 0x40000, scoped, tag = 'input window, operand 1']
    #allocation5 [shape = 'u8[57344]{0}', space=vmem, size = 0xe000, scoped, tag = 'output window, operand 0']
    loop: start=0, step=1, limit=10
    $region2: #{alexnet_pre_forward.10} parent=1 // loop_pre_header
      _
    $region3: #{alexnet_pre_forward.10} parent=1 // loop_header
      %s9 = sphi 0, %s13
      %p10 = scmp.ge.s32.totalorder %s9, 10
      %s16 = sphi 0, %s35
      %s17 = sphi 0, %s31
      %s18 = sphi 0, %s27
      %s19 = sphi 0, %s16
      %s20 = sphi 0, %s17
      %s21 = sphi 0, %s18
      %s22 = sphi 0, %s19
      %s23 = sphi 0, %s20
      %s24 = sphi 0, %s21
      %s40 = sphi 0, %s42
      %s43 = sphi 0, %s40
      %s44 = sphi 0, %s43
      %s60 = sphi 0, %s44
      %s68 = sphi 0, %s70
      %s71 = sphi 0, %s68
      %s72 = sphi 0, %s71
      %s88 = sphi 0, %s72
      %s94 = sphi 0, %s96
      %s97 = sphi 0, %s94
      %s98 = sphi 0, %s97
      %s114 = sphi 0, %s98
      %s122 = sphi 0, %s124
      %s125 = sphi 0, %s122
      %s126 = sphi 0, %s125
      %s142 = sphi 0, %s126
    $region4: #{alexnet_pre_forward.10} parent=1 // loop_header_branch
      %12 = sbr.rel (%p10) target = $region8
    $region5: #{alexnet_pre_forward.10} parent=1 // loop_body
      %s14 = ssub.s32 %s9, 1
      %s15 = ssub.s32 %s9, 2
      %s25 = sadd.s32 1, %s18
      %p26 = scmp.ge.s32.totalorder %s25, 4
      %s27 = scalar_select %p26, 0, %s25
      %s28 = sadd.s32 1, %s17
      %s29 = scalar_select %p26, %s28, %s17
      %p30 = scmp.ge.s32.totalorder %s29, 2
      %s31 = scalar_select %p30, 0, %s29
      %s32 = sadd.s32 1, %s16
      %s33 = scalar_select %p30, %s32, %s16
      %p34 = scmp.ge.s32.totalorder %s33, 1
      %s35 = scalar_select %p34, 0, %s33
      %s36 = ssub.s32 %s16, %s35
      %s37 = ssub.s32 %s18, %s27
      %s38 = sor.u32 %s36, %s37
      %p39 = scmp.eq.s32.totalorder %s38, 0
      %s41 = sadd.s32 %s40, 1
      %s42 = scalar_select %p39, %s40, %s41
      %p45 = pneg %p39
      %p46 = scmp.eq.s32.totalorder %s9, 7
      %p47 = por %p45, %p46
      %p48 = scmp.ne.s32.totalorder %s40, %s43
      %p49 = scmp.eq.s32.totalorder %s9, 0
      %p50 = por %p48, %p49
      %p51 = scmp.ne.s32.totalorder %s40, %s43
      %p52 = scmp.eq.s32.totalorder %s14, 7
      %p53 = por %p51, %p52
      %p54 = scmp.ne.s32.totalorder %s43, %s44
      %p55 = scmp.eq.s32.totalorder %s14, 0
      %p56 = por %p54, %p55
      %p57 = scmp.ne.s32.totalorder %s43, %s44
      %p58 = scmp.eq.s32.totalorder %s15, 7
      %p59 = por %p57, %p58
      %p61 = scmp.ne.s32.totalorder %s44, %s60
      %p62 = scmp.eq.s32.totalorder %s15, 0
      %p63 = por %p61, %p62
      %s64 = ssub.s32 %s18, %s27
      %s65 = ssub.s32 %s17, %s31
      %s66 = sor.u32 %s64, %s65
      %p67 = scmp.eq.s32.totalorder %s66, 0
      %s69 = sadd.s32 %s68, 1
      %s70 = scalar_select %p67, %s68, %s69
      %p73 = pneg %p67
      %p74 = scmp.eq.s32.totalorder %s9, 7
      %p75 = por %p73, %p74
      %p76 = scmp.ne.s32.totalorder %s68, %s71
      %p77 = scmp.eq.s32.totalorder %s9, 0
      %p78 = por %p76, %p77
      %p79 = scmp.ne.s32.totalorder %s68, %s71
      %p80 = scmp.eq.s32.totalorder %s14, 7
      %p81 = por %p79, %p80
      %p82 = scmp.ne.s32.totalorder %s71, %s72
      %p83 = scmp.eq.s32.totalorder %s14, 0
      %p84 = por %p82, %p83
      %p85 = scmp.ne.s32.totalorder %s71, %s72
      %p86 = scmp.eq.s32.totalorder %s15, 7
      %p87 = por %p85, %p86
      %p89 = scmp.ne.s32.totalorder %s72, %s88
      %p90 = scmp.eq.s32.totalorder %s15, 0
      %p91 = por %p89, %p90
      %s92 = ssub.s32 %s17, %s31
      %p93 = scmp.eq.s32.totalorder %s92, 0
      %s95 = sadd.s32 %s94, 1
      %s96 = scalar_select %p93, %s94, %s95
      %p99 = pneg %p93
      %p100 = scmp.eq.s32.totalorder %s9, 7
      %p101 = por %p99, %p100
      %p102 = scmp.ne.s32.totalorder %s94, %s97
      %p103 = scmp.eq.s32.totalorder %s9, 0
      %p104 = por %p102, %p103
      %p105 = scmp.ne.s32.totalorder %s94, %s97
      %p106 = scmp.eq.s32.totalorder %s14, 7
      %p107 = por %p105, %p106
      %p108 = scmp.ne.s32.totalorder %s97, %s98
      %p109 = scmp.eq.s32.totalorder %s14, 0
      %p110 = por %p108, %p109
      %p111 = scmp.ne.s32.totalorder %s97, %s98
      %p112 = scmp.eq.s32.totalorder %s15, 7
      %p113 = por %p111, %p112
      %p115 = scmp.ne.s32.totalorder %s98, %s114
      %p116 = scmp.eq.s32.totalorder %s15, 0
      %p117 = por %p115, %p116
      %s118 = ssub.s32 %s16, %s35
      %s119 = ssub.s32 %s17, %s31
      %s120 = sor.u32 %s118, %s119
      %p121 = scmp.eq.s32.totalorder %s120, 0
      %s123 = sadd.s32 %s122, 1
      %s124 = scalar_select %p121, %s122, %s123
      %p127 = pneg %p121
      %p128 = scmp.eq.s32.totalorder %s9, 7
      %p129 = por %p127, %p128
      %p130 = scmp.ne.s32.totalorder %s122, %s125
      %p131 = scmp.eq.s32.totalorder %s9, 0
      %p132 = por %p130, %p131
      %p133 = scmp.ne.s32.totalorder %s122, %s125
      %p134 = scmp.eq.s32.totalorder %s14, 7
      %p135 = por %p133, %p134
      %p136 = scmp.ne.s32.totalorder %s125, %s126
      %p137 = scmp.eq.s32.totalorder %s14, 0
      %p138 = por %p136, %p137
      %p139 = scmp.ne.s32.totalorder %s125, %s126
      %p140 = scmp.eq.s32.totalorder %s15, 7
      %p141 = por %p139, %p140
      %p143 = scmp.ne.s32.totalorder %s126, %s142
      %p144 = scmp.eq.s32.totalorder %s15, 0
      %p145 = por %p143, %p144
      %p146 = scmp.le.s32.totalorder 1, %s9
      %p147 = scmp.lt.s32.totalorder %s9, 9
      %p148 = pnand %p146, %p147
      %p149 = pneg %p148
      // Predicated region
      $region9: #{alexnet_pre_forward.10} parent=5 // pred_check
        _
      $region10: #{alexnet_pre_forward.10} parent=5 // pred_check_branch
        %151 = sbr.rel (%p148) target = $region12
      $region11: #{alexnet_pre_forward.10} parent=5 // pred_region
        %s152 = ssub.s32 %s9, 1
      $region12: #{alexnet_pre_forward.10} parent=5 // pred_fallthru
        _
      %p153 = scmp.lt.s32.totalorder %s9, 8
      // Predicated region
      $region13: #{alexnet_pre_forward.10} parent=5 // pred_check
        %p154 = pneg %p153
      $region14: #{alexnet_pre_forward.10} parent=5 // pred_check_branch
        %156 = sbr.rel (%p154) target = $region16
      $region15: #{alexnet_pre_forward.10} parent=5 // pred_region
        // Predicated region
        $region17: #{alexnet_pre_forward.10} parent=15 // pred_check
          %p157 = pneg %p50
        $region18: #{alexnet_pre_forward.10} parent=15 // pred_check_branch
          %159 = sbr.rel (%p157) target = $region20
        $region19: #{alexnet_pre_forward.10} parent=15 // pred_region
          %s160 = sand.u32 %s40, 1
          %s161 = sand.u32 %s40, 1
          %s162 = smul.addr %s161, 224
          %s163 = scalar_lea.vmem [#allocation3], %s162
          %s164 = smul.u32 14, %s16
          %s165 = smul.u32 4, %s18
          %s166 = smul.addr %s164, 16
          %s167 = sadd.s32 %s165, %s166
          %s168 = smul.addr %s167, 4
          %s169 = scalar_lea.vmem %s0, %s168
          // Predicated region
          $region21: #{alexnet_pre_forward.10} parent=19 // pred_check
            _
          $region22: #{alexnet_pre_forward.10} parent=19 // pred_check_branch
            %171 = sbr.rel (0) target = $region24
          $region23: #{alexnet_pre_forward.10} parent=19 // pred_region
            // Predicated region
            $region25: #{alexnet_pre_forward.10} parent=23 // pred_check
              _
            $region26: #{alexnet_pre_forward.10} parent=23 // pred_check_branch
              %173 = sbr.rel (0) target = $region28
            $region27: #{alexnet_pre_forward.10} parent=23 // pred_region
              loop: start=0, step=1, limit=1
              $region29: #{alexnet_pre_forward.10} parent=27 // loop_pre_header
                _
              $region30: #{alexnet_pre_forward.10} parent=27 // loop_header
                %s175 = sphi 0, %s179
                %p176 = scmp.ge.s32.totalorder %s175, 1
                %s180 = sphi %s169, %s169
                %s181 = sphi %s163, %s163
              $region31: #{alexnet_pre_forward.10} parent=27 // loop_header_branch
                %178 = sbr.rel (%p176) target = $region35
              $region32: #{alexnet_pre_forward.10} parent=27 // loop_body
                %v182 = vld [vmem:[%s180] sm:$0xff]
                %183 = vst [vmem:[%s181] sm:$0xff] %v182
                %v184 = vld [vmem:[%s180 + $0x8] sm:$0xff]
                %185 = vst [vmem:[%s181 + $0x8] sm:$0xff] %v184
                %v186 = vld [vmem:[%s180 + $0x40] sm:$0xff]
                %187 = vst [vmem:[%s181 + $0x10] sm:$0xff] %v186
                %v188 = vld [vmem:[%s180 + $0x48] sm:$0xff]
                %189 = vst [vmem:[%s181 + $0x18] sm:$0xff] %v188
                %v190 = vld [vmem:[%s180 + $0x80] sm:$0xff]
                %191 = vst [vmem:[%s181 + $0x20] sm:$0xff] %v190
                %v192 = vld [vmem:[%s180 + $0x88] sm:$0xff]
                %193 = vst [vmem:[%s181 + $0x28] sm:$0xff] %v192
                %v194 = vld [vmem:[%s180 + $0xc0] sm:$0xff]
                %195 = vst [vmem:[%s181 + $0x30] sm:$0xff] %v194
                %v196 = vld [vmem:[%s180 + $0xc8] sm:$0xff]
                %197 = vst [vmem:[%s181 + $0x38] sm:$0xff] %v196
                %v198 = vld [vmem:[%s180 + $0x100] sm:$0xff]
                %199 = vst [vmem:[%s181 + $0x40] sm:$0xff] %v198
                %v200 = vld [vmem:[%s180 + $0x108] sm:$0xff]
                %201 = vst [vmem:[%s181 + $0x48] sm:$0xff] %v200
                %v202 = vld [vmem:[%s180 + $0x140] sm:$0xff]
                %203 = vst [vmem:[%s181 + $0x50] sm:$0xff] %v202
                %v204 = vld [vmem:[%s180 + $0x148] sm:$0xff]
                %205 = vst [vmem:[%s181 + $0x58] sm:$0xff] %v204
                %v206 = vld [vmem:[%s180 + $0x180] sm:$0xff]
                %207 = vst [vmem:[%s181 + $0x60] sm:$0xff] %v206
                %v208 = vld [vmem:[%s180 + $0x188] sm:$0xff]
                %209 = vst [vmem:[%s181 + $0x68] sm:$0xff] %v208
                %v210 = vld [vmem:[%s180 + $0x1c0] sm:$0xff]
                %211 = vst [vmem:[%s181 + $0x70] sm:$0xff] %v210
                %v212 = vld [vmem:[%s180 + $0x1c8] sm:$0xff]
                %213 = vst [vmem:[%s181 + $0x78] sm:$0xff] %v212
                %v214 = vld [vmem:[%s180 + $0x200] sm:$0xff]
                %215 = vst [vmem:[%s181 + $0x80] sm:$0xff] %v214
                %v216 = vld [vmem:[%s180 + $0x208] sm:$0xff]
                %217 = vst [vmem:[%s181 + $0x88] sm:$0xff] %v216
                %v218 = vld [vmem:[%s180 + $0x240] sm:$0xff]
                %219 = vst [vmem:[%s181 + $0x90] sm:$0xff] %v218
                %v220 = vld [vmem:[%s180 + $0x248] sm:$0xff]
                %221 = vst [vmem:[%s181 + $0x98] sm:$0xff] %v220
                %v222 = vld [vmem:[%s180 + $0x280] sm:$0xff]
                %223 = vst [vmem:[%s181 + $0xa0] sm:$0xff] %v222
                %v224 = vld [vmem:[%s180 + $0x288] sm:$0xff]
                %225 = vst [vmem:[%s181 + $0xa8] sm:$0xff] %v224
                %v226 = vld [vmem:[%s180 + $0x2c0] sm:$0xff]
                %227 = vst [vmem:[%s181 + $0xb0] sm:$0xff] %v226
                %v228 = vld [vmem:[%s180 + $0x2c8] sm:$0xff]
                %229 = vst [vmem:[%s181 + $0xb8] sm:$0xff] %v228
                %v230 = vld [vmem:[%s180 + $0x300] sm:$0xff]
                %231 = vst [vmem:[%s181 + $0xc0] sm:$0xff] %v230
                %v232 = vld [vmem:[%s180 + $0x308] sm:$0xff]
                %233 = vst [vmem:[%s181 + $0xc8] sm:$0xff] %v232
                %v234 = vld [vmem:[%s180 + $0x340] sm:$0xff]
                %235 = vst [vmem:[%s181 + $0xd0] sm:$0xff] %v234
                %v236 = vld [vmem:[%s180 + $0x348] sm:$0xff]
                %237 = vst [vmem:[%s181 + $0xd8] sm:$0xff] %v236
              $region33: #{alexnet_pre_forward.10} parent=27 // loop_footer
                %s179 = sadd.s32 1, %s175
              $region34: #{alexnet_pre_forward.10} parent=27 // loop_footer_branch
                %174 = sbr.rel target = $region30
              $region35: #{alexnet_pre_forward.10} parent=27 // loop_exit
                _
            $region28: #{alexnet_pre_forward.10} parent=23 // pred_fallthru
              _
            // Predicated region
            $region36: #{alexnet_pre_forward.10} parent=23 // pred_check
              _
            $region37: #{alexnet_pre_forward.10} parent=23 // pred_check_branch
              %239 = sbr.rel target = $region39
            $region38: #{alexnet_pre_forward.10} parent=23 // pred_region
              _
            $region39: #{alexnet_pre_forward.10} parent=23 // pred_fallthru
              _
          $region24: #{alexnet_pre_forward.10} parent=19 // pred_fallthru
            _
          %240 = vnop
        $region20: #{alexnet_pre_forward.10} parent=15 // pred_fallthru
          _
        // Predicated region
        $region40: #{alexnet_pre_forward.10} parent=15 // pred_check
          %p241 = pneg %p78
        $region41: #{alexnet_pre_forward.10} parent=15 // pred_check_branch
          %243 = sbr.rel (%p241) target = $region43
        $region42: #{alexnet_pre_forward.10} parent=15 // pred_region
          %s244 = sand.u32 %s68, 1
          %s245 = sand.u32 %s68, 1
          %s246 = smul.addr %s245, 256
          %s247 = scalar_lea.vmem [#allocation4], %s246
          %s248 = smul.u32 64, %s18
          %s249 = smul.addr %s248, 2
          %s250 = sadd.s32 %s17, %s249
          %s251 = smul.addr %s250, 4
          %s252 = scalar_lea.vmem %s1, %s251
          // Predicated region
          $region44: #{alexnet_pre_forward.10} parent=42 // pred_check
            _
          $region45: #{alexnet_pre_forward.10} parent=42 // pred_check_branch
            %254 = sbr.rel (0) target = $region47
          $region46: #{alexnet_pre_forward.10} parent=42 // pred_region
            // Predicated region
            $region48: #{alexnet_pre_forward.10} parent=46 // pred_check
              _
            $region49: #{alexnet_pre_forward.10} parent=46 // pred_check_branch
              %256 = sbr.rel target = $region51
            $region50: #{alexnet_pre_forward.10} parent=46 // pred_region
              // Predicated region
              $region63: #{alexnet_pre_forward.10} parent=50 // pred_check
                _
              $region64: #{alexnet_pre_forward.10} parent=50 // pred_check_branch
                %398 = sbr.rel (0) target = $region66
              $region65: #{alexnet_pre_forward.10} parent=50 // pred_region
                loop: start=0, step=1, limit=1
                $region67: #{alexnet_pre_forward.10} parent=65 // loop_pre_header
                  _
                $region68: #{alexnet_pre_forward.10} parent=65 // loop_header
                  %s400 = sphi 0, %s404
                  %p401 = scmp.ge.s32.totalorder %s400, 1
                  %s405 = sphi %s252, %s252
                  %s406 = sphi %s247, %s247
                $region69: #{alexnet_pre_forward.10} parent=65 // loop_header_branch
                  %403 = sbr.rel (%p401) target = $region73
                $region70: #{alexnet_pre_forward.10} parent=65 // loop_body
                  _
                $region71: #{alexnet_pre_forward.10} parent=65 // loop_footer
                  %s404 = sadd.s32 1, %s400
                $region72: #{alexnet_pre_forward.10} parent=65 // loop_footer_branch
                  %399 = sbr.rel target = $region68
                $region73: #{alexnet_pre_forward.10} parent=65 // loop_exit
                  _
                %s408 = ssub.s32 16, 1
                loop: start=0, step=1, limit=1
                $region74: #{alexnet_pre_forward.10} parent=65 // loop_pre_header
                  _
                $region75: #{alexnet_pre_forward.10} parent=65 // loop_header
                  %s410 = sphi 0, %s414
                  %p411 = scmp.ge.s32.totalorder %s410, 1
                  %s415 = sphi %s252, %s252
                  %s416 = sphi %s247, %s247
                $region76: #{alexnet_pre_forward.10} parent=65 // loop_header_branch
                  %413 = sbr.rel (%p411) target = $region80
                $region77: #{alexnet_pre_forward.10} parent=65 // loop_body
                  %v417 = vld [vmem:[%s415] sm:%s408]
                  %418 = vst [vmem:[%s416] sm:%s408] %v417
                  %v419 = vld [vmem:[%s415 + $0x8] sm:%s408]
                  %420 = vst [vmem:[%s416 + $0x4] sm:%s408] %v419
                  %v421 = vld [vmem:[%s415 + $0x10] sm:%s408]
                  %422 = vst [vmem:[%s416 + $0x8] sm:%s408] %v421
                  %v423 = vld [vmem:[%s415 + $0x18] sm:%s408]
                  %424 = vst [vmem:[%s416 + $0xc] sm:%s408] %v423
                  %v425 = vld [vmem:[%s415 + $0x20] sm:%s408]
                  %426 = vst [vmem:[%s416 + $0x10] sm:%s408] %v425
                  %v427 = vld [vmem:[%s415 + $0x28] sm:%s408]
                  %428 = vst [vmem:[%s416 + $0x14] sm:%s408] %v427
                  %v429 = vld [vmem:[%s415 + $0x30] sm:%s408]
                  %430 = vst [vmem:[%s416 + $0x18] sm:%s408] %v429
                  %v431 = vld [vmem:[%s415 + $0x38] sm:%s408]
                  %432 = vst [vmem:[%s416 + $0x1c] sm:%s408] %v431
                  %v433 = vld [vmem:[%s415 + $0x40] sm:%s408]
                  %434 = vst [vmem:[%s416 + $0x20] sm:%s408] %v433
                  %v435 = vld [vmem:[%s415 + $0x48] sm:%s408]
                  %436 = vst [vmem:[%s416 + $0x24] sm:%s408] %v435
                  %v437 = vld [vmem:[%s415 + $0x50] sm:%s408]
                  %438 = vst [vmem:[%s416 + $0x28] sm:%s408] %v437
                  %v439 = vld [vmem:[%s415 + $0x58] sm:%s408]
                  %440 = vst [vmem:[%s416 + $0x2c] sm:%s408] %v439
                  %v441 = vld [vmem:[%s415 + $0x60] sm:%s408]
                  %442 = vst [vmem:[%s416 + $0x30] sm:%s408] %v441
                  %v443 = vld [vmem:[%s415 + $0x68] sm:%s408]
                  %444 = vst [vmem:[%s416 + $0x34] sm:%s408] %v443
                  %v445 = vld [vmem:[%s415 + $0x70] sm:%s408]
                  %446 = vst [vmem:[%s416 + $0x38] sm:%s408] %v445
                  %v447 = vld [vmem:[%s415 + $0x78] sm:%s408]
                  %448 = vst [vmem:[%s416 + $0x3c] sm:%s408] %v447
                  %v449 = vld [vmem:[%s415 + $0x80] sm:%s408]
                  %450 = vst [vmem:[%s416 + $0x40] sm:%s408] %v449
                  %v451 = vld [vmem:[%s415 + $0x88] sm:%s408]
                  %452 = vst [vmem:[%s416 + $0x44] sm:%s408] %v451
                  %v453 = vld [vmem:[%s415 + $0x90] sm:%s408]
                  %454 = vst [vmem:[%s416 + $0x48] sm:%s408] %v453
                  %v455 = vld [vmem:[%s415 + $0x98] sm:%s408]
                  %456 = vst [vmem:[%s416 + $0x4c] sm:%s408] %v455
                  %v457 = vld [vmem:[%s415 + $0xa0] sm:%s408]
                  %458 = vst [vmem:[%s416 + $0x50] sm:%s408] %v457
                  %v459 = vld [vmem:[%s415 + $0xa8] sm:%s408]
                  %460 = vst [vmem:[%s416 + $0x54] sm:%s408] %v459
                  %v461 = vld [vmem:[%s415 + $0xb0] sm:%s408]
                  %462 = vst [vmem:[%s416 + $0x58] sm:%s408] %v461
                  %v463 = vld [vmem:[%s415 + $0xb8] sm:%s408]
                  %464 = vst [vmem:[%s416 + $0x5c] sm:%s408] %v463
                  %v465 = vld [vmem:[%s415 + $0xc0] sm:%s408]
                  %466 = vst [vmem:[%s416 + $0x60] sm:%s408] %v465
                  %v467 = vld [vmem:[%s415 + $0xc8] sm:%s408]
                  %468 = vst [vmem:[%s416 + $0x64] sm:%s408] %v467
                  %v469 = vld [vmem:[%s415 + $0xd0] sm:%s408]
                  %470 = vst [vmem:[%s416 + $0x68] sm:%s408] %v469
                  %v471 = vld [vmem:[%s415 + $0xd8] sm:%s408]
                  %472 = vst [vmem:[%s416 + $0x6c] sm:%s408] %v471
                  %v473 = vld [vmem:[%s415 + $0xe0] sm:%s408]
                  %474 = vst [vmem:[%s416 + $0x70] sm:%s408] %v473
                  %v475 = vld [vmem:[%s415 + $0xe8] sm:%s408]
                  %476 = vst [vmem:[%s416 + $0x74] sm:%s408] %v475
                  %v477 = vld [vmem:[%s415 + $0xf0] sm:%s408]
                  %478 = vst [vmem:[%s416 + $0x78] sm:%s408] %v477
                  %v479 = vld [vmem:[%s415 + $0xf8] sm:%s408]
                  %480 = vst [vmem:[%s416 + $0x7c] sm:%s408] %v479
                  %v481 = vld [vmem:[%s415 + $0x100] sm:%s408]
                  %482 = vst [vmem:[%s416 + $0x80] sm:%s408] %v481
                  %v483 = vld [vmem:[%s415 + $0x108] sm:%s408]
                  %484 = vst [vmem:[%s416 + $0x84] sm:%s408] %v483
                  %v485 = vld [vmem:[%s415 + $0x110] sm:%s408]
                  %486 = vst [vmem:[%s416 + $0x88] sm:%s408] %v485
                  %v487 = vld [vmem:[%s415 + $0x118] sm:%s408]
                  %488 = vst [vmem:[%s416 + $0x8c] sm:%s408] %v487
                  %v489 = vld [vmem:[%s415 + $0x120] sm:%s408]
                  %490 = vst [vmem:[%s416 + $0x90] sm:%s408] %v489
                  %v491 = vld [vmem:[%s415 + $0x128] sm:%s408]
                  %492 = vst [vmem:[%s416 + $0x94] sm:%s408] %v491
                  %v493 = vld [vmem:[%s415 + $0x130] sm:%s408]
                  %494 = vst [vmem:[%s416 + $0x98] sm:%s408] %v493
                  %v495 = vld [vmem:[%s415 + $0x138] sm:%s408]
                  %496 = vst [vmem:[%s416 + $0x9c] sm:%s408] %v495
                  %v497 = vld [vmem:[%s415 + $0x140] sm:%s408]
                  %498 = vst [vmem:[%s416 + $0xa0] sm:%s408] %v497
                  %v499 = vld [vmem:[%s415 + $0x148] sm:%s408]
                  %500 = vst [vmem:[%s416 + $0xa4] sm:%s408] %v499
                  %v501 = vld [vmem:[%s415 + $0x150] sm:%s408]
                  %502 = vst [vmem:[%s416 + $0xa8] sm:%s408] %v501
                  %v503 = vld [vmem:[%s415 + $0x158] sm:%s408]
                  %504 = vst [vmem:[%s416 + $0xac] sm:%s408] %v503
                  %v505 = vld [vmem:[%s415 + $0x160] sm:%s408]
                  %506 = vst [vmem:[%s416 + $0xb0] sm:%s408] %v505
                  %v507 = vld [vmem:[%s415 + $0x168] sm:%s408]
                  %508 = vst [vmem:[%s416 + $0xb4] sm:%s408] %v507
                  %v509 = vld [vmem:[%s415 + $0x170] sm:%s408]
                  %510 = vst [vmem:[%s416 + $0xb8] sm:%s408] %v509
                  %v511 = vld [vmem:[%s415 + $0x178] sm:%s408]
                  %512 = vst [vmem:[%s416 + $0xbc] sm:%s408] %v511
                  %v513 = vld [vmem:[%s415 + $0x180] sm:%s408]
                  %514 = vst [vmem:[%s416 + $0xc0] sm:%s408] %v513
                  %v515 = vld [vmem:[%s415 + $0x188] sm:%s408]
                  %516 = vst [vmem:[%s416 + $0xc4] sm:%s408] %v515
                  %v517 = vld [vmem:[%s415 + $0x190] sm:%s408]
                  %518 = vst [vmem:[%s416 + $0xc8] sm:%s408] %v517
                  %v519 = vld [vmem:[%s415 + $0x198] sm:%s408]
                  %520 = vst [vmem:[%s416 + $0xcc] sm:%s408] %v519
                  %v521 = vld [vmem:[%s415 + $0x1a0] sm:%s408]
                  %522 = vst [vmem:[%s416 + $0xd0] sm:%s408] %v521
                  %v523 = vld [vmem:[%s415 + $0x1a8] sm:%s408]
                  %524 = vst [vmem:[%s416 + $0xd4] sm:%s408] %v523
                  %v525 = vld [vmem:[%s415 + $0x1b0] sm:%s408]
                  %526 = vst [vmem:[%s416 + $0xd8] sm:%s408] %v525
                  %v527 = vld [vmem:[%s415 + $0x1b8] sm:%s408]
                  %528 = vst [vmem:[%s416 + $0xdc] sm:%s408] %v527
                  %v529 = vld [vmem:[%s415 + $0x1c0] sm:%s408]
                  %530 = vst [vmem:[%s416 + $0xe0] sm:%s408] %v529
                  %v531 = vld [vmem:[%s415 + $0x1c8] sm:%s408]
                  %532 = vst [vmem:[%s416 + $0xe4] sm:%s408] %v531
                  %v533 = vld [vmem:[%s415 + $0x1d0] sm:%s408]
                  %534 = vst [vmem:[%s416 + $0xe8] sm:%s408] %v533
                  %v535 = vld [vmem:[%s415 + $0x1d8] sm:%s408]
                  %536 = vst [vmem:[%s416 + $0xec] sm:%s408] %v535
                  %v537 = vld [vmem:[%s415 + $0x1e0] sm:%s408]
                  %538 = vst [vmem:[%s416 + $0xf0] sm:%s408] %v537
                  %v539 = vld [vmem:[%s415 + $0x1e8] sm:%s408]
                  %540 = vst [vmem:[%s416 + $0xf4] sm:%s408] %v539
                  %v541 = vld [vmem:[%s415 + $0x1f0] sm:%s408]
                  %542 = vst [vmem:[%s416 + $0xf8] sm:%s408] %v541
                  %v543 = vld [vmem:[%s415 + $0x1f8] sm:%s408]
                  %544 = vst [vmem:[%s416 + $0xfc] sm:%s408] %v543
                $region78: #{alexnet_pre_forward.10} parent=65 // loop_footer
                  %s414 = sadd.s32 1, %s410
                $region79: #{alexnet_pre_forward.10} parent=65 // loop_footer_branch
                  %409 = sbr.rel target = $region75
                $region80: #{alexnet_pre_forward.10} parent=65 // loop_exit
                  _
              $region66: #{alexnet_pre_forward.10} parent=50 // pred_fallthru
                _
            $region51: #{alexnet_pre_forward.10} parent=46 // pred_fallthru
              _
            // Predicated region
            $region52: #{alexnet_pre_forward.10} parent=46 // pred_check
              _
            $region53: #{alexnet_pre_forward.10} parent=46 // pred_check_branch
              %258 = sbr.rel (0) target = $region55
            $region54: #{alexnet_pre_forward.10} parent=46 // pred_region
              %s260 = ssub.s32 16, 1
              loop: start=0, step=1, limit=1
              $region56: #{alexnet_pre_forward.10} parent=54 // loop_pre_header
                _
              $region57: #{alexnet_pre_forward.10} parent=54 // loop_header
                %s262 = sphi 0, %s266
                %p263 = scmp.ge.s32.totalorder %s262, 1
                %s267 = sphi %s252, %s252
                %s268 = sphi %s247, %s247
              $region58: #{alexnet_pre_forward.10} parent=54 // loop_header_branch
                %265 = sbr.rel (%p263) target = $region62
              $region59: #{alexnet_pre_forward.10} parent=54 // loop_body
                %v269 = vld [vmem:[%s267] sm:%s260]
                %270 = vst [vmem:[%s268] sm:%s260] %v269
                %v271 = vld [vmem:[%s267 + $0x8] sm:%s260]
                %272 = vst [vmem:[%s268 + $0x4] sm:%s260] %v271
                %v273 = vld [vmem:[%s267 + $0x10] sm:%s260]
                %274 = vst [vmem:[%s268 + $0x8] sm:%s260] %v273
                %v275 = vld [vmem:[%s267 + $0x18] sm:%s260]
                %276 = vst [vmem:[%s268 + $0xc] sm:%s260] %v275
                %v277 = vld [vmem:[%s267 + $0x20] sm:%s260]
                %278 = vst [vmem:[%s268 + $0x10] sm:%s260] %v277
                %v279 = vld [vmem:[%s267 + $0x28] sm:%s260]
                %280 = vst [vmem:[%s268 + $0x14] sm:%s260] %v279
                %v281 = vld [vmem:[%s267 + $0x30] sm:%s260]
                %282 = vst [vmem:[%s268 + $0x18] sm:%s260] %v281
                %v283 = vld [vmem:[%s267 + $0x38] sm:%s260]
                %284 = vst [vmem:[%s268 + $0x1c] sm:%s260] %v283
                %v285 = vld [vmem:[%s267 + $0x40] sm:%s260]
                %286 = vst [vmem:[%s268 + $0x20] sm:%s260] %v285
                %v287 = vld [vmem:[%s267 + $0x48] sm:%s260]
                %288 = vst [vmem:[%s268 + $0x24] sm:%s260] %v287
                %v289 = vld [vmem:[%s267 + $0x50] sm:%s260]
                %290 = vst [vmem:[%s268 + $0x28] sm:%s260] %v289
                %v291 = vld [vmem:[%s267 + $0x58] sm:%s260]
                %292 = vst [vmem:[%s268 + $0x2c] sm:%s260] %v291
                %v293 = vld [vmem:[%s267 + $0x60] sm:%s260]
                %294 = vst [vmem:[%s268 + $0x30] sm:%s260] %v293
                %v295 = vld [vmem:[%s267 + $0x68] sm:%s260]
                %296 = vst [vmem:[%s268 + $0x34] sm:%s260] %v295
                %v297 = vld [vmem:[%s267 + $0x70] sm:%s260]
                %298 = vst [vmem:[%s268 + $0x38] sm:%s260] %v297
                %v299 = vld [vmem:[%s267 + $0x78] sm:%s260]
                %300 = vst [vmem:[%s268 + $0x3c] sm:%s260] %v299
                %v301 = vld [vmem:[%s267 + $0x80] sm:%s260]
                %302 = vst [vmem:[%s268 + $0x40] sm:%s260] %v301
                %v303 = vld [vmem:[%s267 + $0x88] sm:%s260]
                %304 = vst [vmem:[%s268 + $0x44] sm:%s260] %v303
                %v305 = vld [vmem:[%s267 + $0x90] sm:%s260]
                %306 = vst [vmem:[%s268 + $0x48] sm:%s260] %v305
                %v307 = vld [vmem:[%s267 + $0x98] sm:%s260]
                %308 = vst [vmem:[%s268 + $0x4c] sm:%s260] %v307
                %v309 = vld [vmem:[%s267 + $0xa0] sm:%s260]
                %310 = vst [vmem:[%s268 + $0x50] sm:%s260] %v309
                %v311 = vld [vmem:[%s267 + $0xa8] sm:%s260]
                %312 = vst [vmem:[%s268 + $0x54] sm:%s260] %v311
                %v313 = vld [vmem:[%s267 + $0xb0] sm:%s260]
                %314 = vst [vmem:[%s268 + $0x58] sm:%s260] %v313
                %v315 = vld [vmem:[%s267 + $0xb8] sm:%s260]
                %316 = vst [vmem:[%s268 + $0x5c] sm:%s260] %v315
                %v317 = vld [vmem:[%s267 + $0xc0] sm:%s260]
                %318 = vst [vmem:[%s268 + $0x60] sm:%s260] %v317
                %v319 = vld [vmem:[%s267 + $0xc8] sm:%s260]
                %320 = vst [vmem:[%s268 + $0x64] sm:%s260] %v319
                %v321 = vld [vmem:[%s267 + $0xd0] sm:%s260]
                %322 = vst [vmem:[%s268 + $0x68] sm:%s260] %v321
                %v323 = vld [vmem:[%s267 + $0xd8] sm:%s260]
                %324 = vst [vmem:[%s268 + $0x6c] sm:%s260] %v323
                %v325 = vld [vmem:[%s267 + $0xe0] sm:%s260]
                %326 = vst [vmem:[%s268 + $0x70] sm:%s260] %v325
                %v327 = vld [vmem:[%s267 + $0xe8] sm:%s260]
                %328 = vst [vmem:[%s268 + $0x74] sm:%s260] %v327
                %v329 = vld [vmem:[%s267 + $0xf0] sm:%s260]
                %330 = vst [vmem:[%s268 + $0x78] sm:%s260] %v329
                %v331 = vld [vmem:[%s267 + $0xf8] sm:%s260]
                %332 = vst [vmem:[%s268 + $0x7c] sm:%s260] %v331
                %v333 = vld [vmem:[%s267 + $0x100] sm:%s260]
                %334 = vst [vmem:[%s268 + $0x80] sm:%s260] %v333
                %v335 = vld [vmem:[%s267 + $0x108] sm:%s260]
                %336 = vst [vmem:[%s268 + $0x84] sm:%s260] %v335
                %v337 = vld [vmem:[%s267 + $0x110] sm:%s260]
                %338 = vst [vmem:[%s268 + $0x88] sm:%s260] %v337
                %v339 = vld [vmem:[%s267 + $0x118] sm:%s260]
                %340 = vst [vmem:[%s268 + $0x8c] sm:%s260] %v339
                %v341 = vld [vmem:[%s267 + $0x120] sm:%s260]
                %342 = vst [vmem:[%s268 + $0x90] sm:%s260] %v341
                %v343 = vld [vmem:[%s267 + $0x128] sm:%s260]
                %344 = vst [vmem:[%s268 + $0x94] sm:%s260] %v343
                %v345 = vld [vmem:[%s267 + $0x130] sm:%s260]
                %346 = vst [vmem:[%s268 + $0x98] sm:%s260] %v345
                %v347 = vld [vmem:[%s267 + $0x138] sm:%s260]
                %348 = vst [vmem:[%s268 + $0x9c] sm:%s260] %v347
                %v349 = vld [vmem:[%s267 + $0x140] sm:%s260]
                %350 = vst [vmem:[%s268 + $0xa0] sm:%s260] %v349
                %v351 = vld [vmem:[%s267 + $0x148] sm:%s260]
                %352 = vst [vmem:[%s268 + $0xa4] sm:%s260] %v351
                %v353 = vld [vmem:[%s267 + $0x150] sm:%s260]
                %354 = vst [vmem:[%s268 + $0xa8] sm:%s260] %v353
                %v355 = vld [vmem:[%s267 + $0x158] sm:%s260]
                %356 = vst [vmem:[%s268 + $0xac] sm:%s260] %v355
                %v357 = vld [vmem:[%s267 + $0x160] sm:%s260]
                %358 = vst [vmem:[%s268 + $0xb0] sm:%s260] %v357
                %v359 = vld [vmem:[%s267 + $0x168] sm:%s260]
                %360 = vst [vmem:[%s268 + $0xb4] sm:%s260] %v359
                %v361 = vld [vmem:[%s267 + $0x170] sm:%s260]
                %362 = vst [vmem:[%s268 + $0xb8] sm:%s260] %v361
                %v363 = vld [vmem:[%s267 + $0x178] sm:%s260]
                %364 = vst [vmem:[%s268 + $0xbc] sm:%s260] %v363
                %v365 = vld [vmem:[%s267 + $0x180] sm:%s260]
                %366 = vst [vmem:[%s268 + $0xc0] sm:%s260] %v365
                %v367 = vld [vmem:[%s267 + $0x188] sm:%s260]
                %368 = vst [vmem:[%s268 + $0xc4] sm:%s260] %v367
                %v369 = vld [vmem:[%s267 + $0x190] sm:%s260]
                %370 = vst [vmem:[%s268 + $0xc8] sm:%s260] %v369
                %v371 = vld [vmem:[%s267 + $0x198] sm:%s260]
                %372 = vst [vmem:[%s268 + $0xcc] sm:%s260] %v371
                %v373 = vld [vmem:[%s267 + $0x1a0] sm:%s260]
                %374 = vst [vmem:[%s268 + $0xd0] sm:%s260] %v373
                %v375 = vld [vmem:[%s267 + $0x1a8] sm:%s260]
                %376 = vst [vmem:[%s268 + $0xd4] sm:%s260] %v375
                %v377 = vld [vmem:[%s267 + $0x1b0] sm:%s260]
                %378 = vst [vmem:[%s268 + $0xd8] sm:%s260] %v377
                %v379 = vld [vmem:[%s267 + $0x1b8] sm:%s260]
                %380 = vst [vmem:[%s268 + $0xdc] sm:%s260] %v379
                %v381 = vld [vmem:[%s267 + $0x1c0] sm:%s260]
                %382 = vst [vmem:[%s268 + $0xe0] sm:%s260] %v381
                %v383 = vld [vmem:[%s267 + $0x1c8] sm:%s260]
                %384 = vst [vmem:[%s268 + $0xe4] sm:%s260] %v383
                %v385 = vld [vmem:[%s267 + $0x1d0] sm:%s260]
                %386 = vst [vmem:[%s268 + $0xe8] sm:%s260] %v385
                %v387 = vld [vmem:[%s267 + $0x1d8] sm:%s260]
                %388 = vst [vmem:[%s268 + $0xec] sm:%s260] %v387
                %v389 = vld [vmem:[%s267 + $0x1e0] sm:%s260]
                %390 = vst [vmem:[%s268 + $0xf0] sm:%s260] %v389
                %v391 = vld [vmem:[%s267 + $0x1e8] sm:%s260]
                %392 = vst [vmem:[%s268 + $0xf4] sm:%s260] %v391
                %v393 = vld [vmem:[%s267 + $0x1f0] sm:%s260]
                %394 = vst [vmem:[%s268 + $0xf8] sm:%s260] %v393
                %v395 = vld [vmem:[%s267 + $0x1f8] sm:%s260]
                %396 = vst [vmem:[%s268 + $0xfc] sm:%s260] %v395
              $region60: #{alexnet_pre_forward.10} parent=54 // loop_footer
                %s266 = sadd.s32 1, %s262
              $region61: #{alexnet_pre_forward.10} parent=54 // loop_footer_branch
                %261 = sbr.rel target = $region57
              $region62: #{alexnet_pre_forward.10} parent=54 // loop_exit
                _
            $region55: #{alexnet_pre_forward.10} parent=46 // pred_fallthru
              _
          $region47: #{alexnet_pre_forward.10} parent=42 // pred_fallthru
            _
          %545 = vnop
        $region43: #{alexnet_pre_forward.10} parent=15 // pred_fallthru
          _
        // Predicated region
        $region81: #{alexnet_pre_forward.10} parent=15 // pred_check
          %p546 = pneg %p104
        $region82: #{alexnet_pre_forward.10} parent=15 // pred_check_branch
          %548 = sbr.rel (%p546) target = $region84
        $region83: #{alexnet_pre_forward.10} parent=15 // pred_region
          %p549 = scmp.lt.s32.totalorder %s17, 1
          %s550 = scalar_select %p549, %s17, 1
          %s551 = scalar_lea.vmem %s2, %s550
        $region84: #{alexnet_pre_forward.10} parent=15 // pred_fallthru
          _
      $region16: #{alexnet_pre_forward.10} parent=5 // pred_fallthru
        _
      %p552 = scmp.le.s32.totalorder 1, %s9
      %p553 = scmp.lt.s32.totalorder %s9, 9
      %p554 = pnand %p552, %p553
      %p555 = pneg %p554
      // Predicated region
      $region85: #{alexnet_pre_forward.10} parent=5 // pred_check
        _
      $region86: #{alexnet_pre_forward.10} parent=5 // pred_check_branch
        %557 = sbr.rel (%p554) target = $region88
      $region87: #{alexnet_pre_forward.10} parent=5 // pred_region
        %s558 = ssub.s32 %s9, 1
        %s559 = sand.u32 %s43, 1
        %s560 = sand.u32 %s43, 1
        %s561 = smul.addr %s560, 224
        %s562 = scalar_lea.vmem [#allocation3], %s561
        // Predicated region
        $region89: #{alexnet_pre_forward.10} parent=87 // pred_check
          %p563 = pneg %p56
        $region90: #{alexnet_pre_forward.10} parent=87 // pred_check_branch
          %565 = sbr.rel (%p563) target = $region92
        $region91: #{alexnet_pre_forward.10} parent=87 // pred_region
          _
        $region92: #{alexnet_pre_forward.10} parent=87 // pred_fallthru
          _
        %s566 = sand.u32 %s71, 1
        %s567 = sand.u32 %s71, 1
        %s568 = smul.addr %s567, 256
        %s569 = scalar_lea.vmem [#allocation4], %s568
        // Predicated region
        $region93: #{alexnet_pre_forward.10} parent=87 // pred_check
          %p570 = pneg %p84
        $region94: #{alexnet_pre_forward.10} parent=87 // pred_check_branch
          %572 = sbr.rel (%p570) target = $region96
        $region95: #{alexnet_pre_forward.10} parent=87 // pred_region
          _
        $region96: #{alexnet_pre_forward.10} parent=87 // pred_fallthru
          _
        %s573 = sand.u32 %s43, 1
        %s574 = sand.u32 %s43, 1
        %s575 = smul.addr %s574, 224
        %s576 = scalar_lea.vmem [#allocation3], %s575
        %p577 = pneg %p56
        %p578 = pneg %p53
        %s579 = sand.u32 %s71, 1
        %s580 = sand.u32 %s71, 1
        %s581 = smul.addr %s580, 256
        %s582 = scalar_lea.vmem [#allocation4], %s581
        %p583 = pneg %p84
        %p584 = pneg %p81
        %p585 = scmp.lt.s32.totalorder %s20, 1
        %s586 = scalar_select %p585, %s20, 1
        %s587 = scalar_lea.vmem %s2, %s586
        %p588 = pneg %p110
        %p589 = pneg %p107
        %p590 = pneg %p138
        %p591 = pneg %p135
        %s592 = sand.u32 %s125, 1
        %s593 = sand.u32 %s125, 1
        %s594 = smul.addr %s593, 56
        %s595 = scalar_lea.vmem [#allocation5], %s594
        %s596 = smul.u32 14, %s19
        %s597 = smul.u32 4, %s21
        %s598 = smul.u32 64, %s21
        %p599 = scmp.lt.s32.totalorder %s20, 1
        %s600 = scalar_select %p599, %s20, 1
        %s601 = scalar_lea.vmem %s2, %s600
        %s602 = smul.u32 14, %s19
        %p603 = scmp.eq.s32.totalorder %s21, 0
        // Predicated region
        $region97: #{alexnet_pre_forward.10} parent=87 // pred_check
          %p604 = pneg %p603
        $region98: #{alexnet_pre_forward.10} parent=87 // pred_check_branch
          %606 = sbr.rel (%p604) target = $region100
        $region99: #{alexnet_pre_forward.10} parent=87 // pred_region
          %607 = vst [vmem:[#allocation2] sm:$0xff] 0.0
          %608 = vst [vmem:[#allocation2 + $0x8] sm:$0xff] 0.0
          %609 = vst [vmem:[#allocation2 + $0x10] sm:$0xff] 0.0
          %610 = vst [vmem:[#allocation2 + $0x18] sm:$0xff] 0.0
          %611 = vst [vmem:[#allocation2 + $0x20] sm:$0xff] 0.0
          %612 = vst [vmem:[#allocation2 + $0x28] sm:$0xff] 0.0
          %613 = vst [vmem:[#allocation2 + $0x30] sm:$0xff] 0.0
          %614 = vst [vmem:[#allocation2 + $0x38] sm:$0xff] 0.0
          %615 = vst [vmem:[#allocation2 + $0x40] sm:$0xff] 0.0
          %616 = vst [vmem:[#allocation2 + $0x48] sm:$0xff] 0.0
          %617 = vst [vmem:[#allocation2 + $0x50] sm:$0xff] 0.0
          %618 = vst [vmem:[#allocation2 + $0x58] sm:$0xff] 0.0
          %619 = vst [vmem:[#allocation2 + $0x60] sm:$0xff] 0.0
          %620 = vst [vmem:[#allocation2 + $0x68] sm:$0xff] 0.0
        $region100: #{alexnet_pre_forward.10} parent=87 // pred_fallthru
          _
        %v621 = vld [vmem:[#allocation2] sm:$0xff]
        %v622 = vld [vmem:[#allocation2 + $0x8] sm:$0xff]
        %v623 = vld [vmem:[#allocation2 + $0x10] sm:$0xff]
        %v624 = vld [vmem:[#allocation2 + $0x18] sm:$0xff]
        %v625 = vld [vmem:[#allocation2 + $0x20] sm:$0xff]
        %v626 = vld [vmem:[#allocation2 + $0x28] sm:$0xff]
        %v627 = vld [vmem:[#allocation2 + $0x30] sm:$0xff]
        %v628 = vld [vmem:[#allocation2 + $0x38] sm:$0xff]
        %v629 = vld [vmem:[#allocation2 + $0x40] sm:$0xff]
        %v630 = vld [vmem:[#allocation2 + $0x48] sm:$0xff]
        %v631 = vld [vmem:[#allocation2 + $0x50] sm:$0xff]
        %v632 = vld [vmem:[#allocation2 + $0x58] sm:$0xff]
        %v633 = vld [vmem:[#allocation2 + $0x60] sm:$0xff]
        %v634 = vld [vmem:[#allocation2 + $0x68] sm:$0xff]
        %v635 = vld [vmem:[%s562] sm:$0xff]
        %v636 = vld [vmem:[%s562 + $0x8] sm:$0xff]
        %v637 = vld [vmem:[%s562 + $0x10] sm:$0xff]
        %v638 = vld [vmem:[%s562 + $0x18] sm:$0xff]
        %v639 = vld [vmem:[%s562 + $0x20] sm:$0xff]
        %v640 = vld [vmem:[%s562 + $0x28] sm:$0xff]
        %v641 = vld [vmem:[%s562 + $0x30] sm:$0xff]
        %v642 = vld [vmem:[%s562 + $0x38] sm:$0xff]
        %v643 = vld [vmem:[%s562 + $0x40] sm:$0xff]
        %v644 = vld [vmem:[%s562 + $0x48] sm:$0xff]
        %v645 = vld [vmem:[%s562 + $0x50] sm:$0xff]
        %v646 = vld [vmem:[%s562 + $0x58] sm:$0xff]
        %v647 = vld [vmem:[%s562 + $0x60] sm:$0xff]
        %v648 = vld [vmem:[%s562 + $0x68] sm:$0xff]
        %v649 = vld [vmem:[%s562 + $0x70] sm:$0xff]
        %v650 = vld [vmem:[%s562 + $0x78] sm:$0xff]
        %v651 = vld [vmem:[%s562 + $0x80] sm:$0xff]
        %v652 = vld [vmem:[%s562 + $0x88] sm:$0xff]
        %v653 = vld [vmem:[%s562 + $0x90] sm:$0xff]
        %v654 = vld [vmem:[%s562 + $0x98] sm:$0xff]
        %v655 = vld [vmem:[%s562 + $0xa0] sm:$0xff]
        %v656 = vld [vmem:[%s562 + $0xa8] sm:$0xff]
        %v657 = vld [vmem:[%s562 + $0xb0] sm:$0xff]
        %v658 = vld [vmem:[%s562 + $0xb8] sm:$0xff]
        %v659 = vld [vmem:[%s562 + $0xc0] sm:$0xff]
        %v660 = vld [vmem:[%s562 + $0xc8] sm:$0xff]
        %v661 = vld [vmem:[%s562 + $0xd0] sm:$0xff]
        %v662 = vld [vmem:[%s562 + $0xd8] sm:$0xff]
        %v663 = vld [vmem:[%s569] sm:$0xf]
        %v664 = vld [vmem:[%s569 + $0x4] sm:$0xf]
        %v665 = vld [vmem:[%s569 + $0x8] sm:$0xf]
        %v666 = vld [vmem:[%s569 + $0xc] sm:$0xf]
        %v667 = vld [vmem:[%s569 + $0x10] sm:$0xf]
        %v668 = vld [vmem:[%s569 + $0x14] sm:$0xf]
        %v669 = vld [vmem:[%s569 + $0x18] sm:$0xf]
        %v670 = vld [vmem:[%s569 + $0x1c] sm:$0xf]
        %v671 = vld [vmem:[%s569 + $0x20] sm:$0xf]
        %v672 = vld [vmem:[%s569 + $0x24] sm:$0xf]
        %v673 = vld [vmem:[%s569 + $0x28] sm:$0xf]
        %v674 = vld [vmem:[%s569 + $0x2c] sm:$0xf]
        %v675 = vld [vmem:[%s569 + $0x30] sm:$0xf]
        %v676 = vld [vmem:[%s569 + $0x34] sm:$0xf]
        %v677 = vld [vmem:[%s569 + $0x38] sm:$0xf]
        %v678 = vld [vmem:[%s569 + $0x3c] sm:$0xf]
        %v679 = vld [vmem:[%s569 + $0x40] sm:$0xf]
        %v680 = vld [vmem:[%s569 + $0x44] sm:$0xf]
        %v681 = vld [vmem:[%s569 + $0x48] sm:$0xf]
        %v682 = vld [vmem:[%s569 + $0x4c] sm:$0xf]
        %v683 = vld [vmem:[%s569 + $0x50] sm:$0xf]
        %v684 = vld [vmem:[%s569 + $0x54] sm:$0xf]
        %v685 = vld [vmem:[%s569 + $0x58] sm:$0xf]
        %v686 = vld [vmem:[%s569 + $0x5c] sm:$0xf]
        %v687 = vld [vmem:[%s569 + $0x60] sm:$0xf]
        %v688 = vld [vmem:[%s569 + $0x64] sm:$0xf]
        %v689 = vld [vmem:[%s569 + $0x68] sm:$0xf]
        %v690 = vld [vmem:[%s569 + $0x6c] sm:$0xf]
        %v691 = vld [vmem:[%s569 + $0x70] sm:$0xf]
        %v692 = vld [vmem:[%s569 + $0x74] sm:$0xf]
        %v693 = vld [vmem:[%s569 + $0x78] sm:$0xf]
        %v694 = vld [vmem:[%s569 + $0x7c] sm:$0xf]
        %v695 = vld [vmem:[%s569 + $0x80] sm:$0xf]
        %v696 = vld [vmem:[%s569 + $0x84] sm:$0xf]
        %v697 = vld [vmem:[%s569 + $0x88] sm:$0xf]
        %v698 = vld [vmem:[%s569 + $0x8c] sm:$0xf]
        %v699 = vld [vmem:[%s569 + $0x90] sm:$0xf]
        %v700 = vld [vmem:[%s569 + $0x94] sm:$0xf]
        %v701 = vld [vmem:[%s569 + $0x98] sm:$0xf]
        %v702 = vld [vmem:[%s569 + $0x9c] sm:$0xf]
        %v703 = vld [vmem:[%s569 + $0xa0] sm:$0xf]
        %v704 = vld [vmem:[%s569 + $0xa4] sm:$0xf]
        %v705 = vld [vmem:[%s569 + $0xa8] sm:$0xf]
        %v706 = vld [vmem:[%s569 + $0xac] sm:$0xf]
        %v707 = vld [vmem:[%s569 + $0xb0] sm:$0xf]
        %v708 = vld [vmem:[%s569 + $0xb4] sm:$0xf]
        %v709 = vld [vmem:[%s569 + $0xb8] sm:$0xf]
        %v710 = vld [vmem:[%s569 + $0xbc] sm:$0xf]
        %v711 = vld [vmem:[%s569 + $0xc0] sm:$0xf]
        %v712 = vld [vmem:[%s569 + $0xc4] sm:$0xf]
        %v713 = vld [vmem:[%s569 + $0xc8] sm:$0xf]
        %v714 = vld [vmem:[%s569 + $0xcc] sm:$0xf]
        %v715 = vld [vmem:[%s569 + $0xd0] sm:$0xf]
        %v716 = vld [vmem:[%s569 + $0xd4] sm:$0xf]
        %v717 = vld [vmem:[%s569 + $0xd8] sm:$0xf]
        %v718 = vld [vmem:[%s569 + $0xdc] sm:$0xf]
        %v719 = vld [vmem:[%s569 + $0xe0] sm:$0xf]
        %v720 = vld [vmem:[%s569 + $0xe4] sm:$0xf]
        %v721 = vld [vmem:[%s569 + $0xe8] sm:$0xf]
        %v722 = vld [vmem:[%s569 + $0xec] sm:$0xf]
        %v723 = vld [vmem:[%s569 + $0xf0] sm:$0xf]
        %v724 = vld [vmem:[%s569 + $0xf4] sm:$0xf]
        %v725 = vld [vmem:[%s569 + $0xf8] sm:$0xf]
        %v726 = vld [vmem:[%s569 + $0xfc] sm:$0xf]
        %v755 = vunpack.c.l.b16 %v635
        %v756 = vunpack.c.h.b16 %v635
        %v757 = vunpack.c.l.b16 %v636
        %v758 = vunpack.c.h.b16 %v636
        %v759 = vunpack.c.l.b16 %v637
        %v760 = vunpack.c.h.b16 %v637
        %v761 = vunpack.c.l.b16 %v638
        %v762 = vunpack.c.h.b16 %v638
        %v763 = vunpack.c.l.b16 %v639
        %v764 = vunpack.c.h.b16 %v639
        %v765 = vunpack.c.l.b16 %v640
        %v766 = vunpack.c.h.b16 %v640
        %v767 = vunpack.c.l.b16 %v641
        %v768 = vunpack.c.h.b16 %v641
        %v769 = vunpack.c.l.b16 %v642
        %v770 = vunpack.c.h.b16 %v642
        %v771 = vunpack.c.l.b16 %v643
        %v772 = vunpack.c.h.b16 %v643
        %v773 = vunpack.c.l.b16 %v644
        %v774 = vunpack.c.h.b16 %v644
        %v775 = vunpack.c.l.b16 %v645
        %v776 = vunpack.c.h.b16 %v645
        %v777 = vunpack.c.l.b16 %v646
        %v778 = vunpack.c.h.b16 %v646
        %v779 = vunpack.c.l.b16 %v647
        %v780 = vunpack.c.h.b16 %v647
        %v781 = vunpack.c.l.b16 %v648
        %v782 = vunpack.c.h.b16 %v648
        %v783 = vunpack.c.l.b16 %v649
        %v784 = vunpack.c.h.b16 %v649
        %v785 = vunpack.c.l.b16 %v650
        %v786 = vunpack.c.h.b16 %v650
        %v787 = vunpack.c.l.b16 %v651
        %v788 = vunpack.c.h.b16 %v651
        %v789 = vunpack.c.l.b16 %v652
        %v790 = vunpack.c.h.b16 %v652
        %v791 = vunpack.c.l.b16 %v653
        %v792 = vunpack.c.h.b16 %v653
        %v793 = vunpack.c.l.b16 %v654
        %v794 = vunpack.c.h.b16 %v654
        %v795 = vunpack.c.l.b16 %v655
        %v796 = vunpack.c.h.b16 %v655
        %v797 = vunpack.c.l.b16 %v656
        %v798 = vunpack.c.h.b16 %v656
        %v799 = vunpack.c.l.b16 %v657
        %v800 = vunpack.c.h.b16 %v657
        %v801 = vunpack.c.l.b16 %v658
        %v802 = vunpack.c.h.b16 %v658
        %v803 = vunpack.c.l.b16 %v659
        %v804 = vunpack.c.h.b16 %v659
        %v805 = vunpack.c.l.b16 %v660
        %v806 = vunpack.c.h.b16 %v660
        %v807 = vunpack.c.l.b16 %v661
        %v808 = vunpack.c.h.b16 %v661
        %v809 = vunpack.c.l.b16 %v662
        %v810 = vunpack.c.h.b16 %v662
        %v811 = vpack.c.b16 %v759, %v755
        %v812 = vpack.c.b16 %v760, %v756
        %v813 = vpack.c.b16 %v761, %v757
        %v814 = vpack.c.b16 %v762, %v758
        %v815 = vpack.c.b16 %v767, %v763
        %v816 = vpack.c.b16 %v768, %v764
        %v817 = vpack.c.b16 %v769, %v765
        %v818 = vpack.c.b16 %v770, %v766
        %v819 = vpack.c.b16 %v775, %v771
        %v820 = vpack.c.b16 %v776, %v772
        %v821 = vpack.c.b16 %v777, %v773
        %v822 = vpack.c.b16 %v778, %v774
        %v823 = vpack.c.b16 %v783, %v779
        %v824 = vpack.c.b16 %v784, %v780
        %v825 = vpack.c.b16 %v785, %v781
        %v826 = vpack.c.b16 %v786, %v782
        %v827 = vpack.c.b16 %v791, %v787
        %v828 = vpack.c.b16 %v792, %v788
        %v829 = vpack.c.b16 %v793, %v789
        %v830 = vpack.c.b16 %v794, %v790
        %v831 = vpack.c.b16 %v799, %v795
        %v832 = vpack.c.b16 %v800, %v796
        %v833 = vpack.c.b16 %v801, %v797
        %v834 = vpack.c.b16 %v802, %v798
        %v835 = vpack.c.b16 %v807, %v803
        %v836 = vpack.c.b16 %v808, %v804
        %v837 = vpack.c.b16 %v809, %v805
        %v838 = vpack.c.b16 %v810, %v806
        %v931 = vunpack.c.l.b16 %v663
        %v932 = vunpack.c.l.b16 %v664
        %v933 = vunpack.c.l.b16 %v665
        %v934 = vunpack.c.l.b16 %v666
        %v935 = vunpack.c.l.b16 %v667
        %v936 = vunpack.c.l.b16 %v668
        %v937 = vunpack.c.l.b16 %v669
        %v938 = vunpack.c.l.b16 %v670
        %v939 = vunpack.c.l.b16 %v671
        %v940 = vunpack.c.l.b16 %v672
        %v941 = vunpack.c.l.b16 %v673
        %v942 = vunpack.c.l.b16 %v674
        %v943 = vunpack.c.l.b16 %v675
        %v944 = vunpack.c.l.b16 %v676
        %v945 = vunpack.c.l.b16 %v677
        %v946 = vunpack.c.l.b16 %v678
        %v947 = vunpack.c.l.b16 %v679
        %v948 = vunpack.c.l.b16 %v680
        %v949 = vunpack.c.l.b16 %v681
        %v950 = vunpack.c.l.b16 %v682
        %v951 = vunpack.c.l.b16 %v683
        %v952 = vunpack.c.l.b16 %v684
        %v953 = vunpack.c.l.b16 %v685
        %v954 = vunpack.c.l.b16 %v686
        %v955 = vunpack.c.l.b16 %v687
        %v956 = vunpack.c.l.b16 %v688
        %v957 = vunpack.c.l.b16 %v689
        %v958 = vunpack.c.l.b16 %v690
        %v959 = vunpack.c.l.b16 %v691
        %v960 = vunpack.c.l.b16 %v692
        %v961 = vunpack.c.l.b16 %v693
        %v962 = vunpack.c.l.b16 %v694
        %v963 = vunpack.c.l.b16 %v695
        %v964 = vunpack.c.l.b16 %v696
        %v965 = vunpack.c.l.b16 %v697
        %v966 = vunpack.c.l.b16 %v698
        %v967 = vunpack.c.l.b16 %v699
        %v968 = vunpack.c.l.b16 %v700
        %v969 = vunpack.c.l.b16 %v701
        %v970 = vunpack.c.l.b16 %v702
        %v971 = vunpack.c.l.b16 %v703
        %v972 = vunpack.c.l.b16 %v704
        %v973 = vunpack.c.l.b16 %v705
        %v974 = vunpack.c.l.b16 %v706
        %v975 = vunpack.c.l.b16 %v707
        %v976 = vunpack.c.l.b16 %v708
        %v977 = vunpack.c.l.b16 %v709
        %v978 = vunpack.c.l.b16 %v710
        %v979 = vunpack.c.l.b16 %v711
        %v980 = vunpack.c.l.b16 %v712
        %v981 = vunpack.c.l.b16 %v713
        %v982 = vunpack.c.l.b16 %v714
        %v983 = vunpack.c.l.b16 %v715
        %v984 = vunpack.c.l.b16 %v716
        %v985 = vunpack.c.l.b16 %v717
        %v986 = vunpack.c.l.b16 %v718
        %v987 = vunpack.c.l.b16 %v719
        %v988 = vunpack.c.l.b16 %v720
        %v989 = vunpack.c.l.b16 %v721
        %v990 = vunpack.c.l.b16 %v722
        %v991 = vunpack.c.l.b16 %v723
        %v992 = vunpack.c.l.b16 %v724
        %v993 = vunpack.c.l.b16 %v725
        %v994 = vunpack.c.l.b16 %v726
        %v995 = vpack.c.b16 %v932, %v931
        %v996 = vpack.c.b16 %v934, %v933
        %v997 = vpack.c.b16 %v936, %v935
        %v998 = vpack.c.b16 %v938, %v937
        %v999 = vpack.c.b16 %v940, %v939
        %v1000 = vpack.c.b16 %v942, %v941
        %v1001 = vpack.c.b16 %v944, %v943
        %v1002 = vpack.c.b16 %v946, %v945
        %v1003 = vpack.c.b16 %v948, %v947
        %v1004 = vpack.c.b16 %v950, %v949
        %v1005 = vpack.c.b16 %v952, %v951
        %v1006 = vpack.c.b16 %v954, %v953
        %v1007 = vpack.c.b16 %v956, %v955
        %v1008 = vpack.c.b16 %v958, %v957
        %v1009 = vpack.c.b16 %v960, %v959
        %v1010 = vpack.c.b16 %v962, %v961
        %v1011 = vpack.c.b16 %v964, %v963
        %v1012 = vpack.c.b16 %v966, %v965
        %v1013 = vpack.c.b16 %v968, %v967
        %v1014 = vpack.c.b16 %v970, %v969
        %v1015 = vpack.c.b16 %v972, %v971
        %v1016 = vpack.c.b16 %v974, %v973
        %v1017 = vpack.c.b16 %v976, %v975
        %v1018 = vpack.c.b16 %v978, %v977
        %v1019 = vpack.c.b16 %v980, %v979
        %v1020 = vpack.c.b16 %v982, %v981
        %v1021 = vpack.c.b16 %v984, %v983
        %v1022 = vpack.c.b16 %v986, %v985
        %v1023 = vpack.c.b16 %v988, %v987
        %v1024 = vpack.c.b16 %v990, %v989
        %v1025 = vpack.c.b16 %v992, %v991
        %v1026 = vpack.c.b16 %v994, %v993
        %1059 = vmatpush.bf16.msra.mxu0 %v1002
        %1060 = vmatpush.bf16.msra.mxu0 %v1001
        %1061 = vmatpush.bf16.msra.mxu0 %v1000
        %1062 = vmatpush.bf16.msra.mxu0 %v999
        %1063 = vmatpush.bf16.msra.mxu0 %v998
        %1064 = vmatpush.bf16.msra.mxu0 %v997
        %1065 = vmatpush.bf16.msra.mxu0 %v996
        %1066 = vmatpush.bf16.msra.mxu0 %v995
        %1067 = vmatmul.bf16.gmra.mxu0 %v811
        %v1068 = vpop.f32.mrf.mxu0
        %v1069 = vadd.f32 0.0, %v1068
        %v1070 = vpop.f32.mrf.mxu0
        %v1071 = vadd.f32 0.0, %v1070
        %1072 = vmatmul.bf16.gmra.mxu0 %v815
        %v1073 = vpop.f32.mrf.mxu0
        %v1074 = vadd.f32 0.0, %v1073
        %v1075 = vpop.f32.mrf.mxu0
        %v1076 = vadd.f32 0.0, %v1075
        %1077 = vmatmul.bf16.gmra.mxu0 %v819
        %v1078 = vpop.f32.mrf.mxu0
        %v1079 = vadd.f32 0.0, %v1078
        %v1080 = vpop.f32.mrf.mxu0
        %v1081 = vadd.f32 0.0, %v1080
        %1082 = vmatmul.bf16.gmra.mxu0 %v823
        %v1083 = vpop.f32.mrf.mxu0
        %v1084 = vadd.f32 0.0, %v1083
        %v1085 = vpop.f32.mrf.mxu0
        %v1086 = vadd.f32 0.0, %v1085
        %1087 = vmatmul.bf16.gmra.mxu0 %v827
        %v1088 = vpop.f32.mrf.mxu0
        %v1089 = vadd.f32 0.0, %v1088
        %v1090 = vpop.f32.mrf.mxu0
        %v1091 = vadd.f32 0.0, %v1090
        %1092 = vmatmul.bf16.gmra.mxu0 %v831
        %v1093 = vpop.f32.mrf.mxu0
        %v1094 = vadd.f32 0.0, %v1093
        %v1095 = vpop.f32.mrf.mxu0
        %v1096 = vadd.f32 0.0, %v1095
        %1097 = vmatmul.bf16.gmra.mxu0 %v835
        %v1098 = vpop.f32.mrf.mxu0
        %v1099 = vadd.f32 0.0, %v1098
        %v1100 = vpop.f32.mrf.mxu0
        %v1101 = vadd.f32 0.0, %v1100
        %1102 = vdwg.mxu0
        %1103 = vmatpush.bf16.msra.mxu0 %v1010
        %1104 = vmatpush.bf16.msra.mxu0 %v1009
        %1105 = vmatpush.bf16.msra.mxu0 %v1008
        %1106 = vmatpush.bf16.msra.mxu0 %v1007
        %1107 = vmatpush.bf16.msra.mxu0 %v1006
        %1108 = vmatpush.bf16.msra.mxu0 %v1005
        %1109 = vmatpush.bf16.msra.mxu0 %v1004
        %1110 = vmatpush.bf16.msra.mxu0 %v1003
        %1111 = vmatmul.bf16.gmra.mxu0 %v812
        %v1112 = vpop.f32.mrf.mxu0
        %v1113 = vadd.f32 %v1069, %v1112
        %v1114 = vpop.f32.mrf.mxu0
        %v1115 = vadd.f32 %v1071, %v1114
        %1116 = vmatmul.bf16.gmra.mxu0 %v816
        %v1117 = vpop.f32.mrf.mxu0
        %v1118 = vadd.f32 %v1074, %v1117
        %v1119 = vpop.f32.mrf.mxu0
        %v1120 = vadd.f32 %v1076, %v1119
        %1121 = vmatmul.bf16.gmra.mxu0 %v820
        %v1122 = vpop.f32.mrf.mxu0
        %v1123 = vadd.f32 %v1079, %v1122
        %v1124 = vpop.f32.mrf.mxu0
        %v1125 = vadd.f32 %v1081, %v1124
        %1126 = vmatmul.bf16.gmra.mxu0 %v824
        %v1127 = vpop.f32.mrf.mxu0
        %v1128 = vadd.f32 %v1084, %v1127
        %v1129 = vpop.f32.mrf.mxu0
        %v1130 = vadd.f32 %v1086, %v1129
        %1131 = vmatmul.bf16.gmra.mxu0 %v828
        %v1132 = vpop.f32.mrf.mxu0
        %v1133 = vadd.f32 %v1089, %v1132
        %v1134 = vpop.f32.mrf.mxu0
        %v1135 = vadd.f32 %v1091, %v1134
        %1136 = vmatmul.bf16.gmra.mxu0 %v832
        %v1137 = vpop.f32.mrf.mxu0
        %v1138 = vadd.f32 %v1094, %v1137
        %v1139 = vpop.f32.mrf.mxu0
        %v1140 = vadd.f32 %v1096, %v1139
        %1141 = vmatmul.bf16.gmra.mxu0 %v836
        %v1142 = vpop.f32.mrf.mxu0
        %v1143 = vadd.f32 %v1099, %v1142
        %v1144 = vpop.f32.mrf.mxu0
        %v1145 = vadd.f32 %v1101, %v1144
        %1146 = vdwg.mxu0
        %1147 = vmatpush.bf16.msra.mxu0 %v1018
        %1148 = vmatpush.bf16.msra.mxu0 %v1017
        %1149 = vmatpush.bf16.msra.mxu0 %v1016
        %1150 = vmatpush.bf16.msra.mxu0 %v1015
        %1151 = vmatpush.bf16.msra.mxu0 %v1014
        %1152 = vmatpush.bf16.msra.mxu0 %v1013
        %1153 = vmatpush.bf16.msra.mxu0 %v1012
        %1154 = vmatpush.bf16.msra.mxu0 %v1011
        %1155 = vmatmul.bf16.gmra.mxu0 %v813
        %v1156 = vpop.f32.mrf.mxu0
        %v1157 = vadd.f32 %v1113, %v1156
        %v1158 = vpop.f32.mrf.mxu0
        %v1159 = vadd.f32 %v1115, %v1158
        %1160 = vmatmul.bf16.gmra.mxu0 %v817
        %v1161 = vpop.f32.mrf.mxu0
        %v1162 = vadd.f32 %v1118, %v1161
        %v1163 = vpop.f32.mrf.mxu0
        %v1164 = vadd.f32 %v1120, %v1163
        %1165 = vmatmul.bf16.gmra.mxu0 %v821
        %v1166 = vpop.f32.mrf.mxu0
        %v1167 = vadd.f32 %v1123, %v1166
        %v1168 = vpop.f32.mrf.mxu0
        %v1169 = vadd.f32 %v1125, %v1168
        %1170 = vmatmul.bf16.gmra.mxu0 %v825
        %v1171 = vpop.f32.mrf.mxu0
        %v1172 = vadd.f32 %v1128, %v1171
        %v1173 = vpop.f32.mrf.mxu0
        %v1174 = vadd.f32 %v1130, %v1173
        %1175 = vmatmul.bf16.gmra.mxu0 %v829
        %v1176 = vpop.f32.mrf.mxu0
        %v1177 = vadd.f32 %v1133, %v1176
        %v1178 = vpop.f32.mrf.mxu0
        %v1179 = vadd.f32 %v1135, %v1178
        %1180 = vmatmul.bf16.gmra.mxu0 %v833
        %v1181 = vpop.f32.mrf.mxu0
        %v1182 = vadd.f32 %v1138, %v1181
        %v1183 = vpop.f32.mrf.mxu0
        %v1184 = vadd.f32 %v1140, %v1183
        %1185 = vmatmul.bf16.gmra.mxu0 %v837
        %v1186 = vpop.f32.mrf.mxu0
        %v1187 = vadd.f32 %v1143, %v1186
        %v1188 = vpop.f32.mrf.mxu0
        %v1189 = vadd.f32 %v1145, %v1188
        %1190 = vdwg.mxu0
        %1191 = vmatpush.bf16.msra.mxu0 %v1026
        %1192 = vmatpush.bf16.msra.mxu0 %v1025
        %1193 = vmatpush.bf16.msra.mxu0 %v1024
        %1194 = vmatpush.bf16.msra.mxu0 %v1023
        %1195 = vmatpush.bf16.msra.mxu0 %v1022
        %1196 = vmatpush.bf16.msra.mxu0 %v1021
        %1197 = vmatpush.bf16.msra.mxu0 %v1020
        %1198 = vmatpush.bf16.msra.mxu0 %v1019
        %1199 = vmatmul.bf16.gmra.mxu0 %v814
        %v1200 = vpop.f32.mrf.mxu0
        %v1201 = vadd.f32 %v1157, %v1200
        %v1202 = vpop.f32.mrf.mxu0
        %v1203 = vadd.f32 %v1159, %v1202
        %1204 = vmatmul.bf16.gmra.mxu0 %v818
        %v1205 = vpop.f32.mrf.mxu0
        %v1206 = vadd.f32 %v1162, %v1205
        %v1207 = vpop.f32.mrf.mxu0
        %v1208 = vadd.f32 %v1164, %v1207
        %1209 = vmatmul.bf16.gmra.mxu0 %v822
        %v1210 = vpop.f32.mrf.mxu0
        %v1211 = vadd.f32 %v1167, %v1210
        %v1212 = vpop.f32.mrf.mxu0
        %v1213 = vadd.f32 %v1169, %v1212
        %1214 = vmatmul.bf16.gmra.mxu0 %v826
        %v1215 = vpop.f32.mrf.mxu0
        %v1216 = vadd.f32 %v1172, %v1215
        %v1217 = vpop.f32.mrf.mxu0
        %v1218 = vadd.f32 %v1174, %v1217
        %1219 = vmatmul.bf16.gmra.mxu0 %v830
        %v1220 = vpop.f32.mrf.mxu0
        %v1221 = vadd.f32 %v1177, %v1220
        %v1222 = vpop.f32.mrf.mxu0
        %v1223 = vadd.f32 %v1179, %v1222
        %1224 = vmatmul.bf16.gmra.mxu0 %v834
        %v1225 = vpop.f32.mrf.mxu0
        %v1226 = vadd.f32 %v1182, %v1225
        %v1227 = vpop.f32.mrf.mxu0
        %v1228 = vadd.f32 %v1184, %v1227
        %1229 = vmatmul.bf16.gmra.mxu0 %v838
        %v1230 = vpop.f32.mrf.mxu0
        %v1231 = vadd.f32 %v1187, %v1230
        %v1232 = vpop.f32.mrf.mxu0
        %v1233 = vadd.f32 %v1189, %v1232
        %1234 = vdwg.mxu0
        %v1235 = vadd.f32 %v621, %v1201
        %v1236 = vadd.f32 %v622, %v1203
        %v1237 = vadd.f32 %v623, %v1206
        %v1238 = vadd.f32 %v624, %v1208
        %v1239 = vadd.f32 %v625, %v1211
        %v1240 = vadd.f32 %v626, %v1213
        %v1241 = vadd.f32 %v627, %v1216
        %v1242 = vadd.f32 %v628, %v1218
        %v1243 = vadd.f32 %v629, %v1221
        %v1244 = vadd.f32 %v630, %v1223
        %v1245 = vadd.f32 %v631, %v1226
        %v1246 = vadd.f32 %v632, %v1228
        %v1247 = vadd.f32 %v633, %v1231
        %v1248 = vadd.f32 %v634, %v1233
        %1249 = vst [vmem:[#allocation2] sm:$0xff] %v1235
        %1250 = vst [vmem:[#allocation2 + $0x8] sm:$0xff] %v1236
        %1251 = vst [vmem:[#allocation2 + $0x10] sm:$0xff] %v1237
        %1252 = vst [vmem:[#allocation2 + $0x18] sm:$0xff] %v1238
        %1253 = vst [vmem:[#allocation2 + $0x20] sm:$0xff] %v1239
        %1254 = vst [vmem:[#allocation2 + $0x28] sm:$0xff] %v1240
        %1255 = vst [vmem:[#allocation2 + $0x30] sm:$0xff] %v1241
        %1256 = vst [vmem:[#allocation2 + $0x38] sm:$0xff] %v1242
        %1257 = vst [vmem:[#allocation2 + $0x40] sm:$0xff] %v1243
        %1258 = vst [vmem:[#allocation2 + $0x48] sm:$0xff] %v1244
        %1259 = vst [vmem:[#allocation2 + $0x50] sm:$0xff] %v1245
        %1260 = vst [vmem:[#allocation2 + $0x58] sm:$0xff] %v1246
        %1261 = vst [vmem:[#allocation2 + $0x60] sm:$0xff] %v1247
        %1262 = vst [vmem:[#allocation2 + $0x68] sm:$0xff] %v1248
        %p1263 = scmp.eq.s32.totalorder %s21, 3
        // Predicated region
        $region101: #{alexnet_pre_forward.10} parent=87 // pred_check
          %p1264 = pneg %p1263
        $region102: #{alexnet_pre_forward.10} parent=87 // pred_check_branch
          %1266 = sbr.rel (%p1264) target = $region104
        $region103: #{alexnet_pre_forward.10} parent=87 // pred_region
          %v1267 = vld [vmem:[#allocation2] sm:$0xff]
          %v1268 = vld [vmem:[#allocation2 + $0x8] sm:$0xff]
          %v1269 = vld [vmem:[#allocation2 + $0x10] sm:$0xff]
          %v1270 = vld [vmem:[#allocation2 + $0x18] sm:$0xff]
          %v1271 = vld [vmem:[#allocation2 + $0x20] sm:$0xff]
          %v1272 = vld [vmem:[#allocation2 + $0x28] sm:$0xff]
          %v1273 = vld [vmem:[#allocation2 + $0x30] sm:$0xff]
          %v1274 = vld [vmem:[#allocation2 + $0x38] sm:$0xff]
          %v1275 = vld [vmem:[#allocation2 + $0x40] sm:$0xff]
          %v1276 = vld [vmem:[#allocation2 + $0x48] sm:$0xff]
          %v1277 = vld [vmem:[#allocation2 + $0x50] sm:$0xff]
          %v1278 = vld [vmem:[#allocation2 + $0x58] sm:$0xff]
          %v1279 = vld [vmem:[#allocation2 + $0x60] sm:$0xff]
          %v1280 = vld [vmem:[#allocation2 + $0x68] sm:$0xff]
          %v1281 = vld [vmem:[%s601] sm:$0x1]
          %v1283 = vperm.slane %v1281, 0
          %v1285 = vadd.f32 %v1267, %v1283
          %v1286 = vadd.f32 %v1268, %v1283
          %v1287 = vadd.f32 %v1269, %v1283
          %v1288 = vadd.f32 %v1270, %v1283
          %v1289 = vadd.f32 %v1271, %v1283
          %v1290 = vadd.f32 %v1272, %v1283
          %v1291 = vadd.f32 %v1273, %v1283
          %v1292 = vadd.f32 %v1274, %v1283
          %v1293 = vadd.f32 %v1275, %v1283
          %v1294 = vadd.f32 %v1276, %v1283
          %v1295 = vadd.f32 %v1277, %v1283
          %v1296 = vadd.f32 %v1278, %v1283
          %v1297 = vadd.f32 %v1279, %v1283
          %v1298 = vadd.f32 %v1280, %v1283
          %v1299 = vmax.f32 %v1285, 0.0
          %v1300 = vmax.f32 %v1286, 0.0
          %v1301 = vmax.f32 %v1287, 0.0
          %v1302 = vmax.f32 %v1288, 0.0
          %v1303 = vmax.f32 %v1289, 0.0
          %v1304 = vmax.f32 %v1290, 0.0
          %v1305 = vmax.f32 %v1291, 0.0
          %v1306 = vmax.f32 %v1292, 0.0
          %v1307 = vmax.f32 %v1293, 0.0
          %v1308 = vmax.f32 %v1294, 0.0
          %v1309 = vmax.f32 %v1295, 0.0
          %v1310 = vmax.f32 %v1296, 0.0
          %v1311 = vmax.f32 %v1297, 0.0
          %v1312 = vmax.f32 %v1298, 0.0
          %v1313 = vpack.c.bf16 %v1299, %v1299
          %v1314 = vpack.c.bf16 %v1300, %v1300
          %v1315 = vpack.c.bf16 %v1301, %v1301
          %v1316 = vpack.c.bf16 %v1302, %v1302
          %v1317 = vpack.c.bf16 %v1303, %v1303
          %v1318 = vpack.c.bf16 %v1304, %v1304
          %v1319 = vpack.c.bf16 %v1305, %v1305
          %v1320 = vpack.c.bf16 %v1306, %v1306
          %v1321 = vpack.c.bf16 %v1307, %v1307
          %v1322 = vpack.c.bf16 %v1308, %v1308
          %v1323 = vpack.c.bf16 %v1309, %v1309
          %v1324 = vpack.c.bf16 %v1310, %v1310
          %v1325 = vpack.c.bf16 %v1311, %v1311
          %v1326 = vpack.c.bf16 %v1312, %v1312
          %1327 = vst [vmem:[%s595] sm:$0xf] %v1313
          %1328 = vst [vmem:[%s595 + $0x4] sm:$0xf] %v1314
          %1329 = vst [vmem:[%s595 + $0x8] sm:$0xf] %v1315
          %1330 = vst [vmem:[%s595 + $0xc] sm:$0xf] %v1316
          %1331 = vst [vmem:[%s595 + $0x10] sm:$0xf] %v1317
          %1332 = vst [vmem:[%s595 + $0x14] sm:$0xf] %v1318
          %1333 = vst [vmem:[%s595 + $0x18] sm:$0xf] %v1319
          %1334 = vst [vmem:[%s595 + $0x1c] sm:$0xf] %v1320
          %1335 = vst [vmem:[%s595 + $0x20] sm:$0xf] %v1321
          %1336 = vst [vmem:[%s595 + $0x24] sm:$0xf] %v1322
          %1337 = vst [vmem:[%s595 + $0x28] sm:$0xf] %v1323
          %1338 = vst [vmem:[%s595 + $0x2c] sm:$0xf] %v1324
          %1339 = vst [vmem:[%s595 + $0x30] sm:$0xf] %v1325
          %1340 = vst [vmem:[%s595 + $0x34] sm:$0xf] %v1326
        $region104: #{alexnet_pre_forward.10} parent=87 // pred_fallthru
          _
        %s1341 = sand.u32 %s125, 1
        %s1342 = sand.u32 %s125, 1
        %s1343 = smul.addr %s1342, 56
        %s1344 = scalar_lea.vmem [#allocation5], %s1343
        // Predicated region
        $region105: #{alexnet_pre_forward.10} parent=87 // pred_check
          %p1345 = pneg %p135
        $region106: #{alexnet_pre_forward.10} parent=87 // pred_check_branch
          %1347 = sbr.rel (%p1345) target = $region108
        $region107: #{alexnet_pre_forward.10} parent=87 // pred_region
          %s1348 = smul.u32 14, %s19
          %s1349 = smul.addr %s1348, 2
          %s1350 = sadd.s32 %s20, %s1349
          %s1351 = smul.addr %s1350, 4
          %s1352 = scalar_lea.vmem %s3, %s1351
          // Predicated region
          $region109: #{alexnet_pre_forward.10} parent=107 // pred_check
            _
          $region110: #{alexnet_pre_forward.10} parent=107 // pred_check_branch
            %1354 = sbr.rel (0) target = $region112
          $region111: #{alexnet_pre_forward.10} parent=107 // pred_region
            // Predicated region
            $region113: #{alexnet_pre_forward.10} parent=111 // pred_check
              _
            $region114: #{alexnet_pre_forward.10} parent=111 // pred_check_branch
              %1356 = sbr.rel target = $region116
            $region115: #{alexnet_pre_forward.10} parent=111 // pred_region
              // Predicated region
              $region128: #{alexnet_pre_forward.10} parent=115 // pred_check
                _
              $region129: #{alexnet_pre_forward.10} parent=115 // pred_check_branch
                %1398 = sbr.rel (0) target = $region131
              $region130: #{alexnet_pre_forward.10} parent=115 // pred_region
                loop: start=0, step=1, limit=1
                $region132: #{alexnet_pre_forward.10} parent=130 // loop_pre_header
                  _
                $region133: #{alexnet_pre_forward.10} parent=130 // loop_header
                  %s1400 = sphi 0, %s1404
                  %p1401 = scmp.ge.s32.totalorder %s1400, 1
                  %s1405 = sphi %s1344, %s1344
                  %s1406 = sphi %s1352, %s1352
                $region134: #{alexnet_pre_forward.10} parent=130 // loop_header_branch
                  %1403 = sbr.rel (%p1401) target = $region138
                $region135: #{alexnet_pre_forward.10} parent=130 // loop_body
                  _
                $region136: #{alexnet_pre_forward.10} parent=130 // loop_footer
                  %s1404 = sadd.s32 1, %s1400
                $region137: #{alexnet_pre_forward.10} parent=130 // loop_footer_branch
                  %1399 = sbr.rel target = $region133
                $region138: #{alexnet_pre_forward.10} parent=130 // loop_exit
                  _
                %s1408 = ssub.s32 16, 1
                loop: start=0, step=1, limit=1
                $region139: #{alexnet_pre_forward.10} parent=130 // loop_pre_header
                  _
                $region140: #{alexnet_pre_forward.10} parent=130 // loop_header
                  %s1410 = sphi 0, %s1414
                  %p1411 = scmp.ge.s32.totalorder %s1410, 1
                  %s1415 = sphi %s1344, %s1344
                  %s1416 = sphi %s1352, %s1352
                $region141: #{alexnet_pre_forward.10} parent=130 // loop_header_branch
                  %1413 = sbr.rel (%p1411) target = $region145
                $region142: #{alexnet_pre_forward.10} parent=130 // loop_body
                  %v1417 = vld [vmem:[%s1415] sm:%s1408]
                  %1418 = vst [vmem:[%s1416] sm:%s1408] %v1417
                  %v1419 = vld [vmem:[%s1415 + $0x4] sm:%s1408]
                  %1420 = vst [vmem:[%s1416 + $0x8] sm:%s1408] %v1419
                  %v1421 = vld [vmem:[%s1415 + $0x8] sm:%s1408]
                  %1422 = vst [vmem:[%s1416 + $0x10] sm:%s1408] %v1421
                  %v1423 = vld [vmem:[%s1415 + $0xc] sm:%s1408]
                  %1424 = vst [vmem:[%s1416 + $0x18] sm:%s1408] %v1423
                  %v1425 = vld [vmem:[%s1415 + $0x10] sm:%s1408]
                  %1426 = vst [vmem:[%s1416 + $0x20] sm:%s1408] %v1425
                  %v1427 = vld [vmem:[%s1415 + $0x14] sm:%s1408]
                  %1428 = vst [vmem:[%s1416 + $0x28] sm:%s1408] %v1427
                  %v1429 = vld [vmem:[%s1415 + $0x18] sm:%s1408]
                  %1430 = vst [vmem:[%s1416 + $0x30] sm:%s1408] %v1429
                  %v1431 = vld [vmem:[%s1415 + $0x1c] sm:%s1408]
                  %1432 = vst [vmem:[%s1416 + $0x38] sm:%s1408] %v1431
                  %v1433 = vld [vmem:[%s1415 + $0x20] sm:%s1408]
                  %1434 = vst [vmem:[%s1416 + $0x40] sm:%s1408] %v1433
                  %v1435 = vld [vmem:[%s1415 + $0x24] sm:%s1408]
                  %1436 = vst [vmem:[%s1416 + $0x48] sm:%s1408] %v1435
                  %v1437 = vld [vmem:[%s1415 + $0x28] sm:%s1408]
                  %1438 = vst [vmem:[%s1416 + $0x50] sm:%s1408] %v1437
                  %v1439 = vld [vmem:[%s1415 + $0x2c] sm:%s1408]
                  %1440 = vst [vmem:[%s1416 + $0x58] sm:%s1408] %v1439
                  %v1441 = vld [vmem:[%s1415 + $0x30] sm:%s1408]
                  %1442 = vst [vmem:[%s1416 + $0x60] sm:%s1408] %v1441
                  %v1443 = vld [vmem:[%s1415 + $0x34] sm:%s1408]
                  %1444 = vst [vmem:[%s1416 + $0x68] sm:%s1408] %v1443
                $region143: #{alexnet_pre_forward.10} parent=130 // loop_footer
                  %s1414 = sadd.s32 1, %s1410
                $region144: #{alexnet_pre_forward.10} parent=130 // loop_footer_branch
                  %1409 = sbr.rel target = $region140
                $region145: #{alexnet_pre_forward.10} parent=130 // loop_exit
                  _
              $region131: #{alexnet_pre_forward.10} parent=115 // pred_fallthru
                _
            $region116: #{alexnet_pre_forward.10} parent=111 // pred_fallthru
              _
            // Predicated region
            $region117: #{alexnet_pre_forward.10} parent=111 // pred_check
              _
            $region118: #{alexnet_pre_forward.10} parent=111 // pred_check_branch
              %1358 = sbr.rel (0) target = $region120
            $region119: #{alexnet_pre_forward.10} parent=111 // pred_region
              %s1360 = ssub.s32 16, 1
              loop: start=0, step=1, limit=1
              $region121: #{alexnet_pre_forward.10} parent=119 // loop_pre_header
                _
              $region122: #{alexnet_pre_forward.10} parent=119 // loop_header
                %s1362 = sphi 0, %s1366
                %p1363 = scmp.ge.s32.totalorder %s1362, 1
                %s1367 = sphi %s1344, %s1344
                %s1368 = sphi %s1352, %s1352
              $region123: #{alexnet_pre_forward.10} parent=119 // loop_header_branch
                %1365 = sbr.rel (%p1363) target = $region127
              $region124: #{alexnet_pre_forward.10} parent=119 // loop_body
                %v1369 = vld [vmem:[%s1367] sm:%s1360]
                %1370 = vst [vmem:[%s1368] sm:%s1360] %v1369
                %v1371 = vld [vmem:[%s1367 + $0x4] sm:%s1360]
                %1372 = vst [vmem:[%s1368 + $0x8] sm:%s1360] %v1371
                %v1373 = vld [vmem:[%s1367 + $0x8] sm:%s1360]
                %1374 = vst [vmem:[%s1368 + $0x10] sm:%s1360] %v1373
                %v1375 = vld [vmem:[%s1367 + $0xc] sm:%s1360]
                %1376 = vst [vmem:[%s1368 + $0x18] sm:%s1360] %v1375
                %v1377 = vld [vmem:[%s1367 + $0x10] sm:%s1360]
                %1378 = vst [vmem:[%s1368 + $0x20] sm:%s1360] %v1377
                %v1379 = vld [vmem:[%s1367 + $0x14] sm:%s1360]
                %1380 = vst [vmem:[%s1368 + $0x28] sm:%s1360] %v1379
                %v1381 = vld [vmem:[%s1367 + $0x18] sm:%s1360]
                %1382 = vst [vmem:[%s1368 + $0x30] sm:%s1360] %v1381
                %v1383 = vld [vmem:[%s1367 + $0x1c] sm:%s1360]
                %1384 = vst [vmem:[%s1368 + $0x38] sm:%s1360] %v1383
                %v1385 = vld [vmem:[%s1367 + $0x20] sm:%s1360]
                %1386 = vst [vmem:[%s1368 + $0x40] sm:%s1360] %v1385
                %v1387 = vld [vmem:[%s1367 + $0x24] sm:%s1360]
                %1388 = vst [vmem:[%s1368 + $0x48] sm:%s1360] %v1387
                %v1389 = vld [vmem:[%s1367 + $0x28] sm:%s1360]
                %1390 = vst [vmem:[%s1368 + $0x50] sm:%s1360] %v1389
                %v1391 = vld [vmem:[%s1367 + $0x2c] sm:%s1360]
                %1392 = vst [vmem:[%s1368 + $0x58] sm:%s1360] %v1391
                %v1393 = vld [vmem:[%s1367 + $0x30] sm:%s1360]
                %1394 = vst [vmem:[%s1368 + $0x60] sm:%s1360] %v1393
                %v1395 = vld [vmem:[%s1367 + $0x34] sm:%s1360]
                %1396 = vst [vmem:[%s1368 + $0x68] sm:%s1360] %v1395
              $region125: #{alexnet_pre_forward.10} parent=119 // loop_footer
                %s1366 = sadd.s32 1, %s1362
              $region126: #{alexnet_pre_forward.10} parent=119 // loop_footer_branch
                %1361 = sbr.rel target = $region122
              $region127: #{alexnet_pre_forward.10} parent=119 // loop_exit
                _
            $region120: #{alexnet_pre_forward.10} parent=111 // pred_fallthru
              _
          $region112: #{alexnet_pre_forward.10} parent=107 // pred_fallthru
            _
          %1445 = vnop
        $region108: #{alexnet_pre_forward.10} parent=87 // pred_fallthru
          _
      $region88: #{alexnet_pre_forward.10} parent=5 // pred_fallthru
        _
      %p1446 = scmp.le.s32.totalorder 2, %s9
      // Predicated region
      $region146: #{alexnet_pre_forward.10} parent=5 // pred_check
        %p1447 = pneg %p1446
      $region147: #{alexnet_pre_forward.10} parent=5 // pred_check_branch
        %1449 = sbr.rel (%p1447) target = $region149
      $region148: #{alexnet_pre_forward.10} parent=5 // pred_region
        %s1450 = ssub.s32 %s9, 2
        // Predicated region
        $region150: #{alexnet_pre_forward.10} parent=148 // pred_check
          %p1451 = pneg %p141
        $region151: #{alexnet_pre_forward.10} parent=148 // pred_check_branch
          %1453 = sbr.rel (%p1451) target = $region153
        $region152: #{alexnet_pre_forward.10} parent=148 // pred_region
          %s1454 = sand.u32 %s126, 1
          %s1455 = sand.u32 %s126, 1
          %s1456 = smul.addr %s1455, 56
          %s1457 = scalar_lea.vmem [#allocation5], %s1456
        $region153: #{alexnet_pre_forward.10} parent=148 // pred_fallthru
          _
      $region149: #{alexnet_pre_forward.10} parent=5 // pred_fallthru
        _
    $region6: #{alexnet_pre_forward.10} parent=1 // loop_footer
      %s13 = sadd.s32 1, %s9
    $region7: #{alexnet_pre_forward.10} parent=1 // loop_footer_branch
      %8 = sbr.rel target = $region3
    $region8: #{alexnet_pre_forward.10} parent=1 // loop_exit
      _

// kernel: alexnet_pre_forward.12
$region0: #{alexnet_pre_forward.12}
  #allocation0 [shape = 'u32[]', space=smem, size = 0x4, offset = 0x4, fixed_abs, tag = 'smem constant byte address 0x4 - core index']
  #allocation1 [shape = 'u32[72,128]{1,0:T(1,128)}', space=vmem, size = 0x9000, scoped, tag = 'internal scratch']
  #allocation2 [shape = 'f32[32,128]{1,0:T(8,128)}', space=vmem, size = 0x4000, scoped, tag = 'scratch operand']
  %s0 = inlined_call_operand.vmem [shape: bf16[32,2048], index: 0, kind: input, shape index: {}]
  %s1 = inlined_call_operand.vmem [shape: bf16[2048,384], index: 1, kind: input, shape index: {}]
  %s2 = inlined_call_operand.vmem [shape: f32[1,384], index: 2, kind: input, shape index: {}]
  %s3 = inlined_call_operand.vmem [shape: bf16[32,384], index: 3, kind: output, shape index: {}]
  %s4 = sld [smem:[#allocation0]]
  $region154: #{alexnet_pre_forward.12} parent=0
    _
  %s6 = ssub.s32 1, %s4
  %s7 = scalar_select 0, %s6, %s4
  $region1: #{alexnet_pre_forward.12} parent=0
    #allocation3 [shape = 'u8[65536]{0}', space=vmem, size = 0x10000, scoped, tag = 'input window, operand 0']
    #allocation4 [shape = 'u8[262144]{0}', space=vmem, size = 0x40000, scoped, tag = 'input window, operand 1']
    #allocation5 [shape = 'u8[16384]{0}', space=vmem, size = 0x4000, scoped, tag = 'output window, operand 0']
    loop: start=0, step=1, limit=14
    $region2: #{alexnet_pre_forward.12} parent=1 // loop_pre_header
      _
    $region3: #{alexnet_pre_forward.12} parent=1 // loop_header
      %s9 = sphi 0, %s13
      %p10 = scmp.ge.s32.totalorder %s9, 14
      %s16 = sphi 0, %s35
      %s17 = sphi 0, %s31
      %s18 = sphi 0, %s27
      %s19 = sphi 0, %s16
      %s20 = sphi 0, %s17
      %s21 = sphi 0, %s18
      %s22 = sphi 0, %s19
      %s23 = sphi 0, %s20
      %s24 = sphi 0, %s21
      %s40 = sphi 0, %s42
      %s43 = sphi 0, %s40
      %s44 = sphi 0, %s43
      %s60 = sphi 0, %s44
      %s68 = sphi 0, %s70
      %s71 = sphi 0, %s68
      %s72 = sphi 0, %s71
      %s88 = sphi 0, %s72
      %s94 = sphi 0, %s96
      %s97 = sphi 0, %s94
      %s98 = sphi 0, %s97
      %s114 = sphi 0, %s98
      %s122 = sphi 0, %s124
      %s125 = sphi 0, %s122
      %s126 = sphi 0, %s125
      %s142 = sphi 0, %s126
    $region4: #{alexnet_pre_forward.12} parent=1 // loop_header_branch
      %12 = sbr.rel (%p10) target = $region8
    $region5: #{alexnet_pre_forward.12} parent=1 // loop_body
      %s14 = ssub.s32 %s9, 1
      %s15 = ssub.s32 %s9, 2
      %s25 = sadd.s32 1, %s18
      %p26 = scmp.ge.s32.totalorder %s25, 4
      %s27 = scalar_select %p26, 0, %s25
      %s28 = sadd.s32 1, %s17
      %s29 = scalar_select %p26, %s28, %s17
      %p30 = scmp.ge.s32.totalorder %s29, 3
      %s31 = scalar_select %p30, 0, %s29
      %s32 = sadd.s32 1, %s16
      %s33 = scalar_select %p30, %s32, %s16
      %p34 = scmp.ge.s32.totalorder %s33, 1
      %s35 = scalar_select %p34, 0, %s33
      %s36 = ssub.s32 %s16, %s35
      %s37 = ssub.s32 %s18, %s27
      %s38 = sor.u32 %s36, %s37
      %p39 = scmp.eq.s32.totalorder %s38, 0
      %s41 = sadd.s32 %s40, 1
      %s42 = scalar_select %p39, %s40, %s41
      %p45 = pneg %p39
      %p46 = scmp.eq.s32.totalorder %s9, 11
      %p47 = por %p45, %p46
      %p48 = scmp.ne.s32.totalorder %s40, %s43
      %p49 = scmp.eq.s32.totalorder %s9, 0
      %p50 = por %p48, %p49
      %p51 = scmp.ne.s32.totalorder %s40, %s43
      %p52 = scmp.eq.s32.totalorder %s14, 11
      %p53 = por %p51, %p52
      %p54 = scmp.ne.s32.totalorder %s43, %s44
      %p55 = scmp.eq.s32.totalorder %s14, 0
      %p56 = por %p54, %p55
      %p57 = scmp.ne.s32.totalorder %s43, %s44
      %p58 = scmp.eq.s32.totalorder %s15, 11
      %p59 = por %p57, %p58
      %p61 = scmp.ne.s32.totalorder %s44, %s60
      %p62 = scmp.eq.s32.totalorder %s15, 0
      %p63 = por %p61, %p62
      %s64 = ssub.s32 %s18, %s27
      %s65 = ssub.s32 %s17, %s31
      %s66 = sor.u32 %s64, %s65
      %p67 = scmp.eq.s32.totalorder %s66, 0
      %s69 = sadd.s32 %s68, 1
      %s70 = scalar_select %p67, %s68, %s69
      %p73 = pneg %p67
      %p74 = scmp.eq.s32.totalorder %s9, 11
      %p75 = por %p73, %p74
      %p76 = scmp.ne.s32.totalorder %s68, %s71
      %p77 = scmp.eq.s32.totalorder %s9, 0
      %p78 = por %p76, %p77
      %p79 = scmp.ne.s32.totalorder %s68, %s71
      %p80 = scmp.eq.s32.totalorder %s14, 11
      %p81 = por %p79, %p80
      %p82 = scmp.ne.s32.totalorder %s71, %s72
      %p83 = scmp.eq.s32.totalorder %s14, 0
      %p84 = por %p82, %p83
      %p85 = scmp.ne.s32.totalorder %s71, %s72
      %p86 = scmp.eq.s32.totalorder %s15, 11
      %p87 = por %p85, %p86
      %p89 = scmp.ne.s32.totalorder %s72, %s88
      %p90 = scmp.eq.s32.totalorder %s15, 0
      %p91 = por %p89, %p90
      %s92 = ssub.s32 %s17, %s31
      %p93 = scmp.eq.s32.totalorder %s92, 0
      %s95 = sadd.s32 %s94, 1
      %s96 = scalar_select %p93, %s94, %s95
      %p99 = pneg %p93
      %p100 = scmp.eq.s32.totalorder %s9, 11
      %p101 = por %p99, %p100
      %p102 = scmp.ne.s32.totalorder %s94, %s97
      %p103 = scmp.eq.s32.totalorder %s9, 0
      %p104 = por %p102, %p103
      %p105 = scmp.ne.s32.totalorder %s94, %s97
      %p106 = scmp.eq.s32.totalorder %s14, 11
      %p107 = por %p105, %p106
      %p108 = scmp.ne.s32.totalorder %s97, %s98
      %p109 = scmp.eq.s32.totalorder %s14, 0
      %p110 = por %p108, %p109
      %p111 = scmp.ne.s32.totalorder %s97, %s98
      %p112 = scmp.eq.s32.totalorder %s15, 11
      %p113 = por %p111, %p112
      %p115 = scmp.ne.s32.totalorder %s98, %s114
      %p116 = scmp.eq.s32.totalorder %s15, 0
      %p117 = por %p115, %p116
      %s118 = ssub.s32 %s16, %s35
      %s119 = ssub.s32 %s17, %s31
      %s120 = sor.u32 %s118, %s119
      %p121 = scmp.eq.s32.totalorder %s120, 0
      %s123 = sadd.s32 %s122, 1
      %s124 = scalar_select %p121, %s122, %s123
      %p127 = pneg %p121
      %p128 = scmp.eq.s32.totalorder %s9, 11
      %p129 = por %p127, %p128
      %p130 = scmp.ne.s32.totalorder %s122, %s125
      %p131 = scmp.eq.s32.totalorder %s9, 0
      %p132 = por %p130, %p131
      %p133 = scmp.ne.s32.totalorder %s122, %s125
      %p134 = scmp.eq.s32.totalorder %s14, 11
      %p135 = por %p133, %p134
      %p136 = scmp.ne.s32.totalorder %s125, %s126
      %p137 = scmp.eq.s32.totalorder %s14, 0
      %p138 = por %p136, %p137
      %p139 = scmp.ne.s32.totalorder %s125, %s126
      %p140 = scmp.eq.s32.totalorder %s15, 11
      %p141 = por %p139, %p140
      %p143 = scmp.ne.s32.totalorder %s126, %s142
      %p144 = scmp.eq.s32.totalorder %s15, 0
      %p145 = por %p143, %p144
      %p146 = scmp.le.s32.totalorder 1, %s9
      %p147 = scmp.lt.s32.totalorder %s9, 13
      %p148 = pnand %p146, %p147
      %p149 = pneg %p148
      // Predicated region
      $region9: #{alexnet_pre_forward.12} parent=5 // pred_check
        _
      $region10: #{alexnet_pre_forward.12} parent=5 // pred_check_branch
        %151 = sbr.rel (%p148) target = $region12
      $region11: #{alexnet_pre_forward.12} parent=5 // pred_region
        %s152 = ssub.s32 %s9, 1
      $region12: #{alexnet_pre_forward.12} parent=5 // pred_fallthru
        _
      %p153 = scmp.lt.s32.totalorder %s9, 12
      // Predicated region
      $region13: #{alexnet_pre_forward.12} parent=5 // pred_check
        %p154 = pneg %p153
      $region14: #{alexnet_pre_forward.12} parent=5 // pred_check_branch
        %156 = sbr.rel (%p154) target = $region16
      $region15: #{alexnet_pre_forward.12} parent=5 // pred_region
        // Predicated region
        $region17: #{alexnet_pre_forward.12} parent=15 // pred_check
          %p157 = pneg %p50
        $region18: #{alexnet_pre_forward.12} parent=15 // pred_check_branch
          %159 = sbr.rel (%p157) target = $region20
        $region19: #{alexnet_pre_forward.12} parent=15 // pred_region
          %s160 = sand.u32 %s40, 1
          %s161 = sand.u32 %s40, 1
          %s162 = smul.addr %s161, 64
          %s163 = scalar_lea.vmem [#allocation3], %s162
          %s164 = smul.u32 4, %s16
          %s165 = smul.u32 4, %s18
          %s166 = smul.addr %s164, 16
          %s167 = sadd.s32 %s165, %s166
          %s168 = smul.addr %s167, 4
          %s169 = scalar_lea.vmem %s0, %s168
          // Predicated region
          $region21: #{alexnet_pre_forward.12} parent=19 // pred_check
            _
          $region22: #{alexnet_pre_forward.12} parent=19 // pred_check_branch
            %171 = sbr.rel (0) target = $region24
          $region23: #{alexnet_pre_forward.12} parent=19 // pred_region
            // Predicated region
            $region25: #{alexnet_pre_forward.12} parent=23 // pred_check
              _
            $region26: #{alexnet_pre_forward.12} parent=23 // pred_check_branch
              %173 = sbr.rel (0) target = $region28
            $region27: #{alexnet_pre_forward.12} parent=23 // pred_region
              loop: start=0, step=1, limit=1
              $region29: #{alexnet_pre_forward.12} parent=27 // loop_pre_header
                _
              $region30: #{alexnet_pre_forward.12} parent=27 // loop_header
                %s175 = sphi 0, %s179
                %p176 = scmp.ge.s32.totalorder %s175, 1
                %s180 = sphi %s169, %s169
                %s181 = sphi %s163, %s163
              $region31: #{alexnet_pre_forward.12} parent=27 // loop_header_branch
                %178 = sbr.rel (%p176) target = $region35
              $region32: #{alexnet_pre_forward.12} parent=27 // loop_body
                %v182 = vld [vmem:[%s180] sm:$0xff]
                %183 = vst [vmem:[%s181] sm:$0xff] %v182
                %v184 = vld [vmem:[%s180 + $0x8] sm:$0xff]
                %185 = vst [vmem:[%s181 + $0x8] sm:$0xff] %v184
                %v186 = vld [vmem:[%s180 + $0x40] sm:$0xff]
                %187 = vst [vmem:[%s181 + $0x10] sm:$0xff] %v186
                %v188 = vld [vmem:[%s180 + $0x48] sm:$0xff]
                %189 = vst [vmem:[%s181 + $0x18] sm:$0xff] %v188
                %v190 = vld [vmem:[%s180 + $0x80] sm:$0xff]
                %191 = vst [vmem:[%s181 + $0x20] sm:$0xff] %v190
                %v192 = vld [vmem:[%s180 + $0x88] sm:$0xff]
                %193 = vst [vmem:[%s181 + $0x28] sm:$0xff] %v192
                %v194 = vld [vmem:[%s180 + $0xc0] sm:$0xff]
                %195 = vst [vmem:[%s181 + $0x30] sm:$0xff] %v194
                %v196 = vld [vmem:[%s180 + $0xc8] sm:$0xff]
                %197 = vst [vmem:[%s181 + $0x38] sm:$0xff] %v196
              $region33: #{alexnet_pre_forward.12} parent=27 // loop_footer
                %s179 = sadd.s32 1, %s175
              $region34: #{alexnet_pre_forward.12} parent=27 // loop_footer_branch
                %174 = sbr.rel target = $region30
              $region35: #{alexnet_pre_forward.12} parent=27 // loop_exit
                _
            $region28: #{alexnet_pre_forward.12} parent=23 // pred_fallthru
              _
            // Predicated region
            $region36: #{alexnet_pre_forward.12} parent=23 // pred_check
              _
            $region37: #{alexnet_pre_forward.12} parent=23 // pred_check_branch
              %199 = sbr.rel target = $region39
            $region38: #{alexnet_pre_forward.12} parent=23 // pred_region
              _
            $region39: #{alexnet_pre_forward.12} parent=23 // pred_fallthru
              _
          $region24: #{alexnet_pre_forward.12} parent=19 // pred_fallthru
            _
          %200 = vnop
        $region20: #{alexnet_pre_forward.12} parent=15 // pred_fallthru
          _
        // Predicated region
        $region40: #{alexnet_pre_forward.12} parent=15 // pred_check
          %p201 = pneg %p78
        $region41: #{alexnet_pre_forward.12} parent=15 // pred_check_branch
          %203 = sbr.rel (%p201) target = $region43
        $region42: #{alexnet_pre_forward.12} parent=15 // pred_region
          %s204 = sand.u32 %s68, 1
          %s205 = sand.u32 %s68, 1
          %s206 = smul.addr %s205, 256
          %s207 = scalar_lea.vmem [#allocation4], %s206
          %s208 = smul.u32 64, %s18
          %s209 = smul.addr %s208, 3
          %s210 = sadd.s32 %s17, %s209
          %s211 = smul.addr %s210, 4
          %s212 = scalar_lea.vmem %s1, %s211
          // Predicated region
          $region44: #{alexnet_pre_forward.12} parent=42 // pred_check
            _
          $region45: #{alexnet_pre_forward.12} parent=42 // pred_check_branch
            %214 = sbr.rel (0) target = $region47
          $region46: #{alexnet_pre_forward.12} parent=42 // pred_region
            // Predicated region
            $region48: #{alexnet_pre_forward.12} parent=46 // pred_check
              _
            $region49: #{alexnet_pre_forward.12} parent=46 // pred_check_branch
              %216 = sbr.rel target = $region51
            $region50: #{alexnet_pre_forward.12} parent=46 // pred_region
              // Predicated region
              $region63: #{alexnet_pre_forward.12} parent=50 // pred_check
                _
              $region64: #{alexnet_pre_forward.12} parent=50 // pred_check_branch
                %358 = sbr.rel (0) target = $region66
              $region65: #{alexnet_pre_forward.12} parent=50 // pred_region
                loop: start=0, step=1, limit=1
                $region67: #{alexnet_pre_forward.12} parent=65 // loop_pre_header
                  _
                $region68: #{alexnet_pre_forward.12} parent=65 // loop_header
                  %s360 = sphi 0, %s364
                  %p361 = scmp.ge.s32.totalorder %s360, 1
                  %s365 = sphi %s212, %s212
                  %s366 = sphi %s207, %s207
                $region69: #{alexnet_pre_forward.12} parent=65 // loop_header_branch
                  %363 = sbr.rel (%p361) target = $region73
                $region70: #{alexnet_pre_forward.12} parent=65 // loop_body
                  _
                $region71: #{alexnet_pre_forward.12} parent=65 // loop_footer
                  %s364 = sadd.s32 1, %s360
                $region72: #{alexnet_pre_forward.12} parent=65 // loop_footer_branch
                  %359 = sbr.rel target = $region68
                $region73: #{alexnet_pre_forward.12} parent=65 // loop_exit
                  _
                %s368 = ssub.s32 16, 1
                loop: start=0, step=1, limit=1
                $region74: #{alexnet_pre_forward.12} parent=65 // loop_pre_header
                  _
                $region75: #{alexnet_pre_forward.12} parent=65 // loop_header
                  %s370 = sphi 0, %s374
                  %p371 = scmp.ge.s32.totalorder %s370, 1
                  %s375 = sphi %s212, %s212
                  %s376 = sphi %s207, %s207
                $region76: #{alexnet_pre_forward.12} parent=65 // loop_header_branch
                  %373 = sbr.rel (%p371) target = $region80
                $region77: #{alexnet_pre_forward.12} parent=65 // loop_body
                  %v377 = vld [vmem:[%s375] sm:%s368]
                  %378 = vst [vmem:[%s376] sm:%s368] %v377
                  %v379 = vld [vmem:[%s375 + $0xc] sm:%s368]
                  %380 = vst [vmem:[%s376 + $0x4] sm:%s368] %v379
                  %v381 = vld [vmem:[%s375 + $0x18] sm:%s368]
                  %382 = vst [vmem:[%s376 + $0x8] sm:%s368] %v381
                  %v383 = vld [vmem:[%s375 + $0x24] sm:%s368]
                  %384 = vst [vmem:[%s376 + $0xc] sm:%s368] %v383
                  %v385 = vld [vmem:[%s375 + $0x30] sm:%s368]
                  %386 = vst [vmem:[%s376 + $0x10] sm:%s368] %v385
                  %v387 = vld [vmem:[%s375 + $0x3c] sm:%s368]
                  %388 = vst [vmem:[%s376 + $0x14] sm:%s368] %v387
                  %v389 = vld [vmem:[%s375 + $0x48] sm:%s368]
                  %390 = vst [vmem:[%s376 + $0x18] sm:%s368] %v389
                  %v391 = vld [vmem:[%s375 + $0x54] sm:%s368]
                  %392 = vst [vmem:[%s376 + $0x1c] sm:%s368] %v391
                  %v393 = vld [vmem:[%s375 + $0x60] sm:%s368]
                  %394 = vst [vmem:[%s376 + $0x20] sm:%s368] %v393
                  %v395 = vld [vmem:[%s375 + $0x6c] sm:%s368]
                  %396 = vst [vmem:[%s376 + $0x24] sm:%s368] %v395
                  %v397 = vld [vmem:[%s375 + $0x78] sm:%s368]
                  %398 = vst [vmem:[%s376 + $0x28] sm:%s368] %v397
                  %v399 = vld [vmem:[%s375 + $0x84] sm:%s368]
                  %400 = vst [vmem:[%s376 + $0x2c] sm:%s368] %v399
                  %v401 = vld [vmem:[%s375 + $0x90] sm:%s368]
                  %402 = vst [vmem:[%s376 + $0x30] sm:%s368] %v401
                  %v403 = vld [vmem:[%s375 + $0x9c] sm:%s368]
                  %404 = vst [vmem:[%s376 + $0x34] sm:%s368] %v403
                  %v405 = vld [vmem:[%s375 + $0xa8] sm:%s368]
                  %406 = vst [vmem:[%s376 + $0x38] sm:%s368] %v405
                  %v407 = vld [vmem:[%s375 + $0xb4] sm:%s368]
                  %408 = vst [vmem:[%s376 + $0x3c] sm:%s368] %v407
                  %v409 = vld [vmem:[%s375 + $0xc0] sm:%s368]
                  %410 = vst [vmem:[%s376 + $0x40] sm:%s368] %v409
                  %v411 = vld [vmem:[%s375 + $0xcc] sm:%s368]
                  %412 = vst [vmem:[%s376 + $0x44] sm:%s368] %v411
                  %v413 = vld [vmem:[%s375 + $0xd8] sm:%s368]
                  %414 = vst [vmem:[%s376 + $0x48] sm:%s368] %v413
                  %v415 = vld [vmem:[%s375 + $0xe4] sm:%s368]
                  %416 = vst [vmem:[%s376 + $0x4c] sm:%s368] %v415
                  %v417 = vld [vmem:[%s375 + $0xf0] sm:%s368]
                  %418 = vst [vmem:[%s376 + $0x50] sm:%s368] %v417
                  %v419 = vld [vmem:[%s375 + $0xfc] sm:%s368]
                  %420 = vst [vmem:[%s376 + $0x54] sm:%s368] %v419
                  %v421 = vld [vmem:[%s375 + $0x108] sm:%s368]
                  %422 = vst [vmem:[%s376 + $0x58] sm:%s368] %v421
                  %v423 = vld [vmem:[%s375 + $0x114] sm:%s368]
                  %424 = vst [vmem:[%s376 + $0x5c] sm:%s368] %v423
                  %v425 = vld [vmem:[%s375 + $0x120] sm:%s368]
                  %426 = vst [vmem:[%s376 + $0x60] sm:%s368] %v425
                  %v427 = vld [vmem:[%s375 + $0x12c] sm:%s368]
                  %428 = vst [vmem:[%s376 + $0x64] sm:%s368] %v427
                  %v429 = vld [vmem:[%s375 + $0x138] sm:%s368]
                  %430 = vst [vmem:[%s376 + $0x68] sm:%s368] %v429
                  %v431 = vld [vmem:[%s375 + $0x144] sm:%s368]
                  %432 = vst [vmem:[%s376 + $0x6c] sm:%s368] %v431
                  %v433 = vld [vmem:[%s375 + $0x150] sm:%s368]
                  %434 = vst [vmem:[%s376 + $0x70] sm:%s368] %v433
                  %v435 = vld [vmem:[%s375 + $0x15c] sm:%s368]
                  %436 = vst [vmem:[%s376 + $0x74] sm:%s368] %v435
                  %v437 = vld [vmem:[%s375 + $0x168] sm:%s368]
                  %438 = vst [vmem:[%s376 + $0x78] sm:%s368] %v437
                  %v439 = vld [vmem:[%s375 + $0x174] sm:%s368]
                  %440 = vst [vmem:[%s376 + $0x7c] sm:%s368] %v439
                  %v441 = vld [vmem:[%s375 + $0x180] sm:%s368]
                  %442 = vst [vmem:[%s376 + $0x80] sm:%s368] %v441
                  %v443 = vld [vmem:[%s375 + $0x18c] sm:%s368]
                  %444 = vst [vmem:[%s376 + $0x84] sm:%s368] %v443
                  %v445 = vld [vmem:[%s375 + $0x198] sm:%s368]
                  %446 = vst [vmem:[%s376 + $0x88] sm:%s368] %v445
                  %v447 = vld [vmem:[%s375 + $0x1a4] sm:%s368]
                  %448 = vst [vmem:[%s376 + $0x8c] sm:%s368] %v447
                  %v449 = vld [vmem:[%s375 + $0x1b0] sm:%s368]
                  %450 = vst [vmem:[%s376 + $0x90] sm:%s368] %v449
                  %v451 = vld [vmem:[%s375 + $0x1bc] sm:%s368]
                  %452 = vst [vmem:[%s376 + $0x94] sm:%s368] %v451
                  %v453 = vld [vmem:[%s375 + $0x1c8] sm:%s368]
                  %454 = vst [vmem:[%s376 + $0x98] sm:%s368] %v453
                  %v455 = vld [vmem:[%s375 + $0x1d4] sm:%s368]
                  %456 = vst [vmem:[%s376 + $0x9c] sm:%s368] %v455
                  %v457 = vld [vmem:[%s375 + $0x1e0] sm:%s368]
                  %458 = vst [vmem:[%s376 + $0xa0] sm:%s368] %v457
                  %v459 = vld [vmem:[%s375 + $0x1ec] sm:%s368]
                  %460 = vst [vmem:[%s376 + $0xa4] sm:%s368] %v459
                  %v461 = vld [vmem:[%s375 + $0x1f8] sm:%s368]
                  %462 = vst [vmem:[%s376 + $0xa8] sm:%s368] %v461
                  %v463 = vld [vmem:[%s375 + $0x204] sm:%s368]
                  %464 = vst [vmem:[%s376 + $0xac] sm:%s368] %v463
                  %v465 = vld [vmem:[%s375 + $0x210] sm:%s368]
                  %466 = vst [vmem:[%s376 + $0xb0] sm:%s368] %v465
                  %v467 = vld [vmem:[%s375 + $0x21c] sm:%s368]
                  %468 = vst [vmem:[%s376 + $0xb4] sm:%s368] %v467
                  %v469 = vld [vmem:[%s375 + $0x228] sm:%s368]
                  %470 = vst [vmem:[%s376 + $0xb8] sm:%s368] %v469
                  %v471 = vld [vmem:[%s375 + $0x234] sm:%s368]
                  %472 = vst [vmem:[%s376 + $0xbc] sm:%s368] %v471
                  %v473 = vld [vmem:[%s375 + $0x240] sm:%s368]
                  %474 = vst [vmem:[%s376 + $0xc0] sm:%s368] %v473
                  %v475 = vld [vmem:[%s375 + $0x24c] sm:%s368]
                  %476 = vst [vmem:[%s376 + $0xc4] sm:%s368] %v475
                  %v477 = vld [vmem:[%s375 + $0x258] sm:%s368]
                  %478 = vst [vmem:[%s376 + $0xc8] sm:%s368] %v477
                  %v479 = vld [vmem:[%s375 + $0x264] sm:%s368]
                  %480 = vst [vmem:[%s376 + $0xcc] sm:%s368] %v479
                  %v481 = vld [vmem:[%s375 + $0x270] sm:%s368]
                  %482 = vst [vmem:[%s376 + $0xd0] sm:%s368] %v481
                  %v483 = vld [vmem:[%s375 + $0x27c] sm:%s368]
                  %484 = vst [vmem:[%s376 + $0xd4] sm:%s368] %v483
                  %v485 = vld [vmem:[%s375 + $0x288] sm:%s368]
                  %486 = vst [vmem:[%s376 + $0xd8] sm:%s368] %v485
                  %v487 = vld [vmem:[%s375 + $0x294] sm:%s368]
                  %488 = vst [vmem:[%s376 + $0xdc] sm:%s368] %v487
                  %v489 = vld [vmem:[%s375 + $0x2a0] sm:%s368]
                  %490 = vst [vmem:[%s376 + $0xe0] sm:%s368] %v489
                  %v491 = vld [vmem:[%s375 + $0x2ac] sm:%s368]
                  %492 = vst [vmem:[%s376 + $0xe4] sm:%s368] %v491
                  %v493 = vld [vmem:[%s375 + $0x2b8] sm:%s368]
                  %494 = vst [vmem:[%s376 + $0xe8] sm:%s368] %v493
                  %v495 = vld [vmem:[%s375 + $0x2c4] sm:%s368]
                  %496 = vst [vmem:[%s376 + $0xec] sm:%s368] %v495
                  %v497 = vld [vmem:[%s375 + $0x2d0] sm:%s368]
                  %498 = vst [vmem:[%s376 + $0xf0] sm:%s368] %v497
                  %v499 = vld [vmem:[%s375 + $0x2dc] sm:%s368]
                  %500 = vst [vmem:[%s376 + $0xf4] sm:%s368] %v499
                  %v501 = vld [vmem:[%s375 + $0x2e8] sm:%s368]
                  %502 = vst [vmem:[%s376 + $0xf8] sm:%s368] %v501
                  %v503 = vld [vmem:[%s375 + $0x2f4] sm:%s368]
                  %504 = vst [vmem:[%s376 + $0xfc] sm:%s368] %v503
                $region78: #{alexnet_pre_forward.12} parent=65 // loop_footer
                  %s374 = sadd.s32 1, %s370
                $region79: #{alexnet_pre_forward.12} parent=65 // loop_footer_branch
                  %369 = sbr.rel target = $region75
                $region80: #{alexnet_pre_forward.12} parent=65 // loop_exit
                  _
              $region66: #{alexnet_pre_forward.12} parent=50 // pred_fallthru
                _
            $region51: #{alexnet_pre_forward.12} parent=46 // pred_fallthru
              _
            // Predicated region
            $region52: #{alexnet_pre_forward.12} parent=46 // pred_check
              _
            $region53: #{alexnet_pre_forward.12} parent=46 // pred_check_branch
              %218 = sbr.rel (0) target = $region55
            $region54: #{alexnet_pre_forward.12} parent=46 // pred_region
              %s220 = ssub.s32 16, 1
              loop: start=0, step=1, limit=1
              $region56: #{alexnet_pre_forward.12} parent=54 // loop_pre_header
                _
              $region57: #{alexnet_pre_forward.12} parent=54 // loop_header
                %s222 = sphi 0, %s226
                %p223 = scmp.ge.s32.totalorder %s222, 1
                %s227 = sphi %s212, %s212
                %s228 = sphi %s207, %s207
              $region58: #{alexnet_pre_forward.12} parent=54 // loop_header_branch
                %225 = sbr.rel (%p223) target = $region62
              $region59: #{alexnet_pre_forward.12} parent=54 // loop_body
                %v229 = vld [vmem:[%s227] sm:%s220]
                %230 = vst [vmem:[%s228] sm:%s220] %v229
                %v231 = vld [vmem:[%s227 + $0xc] sm:%s220]
                %232 = vst [vmem:[%s228 + $0x4] sm:%s220] %v231
                %v233 = vld [vmem:[%s227 + $0x18] sm:%s220]
                %234 = vst [vmem:[%s228 + $0x8] sm:%s220] %v233
                %v235 = vld [vmem:[%s227 + $0x24] sm:%s220]
                %236 = vst [vmem:[%s228 + $0xc] sm:%s220] %v235
                %v237 = vld [vmem:[%s227 + $0x30] sm:%s220]
                %238 = vst [vmem:[%s228 + $0x10] sm:%s220] %v237
                %v239 = vld [vmem:[%s227 + $0x3c] sm:%s220]
                %240 = vst [vmem:[%s228 + $0x14] sm:%s220] %v239
                %v241 = vld [vmem:[%s227 + $0x48] sm:%s220]
                %242 = vst [vmem:[%s228 + $0x18] sm:%s220] %v241
                %v243 = vld [vmem:[%s227 + $0x54] sm:%s220]
                %244 = vst [vmem:[%s228 + $0x1c] sm:%s220] %v243
                %v245 = vld [vmem:[%s227 + $0x60] sm:%s220]
                %246 = vst [vmem:[%s228 + $0x20] sm:%s220] %v245
                %v247 = vld [vmem:[%s227 + $0x6c] sm:%s220]
                %248 = vst [vmem:[%s228 + $0x24] sm:%s220] %v247
                %v249 = vld [vmem:[%s227 + $0x78] sm:%s220]
                %250 = vst [vmem:[%s228 + $0x28] sm:%s220] %v249
                %v251 = vld [vmem:[%s227 + $0x84] sm:%s220]
                %252 = vst [vmem:[%s228 + $0x2c] sm:%s220] %v251
                %v253 = vld [vmem:[%s227 + $0x90] sm:%s220]
                %254 = vst [vmem:[%s228 + $0x30] sm:%s220] %v253
                %v255 = vld [vmem:[%s227 + $0x9c] sm:%s220]
                %256 = vst [vmem:[%s228 + $0x34] sm:%s220] %v255
                %v257 = vld [vmem:[%s227 + $0xa8] sm:%s220]
                %258 = vst [vmem:[%s228 + $0x38] sm:%s220] %v257
                %v259 = vld [vmem:[%s227 + $0xb4] sm:%s220]
                %260 = vst [vmem:[%s228 + $0x3c] sm:%s220] %v259
                %v261 = vld [vmem:[%s227 + $0xc0] sm:%s220]
                %262 = vst [vmem:[%s228 + $0x40] sm:%s220] %v261
                %v263 = vld [vmem:[%s227 + $0xcc] sm:%s220]
                %264 = vst [vmem:[%s228 + $0x44] sm:%s220] %v263
                %v265 = vld [vmem:[%s227 + $0xd8] sm:%s220]
                %266 = vst [vmem:[%s228 + $0x48] sm:%s220] %v265
                %v267 = vld [vmem:[%s227 + $0xe4] sm:%s220]
                %268 = vst [vmem:[%s228 + $0x4c] sm:%s220] %v267
                %v269 = vld [vmem:[%s227 + $0xf0] sm:%s220]
                %270 = vst [vmem:[%s228 + $0x50] sm:%s220] %v269
                %v271 = vld [vmem:[%s227 + $0xfc] sm:%s220]
                %272 = vst [vmem:[%s228 + $0x54] sm:%s220] %v271
                %v273 = vld [vmem:[%s227 + $0x108] sm:%s220]
                %274 = vst [vmem:[%s228 + $0x58] sm:%s220] %v273
                %v275 = vld [vmem:[%s227 + $0x114] sm:%s220]
                %276 = vst [vmem:[%s228 + $0x5c] sm:%s220] %v275
                %v277 = vld [vmem:[%s227 + $0x120] sm:%s220]
                %278 = vst [vmem:[%s228 + $0x60] sm:%s220] %v277
                %v279 = vld [vmem:[%s227 + $0x12c] sm:%s220]
                %280 = vst [vmem:[%s228 + $0x64] sm:%s220] %v279
                %v281 = vld [vmem:[%s227 + $0x138] sm:%s220]
                %282 = vst [vmem:[%s228 + $0x68] sm:%s220] %v281
                %v283 = vld [vmem:[%s227 + $0x144] sm:%s220]
                %284 = vst [vmem:[%s228 + $0x6c] sm:%s220] %v283
                %v285 = vld [vmem:[%s227 + $0x150] sm:%s220]
                %286 = vst [vmem:[%s228 + $0x70] sm:%s220] %v285
                %v287 = vld [vmem:[%s227 + $0x15c] sm:%s220]
                %288 = vst [vmem:[%s228 + $0x74] sm:%s220] %v287
                %v289 = vld [vmem:[%s227 + $0x168] sm:%s220]
                %290 = vst [vmem:[%s228 + $0x78] sm:%s220] %v289
                %v291 = vld [vmem:[%s227 + $0x174] sm:%s220]
                %292 = vst [vmem:[%s228 + $0x7c] sm:%s220] %v291
                %v293 = vld [vmem:[%s227 + $0x180] sm:%s220]
                %294 = vst [vmem:[%s228 + $0x80] sm:%s220] %v293
                %v295 = vld [vmem:[%s227 + $0x18c] sm:%s220]
                %296 = vst [vmem:[%s228 + $0x84] sm:%s220] %v295
                %v297 = vld [vmem:[%s227 + $0x198] sm:%s220]
                %298 = vst [vmem:[%s228 + $0x88] sm:%s220] %v297
                %v299 = vld [vmem:[%s227 + $0x1a4] sm:%s220]
                %300 = vst [vmem:[%s228 + $0x8c] sm:%s220] %v299
                %v301 = vld [vmem:[%s227 + $0x1b0] sm:%s220]
                %302 = vst [vmem:[%s228 + $0x90] sm:%s220] %v301
                %v303 = vld [vmem:[%s227 + $0x1bc] sm:%s220]
                %304 = vst [vmem:[%s228 + $0x94] sm:%s220] %v303
                %v305 = vld [vmem:[%s227 + $0x1c8] sm:%s220]
                %306 = vst [vmem:[%s228 + $0x98] sm:%s220] %v305
                %v307 = vld [vmem:[%s227 + $0x1d4] sm:%s220]
                %308 = vst [vmem:[%s228 + $0x9c] sm:%s220] %v307
                %v309 = vld [vmem:[%s227 + $0x1e0] sm:%s220]
                %310 = vst [vmem:[%s228 + $0xa0] sm:%s220] %v309
                %v311 = vld [vmem:[%s227 + $0x1ec] sm:%s220]
                %312 = vst [vmem:[%s228 + $0xa4] sm:%s220] %v311
                %v313 = vld [vmem:[%s227 + $0x1f8] sm:%s220]
                %314 = vst [vmem:[%s228 + $0xa8] sm:%s220] %v313
                %v315 = vld [vmem:[%s227 + $0x204] sm:%s220]
                %316 = vst [vmem:[%s228 + $0xac] sm:%s220] %v315
                %v317 = vld [vmem:[%s227 + $0x210] sm:%s220]
                %318 = vst [vmem:[%s228 + $0xb0] sm:%s220] %v317
                %v319 = vld [vmem:[%s227 + $0x21c] sm:%s220]
                %320 = vst [vmem:[%s228 + $0xb4] sm:%s220] %v319
                %v321 = vld [vmem:[%s227 + $0x228] sm:%s220]
                %322 = vst [vmem:[%s228 + $0xb8] sm:%s220] %v321
                %v323 = vld [vmem:[%s227 + $0x234] sm:%s220]
                %324 = vst [vmem:[%s228 + $0xbc] sm:%s220] %v323
                %v325 = vld [vmem:[%s227 + $0x240] sm:%s220]
                %326 = vst [vmem:[%s228 + $0xc0] sm:%s220] %v325
                %v327 = vld [vmem:[%s227 + $0x24c] sm:%s220]
                %328 = vst [vmem:[%s228 + $0xc4] sm:%s220] %v327
                %v329 = vld [vmem:[%s227 + $0x258] sm:%s220]
                %330 = vst [vmem:[%s228 + $0xc8] sm:%s220] %v329
                %v331 = vld [vmem:[%s227 + $0x264] sm:%s220]
                %332 = vst [vmem:[%s228 + $0xcc] sm:%s220] %v331
                %v333 = vld [vmem:[%s227 + $0x270] sm:%s220]
                %334 = vst [vmem:[%s228 + $0xd0] sm:%s220] %v333
                %v335 = vld [vmem:[%s227 + $0x27c] sm:%s220]
                %336 = vst [vmem:[%s228 + $0xd4] sm:%s220] %v335
                %v337 = vld [vmem:[%s227 + $0x288] sm:%s220]
                %338 = vst [vmem:[%s228 + $0xd8] sm:%s220] %v337
                %v339 = vld [vmem:[%s227 + $0x294] sm:%s220]
                %340 = vst [vmem:[%s228 + $0xdc] sm:%s220] %v339
                %v341 = vld [vmem:[%s227 + $0x2a0] sm:%s220]
                %342 = vst [vmem:[%s228 + $0xe0] sm:%s220] %v341
                %v343 = vld [vmem:[%s227 + $0x2ac] sm:%s220]
                %344 = vst [vmem:[%s228 + $0xe4] sm:%s220] %v343
                %v345 = vld [vmem:[%s227 + $0x2b8] sm:%s220]
                %346 = vst [vmem:[%s228 + $0xe8] sm:%s220] %v345
                %v347 = vld [vmem:[%s227 + $0x2c4] sm:%s220]
                %348 = vst [vmem:[%s228 + $0xec] sm:%s220] %v347
                %v349 = vld [vmem:[%s227 + $0x2d0] sm:%s220]
                %350 = vst [vmem:[%s228 + $0xf0] sm:%s220] %v349
                %v351 = vld [vmem:[%s227 + $0x2dc] sm:%s220]
                %352 = vst [vmem:[%s228 + $0xf4] sm:%s220] %v351
                %v353 = vld [vmem:[%s227 + $0x2e8] sm:%s220]
                %354 = vst [vmem:[%s228 + $0xf8] sm:%s220] %v353
                %v355 = vld [vmem:[%s227 + $0x2f4] sm:%s220]
                %356 = vst [vmem:[%s228 + $0xfc] sm:%s220] %v355
              $region60: #{alexnet_pre_forward.12} parent=54 // loop_footer
                %s226 = sadd.s32 1, %s222
              $region61: #{alexnet_pre_forward.12} parent=54 // loop_footer_branch
                %221 = sbr.rel target = $region57
              $region62: #{alexnet_pre_forward.12} parent=54 // loop_exit
                _
            $region55: #{alexnet_pre_forward.12} parent=46 // pred_fallthru
              _
          $region47: #{alexnet_pre_forward.12} parent=42 // pred_fallthru
            _
          %505 = vnop
        $region43: #{alexnet_pre_forward.12} parent=15 // pred_fallthru
          _
        // Predicated region
        $region81: #{alexnet_pre_forward.12} parent=15 // pred_check
          %p506 = pneg %p104
        $region82: #{alexnet_pre_forward.12} parent=15 // pred_check_branch
          %508 = sbr.rel (%p506) target = $region84
        $region83: #{alexnet_pre_forward.12} parent=15 // pred_region
          %p509 = scmp.lt.s32.totalorder %s17, 2
          %s510 = scalar_select %p509, %s17, 2
          %s511 = scalar_lea.vmem %s2, %s510
        $region84: #{alexnet_pre_forward.12} parent=15 // pred_fallthru
          _
      $region16: #{alexnet_pre_forward.12} parent=5 // pred_fallthru
        _
      %p512 = scmp.le.s32.totalorder 1, %s9
      %p513 = scmp.lt.s32.totalorder %s9, 13
      %p514 = pnand %p512, %p513
      %p515 = pneg %p514
      // Predicated region
      $region85: #{alexnet_pre_forward.12} parent=5 // pred_check
        _
      $region86: #{alexnet_pre_forward.12} parent=5 // pred_check_branch
        %517 = sbr.rel (%p514) target = $region88
      $region87: #{alexnet_pre_forward.12} parent=5 // pred_region
        %s518 = ssub.s32 %s9, 1
        %s519 = sand.u32 %s43, 1
        %s520 = sand.u32 %s43, 1
        %s521 = smul.addr %s520, 64
        %s522 = scalar_lea.vmem [#allocation3], %s521
        // Predicated region
        $region89: #{alexnet_pre_forward.12} parent=87 // pred_check
          %p523 = pneg %p56
        $region90: #{alexnet_pre_forward.12} parent=87 // pred_check_branch
          %525 = sbr.rel (%p523) target = $region92
        $region91: #{alexnet_pre_forward.12} parent=87 // pred_region
          _
        $region92: #{alexnet_pre_forward.12} parent=87 // pred_fallthru
          _
        %s526 = sand.u32 %s71, 1
        %s527 = sand.u32 %s71, 1
        %s528 = smul.addr %s527, 256
        %s529 = scalar_lea.vmem [#allocation4], %s528
        // Predicated region
        $region93: #{alexnet_pre_forward.12} parent=87 // pred_check
          %p530 = pneg %p84
        $region94: #{alexnet_pre_forward.12} parent=87 // pred_check_branch
          %532 = sbr.rel (%p530) target = $region96
        $region95: #{alexnet_pre_forward.12} parent=87 // pred_region
          _
        $region96: #{alexnet_pre_forward.12} parent=87 // pred_fallthru
          _
        %s533 = sand.u32 %s43, 1
        %s534 = sand.u32 %s43, 1
        %s535 = smul.addr %s534, 64
        %s536 = scalar_lea.vmem [#allocation3], %s535
        %p537 = pneg %p56
        %p538 = pneg %p53
        %s539 = sand.u32 %s71, 1
        %s540 = sand.u32 %s71, 1
        %s541 = smul.addr %s540, 256
        %s542 = scalar_lea.vmem [#allocation4], %s541
        %p543 = pneg %p84
        %p544 = pneg %p81
        %p545 = scmp.lt.s32.totalorder %s20, 2
        %s546 = scalar_select %p545, %s20, 2
        %s547 = scalar_lea.vmem %s2, %s546
        %p548 = pneg %p110
        %p549 = pneg %p107
        %p550 = pneg %p138
        %p551 = pneg %p135
        %s552 = sand.u32 %s125, 1
        %s553 = sand.u32 %s125, 1
        %s554 = smul.addr %s553, 16
        %s555 = scalar_lea.vmem [#allocation5], %s554
        %s556 = smul.u32 4, %s19
        %s557 = smul.u32 4, %s21
        %s558 = smul.u32 64, %s21
        %p559 = scmp.lt.s32.totalorder %s20, 2
        %s560 = scalar_select %p559, %s20, 2
        %s561 = scalar_lea.vmem %s2, %s560
        %s562 = smul.u32 4, %s19
        %p563 = scmp.eq.s32.totalorder %s21, 0
        // Predicated region
        $region97: #{alexnet_pre_forward.12} parent=87 // pred_check
          %p564 = pneg %p563
        $region98: #{alexnet_pre_forward.12} parent=87 // pred_check_branch
          %566 = sbr.rel (%p564) target = $region100
        $region99: #{alexnet_pre_forward.12} parent=87 // pred_region
          %567 = vst [vmem:[#allocation2] sm:$0xff] 0.0
          %568 = vst [vmem:[#allocation2 + $0x8] sm:$0xff] 0.0
          %569 = vst [vmem:[#allocation2 + $0x10] sm:$0xff] 0.0
          %570 = vst [vmem:[#allocation2 + $0x18] sm:$0xff] 0.0
        $region100: #{alexnet_pre_forward.12} parent=87 // pred_fallthru
          _
        %v571 = vld [vmem:[#allocation2] sm:$0xff]
        %v572 = vld [vmem:[#allocation2 + $0x8] sm:$0xff]
        %v573 = vld [vmem:[#allocation2 + $0x10] sm:$0xff]
        %v574 = vld [vmem:[#allocation2 + $0x18] sm:$0xff]
        %v575 = vld [vmem:[%s522] sm:$0xff]
        %v576 = vld [vmem:[%s522 + $0x8] sm:$0xff]
        %v577 = vld [vmem:[%s522 + $0x10] sm:$0xff]
        %v578 = vld [vmem:[%s522 + $0x18] sm:$0xff]
        %v579 = vld [vmem:[%s522 + $0x20] sm:$0xff]
        %v580 = vld [vmem:[%s522 + $0x28] sm:$0xff]
        %v581 = vld [vmem:[%s522 + $0x30] sm:$0xff]
        %v582 = vld [vmem:[%s522 + $0x38] sm:$0xff]
        %v583 = vld [vmem:[%s529] sm:$0xf]
        %v584 = vld [vmem:[%s529 + $0x4] sm:$0xf]
        %v585 = vld [vmem:[%s529 + $0x8] sm:$0xf]
        %v586 = vld [vmem:[%s529 + $0xc] sm:$0xf]
        %v587 = vld [vmem:[%s529 + $0x10] sm:$0xf]
        %v588 = vld [vmem:[%s529 + $0x14] sm:$0xf]
        %v589 = vld [vmem:[%s529 + $0x18] sm:$0xf]
        %v590 = vld [vmem:[%s529 + $0x1c] sm:$0xf]
        %v591 = vld [vmem:[%s529 + $0x20] sm:$0xf]
        %v592 = vld [vmem:[%s529 + $0x24] sm:$0xf]
        %v593 = vld [vmem:[%s529 + $0x28] sm:$0xf]
        %v594 = vld [vmem:[%s529 + $0x2c] sm:$0xf]
        %v595 = vld [vmem:[%s529 + $0x30] sm:$0xf]
        %v596 = vld [vmem:[%s529 + $0x34] sm:$0xf]
        %v597 = vld [vmem:[%s529 + $0x38] sm:$0xf]
        %v598 = vld [vmem:[%s529 + $0x3c] sm:$0xf]
        %v599 = vld [vmem:[%s529 + $0x40] sm:$0xf]
        %v600 = vld [vmem:[%s529 + $0x44] sm:$0xf]
        %v601 = vld [vmem:[%s529 + $0x48] sm:$0xf]
        %v602 = vld [vmem:[%s529 + $0x4c] sm:$0xf]
        %v603 = vld [vmem:[%s529 + $0x50] sm:$0xf]
        %v604 = vld [vmem:[%s529 + $0x54] sm:$0xf]
        %v605 = vld [vmem:[%s529 + $0x58] sm:$0xf]
        %v606 = vld [vmem:[%s529 + $0x5c] sm:$0xf]
        %v607 = vld [vmem:[%s529 + $0x60] sm:$0xf]
        %v608 = vld [vmem:[%s529 + $0x64] sm:$0xf]
        %v609 = vld [vmem:[%s529 + $0x68] sm:$0xf]
        %v610 = vld [vmem:[%s529 + $0x6c] sm:$0xf]
        %v611 = vld [vmem:[%s529 + $0x70] sm:$0xf]
        %v612 = vld [vmem:[%s529 + $0x74] sm:$0xf]
        %v613 = vld [vmem:[%s529 + $0x78] sm:$0xf]
        %v614 = vld [vmem:[%s529 + $0x7c] sm:$0xf]
        %v615 = vld [vmem:[%s529 + $0x80] sm:$0xf]
        %v616 = vld [vmem:[%s529 + $0x84] sm:$0xf]
        %v617 = vld [vmem:[%s529 + $0x88] sm:$0xf]
        %v618 = vld [vmem:[%s529 + $0x8c] sm:$0xf]
        %v619 = vld [vmem:[%s529 + $0x90] sm:$0xf]
        %v620 = vld [vmem:[%s529 + $0x94] sm:$0xf]
        %v621 = vld [vmem:[%s529 + $0x98] sm:$0xf]
        %v622 = vld [vmem:[%s529 + $0x9c] sm:$0xf]
        %v623 = vld [vmem:[%s529 + $0xa0] sm:$0xf]
        %v624 = vld [vmem:[%s529 + $0xa4] sm:$0xf]
        %v625 = vld [vmem:[%s529 + $0xa8] sm:$0xf]
        %v626 = vld [vmem:[%s529 + $0xac] sm:$0xf]
        %v627 = vld [vmem:[%s529 + $0xb0] sm:$0xf]
        %v628 = vld [vmem:[%s529 + $0xb4] sm:$0xf]
        %v629 = vld [vmem:[%s529 + $0xb8] sm:$0xf]
        %v630 = vld [vmem:[%s529 + $0xbc] sm:$0xf]
        %v631 = vld [vmem:[%s529 + $0xc0] sm:$0xf]
        %v632 = vld [vmem:[%s529 + $0xc4] sm:$0xf]
        %v633 = vld [vmem:[%s529 + $0xc8] sm:$0xf]
        %v634 = vld [vmem:[%s529 + $0xcc] sm:$0xf]
        %v635 = vld [vmem:[%s529 + $0xd0] sm:$0xf]
        %v636 = vld [vmem:[%s529 + $0xd4] sm:$0xf]
        %v637 = vld [vmem:[%s529 + $0xd8] sm:$0xf]
        %v638 = vld [vmem:[%s529 + $0xdc] sm:$0xf]
        %v639 = vld [vmem:[%s529 + $0xe0] sm:$0xf]
        %v640 = vld [vmem:[%s529 + $0xe4] sm:$0xf]
        %v641 = vld [vmem:[%s529 + $0xe8] sm:$0xf]
        %v642 = vld [vmem:[%s529 + $0xec] sm:$0xf]
        %v643 = vld [vmem:[%s529 + $0xf0] sm:$0xf]
        %v644 = vld [vmem:[%s529 + $0xf4] sm:$0xf]
        %v645 = vld [vmem:[%s529 + $0xf8] sm:$0xf]
        %v646 = vld [vmem:[%s529 + $0xfc] sm:$0xf]
        %v655 = vunpack.c.l.b16 %v575
        %v656 = vunpack.c.h.b16 %v575
        %v657 = vunpack.c.l.b16 %v576
        %v658 = vunpack.c.h.b16 %v576
        %v659 = vunpack.c.l.b16 %v577
        %v660 = vunpack.c.h.b16 %v577
        %v661 = vunpack.c.l.b16 %v578
        %v662 = vunpack.c.h.b16 %v578
        %v663 = vunpack.c.l.b16 %v579
        %v664 = vunpack.c.h.b16 %v579
        %v665 = vunpack.c.l.b16 %v580
        %v666 = vunpack.c.h.b16 %v580
        %v667 = vunpack.c.l.b16 %v581
        %v668 = vunpack.c.h.b16 %v581
        %v669 = vunpack.c.l.b16 %v582
        %v670 = vunpack.c.h.b16 %v582
        %v671 = vpack.c.b16 %v659, %v655
        %v672 = vpack.c.b16 %v660, %v656
        %v673 = vpack.c.b16 %v661, %v657
        %v674 = vpack.c.b16 %v662, %v658
        %v675 = vpack.c.b16 %v667, %v663
        %v676 = vpack.c.b16 %v668, %v664
        %v677 = vpack.c.b16 %v669, %v665
        %v678 = vpack.c.b16 %v670, %v666
        %v751 = vunpack.c.l.b16 %v583
        %v752 = vunpack.c.l.b16 %v584
        %v753 = vunpack.c.l.b16 %v585
        %v754 = vunpack.c.l.b16 %v586
        %v755 = vunpack.c.l.b16 %v587
        %v756 = vunpack.c.l.b16 %v588
        %v757 = vunpack.c.l.b16 %v589
        %v758 = vunpack.c.l.b16 %v590
        %v759 = vunpack.c.l.b16 %v591
        %v760 = vunpack.c.l.b16 %v592
        %v761 = vunpack.c.l.b16 %v593
        %v762 = vunpack.c.l.b16 %v594
        %v763 = vunpack.c.l.b16 %v595
        %v764 = vunpack.c.l.b16 %v596
        %v765 = vunpack.c.l.b16 %v597
        %v766 = vunpack.c.l.b16 %v598
        %v767 = vunpack.c.l.b16 %v599
        %v768 = vunpack.c.l.b16 %v600
        %v769 = vunpack.c.l.b16 %v601
        %v770 = vunpack.c.l.b16 %v602
        %v771 = vunpack.c.l.b16 %v603
        %v772 = vunpack.c.l.b16 %v604
        %v773 = vunpack.c.l.b16 %v605
        %v774 = vunpack.c.l.b16 %v606
        %v775 = vunpack.c.l.b16 %v607
        %v776 = vunpack.c.l.b16 %v608
        %v777 = vunpack.c.l.b16 %v609
        %v778 = vunpack.c.l.b16 %v610
        %v779 = vunpack.c.l.b16 %v611
        %v780 = vunpack.c.l.b16 %v612
        %v781 = vunpack.c.l.b16 %v613
        %v782 = vunpack.c.l.b16 %v614
        %v783 = vunpack.c.l.b16 %v615
        %v784 = vunpack.c.l.b16 %v616
        %v785 = vunpack.c.l.b16 %v617
        %v786 = vunpack.c.l.b16 %v618
        %v787 = vunpack.c.l.b16 %v619
        %v788 = vunpack.c.l.b16 %v620
        %v789 = vunpack.c.l.b16 %v621
        %v790 = vunpack.c.l.b16 %v622
        %v791 = vunpack.c.l.b16 %v623
        %v792 = vunpack.c.l.b16 %v624
        %v793 = vunpack.c.l.b16 %v625
        %v794 = vunpack.c.l.b16 %v626
        %v795 = vunpack.c.l.b16 %v627
        %v796 = vunpack.c.l.b16 %v628
        %v797 = vunpack.c.l.b16 %v629
        %v798 = vunpack.c.l.b16 %v630
        %v799 = vunpack.c.l.b16 %v631
        %v800 = vunpack.c.l.b16 %v632
        %v801 = vunpack.c.l.b16 %v633
        %v802 = vunpack.c.l.b16 %v634
        %v803 = vunpack.c.l.b16 %v635
        %v804 = vunpack.c.l.b16 %v636
        %v805 = vunpack.c.l.b16 %v637
        %v806 = vunpack.c.l.b16 %v638
        %v807 = vunpack.c.l.b16 %v639
        %v808 = vunpack.c.l.b16 %v640
        %v809 = vunpack.c.l.b16 %v641
        %v810 = vunpack.c.l.b16 %v642
        %v811 = vunpack.c.l.b16 %v643
        %v812 = vunpack.c.l.b16 %v644
        %v813 = vunpack.c.l.b16 %v645
        %v814 = vunpack.c.l.b16 %v646
        %v815 = vpack.c.b16 %v752, %v751
        %v816 = vpack.c.b16 %v754, %v753
        %v817 = vpack.c.b16 %v756, %v755
        %v818 = vpack.c.b16 %v758, %v757
        %v819 = vpack.c.b16 %v760, %v759
        %v820 = vpack.c.b16 %v762, %v761
        %v821 = vpack.c.b16 %v764, %v763
        %v822 = vpack.c.b16 %v766, %v765
        %v823 = vpack.c.b16 %v768, %v767
        %v824 = vpack.c.b16 %v770, %v769
        %v825 = vpack.c.b16 %v772, %v771
        %v826 = vpack.c.b16 %v774, %v773
        %v827 = vpack.c.b16 %v776, %v775
        %v828 = vpack.c.b16 %v778, %v777
        %v829 = vpack.c.b16 %v780, %v779
        %v830 = vpack.c.b16 %v782, %v781
        %v831 = vpack.c.b16 %v784, %v783
        %v832 = vpack.c.b16 %v786, %v785
        %v833 = vpack.c.b16 %v788, %v787
        %v834 = vpack.c.b16 %v790, %v789
        %v835 = vpack.c.b16 %v792, %v791
        %v836 = vpack.c.b16 %v794, %v793
        %v837 = vpack.c.b16 %v796, %v795
        %v838 = vpack.c.b16 %v798, %v797
        %v839 = vpack.c.b16 %v800, %v799
        %v840 = vpack.c.b16 %v802, %v801
        %v841 = vpack.c.b16 %v804, %v803
        %v842 = vpack.c.b16 %v806, %v805
        %v843 = vpack.c.b16 %v808, %v807
        %v844 = vpack.c.b16 %v810, %v809
        %v845 = vpack.c.b16 %v812, %v811
        %v846 = vpack.c.b16 %v814, %v813
        %879 = vmatpush.bf16.msra.mxu0 %v822
        %880 = vmatpush.bf16.msra.mxu0 %v821
        %881 = vmatpush.bf16.msra.mxu0 %v820
        %882 = vmatpush.bf16.msra.mxu0 %v819
        %883 = vmatpush.bf16.msra.mxu0 %v818
        %884 = vmatpush.bf16.msra.mxu0 %v817
        %885 = vmatpush.bf16.msra.mxu0 %v816
        %886 = vmatpush.bf16.msra.mxu0 %v815
        %887 = vmatmul.bf16.gmra.mxu0 %v671
        %v888 = vpop.f32.mrf.mxu0
        %v889 = vadd.f32 0.0, %v888
        %v890 = vpop.f32.mrf.mxu0
        %v891 = vadd.f32 0.0, %v890
        %892 = vmatmul.bf16.gmra.mxu0 %v675
        %v893 = vpop.f32.mrf.mxu0
        %v894 = vadd.f32 0.0, %v893
        %v895 = vpop.f32.mrf.mxu0
        %v896 = vadd.f32 0.0, %v895
        %897 = vdwg.mxu0
        %898 = vmatpush.bf16.msra.mxu0 %v830
        %899 = vmatpush.bf16.msra.mxu0 %v829
        %900 = vmatpush.bf16.msra.mxu0 %v828
        %901 = vmatpush.bf16.msra.mxu0 %v827
        %902 = vmatpush.bf16.msra.mxu0 %v826
        %903 = vmatpush.bf16.msra.mxu0 %v825
        %904 = vmatpush.bf16.msra.mxu0 %v824
        %905 = vmatpush.bf16.msra.mxu0 %v823
        %906 = vmatmul.bf16.gmra.mxu0 %v672
        %v907 = vpop.f32.mrf.mxu0
        %v908 = vadd.f32 %v889, %v907
        %v909 = vpop.f32.mrf.mxu0
        %v910 = vadd.f32 %v891, %v909
        %911 = vmatmul.bf16.gmra.mxu0 %v676
        %v912 = vpop.f32.mrf.mxu0
        %v913 = vadd.f32 %v894, %v912
        %v914 = vpop.f32.mrf.mxu0
        %v915 = vadd.f32 %v896, %v914
        %916 = vdwg.mxu0
        %917 = vmatpush.bf16.msra.mxu0 %v838
        %918 = vmatpush.bf16.msra.mxu0 %v837
        %919 = vmatpush.bf16.msra.mxu0 %v836
        %920 = vmatpush.bf16.msra.mxu0 %v835
        %921 = vmatpush.bf16.msra.mxu0 %v834
        %922 = vmatpush.bf16.msra.mxu0 %v833
        %923 = vmatpush.bf16.msra.mxu0 %v832
        %924 = vmatpush.bf16.msra.mxu0 %v831
        %925 = vmatmul.bf16.gmra.mxu0 %v673
        %v926 = vpop.f32.mrf.mxu0
        %v927 = vadd.f32 %v908, %v926
        %v928 = vpop.f32.mrf.mxu0
        %v929 = vadd.f32 %v910, %v928
        %930 = vmatmul.bf16.gmra.mxu0 %v677
        %v931 = vpop.f32.mrf.mxu0
        %v932 = vadd.f32 %v913, %v931
        %v933 = vpop.f32.mrf.mxu0
        %v934 = vadd.f32 %v915, %v933
        %935 = vdwg.mxu0
        %936 = vmatpush.bf16.msra.mxu0 %v846
        %937 = vmatpush.bf16.msra.mxu0 %v845
        %938 = vmatpush.bf16.msra.mxu0 %v844
        %939 = vmatpush.bf16.msra.mxu0 %v843
        %940 = vmatpush.bf16.msra.mxu0 %v842
        %941 = vmatpush.bf16.msra.mxu0 %v841
        %942 = vmatpush.bf16.msra.mxu0 %v840
        %943 = vmatpush.bf16.msra.mxu0 %v839
        %944 = vmatmul.bf16.gmra.mxu0 %v674
        %v945 = vpop.f32.mrf.mxu0
        %v946 = vadd.f32 %v927, %v945
        %v947 = vpop.f32.mrf.mxu0
        %v948 = vadd.f32 %v929, %v947
        %949 = vmatmul.bf16.gmra.mxu0 %v678
        %v950 = vpop.f32.mrf.mxu0
        %v951 = vadd.f32 %v932, %v950
        %v952 = vpop.f32.mrf.mxu0
        %v953 = vadd.f32 %v934, %v952
        %954 = vdwg.mxu0
        %v955 = vadd.f32 %v571, %v946
        %v956 = vadd.f32 %v572, %v948
        %v957 = vadd.f32 %v573, %v951
        %v958 = vadd.f32 %v574, %v953
        %959 = vst [vmem:[#allocation2] sm:$0xff] %v955
        %960 = vst [vmem:[#allocation2 + $0x8] sm:$0xff] %v956
        %961 = vst [vmem:[#allocation2 + $0x10] sm:$0xff] %v957
        %962 = vst [vmem:[#allocation2 + $0x18] sm:$0xff] %v958
        %p963 = scmp.eq.s32.totalorder %s21, 3
        // Predicated region
        $region101: #{alexnet_pre_forward.12} parent=87 // pred_check
          %p964 = pneg %p963
        $region102: #{alexnet_pre_forward.12} parent=87 // pred_check_branch
          %966 = sbr.rel (%p964) target = $region104
        $region103: #{alexnet_pre_forward.12} parent=87 // pred_region
          %v967 = vld [vmem:[#allocation2] sm:$0xff]
          %v968 = vld [vmem:[#allocation2 + $0x8] sm:$0xff]
          %v969 = vld [vmem:[#allocation2 + $0x10] sm:$0xff]
          %v970 = vld [vmem:[#allocation2 + $0x18] sm:$0xff]
          %v971 = vld [vmem:[%s561] sm:$0x1]
          %v973 = vperm.slane %v971, 0
          %v975 = vadd.f32 %v967, %v973
          %v976 = vadd.f32 %v968, %v973
          %v977 = vadd.f32 %v969, %v973
          %v978 = vadd.f32 %v970, %v973
          %v979 = vmax.f32 %v975, 0.0
          %v980 = vmax.f32 %v976, 0.0
          %v981 = vmax.f32 %v977, 0.0
          %v982 = vmax.f32 %v978, 0.0
          %v983 = vpack.c.bf16 %v979, %v979
          %v984 = vpack.c.bf16 %v980, %v980
          %v985 = vpack.c.bf16 %v981, %v981
          %v986 = vpack.c.bf16 %v982, %v982
          %987 = vst [vmem:[%s555] sm:$0xf] %v983
          %988 = vst [vmem:[%s555 + $0x4] sm:$0xf] %v984
          %989 = vst [vmem:[%s555 + $0x8] sm:$0xf] %v985
          %990 = vst [vmem:[%s555 + $0xc] sm:$0xf] %v986
        $region104: #{alexnet_pre_forward.12} parent=87 // pred_fallthru
          _
        %s991 = sand.u32 %s125, 1
        %s992 = sand.u32 %s125, 1
        %s993 = smul.addr %s992, 16
        %s994 = scalar_lea.vmem [#allocation5], %s993
        // Predicated region
        $region105: #{alexnet_pre_forward.12} parent=87 // pred_check
          %p995 = pneg %p135
        $region106: #{alexnet_pre_forward.12} parent=87 // pred_check_branch
          %997 = sbr.rel (%p995) target = $region108
        $region107: #{alexnet_pre_forward.12} parent=87 // pred_region
          %s998 = smul.u32 4, %s19
          %s999 = smul.addr %s998, 3
          %s1000 = sadd.s32 %s20, %s999
          %s1001 = smul.addr %s1000, 4
          %s1002 = scalar_lea.vmem %s3, %s1001
          // Predicated region
          $region109: #{alexnet_pre_forward.12} parent=107 // pred_check
            _
          $region110: #{alexnet_pre_forward.12} parent=107 // pred_check_branch
            %1004 = sbr.rel (0) target = $region112
          $region111: #{alexnet_pre_forward.12} parent=107 // pred_region
            // Predicated region
            $region113: #{alexnet_pre_forward.12} parent=111 // pred_check
              _
            $region114: #{alexnet_pre_forward.12} parent=111 // pred_check_branch
              %1006 = sbr.rel target = $region116
            $region115: #{alexnet_pre_forward.12} parent=111 // pred_region
              // Predicated region
              $region128: #{alexnet_pre_forward.12} parent=115 // pred_check
                _
              $region129: #{alexnet_pre_forward.12} parent=115 // pred_check_branch
                %1028 = sbr.rel (0) target = $region131
              $region130: #{alexnet_pre_forward.12} parent=115 // pred_region
                loop: start=0, step=1, limit=1
                $region132: #{alexnet_pre_forward.12} parent=130 // loop_pre_header
                  _
                $region133: #{alexnet_pre_forward.12} parent=130 // loop_header
                  %s1030 = sphi 0, %s1034
                  %p1031 = scmp.ge.s32.totalorder %s1030, 1
                  %s1035 = sphi %s994, %s994
                  %s1036 = sphi %s1002, %s1002
                $region134: #{alexnet_pre_forward.12} parent=130 // loop_header_branch
                  %1033 = sbr.rel (%p1031) target = $region138
                $region135: #{alexnet_pre_forward.12} parent=130 // loop_body
                  _
                $region136: #{alexnet_pre_forward.12} parent=130 // loop_footer
                  %s1034 = sadd.s32 1, %s1030
                $region137: #{alexnet_pre_forward.12} parent=130 // loop_footer_branch
                  %1029 = sbr.rel target = $region133
                $region138: #{alexnet_pre_forward.12} parent=130 // loop_exit
                  _
                %s1038 = ssub.s32 16, 1
                loop: start=0, step=1, limit=1
                $region139: #{alexnet_pre_forward.12} parent=130 // loop_pre_header
                  _
                $region140: #{alexnet_pre_forward.12} parent=130 // loop_header
                  %s1040 = sphi 0, %s1044
                  %p1041 = scmp.ge.s32.totalorder %s1040, 1
                  %s1045 = sphi %s994, %s994
                  %s1046 = sphi %s1002, %s1002
                $region141: #{alexnet_pre_forward.12} parent=130 // loop_header_branch
                  %1043 = sbr.rel (%p1041) target = $region145
                $region142: #{alexnet_pre_forward.12} parent=130 // loop_body
                  %v1047 = vld [vmem:[%s1045] sm:%s1038]
                  %1048 = vst [vmem:[%s1046] sm:%s1038] %v1047
                  %v1049 = vld [vmem:[%s1045 + $0x4] sm:%s1038]
                  %1050 = vst [vmem:[%s1046 + $0xc] sm:%s1038] %v1049
                  %v1051 = vld [vmem:[%s1045 + $0x8] sm:%s1038]
                  %1052 = vst [vmem:[%s1046 + $0x18] sm:%s1038] %v1051
                  %v1053 = vld [vmem:[%s1045 + $0xc] sm:%s1038]
                  %1054 = vst [vmem:[%s1046 + $0x24] sm:%s1038] %v1053
                $region143: #{alexnet_pre_forward.12} parent=130 // loop_footer
                  %s1044 = sadd.s32 1, %s1040
                $region144: #{alexnet_pre_forward.12} parent=130 // loop_footer_branch
                  %1039 = sbr.rel target = $region140
                $region145: #{alexnet_pre_forward.12} parent=130 // loop_exit
                  _
              $region131: #{alexnet_pre_forward.12} parent=115 // pred_fallthru
                _
            $region116: #{alexnet_pre_forward.12} parent=111 // pred_fallthru
              _
            // Predicated region
            $region117: #{alexnet_pre_forward.12} parent=111 // pred_check
              _
            $region118: #{alexnet_pre_forward.12} parent=111 // pred_check_branch
              %1008 = sbr.rel (0) target = $region120
            $region119: #{alexnet_pre_forward.12} parent=111 // pred_region
              %s1010 = ssub.s32 16, 1
              loop: start=0, step=1, limit=1
              $region121: #{alexnet_pre_forward.12} parent=119 // loop_pre_header
                _
              $region122: #{alexnet_pre_forward.12} parent=119 // loop_header
                %s1012 = sphi 0, %s1016
                %p1013 = scmp.ge.s32.totalorder %s1012, 1
                %s1017 = sphi %s994, %s994
                %s1018 = sphi %s1002, %s1002
              $region123: #{alexnet_pre_forward.12} parent=119 // loop_header_branch
                %1015 = sbr.rel (%p1013) target = $region127
              $region124: #{alexnet_pre_forward.12} parent=119 // loop_body
                %v1019 = vld [vmem:[%s1017] sm:%s1010]
                %1020 = vst [vmem:[%s1018] sm:%s1010] %v1019
                %v1021 = vld [vmem:[%s1017 + $0x4] sm:%s1010]
                %1022 = vst [vmem:[%s1018 + $0xc] sm:%s1010] %v1021
                %v1023 = vld [vmem:[%s1017 + $0x8] sm:%s1010]
                %1024 = vst [vmem:[%s1018 + $0x18] sm:%s1010] %v1023
                %v1025 = vld [vmem:[%s1017 + $0xc] sm:%s1010]
                %1026 = vst [vmem:[%s1018 + $0x24] sm:%s1010] %v1025
              $region125: #{alexnet_pre_forward.12} parent=119 // loop_footer
                %s1016 = sadd.s32 1, %s1012
              $region126: #{alexnet_pre_forward.12} parent=119 // loop_footer_branch
                %1011 = sbr.rel target = $region122
              $region127: #{alexnet_pre_forward.12} parent=119 // loop_exit
                _
            $region120: #{alexnet_pre_forward.12} parent=111 // pred_fallthru
              _
          $region112: #{alexnet_pre_forward.12} parent=107 // pred_fallthru
            _
          %1055 = vnop
        $region108: #{alexnet_pre_forward.12} parent=87 // pred_fallthru
          _
      $region88: #{alexnet_pre_forward.12} parent=5 // pred_fallthru
        _
      %p1056 = scmp.le.s32.totalorder 2, %s9
      // Predicated region
      $region146: #{alexnet_pre_forward.12} parent=5 // pred_check
        %p1057 = pneg %p1056
      $region147: #{alexnet_pre_forward.12} parent=5 // pred_check_branch
        %1059 = sbr.rel (%p1057) target = $region149
      $region148: #{alexnet_pre_forward.12} parent=5 // pred_region
        %s1060 = ssub.s32 %s9, 2
        // Predicated region
        $region150: #{alexnet_pre_forward.12} parent=148 // pred_check
          %p1061 = pneg %p141
        $region151: #{alexnet_pre_forward.12} parent=148 // pred_check_branch
          %1063 = sbr.rel (%p1061) target = $region153
        $region152: #{alexnet_pre_forward.12} parent=148 // pred_region
          %s1064 = sand.u32 %s126, 1
          %s1065 = sand.u32 %s126, 1
          %s1066 = smul.addr %s1065, 16
          %s1067 = scalar_lea.vmem [#allocation5], %s1066
        $region153: #{alexnet_pre_forward.12} parent=148 // pred_fallthru
          _
      $region149: #{alexnet_pre_forward.12} parent=5 // pred_fallthru
        _
    $region6: #{alexnet_pre_forward.12} parent=1 // loop_footer
      %s13 = sadd.s32 1, %s9
    $region7: #{alexnet_pre_forward.12} parent=1 // loop_footer_branch
      %8 = sbr.rel target = $region3
    $region8: #{alexnet_pre_forward.12} parent=1 // loop_exit
      _

// kernel: alexnet_pre_forward.13
$region0: #{alexnet_pre_forward.13}
  #allocation0 [shape = 'u32[]', space=smem, size = 0x4, offset = 0x4, fixed_abs, tag = 'smem constant byte address 0x4 - core index']
  #allocation1 [shape = 'u32[72,128]{1,0:T(1,128)}', space=vmem, size = 0x9000, scoped, tag = 'internal scratch']
  #allocation2 [shape = 'f32[32,128]{1,0:T(8,128)}', space=vmem, size = 0x4000, scoped, tag = 'scratch operand']
  %s0 = inlined_call_operand.vmem [shape: bf16[32,3584], index: 0, kind: input, shape index: {}]
  %s1 = inlined_call_operand.vmem [shape: bf16[3584,256], index: 1, kind: input, shape index: {}]
  %s2 = inlined_call_operand.vmem [shape: f32[1,256], index: 2, kind: input, shape index: {}]
  %s3 = inlined_call_operand.vmem [shape: bf16[32,256], index: 3, kind: output, shape index: {}]
  %s4 = sld [smem:[#allocation0]]
  $region154: #{alexnet_pre_forward.13} parent=0
    _
  %s6 = ssub.s32 1, %s4
  %s7 = scalar_select 0, %s6, %s4
  $region1: #{alexnet_pre_forward.13} parent=0
    #allocation3 [shape = 'u8[65536]{0}', space=vmem, size = 0x10000, scoped, tag = 'input window, operand 0']
    #allocation4 [shape = 'u8[262144]{0}', space=vmem, size = 0x40000, scoped, tag = 'input window, operand 1']
    #allocation5 [shape = 'u8[16384]{0}', space=vmem, size = 0x4000, scoped, tag = 'output window, operand 0']
    loop: start=0, step=1, limit=16
    $region2: #{alexnet_pre_forward.13} parent=1 // loop_pre_header
      _
    $region3: #{alexnet_pre_forward.13} parent=1 // loop_header
      %s9 = sphi 0, %s13
      %p10 = scmp.ge.s32.totalorder %s9, 16
      %s16 = sphi 0, %s35
      %s17 = sphi 0, %s31
      %s18 = sphi 0, %s27
      %s19 = sphi 0, %s16
      %s20 = sphi 0, %s17
      %s21 = sphi 0, %s18
      %s22 = sphi 0, %s19
      %s23 = sphi 0, %s20
      %s24 = sphi 0, %s21
      %s40 = sphi 0, %s42
      %s43 = sphi 0, %s40
      %s44 = sphi 0, %s43
      %s60 = sphi 0, %s44
      %s68 = sphi 0, %s70
      %s71 = sphi 0, %s68
      %s72 = sphi 0, %s71
      %s88 = sphi 0, %s72
      %s94 = sphi 0, %s96
      %s97 = sphi 0, %s94
      %s98 = sphi 0, %s97
      %s114 = sphi 0, %s98
      %s122 = sphi 0, %s124
      %s125 = sphi 0, %s122
      %s126 = sphi 0, %s125
      %s142 = sphi 0, %s126
    $region4: #{alexnet_pre_forward.13} parent=1 // loop_header_branch
      %12 = sbr.rel (%p10) target = $region8
    $region5: #{alexnet_pre_forward.13} parent=1 // loop_body
      %s14 = ssub.s32 %s9, 1
      %s15 = ssub.s32 %s9, 2
      %s25 = sadd.s32 1, %s18
      %p26 = scmp.ge.s32.totalorder %s25, 7
      %s27 = scalar_select %p26, 0, %s25
      %s28 = sadd.s32 1, %s17
      %s29 = scalar_select %p26, %s28, %s17
      %p30 = scmp.ge.s32.totalorder %s29, 2
      %s31 = scalar_select %p30, 0, %s29
      %s32 = sadd.s32 1, %s16
      %s33 = scalar_select %p30, %s32, %s16
      %p34 = scmp.ge.s32.totalorder %s33, 1
      %s35 = scalar_select %p34, 0, %s33
      %s36 = ssub.s32 %s16, %s35
      %s37 = ssub.s32 %s18, %s27
      %s38 = sor.u32 %s36, %s37
      %p39 = scmp.eq.s32.totalorder %s38, 0
      %s41 = sadd.s32 %s40, 1
      %s42 = scalar_select %p39, %s40, %s41
      %p45 = pneg %p39
      %p46 = scmp.eq.s32.totalorder %s9, 13
      %p47 = por %p45, %p46
      %p48 = scmp.ne.s32.totalorder %s40, %s43
      %p49 = scmp.eq.s32.totalorder %s9, 0
      %p50 = por %p48, %p49
      %p51 = scmp.ne.s32.totalorder %s40, %s43
      %p52 = scmp.eq.s32.totalorder %s14, 13
      %p53 = por %p51, %p52
      %p54 = scmp.ne.s32.totalorder %s43, %s44
      %p55 = scmp.eq.s32.totalorder %s14, 0
      %p56 = por %p54, %p55
      %p57 = scmp.ne.s32.totalorder %s43, %s44
      %p58 = scmp.eq.s32.totalorder %s15, 13
      %p59 = por %p57, %p58
      %p61 = scmp.ne.s32.totalorder %s44, %s60
      %p62 = scmp.eq.s32.totalorder %s15, 0
      %p63 = por %p61, %p62
      %s64 = ssub.s32 %s18, %s27
      %s65 = ssub.s32 %s17, %s31
      %s66 = sor.u32 %s64, %s65
      %p67 = scmp.eq.s32.totalorder %s66, 0
      %s69 = sadd.s32 %s68, 1
      %s70 = scalar_select %p67, %s68, %s69
      %p73 = pneg %p67
      %p74 = scmp.eq.s32.totalorder %s9, 13
      %p75 = por %p73, %p74
      %p76 = scmp.ne.s32.totalorder %s68, %s71
      %p77 = scmp.eq.s32.totalorder %s9, 0
      %p78 = por %p76, %p77
      %p79 = scmp.ne.s32.totalorder %s68, %s71
      %p80 = scmp.eq.s32.totalorder %s14, 13
      %p81 = por %p79, %p80
      %p82 = scmp.ne.s32.totalorder %s71, %s72
      %p83 = scmp.eq.s32.totalorder %s14, 0
      %p84 = por %p82, %p83
      %p85 = scmp.ne.s32.totalorder %s71, %s72
      %p86 = scmp.eq.s32.totalorder %s15, 13
      %p87 = por %p85, %p86
      %p89 = scmp.ne.s32.totalorder %s72, %s88
      %p90 = scmp.eq.s32.totalorder %s15, 0
      %p91 = por %p89, %p90
      %s92 = ssub.s32 %s17, %s31
      %p93 = scmp.eq.s32.totalorder %s92, 0
      %s95 = sadd.s32 %s94, 1
      %s96 = scalar_select %p93, %s94, %s95
      %p99 = pneg %p93
      %p100 = scmp.eq.s32.totalorder %s9, 13
      %p101 = por %p99, %p100
      %p102 = scmp.ne.s32.totalorder %s94, %s97
      %p103 = scmp.eq.s32.totalorder %s9, 0
      %p104 = por %p102, %p103
      %p105 = scmp.ne.s32.totalorder %s94, %s97
      %p106 = scmp.eq.s32.totalorder %s14, 13
      %p107 = por %p105, %p106
      %p108 = scmp.ne.s32.totalorder %s97, %s98
      %p109 = scmp.eq.s32.totalorder %s14, 0
      %p110 = por %p108, %p109
      %p111 = scmp.ne.s32.totalorder %s97, %s98
      %p112 = scmp.eq.s32.totalorder %s15, 13
      %p113 = por %p111, %p112
      %p115 = scmp.ne.s32.totalorder %s98, %s114
      %p116 = scmp.eq.s32.totalorder %s15, 0
      %p117 = por %p115, %p116
      %s118 = ssub.s32 %s16, %s35
      %s119 = ssub.s32 %s17, %s31
      %s120 = sor.u32 %s118, %s119
      %p121 = scmp.eq.s32.totalorder %s120, 0
      %s123 = sadd.s32 %s122, 1
      %s124 = scalar_select %p121, %s122, %s123
      %p127 = pneg %p121
      %p128 = scmp.eq.s32.totalorder %s9, 13
      %p129 = por %p127, %p128
      %p130 = scmp.ne.s32.totalorder %s122, %s125
      %p131 = scmp.eq.s32.totalorder %s9, 0
      %p132 = por %p130, %p131
      %p133 = scmp.ne.s32.totalorder %s122, %s125
      %p134 = scmp.eq.s32.totalorder %s14, 13
      %p135 = por %p133, %p134
      %p136 = scmp.ne.s32.totalorder %s125, %s126
      %p137 = scmp.eq.s32.totalorder %s14, 0
      %p138 = por %p136, %p137
      %p139 = scmp.ne.s32.totalorder %s125, %s126
      %p140 = scmp.eq.s32.totalorder %s15, 13
      %p141 = por %p139, %p140
      %p143 = scmp.ne.s32.totalorder %s126, %s142
      %p144 = scmp.eq.s32.totalorder %s15, 0
      %p145 = por %p143, %p144
      %p146 = scmp.le.s32.totalorder 1, %s9
      %p147 = scmp.lt.s32.totalorder %s9, 15
      %p148 = pnand %p146, %p147
      %p149 = pneg %p148
      // Predicated region
      $region9: #{alexnet_pre_forward.13} parent=5 // pred_check
        _
      $region10: #{alexnet_pre_forward.13} parent=5 // pred_check_branch
        %151 = sbr.rel (%p148) target = $region12
      $region11: #{alexnet_pre_forward.13} parent=5 // pred_region
        %s152 = ssub.s32 %s9, 1
      $region12: #{alexnet_pre_forward.13} parent=5 // pred_fallthru
        _
      %p153 = scmp.lt.s32.totalorder %s9, 14
      // Predicated region
      $region13: #{alexnet_pre_forward.13} parent=5 // pred_check
        %p154 = pneg %p153
      $region14: #{alexnet_pre_forward.13} parent=5 // pred_check_branch
        %156 = sbr.rel (%p154) target = $region16
      $region15: #{alexnet_pre_forward.13} parent=5 // pred_region
        // Predicated region
        $region17: #{alexnet_pre_forward.13} parent=15 // pred_check
          %p157 = pneg %p50
        $region18: #{alexnet_pre_forward.13} parent=15 // pred_check_branch
          %159 = sbr.rel (%p157) target = $region20
        $region19: #{alexnet_pre_forward.13} parent=15 // pred_region
          %s160 = sand.u32 %s40, 1
          %s161 = sand.u32 %s40, 1
          %s162 = smul.addr %s161, 64
          %s163 = scalar_lea.vmem [#allocation3], %s162
          %s164 = smul.u32 4, %s16
          %s165 = smul.u32 4, %s18
          %s166 = smul.addr %s164, 28
          %s167 = sadd.s32 %s165, %s166
          %s168 = smul.addr %s167, 4
          %s169 = scalar_lea.vmem %s0, %s168
          // Predicated region
          $region21: #{alexnet_pre_forward.13} parent=19 // pred_check
            _
          $region22: #{alexnet_pre_forward.13} parent=19 // pred_check_branch
            %171 = sbr.rel (0) target = $region24
          $region23: #{alexnet_pre_forward.13} parent=19 // pred_region
            // Predicated region
            $region25: #{alexnet_pre_forward.13} parent=23 // pred_check
              _
            $region26: #{alexnet_pre_forward.13} parent=23 // pred_check_branch
              %173 = sbr.rel (0) target = $region28
            $region27: #{alexnet_pre_forward.13} parent=23 // pred_region
              loop: start=0, step=1, limit=1
              $region29: #{alexnet_pre_forward.13} parent=27 // loop_pre_header
                _
              $region30: #{alexnet_pre_forward.13} parent=27 // loop_header
                %s175 = sphi 0, %s179
                %p176 = scmp.ge.s32.totalorder %s175, 1
                %s180 = sphi %s169, %s169
                %s181 = sphi %s163, %s163
              $region31: #{alexnet_pre_forward.13} parent=27 // loop_header_branch
                %178 = sbr.rel (%p176) target = $region35
              $region32: #{alexnet_pre_forward.13} parent=27 // loop_body
                %v182 = vld [vmem:[%s180] sm:$0xff]
                %183 = vst [vmem:[%s181] sm:$0xff] %v182
                %v184 = vld [vmem:[%s180 + $0x8] sm:$0xff]
                %185 = vst [vmem:[%s181 + $0x8] sm:$0xff] %v184
                %v186 = vld [vmem:[%s180 + $0x70] sm:$0xff]
                %187 = vst [vmem:[%s181 + $0x10] sm:$0xff] %v186
                %v188 = vld [vmem:[%s180 + $0x78] sm:$0xff]
                %189 = vst [vmem:[%s181 + $0x18] sm:$0xff] %v188
                %v190 = vld [vmem:[%s180 + $0xe0] sm:$0xff]
                %191 = vst [vmem:[%s181 + $0x20] sm:$0xff] %v190
                %v192 = vld [vmem:[%s180 + $0xe8] sm:$0xff]
                %193 = vst [vmem:[%s181 + $0x28] sm:$0xff] %v192
                %v194 = vld [vmem:[%s180 + $0x150] sm:$0xff]
                %195 = vst [vmem:[%s181 + $0x30] sm:$0xff] %v194
                %v196 = vld [vmem:[%s180 + $0x158] sm:$0xff]
                %197 = vst [vmem:[%s181 + $0x38] sm:$0xff] %v196
              $region33: #{alexnet_pre_forward.13} parent=27 // loop_footer
                %s179 = sadd.s32 1, %s175
              $region34: #{alexnet_pre_forward.13} parent=27 // loop_footer_branch
                %174 = sbr.rel target = $region30
              $region35: #{alexnet_pre_forward.13} parent=27 // loop_exit
                _
            $region28: #{alexnet_pre_forward.13} parent=23 // pred_fallthru
              _
            // Predicated region
            $region36: #{alexnet_pre_forward.13} parent=23 // pred_check
              _
            $region37: #{alexnet_pre_forward.13} parent=23 // pred_check_branch
              %199 = sbr.rel target = $region39
            $region38: #{alexnet_pre_forward.13} parent=23 // pred_region
              _
            $region39: #{alexnet_pre_forward.13} parent=23 // pred_fallthru
              _
          $region24: #{alexnet_pre_forward.13} parent=19 // pred_fallthru
            _
          %200 = vnop
        $region20: #{alexnet_pre_forward.13} parent=15 // pred_fallthru
          _
        // Predicated region
        $region40: #{alexnet_pre_forward.13} parent=15 // pred_check
          %p201 = pneg %p78
        $region41: #{alexnet_pre_forward.13} parent=15 // pred_check_branch
          %203 = sbr.rel (%p201) target = $region43
        $region42: #{alexnet_pre_forward.13} parent=15 // pred_region
          %s204 = sand.u32 %s68, 1
          %s205 = sand.u32 %s68, 1
          %s206 = smul.addr %s205, 256
          %s207 = scalar_lea.vmem [#allocation4], %s206
          %s208 = smul.u32 64, %s18
          %s209 = smul.addr %s208, 2
          %s210 = sadd.s32 %s17, %s209
          %s211 = smul.addr %s210, 4
          %s212 = scalar_lea.vmem %s1, %s211
          // Predicated region
          $region44: #{alexnet_pre_forward.13} parent=42 // pred_check
            _
          $region45: #{alexnet_pre_forward.13} parent=42 // pred_check_branch
            %214 = sbr.rel (0) target = $region47
          $region46: #{alexnet_pre_forward.13} parent=42 // pred_region
            // Predicated region
            $region48: #{alexnet_pre_forward.13} parent=46 // pred_check
              _
            $region49: #{alexnet_pre_forward.13} parent=46 // pred_check_branch
              %216 = sbr.rel target = $region51
            $region50: #{alexnet_pre_forward.13} parent=46 // pred_region
              // Predicated region
              $region63: #{alexnet_pre_forward.13} parent=50 // pred_check
                _
              $region64: #{alexnet_pre_forward.13} parent=50 // pred_check_branch
                %358 = sbr.rel (0) target = $region66
              $region65: #{alexnet_pre_forward.13} parent=50 // pred_region
                loop: start=0, step=1, limit=1
                $region67: #{alexnet_pre_forward.13} parent=65 // loop_pre_header
                  _
                $region68: #{alexnet_pre_forward.13} parent=65 // loop_header
                  %s360 = sphi 0, %s364
                  %p361 = scmp.ge.s32.totalorder %s360, 1
                  %s365 = sphi %s212, %s212
                  %s366 = sphi %s207, %s207
                $region69: #{alexnet_pre_forward.13} parent=65 // loop_header_branch
                  %363 = sbr.rel (%p361) target = $region73
                $region70: #{alexnet_pre_forward.13} parent=65 // loop_body
                  _
                $region71: #{alexnet_pre_forward.13} parent=65 // loop_footer
                  %s364 = sadd.s32 1, %s360
                $region72: #{alexnet_pre_forward.13} parent=65 // loop_footer_branch
                  %359 = sbr.rel target = $region68
                $region73: #{alexnet_pre_forward.13} parent=65 // loop_exit
                  _
                %s368 = ssub.s32 16, 1
                loop: start=0, step=1, limit=1
                $region74: #{alexnet_pre_forward.13} parent=65 // loop_pre_header
                  _
                $region75: #{alexnet_pre_forward.13} parent=65 // loop_header
                  %s370 = sphi 0, %s374
                  %p371 = scmp.ge.s32.totalorder %s370, 1
                  %s375 = sphi %s212, %s212
                  %s376 = sphi %s207, %s207
                $region76: #{alexnet_pre_forward.13} parent=65 // loop_header_branch
                  %373 = sbr.rel (%p371) target = $region80
                $region77: #{alexnet_pre_forward.13} parent=65 // loop_body
                  %v377 = vld [vmem:[%s375] sm:%s368]
                  %378 = vst [vmem:[%s376] sm:%s368] %v377
                  %v379 = vld [vmem:[%s375 + $0x8] sm:%s368]
                  %380 = vst [vmem:[%s376 + $0x4] sm:%s368] %v379
                  %v381 = vld [vmem:[%s375 + $0x10] sm:%s368]
                  %382 = vst [vmem:[%s376 + $0x8] sm:%s368] %v381
                  %v383 = vld [vmem:[%s375 + $0x18] sm:%s368]
                  %384 = vst [vmem:[%s376 + $0xc] sm:%s368] %v383
                  %v385 = vld [vmem:[%s375 + $0x20] sm:%s368]
                  %386 = vst [vmem:[%s376 + $0x10] sm:%s368] %v385
                  %v387 = vld [vmem:[%s375 + $0x28] sm:%s368]
                  %388 = vst [vmem:[%s376 + $0x14] sm:%s368] %v387
                  %v389 = vld [vmem:[%s375 + $0x30] sm:%s368]
                  %390 = vst [vmem:[%s376 + $0x18] sm:%s368] %v389
                  %v391 = vld [vmem:[%s375 + $0x38] sm:%s368]
                  %392 = vst [vmem:[%s376 + $0x1c] sm:%s368] %v391
                  %v393 = vld [vmem:[%s375 + $0x40] sm:%s368]
                  %394 = vst [vmem:[%s376 + $0x20] sm:%s368] %v393
                  %v395 = vld [vmem:[%s375 + $0x48] sm:%s368]
                  %396 = vst [vmem:[%s376 + $0x24] sm:%s368] %v395
                  %v397 = vld [vmem:[%s375 + $0x50] sm:%s368]
                  %398 = vst [vmem:[%s376 + $0x28] sm:%s368] %v397
                  %v399 = vld [vmem:[%s375 + $0x58] sm:%s368]
                  %400 = vst [vmem:[%s376 + $0x2c] sm:%s368] %v399
                  %v401 = vld [vmem:[%s375 + $0x60] sm:%s368]
                  %402 = vst [vmem:[%s376 + $0x30] sm:%s368] %v401
                  %v403 = vld [vmem:[%s375 + $0x68] sm:%s368]
                  %404 = vst [vmem:[%s376 + $0x34] sm:%s368] %v403
                  %v405 = vld [vmem:[%s375 + $0x70] sm:%s368]
                  %406 = vst [vmem:[%s376 + $0x38] sm:%s368] %v405
                  %v407 = vld [vmem:[%s375 + $0x78] sm:%s368]
                  %408 = vst [vmem:[%s376 + $0x3c] sm:%s368] %v407
                  %v409 = vld [vmem:[%s375 + $0x80] sm:%s368]
                  %410 = vst [vmem:[%s376 + $0x40] sm:%s368] %v409
                  %v411 = vld [vmem:[%s375 + $0x88] sm:%s368]
                  %412 = vst [vmem:[%s376 + $0x44] sm:%s368] %v411
                  %v413 = vld [vmem:[%s375 + $0x90] sm:%s368]
                  %414 = vst [vmem:[%s376 + $0x48] sm:%s368] %v413
                  %v415 = vld [vmem:[%s375 + $0x98] sm:%s368]
                  %416 = vst [vmem:[%s376 + $0x4c] sm:%s368] %v415
                  %v417 = vld [vmem:[%s375 + $0xa0] sm:%s368]
                  %418 = vst [vmem:[%s376 + $0x50] sm:%s368] %v417
                  %v419 = vld [vmem:[%s375 + $0xa8] sm:%s368]
                  %420 = vst [vmem:[%s376 + $0x54] sm:%s368] %v419
                  %v421 = vld [vmem:[%s375 + $0xb0] sm:%s368]
                  %422 = vst [vmem:[%s376 + $0x58] sm:%s368] %v421
                  %v423 = vld [vmem:[%s375 + $0xb8] sm:%s368]
                  %424 = vst [vmem:[%s376 + $0x5c] sm:%s368] %v423
                  %v425 = vld [vmem:[%s375 + $0xc0] sm:%s368]
                  %426 = vst [vmem:[%s376 + $0x60] sm:%s368] %v425
                  %v427 = vld [vmem:[%s375 + $0xc8] sm:%s368]
                  %428 = vst [vmem:[%s376 + $0x64] sm:%s368] %v427
                  %v429 = vld [vmem:[%s375 + $0xd0] sm:%s368]
                  %430 = vst [vmem:[%s376 + $0x68] sm:%s368] %v429
                  %v431 = vld [vmem:[%s375 + $0xd8] sm:%s368]
                  %432 = vst [vmem:[%s376 + $0x6c] sm:%s368] %v431
                  %v433 = vld [vmem:[%s375 + $0xe0] sm:%s368]
                  %434 = vst [vmem:[%s376 + $0x70] sm:%s368] %v433
                  %v435 = vld [vmem:[%s375 + $0xe8] sm:%s368]
                  %436 = vst [vmem:[%s376 + $0x74] sm:%s368] %v435
                  %v437 = vld [vmem:[%s375 + $0xf0] sm:%s368]
                  %438 = vst [vmem:[%s376 + $0x78] sm:%s368] %v437
                  %v439 = vld [vmem:[%s375 + $0xf8] sm:%s368]
                  %440 = vst [vmem:[%s376 + $0x7c] sm:%s368] %v439
                  %v441 = vld [vmem:[%s375 + $0x100] sm:%s368]
                  %442 = vst [vmem:[%s376 + $0x80] sm:%s368] %v441
                  %v443 = vld [vmem:[%s375 + $0x108] sm:%s368]
                  %444 = vst [vmem:[%s376 + $0x84] sm:%s368] %v443
                  %v445 = vld [vmem:[%s375 + $0x110] sm:%s368]
                  %446 = vst [vmem:[%s376 + $0x88] sm:%s368] %v445
                  %v447 = vld [vmem:[%s375 + $0x118] sm:%s368]
                  %448 = vst [vmem:[%s376 + $0x8c] sm:%s368] %v447
                  %v449 = vld [vmem:[%s375 + $0x120] sm:%s368]
                  %450 = vst [vmem:[%s376 + $0x90] sm:%s368] %v449
                  %v451 = vld [vmem:[%s375 + $0x128] sm:%s368]
                  %452 = vst [vmem:[%s376 + $0x94] sm:%s368] %v451
                  %v453 = vld [vmem:[%s375 + $0x130] sm:%s368]
                  %454 = vst [vmem:[%s376 + $0x98] sm:%s368] %v453
                  %v455 = vld [vmem:[%s375 + $0x138] sm:%s368]
                  %456 = vst [vmem:[%s376 + $0x9c] sm:%s368] %v455
                  %v457 = vld [vmem:[%s375 + $0x140] sm:%s368]
                  %458 = vst [vmem:[%s376 + $0xa0] sm:%s368] %v457
                  %v459 = vld [vmem:[%s375 + $0x148] sm:%s368]
                  %460 = vst [vmem:[%s376 + $0xa4] sm:%s368] %v459
                  %v461 = vld [vmem:[%s375 + $0x150] sm:%s368]
                  %462 = vst [vmem:[%s376 + $0xa8] sm:%s368] %v461
                  %v463 = vld [vmem:[%s375 + $0x158] sm:%s368]
                  %464 = vst [vmem:[%s376 + $0xac] sm:%s368] %v463
                  %v465 = vld [vmem:[%s375 + $0x160] sm:%s368]
                  %466 = vst [vmem:[%s376 + $0xb0] sm:%s368] %v465
                  %v467 = vld [vmem:[%s375 + $0x168] sm:%s368]
                  %468 = vst [vmem:[%s376 + $0xb4] sm:%s368] %v467
                  %v469 = vld [vmem:[%s375 + $0x170] sm:%s368]
                  %470 = vst [vmem:[%s376 + $0xb8] sm:%s368] %v469
                  %v471 = vld [vmem:[%s375 + $0x178] sm:%s368]
                  %472 = vst [vmem:[%s376 + $0xbc] sm:%s368] %v471
                  %v473 = vld [vmem:[%s375 + $0x180] sm:%s368]
                  %474 = vst [vmem:[%s376 + $0xc0] sm:%s368] %v473
                  %v475 = vld [vmem:[%s375 + $0x188] sm:%s368]
                  %476 = vst [vmem:[%s376 + $0xc4] sm:%s368] %v475
                  %v477 = vld [vmem:[%s375 + $0x190] sm:%s368]
                  %478 = vst [vmem:[%s376 + $0xc8] sm:%s368] %v477
                  %v479 = vld [vmem:[%s375 + $0x198] sm:%s368]
                  %480 = vst [vmem:[%s376 + $0xcc] sm:%s368] %v479
                  %v481 = vld [vmem:[%s375 + $0x1a0] sm:%s368]
                  %482 = vst [vmem:[%s376 + $0xd0] sm:%s368] %v481
                  %v483 = vld [vmem:[%s375 + $0x1a8] sm:%s368]
                  %484 = vst [vmem:[%s376 + $0xd4] sm:%s368] %v483
                  %v485 = vld [vmem:[%s375 + $0x1b0] sm:%s368]
                  %486 = vst [vmem:[%s376 + $0xd8] sm:%s368] %v485
                  %v487 = vld [vmem:[%s375 + $0x1b8] sm:%s368]
                  %488 = vst [vmem:[%s376 + $0xdc] sm:%s368] %v487
                  %v489 = vld [vmem:[%s375 + $0x1c0] sm:%s368]
                  %490 = vst [vmem:[%s376 + $0xe0] sm:%s368] %v489
                  %v491 = vld [vmem:[%s375 + $0x1c8] sm:%s368]
                  %492 = vst [vmem:[%s376 + $0xe4] sm:%s368] %v491
                  %v493 = vld [vmem:[%s375 + $0x1d0] sm:%s368]
                  %494 = vst [vmem:[%s376 + $0xe8] sm:%s368] %v493
                  %v495 = vld [vmem:[%s375 + $0x1d8] sm:%s368]
                  %496 = vst [vmem:[%s376 + $0xec] sm:%s368] %v495
                  %v497 = vld [vmem:[%s375 + $0x1e0] sm:%s368]
                  %498 = vst [vmem:[%s376 + $0xf0] sm:%s368] %v497
                  %v499 = vld [vmem:[%s375 + $0x1e8] sm:%s368]
                  %500 = vst [vmem:[%s376 + $0xf4] sm:%s368] %v499
                  %v501 = vld [vmem:[%s375 + $0x1f0] sm:%s368]
                  %502 = vst [vmem:[%s376 + $0xf8] sm:%s368] %v501
                  %v503 = vld [vmem:[%s375 + $0x1f8] sm:%s368]
                  %504 = vst [vmem:[%s376 + $0xfc] sm:%s368] %v503
                $region78: #{alexnet_pre_forward.13} parent=65 // loop_footer
                  %s374 = sadd.s32 1, %s370
                $region79: #{alexnet_pre_forward.13} parent=65 // loop_footer_branch
                  %369 = sbr.rel target = $region75
                $region80: #{alexnet_pre_forward.13} parent=65 // loop_exit
                  _
              $region66: #{alexnet_pre_forward.13} parent=50 // pred_fallthru
                _
            $region51: #{alexnet_pre_forward.13} parent=46 // pred_fallthru
              _
            // Predicated region
            $region52: #{alexnet_pre_forward.13} parent=46 // pred_check
              _
            $region53: #{alexnet_pre_forward.13} parent=46 // pred_check_branch
              %218 = sbr.rel (0) target = $region55
            $region54: #{alexnet_pre_forward.13} parent=46 // pred_region
              %s220 = ssub.s32 16, 1
              loop: start=0, step=1, limit=1
              $region56: #{alexnet_pre_forward.13} parent=54 // loop_pre_header
                _
              $region57: #{alexnet_pre_forward.13} parent=54 // loop_header
                %s222 = sphi 0, %s226
                %p223 = scmp.ge.s32.totalorder %s222, 1
                %s227 = sphi %s212, %s212
                %s228 = sphi %s207, %s207
              $region58: #{alexnet_pre_forward.13} parent=54 // loop_header_branch
                %225 = sbr.rel (%p223) target = $region62
              $region59: #{alexnet_pre_forward.13} parent=54 // loop_body
                %v229 = vld [vmem:[%s227] sm:%s220]
                %230 = vst [vmem:[%s228] sm:%s220] %v229
                %v231 = vld [vmem:[%s227 + $0x8] sm:%s220]
                %232 = vst [vmem:[%s228 + $0x4] sm:%s220] %v231
                %v233 = vld [vmem:[%s227 + $0x10] sm:%s220]
                %234 = vst [vmem:[%s228 + $0x8] sm:%s220] %v233
                %v235 = vld [vmem:[%s227 + $0x18] sm:%s220]
                %236 = vst [vmem:[%s228 + $0xc] sm:%s220] %v235
                %v237 = vld [vmem:[%s227 + $0x20] sm:%s220]
                %238 = vst [vmem:[%s228 + $0x10] sm:%s220] %v237
                %v239 = vld [vmem:[%s227 + $0x28] sm:%s220]
                %240 = vst [vmem:[%s228 + $0x14] sm:%s220] %v239
                %v241 = vld [vmem:[%s227 + $0x30] sm:%s220]
                %242 = vst [vmem:[%s228 + $0x18] sm:%s220] %v241
                %v243 = vld [vmem:[%s227 + $0x38] sm:%s220]
                %244 = vst [vmem:[%s228 + $0x1c] sm:%s220] %v243
                %v245 = vld [vmem:[%s227 + $0x40] sm:%s220]
                %246 = vst [vmem:[%s228 + $0x20] sm:%s220] %v245
                %v247 = vld [vmem:[%s227 + $0x48] sm:%s220]
                %248 = vst [vmem:[%s228 + $0x24] sm:%s220] %v247
                %v249 = vld [vmem:[%s227 + $0x50] sm:%s220]
                %250 = vst [vmem:[%s228 + $0x28] sm:%s220] %v249
                %v251 = vld [vmem:[%s227 + $0x58] sm:%s220]
                %252 = vst [vmem:[%s228 + $0x2c] sm:%s220] %v251
                %v253 = vld [vmem:[%s227 + $0x60] sm:%s220]
                %254 = vst [vmem:[%s228 + $0x30] sm:%s220] %v253
                %v255 = vld [vmem:[%s227 + $0x68] sm:%s220]
                %256 = vst [vmem:[%s228 + $0x34] sm:%s220] %v255
                %v257 = vld [vmem:[%s227 + $0x70] sm:%s220]
                %258 = vst [vmem:[%s228 + $0x38] sm:%s220] %v257
                %v259 = vld [vmem:[%s227 + $0x78] sm:%s220]
                %260 = vst [vmem:[%s228 + $0x3c] sm:%s220] %v259
                %v261 = vld [vmem:[%s227 + $0x80] sm:%s220]
                %262 = vst [vmem:[%s228 + $0x40] sm:%s220] %v261
                %v263 = vld [vmem:[%s227 + $0x88] sm:%s220]
                %264 = vst [vmem:[%s228 + $0x44] sm:%s220] %v263
                %v265 = vld [vmem:[%s227 + $0x90] sm:%s220]
                %266 = vst [vmem:[%s228 + $0x48] sm:%s220] %v265
                %v267 = vld [vmem:[%s227 + $0x98] sm:%s220]
                %268 = vst [vmem:[%s228 + $0x4c] sm:%s220] %v267
                %v269 = vld [vmem:[%s227 + $0xa0] sm:%s220]
                %270 = vst [vmem:[%s228 + $0x50] sm:%s220] %v269
                %v271 = vld [vmem:[%s227 + $0xa8] sm:%s220]
                %272 = vst [vmem:[%s228 + $0x54] sm:%s220] %v271
                %v273 = vld [vmem:[%s227 + $0xb0] sm:%s220]
                %274 = vst [vmem:[%s228 + $0x58] sm:%s220] %v273
                %v275 = vld [vmem:[%s227 + $0xb8] sm:%s220]
                %276 = vst [vmem:[%s228 + $0x5c] sm:%s220] %v275
                %v277 = vld [vmem:[%s227 + $0xc0] sm:%s220]
                %278 = vst [vmem:[%s228 + $0x60] sm:%s220] %v277
                %v279 = vld [vmem:[%s227 + $0xc8] sm:%s220]
                %280 = vst [vmem:[%s228 + $0x64] sm:%s220] %v279
                %v281 = vld [vmem:[%s227 + $0xd0] sm:%s220]
                %282 = vst [vmem:[%s228 + $0x68] sm:%s220] %v281
                %v283 = vld [vmem:[%s227 + $0xd8] sm:%s220]
                %284 = vst [vmem:[%s228 + $0x6c] sm:%s220] %v283
                %v285 = vld [vmem:[%s227 + $0xe0] sm:%s220]
                %286 = vst [vmem:[%s228 + $0x70] sm:%s220] %v285
                %v287 = vld [vmem:[%s227 + $0xe8] sm:%s220]
                %288 = vst [vmem:[%s228 + $0x74] sm:%s220] %v287
                %v289 = vld [vmem:[%s227 + $0xf0] sm:%s220]
                %290 = vst [vmem:[%s228 + $0x78] sm:%s220] %v289
                %v291 = vld [vmem:[%s227 + $0xf8] sm:%s220]
                %292 = vst [vmem:[%s228 + $0x7c] sm:%s220] %v291
                %v293 = vld [vmem:[%s227 + $0x100] sm:%s220]
                %294 = vst [vmem:[%s228 + $0x80] sm:%s220] %v293
                %v295 = vld [vmem:[%s227 + $0x108] sm:%s220]
                %296 = vst [vmem:[%s228 + $0x84] sm:%s220] %v295
                %v297 = vld [vmem:[%s227 + $0x110] sm:%s220]
                %298 = vst [vmem:[%s228 + $0x88] sm:%s220] %v297
                %v299 = vld [vmem:[%s227 + $0x118] sm:%s220]
                %300 = vst [vmem:[%s228 + $0x8c] sm:%s220] %v299
                %v301 = vld [vmem:[%s227 + $0x120] sm:%s220]
                %302 = vst [vmem:[%s228 + $0x90] sm:%s220] %v301
                %v303 = vld [vmem:[%s227 + $0x128] sm:%s220]
                %304 = vst [vmem:[%s228 + $0x94] sm:%s220] %v303
                %v305 = vld [vmem:[%s227 + $0x130] sm:%s220]
                %306 = vst [vmem:[%s228 + $0x98] sm:%s220] %v305
                %v307 = vld [vmem:[%s227 + $0x138] sm:%s220]
                %308 = vst [vmem:[%s228 + $0x9c] sm:%s220] %v307
                %v309 = vld [vmem:[%s227 + $0x140] sm:%s220]
                %310 = vst [vmem:[%s228 + $0xa0] sm:%s220] %v309
                %v311 = vld [vmem:[%s227 + $0x148] sm:%s220]
                %312 = vst [vmem:[%s228 + $0xa4] sm:%s220] %v311
                %v313 = vld [vmem:[%s227 + $0x150] sm:%s220]
                %314 = vst [vmem:[%s228 + $0xa8] sm:%s220] %v313
                %v315 = vld [vmem:[%s227 + $0x158] sm:%s220]
                %316 = vst [vmem:[%s228 + $0xac] sm:%s220] %v315
                %v317 = vld [vmem:[%s227 + $0x160] sm:%s220]
                %318 = vst [vmem:[%s228 + $0xb0] sm:%s220] %v317
                %v319 = vld [vmem:[%s227 + $0x168] sm:%s220]
                %320 = vst [vmem:[%s228 + $0xb4] sm:%s220] %v319
                %v321 = vld [vmem:[%s227 + $0x170] sm:%s220]
                %322 = vst [vmem:[%s228 + $0xb8] sm:%s220] %v321
                %v323 = vld [vmem:[%s227 + $0x178] sm:%s220]
                %324 = vst [vmem:[%s228 + $0xbc] sm:%s220] %v323
                %v325 = vld [vmem:[%s227 + $0x180] sm:%s220]
                %326 = vst [vmem:[%s228 + $0xc0] sm:%s220] %v325
                %v327 = vld [vmem:[%s227 + $0x188] sm:%s220]
                %328 = vst [vmem:[%s228 + $0xc4] sm:%s220] %v327
                %v329 = vld [vmem:[%s227 + $0x190] sm:%s220]
                %330 = vst [vmem:[%s228 + $0xc8] sm:%s220] %v329
                %v331 = vld [vmem:[%s227 + $0x198] sm:%s220]
                %332 = vst [vmem:[%s228 + $0xcc] sm:%s220] %v331
                %v333 = vld [vmem:[%s227 + $0x1a0] sm:%s220]
                %334 = vst [vmem:[%s228 + $0xd0] sm:%s220] %v333
                %v335 = vld [vmem:[%s227 + $0x1a8] sm:%s220]
                %336 = vst [vmem:[%s228 + $0xd4] sm:%s220] %v335
                %v337 = vld [vmem:[%s227 + $0x1b0] sm:%s220]
                %338 = vst [vmem:[%s228 + $0xd8] sm:%s220] %v337
                %v339 = vld [vmem:[%s227 + $0x1b8] sm:%s220]
                %340 = vst [vmem:[%s228 + $0xdc] sm:%s220] %v339
                %v341 = vld [vmem:[%s227 + $0x1c0] sm:%s220]
                %342 = vst [vmem:[%s228 + $0xe0] sm:%s220] %v341
                %v343 = vld [vmem:[%s227 + $0x1c8] sm:%s220]
                %344 = vst [vmem:[%s228 + $0xe4] sm:%s220] %v343
                %v345 = vld [vmem:[%s227 + $0x1d0] sm:%s220]
                %346 = vst [vmem:[%s228 + $0xe8] sm:%s220] %v345
                %v347 = vld [vmem:[%s227 + $0x1d8] sm:%s220]
                %348 = vst [vmem:[%s228 + $0xec] sm:%s220] %v347
                %v349 = vld [vmem:[%s227 + $0x1e0] sm:%s220]
                %350 = vst [vmem:[%s228 + $0xf0] sm:%s220] %v349
                %v351 = vld [vmem:[%s227 + $0x1e8] sm:%s220]
                %352 = vst [vmem:[%s228 + $0xf4] sm:%s220] %v351
                %v353 = vld [vmem:[%s227 + $0x1f0] sm:%s220]
                %354 = vst [vmem:[%s228 + $0xf8] sm:%s220] %v353
                %v355 = vld [vmem:[%s227 + $0x1f8] sm:%s220]
                %356 = vst [vmem:[%s228 + $0xfc] sm:%s220] %v355
              $region60: #{alexnet_pre_forward.13} parent=54 // loop_footer
                %s226 = sadd.s32 1, %s222
              $region61: #{alexnet_pre_forward.13} parent=54 // loop_footer_branch
                %221 = sbr.rel target = $region57
              $region62: #{alexnet_pre_forward.13} parent=54 // loop_exit
                _
            $region55: #{alexnet_pre_forward.13} parent=46 // pred_fallthru
              _
          $region47: #{alexnet_pre_forward.13} parent=42 // pred_fallthru
            _
          %505 = vnop
        $region43: #{alexnet_pre_forward.13} parent=15 // pred_fallthru
          _
        // Predicated region
        $region81: #{alexnet_pre_forward.13} parent=15 // pred_check
          %p506 = pneg %p104
        $region82: #{alexnet_pre_forward.13} parent=15 // pred_check_branch
          %508 = sbr.rel (%p506) target = $region84
        $region83: #{alexnet_pre_forward.13} parent=15 // pred_region
          %p509 = scmp.lt.s32.totalorder %s17, 1
          %s510 = scalar_select %p509, %s17, 1
          %s511 = scalar_lea.vmem %s2, %s510
        $region84: #{alexnet_pre_forward.13} parent=15 // pred_fallthru
          _
      $region16: #{alexnet_pre_forward.13} parent=5 // pred_fallthru
        _
      %p512 = scmp.le.s32.totalorder 1, %s9
      %p513 = scmp.lt.s32.totalorder %s9, 15
      %p514 = pnand %p512, %p513
      %p515 = pneg %p514
      // Predicated region
      $region85: #{alexnet_pre_forward.13} parent=5 // pred_check
        _
      $region86: #{alexnet_pre_forward.13} parent=5 // pred_check_branch
        %517 = sbr.rel (%p514) target = $region88
      $region87: #{alexnet_pre_forward.13} parent=5 // pred_region
        %s518 = ssub.s32 %s9, 1
        %s519 = sand.u32 %s43, 1
        %s520 = sand.u32 %s43, 1
        %s521 = smul.addr %s520, 64
        %s522 = scalar_lea.vmem [#allocation3], %s521
        // Predicated region
        $region89: #{alexnet_pre_forward.13} parent=87 // pred_check
          %p523 = pneg %p56
        $region90: #{alexnet_pre_forward.13} parent=87 // pred_check_branch
          %525 = sbr.rel (%p523) target = $region92
        $region91: #{alexnet_pre_forward.13} parent=87 // pred_region
          _
        $region92: #{alexnet_pre_forward.13} parent=87 // pred_fallthru
          _
        %s526 = sand.u32 %s71, 1
        %s527 = sand.u32 %s71, 1
        %s528 = smul.addr %s527, 256
        %s529 = scalar_lea.vmem [#allocation4], %s528
        // Predicated region
        $region93: #{alexnet_pre_forward.13} parent=87 // pred_check
          %p530 = pneg %p84
        $region94: #{alexnet_pre_forward.13} parent=87 // pred_check_branch
          %532 = sbr.rel (%p530) target = $region96
        $region95: #{alexnet_pre_forward.13} parent=87 // pred_region
          _
        $region96: #{alexnet_pre_forward.13} parent=87 // pred_fallthru
          _
        %s533 = sand.u32 %s43, 1
        %s534 = sand.u32 %s43, 1
        %s535 = smul.addr %s534, 64
        %s536 = scalar_lea.vmem [#allocation3], %s535
        %p537 = pneg %p56
        %p538 = pneg %p53
        %s539 = sand.u32 %s71, 1
        %s540 = sand.u32 %s71, 1
        %s541 = smul.addr %s540, 256
        %s542 = scalar_lea.vmem [#allocation4], %s541
        %p543 = pneg %p84
        %p544 = pneg %p81
        %p545 = scmp.lt.s32.totalorder %s20, 1
        %s546 = scalar_select %p545, %s20, 1
        %s547 = scalar_lea.vmem %s2, %s546
        %p548 = pneg %p110
        %p549 = pneg %p107
        %p550 = pneg %p138
        %p551 = pneg %p135
        %s552 = sand.u32 %s125, 1
        %s553 = sand.u32 %s125, 1
        %s554 = smul.addr %s553, 16
        %s555 = scalar_lea.vmem [#allocation5], %s554
        %s556 = smul.u32 4, %s19
        %s557 = smul.u32 4, %s21
        %s558 = smul.u32 64, %s21
        %p559 = scmp.lt.s32.totalorder %s20, 1
        %s560 = scalar_select %p559, %s20, 1
        %s561 = scalar_lea.vmem %s2, %s560
        %s562 = smul.u32 4, %s19
        %p563 = scmp.eq.s32.totalorder %s21, 0
        // Predicated region
        $region97: #{alexnet_pre_forward.13} parent=87 // pred_check
          %p564 = pneg %p563
        $region98: #{alexnet_pre_forward.13} parent=87 // pred_check_branch
          %566 = sbr.rel (%p564) target = $region100
        $region99: #{alexnet_pre_forward.13} parent=87 // pred_region
          %567 = vst [vmem:[#allocation2] sm:$0xff] 0.0
          %568 = vst [vmem:[#allocation2 + $0x8] sm:$0xff] 0.0
          %569 = vst [vmem:[#allocation2 + $0x10] sm:$0xff] 0.0
          %570 = vst [vmem:[#allocation2 + $0x18] sm:$0xff] 0.0
        $region100: #{alexnet_pre_forward.13} parent=87 // pred_fallthru
          _
        %v571 = vld [vmem:[#allocation2] sm:$0xff]
        %v572 = vld [vmem:[#allocation2 + $0x8] sm:$0xff]
        %v573 = vld [vmem:[#allocation2 + $0x10] sm:$0xff]
        %v574 = vld [vmem:[#allocation2 + $0x18] sm:$0xff]
        %v575 = vld [vmem:[%s522] sm:$0xff]
        %v576 = vld [vmem:[%s522 + $0x8] sm:$0xff]
        %v577 = vld [vmem:[%s522 + $0x10] sm:$0xff]
        %v578 = vld [vmem:[%s522 + $0x18] sm:$0xff]
        %v579 = vld [vmem:[%s522 + $0x20] sm:$0xff]
        %v580 = vld [vmem:[%s522 + $0x28] sm:$0xff]
        %v581 = vld [vmem:[%s522 + $0x30] sm:$0xff]
        %v582 = vld [vmem:[%s522 + $0x38] sm:$0xff]
        %v583 = vld [vmem:[%s529] sm:$0xf]
        %v584 = vld [vmem:[%s529 + $0x4] sm:$0xf]
        %v585 = vld [vmem:[%s529 + $0x8] sm:$0xf]
        %v586 = vld [vmem:[%s529 + $0xc] sm:$0xf]
        %v587 = vld [vmem:[%s529 + $0x10] sm:$0xf]
        %v588 = vld [vmem:[%s529 + $0x14] sm:$0xf]
        %v589 = vld [vmem:[%s529 + $0x18] sm:$0xf]
        %v590 = vld [vmem:[%s529 + $0x1c] sm:$0xf]
        %v591 = vld [vmem:[%s529 + $0x20] sm:$0xf]
        %v592 = vld [vmem:[%s529 + $0x24] sm:$0xf]
        %v593 = vld [vmem:[%s529 + $0x28] sm:$0xf]
        %v594 = vld [vmem:[%s529 + $0x2c] sm:$0xf]
        %v595 = vld [vmem:[%s529 + $0x30] sm:$0xf]
        %v596 = vld [vmem:[%s529 + $0x34] sm:$0xf]
        %v597 = vld [vmem:[%s529 + $0x38] sm:$0xf]
        %v598 = vld [vmem:[%s529 + $0x3c] sm:$0xf]
        %v599 = vld [vmem:[%s529 + $0x40] sm:$0xf]
        %v600 = vld [vmem:[%s529 + $0x44] sm:$0xf]
        %v601 = vld [vmem:[%s529 + $0x48] sm:$0xf]
        %v602 = vld [vmem:[%s529 + $0x4c] sm:$0xf]
        %v603 = vld [vmem:[%s529 + $0x50] sm:$0xf]
        %v604 = vld [vmem:[%s529 + $0x54] sm:$0xf]
        %v605 = vld [vmem:[%s529 + $0x58] sm:$0xf]
        %v606 = vld [vmem:[%s529 + $0x5c] sm:$0xf]
        %v607 = vld [vmem:[%s529 + $0x60] sm:$0xf]
        %v608 = vld [vmem:[%s529 + $0x64] sm:$0xf]
        %v609 = vld [vmem:[%s529 + $0x68] sm:$0xf]
        %v610 = vld [vmem:[%s529 + $0x6c] sm:$0xf]
        %v611 = vld [vmem:[%s529 + $0x70] sm:$0xf]
        %v612 = vld [vmem:[%s529 + $0x74] sm:$0xf]
        %v613 = vld [vmem:[%s529 + $0x78] sm:$0xf]
        %v614 = vld [vmem:[%s529 + $0x7c] sm:$0xf]
        %v615 = vld [vmem:[%s529 + $0x80] sm:$0xf]
        %v616 = vld [vmem:[%s529 + $0x84] sm:$0xf]
        %v617 = vld [vmem:[%s529 + $0x88] sm:$0xf]
        %v618 = vld [vmem:[%s529 + $0x8c] sm:$0xf]
        %v619 = vld [vmem:[%s529 + $0x90] sm:$0xf]
        %v620 = vld [vmem:[%s529 + $0x94] sm:$0xf]
        %v621 = vld [vmem:[%s529 + $0x98] sm:$0xf]
        %v622 = vld [vmem:[%s529 + $0x9c] sm:$0xf]
        %v623 = vld [vmem:[%s529 + $0xa0] sm:$0xf]
        %v624 = vld [vmem:[%s529 + $0xa4] sm:$0xf]
        %v625 = vld [vmem:[%s529 + $0xa8] sm:$0xf]
        %v626 = vld [vmem:[%s529 + $0xac] sm:$0xf]
        %v627 = vld [vmem:[%s529 + $0xb0] sm:$0xf]
        %v628 = vld [vmem:[%s529 + $0xb4] sm:$0xf]
        %v629 = vld [vmem:[%s529 + $0xb8] sm:$0xf]
        %v630 = vld [vmem:[%s529 + $0xbc] sm:$0xf]
        %v631 = vld [vmem:[%s529 + $0xc0] sm:$0xf]
        %v632 = vld [vmem:[%s529 + $0xc4] sm:$0xf]
        %v633 = vld [vmem:[%s529 + $0xc8] sm:$0xf]
        %v634 = vld [vmem:[%s529 + $0xcc] sm:$0xf]
        %v635 = vld [vmem:[%s529 + $0xd0] sm:$0xf]
        %v636 = vld [vmem:[%s529 + $0xd4] sm:$0xf]
        %v637 = vld [vmem:[%s529 + $0xd8] sm:$0xf]
        %v638 = vld [vmem:[%s529 + $0xdc] sm:$0xf]
        %v639 = vld [vmem:[%s529 + $0xe0] sm:$0xf]
        %v640 = vld [vmem:[%s529 + $0xe4] sm:$0xf]
        %v641 = vld [vmem:[%s529 + $0xe8] sm:$0xf]
        %v642 = vld [vmem:[%s529 + $0xec] sm:$0xf]
        %v643 = vld [vmem:[%s529 + $0xf0] sm:$0xf]
        %v644 = vld [vmem:[%s529 + $0xf4] sm:$0xf]
        %v645 = vld [vmem:[%s529 + $0xf8] sm:$0xf]
        %v646 = vld [vmem:[%s529 + $0xfc] sm:$0xf]
        %v655 = vunpack.c.l.b16 %v575
        %v656 = vunpack.c.h.b16 %v575
        %v657 = vunpack.c.l.b16 %v576
        %v658 = vunpack.c.h.b16 %v576
        %v659 = vunpack.c.l.b16 %v577
        %v660 = vunpack.c.h.b16 %v577
        %v661 = vunpack.c.l.b16 %v578
        %v662 = vunpack.c.h.b16 %v578
        %v663 = vunpack.c.l.b16 %v579
        %v664 = vunpack.c.h.b16 %v579
        %v665 = vunpack.c.l.b16 %v580
        %v666 = vunpack.c.h.b16 %v580
        %v667 = vunpack.c.l.b16 %v581
        %v668 = vunpack.c.h.b16 %v581
        %v669 = vunpack.c.l.b16 %v582
        %v670 = vunpack.c.h.b16 %v582
        %v671 = vpack.c.b16 %v659, %v655
        %v672 = vpack.c.b16 %v660, %v656
        %v673 = vpack.c.b16 %v661, %v657
        %v674 = vpack.c.b16 %v662, %v658
        %v675 = vpack.c.b16 %v667, %v663
        %v676 = vpack.c.b16 %v668, %v664
        %v677 = vpack.c.b16 %v669, %v665
        %v678 = vpack.c.b16 %v670, %v666
        %v751 = vunpack.c.l.b16 %v583
        %v752 = vunpack.c.l.b16 %v584
        %v753 = vunpack.c.l.b16 %v585
        %v754 = vunpack.c.l.b16 %v586
        %v755 = vunpack.c.l.b16 %v587
        %v756 = vunpack.c.l.b16 %v588
        %v757 = vunpack.c.l.b16 %v589
        %v758 = vunpack.c.l.b16 %v590
        %v759 = vunpack.c.l.b16 %v591
        %v760 = vunpack.c.l.b16 %v592
        %v761 = vunpack.c.l.b16 %v593
        %v762 = vunpack.c.l.b16 %v594
        %v763 = vunpack.c.l.b16 %v595
        %v764 = vunpack.c.l.b16 %v596
        %v765 = vunpack.c.l.b16 %v597
        %v766 = vunpack.c.l.b16 %v598
        %v767 = vunpack.c.l.b16 %v599
        %v768 = vunpack.c.l.b16 %v600
        %v769 = vunpack.c.l.b16 %v601
        %v770 = vunpack.c.l.b16 %v602
        %v771 = vunpack.c.l.b16 %v603
        %v772 = vunpack.c.l.b16 %v604
        %v773 = vunpack.c.l.b16 %v605
        %v774 = vunpack.c.l.b16 %v606
        %v775 = vunpack.c.l.b16 %v607
        %v776 = vunpack.c.l.b16 %v608
        %v777 = vunpack.c.l.b16 %v609
        %v778 = vunpack.c.l.b16 %v610
        %v779 = vunpack.c.l.b16 %v611
        %v780 = vunpack.c.l.b16 %v612
        %v781 = vunpack.c.l.b16 %v613
        %v782 = vunpack.c.l.b16 %v614
        %v783 = vunpack.c.l.b16 %v615
        %v784 = vunpack.c.l.b16 %v616
        %v785 = vunpack.c.l.b16 %v617
        %v786 = vunpack.c.l.b16 %v618
        %v787 = vunpack.c.l.b16 %v619
        %v788 = vunpack.c.l.b16 %v620
        %v789 = vunpack.c.l.b16 %v621
        %v790 = vunpack.c.l.b16 %v622
        %v791 = vunpack.c.l.b16 %v623
        %v792 = vunpack.c.l.b16 %v624
        %v793 = vunpack.c.l.b16 %v625
        %v794 = vunpack.c.l.b16 %v626
        %v795 = vunpack.c.l.b16 %v627
        %v796 = vunpack.c.l.b16 %v628
        %v797 = vunpack.c.l.b16 %v629
        %v798 = vunpack.c.l.b16 %v630
        %v799 = vunpack.c.l.b16 %v631
        %v800 = vunpack.c.l.b16 %v632
        %v801 = vunpack.c.l.b16 %v633
        %v802 = vunpack.c.l.b16 %v634
        %v803 = vunpack.c.l.b16 %v635
        %v804 = vunpack.c.l.b16 %v636
        %v805 = vunpack.c.l.b16 %v637
        %v806 = vunpack.c.l.b16 %v638
        %v807 = vunpack.c.l.b16 %v639
        %v808 = vunpack.c.l.b16 %v640
        %v809 = vunpack.c.l.b16 %v641
        %v810 = vunpack.c.l.b16 %v642
        %v811 = vunpack.c.l.b16 %v643
        %v812 = vunpack.c.l.b16 %v644
        %v813 = vunpack.c.l.b16 %v645
        %v814 = vunpack.c.l.b16 %v646
        %v815 = vpack.c.b16 %v752, %v751
        %v816 = vpack.c.b16 %v754, %v753
        %v817 = vpack.c.b16 %v756, %v755
        %v818 = vpack.c.b16 %v758, %v757
        %v819 = vpack.c.b16 %v760, %v759
        %v820 = vpack.c.b16 %v762, %v761
        %v821 = vpack.c.b16 %v764, %v763
        %v822 = vpack.c.b16 %v766, %v765
        %v823 = vpack.c.b16 %v768, %v767
        %v824 = vpack.c.b16 %v770, %v769
        %v825 = vpack.c.b16 %v772, %v771
        %v826 = vpack.c.b16 %v774, %v773
        %v827 = vpack.c.b16 %v776, %v775
        %v828 = vpack.c.b16 %v778, %v777
        %v829 = vpack.c.b16 %v780, %v779
        %v830 = vpack.c.b16 %v782, %v781
        %v831 = vpack.c.b16 %v784, %v783
        %v832 = vpack.c.b16 %v786, %v785
        %v833 = vpack.c.b16 %v788, %v787
        %v834 = vpack.c.b16 %v790, %v789
        %v835 = vpack.c.b16 %v792, %v791
        %v836 = vpack.c.b16 %v794, %v793
        %v837 = vpack.c.b16 %v796, %v795
        %v838 = vpack.c.b16 %v798, %v797
        %v839 = vpack.c.b16 %v800, %v799
        %v840 = vpack.c.b16 %v802, %v801
        %v841 = vpack.c.b16 %v804, %v803
        %v842 = vpack.c.b16 %v806, %v805
        %v843 = vpack.c.b16 %v808, %v807
        %v844 = vpack.c.b16 %v810, %v809
        %v845 = vpack.c.b16 %v812, %v811
        %v846 = vpack.c.b16 %v814, %v813
        %879 = vmatpush.bf16.msra.mxu0 %v822
        %880 = vmatpush.bf16.msra.mxu0 %v821
        %881 = vmatpush.bf16.msra.mxu0 %v820
        %882 = vmatpush.bf16.msra.mxu0 %v819
        %883 = vmatpush.bf16.msra.mxu0 %v818
        %884 = vmatpush.bf16.msra.mxu0 %v817
        %885 = vmatpush.bf16.msra.mxu0 %v816
        %886 = vmatpush.bf16.msra.mxu0 %v815
        %887 = vmatmul.bf16.gmra.mxu0 %v671
        %v888 = vpop.f32.mrf.mxu0
        %v889 = vadd.f32 0.0, %v888
        %v890 = vpop.f32.mrf.mxu0
        %v891 = vadd.f32 0.0, %v890
        %892 = vmatmul.bf16.gmra.mxu0 %v675
        %v893 = vpop.f32.mrf.mxu0
        %v894 = vadd.f32 0.0, %v893
        %v895 = vpop.f32.mrf.mxu0
        %v896 = vadd.f32 0.0, %v895
        %897 = vdwg.mxu0
        %898 = vmatpush.bf16.msra.mxu0 %v830
        %899 = vmatpush.bf16.msra.mxu0 %v829
        %900 = vmatpush.bf16.msra.mxu0 %v828
        %901 = vmatpush.bf16.msra.mxu0 %v827
        %902 = vmatpush.bf16.msra.mxu0 %v826
        %903 = vmatpush.bf16.msra.mxu0 %v825
        %904 = vmatpush.bf16.msra.mxu0 %v824
        %905 = vmatpush.bf16.msra.mxu0 %v823
        %906 = vmatmul.bf16.gmra.mxu0 %v672
        %v907 = vpop.f32.mrf.mxu0
        %v908 = vadd.f32 %v889, %v907
        %v909 = vpop.f32.mrf.mxu0
        %v910 = vadd.f32 %v891, %v909
        %911 = vmatmul.bf16.gmra.mxu0 %v676
        %v912 = vpop.f32.mrf.mxu0
        %v913 = vadd.f32 %v894, %v912
        %v914 = vpop.f32.mrf.mxu0
        %v915 = vadd.f32 %v896, %v914
        %916 = vdwg.mxu0
        %917 = vmatpush.bf16.msra.mxu0 %v838
        %918 = vmatpush.bf16.msra.mxu0 %v837
        %919 = vmatpush.bf16.msra.mxu0 %v836
        %920 = vmatpush.bf16.msra.mxu0 %v835
        %921 = vmatpush.bf16.msra.mxu0 %v834
        %922 = vmatpush.bf16.msra.mxu0 %v833
        %923 = vmatpush.bf16.msra.mxu0 %v832
        %924 = vmatpush.bf16.msra.mxu0 %v831
        %925 = vmatmul.bf16.gmra.mxu0 %v673
        %v926 = vpop.f32.mrf.mxu0
        %v927 = vadd.f32 %v908, %v926
        %v928 = vpop.f32.mrf.mxu0
        %v929 = vadd.f32 %v910, %v928
        %930 = vmatmul.bf16.gmra.mxu0 %v677
        %v931 = vpop.f32.mrf.mxu0
        %v932 = vadd.f32 %v913, %v931
        %v933 = vpop.f32.mrf.mxu0
        %v934 = vadd.f32 %v915, %v933
        %935 = vdwg.mxu0
        %936 = vmatpush.bf16.msra.mxu0 %v846
        %937 = vmatpush.bf16.msra.mxu0 %v845
        %938 = vmatpush.bf16.msra.mxu0 %v844
        %939 = vmatpush.bf16.msra.mxu0 %v843
        %940 = vmatpush.bf16.msra.mxu0 %v842
        %941 = vmatpush.bf16.msra.mxu0 %v841
        %942 = vmatpush.bf16.msra.mxu0 %v840
        %943 = vmatpush.bf16.msra.mxu0 %v839
        %944 = vmatmul.bf16.gmra.mxu0 %v674
        %v945 = vpop.f32.mrf.mxu0
        %v946 = vadd.f32 %v927, %v945
        %v947 = vpop.f32.mrf.mxu0
        %v948 = vadd.f32 %v929, %v947
        %949 = vmatmul.bf16.gmra.mxu0 %v678
        %v950 = vpop.f32.mrf.mxu0
        %v951 = vadd.f32 %v932, %v950
        %v952 = vpop.f32.mrf.mxu0
        %v953 = vadd.f32 %v934, %v952
        %954 = vdwg.mxu0
        %v955 = vadd.f32 %v571, %v946
        %v956 = vadd.f32 %v572, %v948
        %v957 = vadd.f32 %v573, %v951
        %v958 = vadd.f32 %v574, %v953
        %959 = vst [vmem:[#allocation2] sm:$0xff] %v955
        %960 = vst [vmem:[#allocation2 + $0x8] sm:$0xff] %v956
        %961 = vst [vmem:[#allocation2 + $0x10] sm:$0xff] %v957
        %962 = vst [vmem:[#allocation2 + $0x18] sm:$0xff] %v958
        %p963 = scmp.eq.s32.totalorder %s21, 6
        // Predicated region
        $region101: #{alexnet_pre_forward.13} parent=87 // pred_check
          %p964 = pneg %p963
        $region102: #{alexnet_pre_forward.13} parent=87 // pred_check_branch
          %966 = sbr.rel (%p964) target = $region104
        $region103: #{alexnet_pre_forward.13} parent=87 // pred_region
          %v967 = vld [vmem:[#allocation2] sm:$0xff]
          %v968 = vld [vmem:[#allocation2 + $0x8] sm:$0xff]
          %v969 = vld [vmem:[#allocation2 + $0x10] sm:$0xff]
          %v970 = vld [vmem:[#allocation2 + $0x18] sm:$0xff]
          %v971 = vld [vmem:[%s561] sm:$0x1]
          %v973 = vperm.slane %v971, 0
          %v975 = vadd.f32 %v967, %v973
          %v976 = vadd.f32 %v968, %v973
          %v977 = vadd.f32 %v969, %v973
          %v978 = vadd.f32 %v970, %v973
          %v979 = vmax.f32 %v975, 0.0
          %v980 = vmax.f32 %v976, 0.0
          %v981 = vmax.f32 %v977, 0.0
          %v982 = vmax.f32 %v978, 0.0
          %v983 = vpack.c.bf16 %v979, %v979
          %v984 = vpack.c.bf16 %v980, %v980
          %v985 = vpack.c.bf16 %v981, %v981
          %v986 = vpack.c.bf16 %v982, %v982
          %987 = vst [vmem:[%s555] sm:$0xf] %v983
          %988 = vst [vmem:[%s555 + $0x4] sm:$0xf] %v984
          %989 = vst [vmem:[%s555 + $0x8] sm:$0xf] %v985
          %990 = vst [vmem:[%s555 + $0xc] sm:$0xf] %v986
        $region104: #{alexnet_pre_forward.13} parent=87 // pred_fallthru
          _
        %s991 = sand.u32 %s125, 1
        %s992 = sand.u32 %s125, 1
        %s993 = smul.addr %s992, 16
        %s994 = scalar_lea.vmem [#allocation5], %s993
        // Predicated region
        $region105: #{alexnet_pre_forward.13} parent=87 // pred_check
          %p995 = pneg %p135
        $region106: #{alexnet_pre_forward.13} parent=87 // pred_check_branch
          %997 = sbr.rel (%p995) target = $region108
        $region107: #{alexnet_pre_forward.13} parent=87 // pred_region
          %s998 = smul.u32 4, %s19
          %s999 = smul.addr %s998, 2
          %s1000 = sadd.s32 %s20, %s999
          %s1001 = smul.addr %s1000, 4
          %s1002 = scalar_lea.vmem %s3, %s1001
          // Predicated region
          $region109: #{alexnet_pre_forward.13} parent=107 // pred_check
            _
          $region110: #{alexnet_pre_forward.13} parent=107 // pred_check_branch
            %1004 = sbr.rel (0) target = $region112
          $region111: #{alexnet_pre_forward.13} parent=107 // pred_region
            // Predicated region
            $region113: #{alexnet_pre_forward.13} parent=111 // pred_check
              _
            $region114: #{alexnet_pre_forward.13} parent=111 // pred_check_branch
              %1006 = sbr.rel target = $region116
            $region115: #{alexnet_pre_forward.13} parent=111 // pred_region
              // Predicated region
              $region128: #{alexnet_pre_forward.13} parent=115 // pred_check
                _
              $region129: #{alexnet_pre_forward.13} parent=115 // pred_check_branch
                %1028 = sbr.rel (0) target = $region131
              $region130: #{alexnet_pre_forward.13} parent=115 // pred_region
                loop: start=0, step=1, limit=1
                $region132: #{alexnet_pre_forward.13} parent=130 // loop_pre_header
                  _
                $region133: #{alexnet_pre_forward.13} parent=130 // loop_header
                  %s1030 = sphi 0, %s1034
                  %p1031 = scmp.ge.s32.totalorder %s1030, 1
                  %s1035 = sphi %s994, %s994
                  %s1036 = sphi %s1002, %s1002
                $region134: #{alexnet_pre_forward.13} parent=130 // loop_header_branch
                  %1033 = sbr.rel (%p1031) target = $region138
                $region135: #{alexnet_pre_forward.13} parent=130 // loop_body
                  _
                $region136: #{alexnet_pre_forward.13} parent=130 // loop_footer
                  %s1034 = sadd.s32 1, %s1030
                $region137: #{alexnet_pre_forward.13} parent=130 // loop_footer_branch
                  %1029 = sbr.rel target = $region133
                $region138: #{alexnet_pre_forward.13} parent=130 // loop_exit
                  _
                %s1038 = ssub.s32 16, 1
                loop: start=0, step=1, limit=1
                $region139: #{alexnet_pre_forward.13} parent=130 // loop_pre_header
                  _
                $region140: #{alexnet_pre_forward.13} parent=130 // loop_header
                  %s1040 = sphi 0, %s1044
                  %p1041 = scmp.ge.s32.totalorder %s1040, 1
                  %s1045 = sphi %s994, %s994
                  %s1046 = sphi %s1002, %s1002
                $region141: #{alexnet_pre_forward.13} parent=130 // loop_header_branch
                  %1043 = sbr.rel (%p1041) target = $region145
                $region142: #{alexnet_pre_forward.13} parent=130 // loop_body
                  %v1047 = vld [vmem:[%s1045] sm:%s1038]
                  %1048 = vst [vmem:[%s1046] sm:%s1038] %v1047
                  %v1049 = vld [vmem:[%s1045 + $0x4] sm:%s1038]
                  %1050 = vst [vmem:[%s1046 + $0x8] sm:%s1038] %v1049
                  %v1051 = vld [vmem:[%s1045 + $0x8] sm:%s1038]
                  %1052 = vst [vmem:[%s1046 + $0x10] sm:%s1038] %v1051
                  %v1053 = vld [vmem:[%s1045 + $0xc] sm:%s1038]
                  %1054 = vst [vmem:[%s1046 + $0x18] sm:%s1038] %v1053
                $region143: #{alexnet_pre_forward.13} parent=130 // loop_footer
                  %s1044 = sadd.s32 1, %s1040
                $region144: #{alexnet_pre_forward.13} parent=130 // loop_footer_branch
                  %1039 = sbr.rel target = $region140
                $region145: #{alexnet_pre_forward.13} parent=130 // loop_exit
                  _
              $region131: #{alexnet_pre_forward.13} parent=115 // pred_fallthru
                _
            $region116: #{alexnet_pre_forward.13} parent=111 // pred_fallthru
              _
            // Predicated region
            $region117: #{alexnet_pre_forward.13} parent=111 // pred_check
              _
            $region118: #{alexnet_pre_forward.13} parent=111 // pred_check_branch
              %1008 = sbr.rel (0) target = $region120
            $region119: #{alexnet_pre_forward.13} parent=111 // pred_region
              %s1010 = ssub.s32 16, 1
              loop: start=0, step=1, limit=1
              $region121: #{alexnet_pre_forward.13} parent=119 // loop_pre_header
                _
              $region122: #{alexnet_pre_forward.13} parent=119 // loop_header
                %s1012 = sphi 0, %s1016
                %p1013 = scmp.ge.s32.totalorder %s1012, 1
                %s1017 = sphi %s994, %s994
                %s1018 = sphi %s1002, %s1002
              $region123: #{alexnet_pre_forward.13} parent=119 // loop_header_branch
                %1015 = sbr.rel (%p1013) target = $region127
              $region124: #{alexnet_pre_forward.13} parent=119 // loop_body
                %v1019 = vld [vmem:[%s1017] sm:%s1010]
                %1020 = vst [vmem:[%s1018] sm:%s1010] %v1019
                %v1021 = vld [vmem:[%s1017 + $0x4] sm:%s1010]
                %1022 = vst [vmem:[%s1018 + $0x8] sm:%s1010] %v1021
                %v1023 = vld [vmem:[%s1017 + $0x8] sm:%s1010]
                %1024 = vst [vmem:[%s1018 + $0x10] sm:%s1010] %v1023
                %v1025 = vld [vmem:[%s1017 + $0xc] sm:%s1010]
                %1026 = vst [vmem:[%s1018 + $0x18] sm:%s1010] %v1025
              $region125: #{alexnet_pre_forward.13} parent=119 // loop_footer
                %s1016 = sadd.s32 1, %s1012
              $region126: #{alexnet_pre_forward.13} parent=119 // loop_footer_branch
                %1011 = sbr.rel target = $region122
              $region127: #{alexnet_pre_forward.13} parent=119 // loop_exit
                _
            $region120: #{alexnet_pre_forward.13} parent=111 // pred_fallthru
              _
          $region112: #{alexnet_pre_forward.13} parent=107 // pred_fallthru
            _
          %1055 = vnop
        $region108: #{alexnet_pre_forward.13} parent=87 // pred_fallthru
          _
      $region88: #{alexnet_pre_forward.13} parent=5 // pred_fallthru
        _
      %p1056 = scmp.le.s32.totalorder 2, %s9
      // Predicated region
      $region146: #{alexnet_pre_forward.13} parent=5 // pred_check
        %p1057 = pneg %p1056
      $region147: #{alexnet_pre_forward.13} parent=5 // pred_check_branch
        %1059 = sbr.rel (%p1057) target = $region149
      $region148: #{alexnet_pre_forward.13} parent=5 // pred_region
        %s1060 = ssub.s32 %s9, 2
        // Predicated region
        $region150: #{alexnet_pre_forward.13} parent=148 // pred_check
          %p1061 = pneg %p141
        $region151: #{alexnet_pre_forward.13} parent=148 // pred_check_branch
          %1063 = sbr.rel (%p1061) target = $region153
        $region152: #{alexnet_pre_forward.13} parent=148 // pred_region
          %s1064 = sand.u32 %s126, 1
          %s1065 = sand.u32 %s126, 1
          %s1066 = smul.addr %s1065, 16
          %s1067 = scalar_lea.vmem [#allocation5], %s1066
        $region153: #{alexnet_pre_forward.13} parent=148 // pred_fallthru
          _
      $region149: #{alexnet_pre_forward.13} parent=5 // pred_fallthru
        _
    $region6: #{alexnet_pre_forward.13} parent=1 // loop_footer
      %s13 = sadd.s32 1, %s9
    $region7: #{alexnet_pre_forward.13} parent=1 // loop_footer_branch
      %8 = sbr.rel target = $region3
    $region8: #{alexnet_pre_forward.13} parent=1 // loop_exit
      _

// kernel: alexnet_pre_forward.15
$region0: #{alexnet_pre_forward.15}
  #allocation0 [shape = 'u32[]', space=smem, size = 0x4, offset = 0x4, fixed_abs, tag = 'smem constant byte address 0x4 - core index']
  #allocation1 [shape = 'u32[72,128]{1,0:T(1,128)}', space=vmem, size = 0x9000, scoped, tag = 'internal scratch']
  %s0 = inlined_call_operand.vmem [shape: bf16[2,3,3,256], index: 0, kind: input, shape index: {}]
  %s1 = inlined_call_operand.vmem [shape: bf16[2,1,1,256], index: 1, kind: output, shape index: {}]
  %s2 = sld [smem:[#allocation0]]
  $region37: #{alexnet_pre_forward.15} parent=0
    _
  %s4 = ssub.s32 1, %s2
  %s5 = scalar_select 0, %s4, %s2
  loop: start=0, step=1, limit=4
  $region2: #{alexnet_pre_forward.15} parent=0 // loop_pre_header
    _
  $region3: #{alexnet_pre_forward.15} parent=0 // loop_header
    %s7 = sphi 0, %s11
    %p8 = scmp.ge.s32.totalorder %s7, 4
    %s17 = sphi 0, %s19
    %s20 = sphi 0, %s17
    %s21 = sphi 0, %s20
    %s37 = sphi 0, %s21
    %s43 = sphi 0, %s45
    %s46 = sphi 0, %s43
    %s47 = sphi 0, %s46
    %s63 = sphi 0, %s47
  $region4: #{alexnet_pre_forward.15} parent=0 // loop_header_branch
    %10 = sbr.rel (%p8) target = $region8
  $region5: #{alexnet_pre_forward.15} parent=0 // loop_body
    %s12 = ssub.s32 %s7, 1
    %s13 = ssub.s32 %s7, 2
    %s14 = sadd.s32 %s7, 1
    %s15 = ssub.s32 %s7, %s14
    %p16 = scmp.eq.s32.totalorder %s15, 0
    %s18 = sadd.s32 %s17, 1
    %s19 = scalar_select %p16, %s17, %s18
    %p22 = pneg %p16
    %p23 = scmp.eq.s32.totalorder %s7, 1
    %p24 = por %p22, %p23
    %p25 = scmp.ne.s32.totalorder %s17, %s20
    %p26 = scmp.eq.s32.totalorder %s7, 0
    %p27 = por %p25, %p26
    %p28 = scmp.ne.s32.totalorder %s17, %s20
    %p29 = scmp.eq.s32.totalorder %s12, 1
    %p30 = por %p28, %p29
    %p31 = scmp.ne.s32.totalorder %s20, %s21
    %p32 = scmp.eq.s32.totalorder %s12, 0
    %p33 = por %p31, %p32
    %p34 = scmp.ne.s32.totalorder %s20, %s21
    %p35 = scmp.eq.s32.totalorder %s13, 1
    %p36 = por %p34, %p35
    %p38 = scmp.ne.s32.totalorder %s21, %s37
    %p39 = scmp.eq.s32.totalorder %s13, 0
    %p40 = por %p38, %p39
    %s41 = ssub.s32 %s7, %s14
    %p42 = scmp.eq.s32.totalorder %s41, 0
    %s44 = sadd.s32 %s43, 1
    %s45 = scalar_select %p42, %s43, %s44
    %p48 = pneg %p42
    %p49 = scmp.eq.s32.totalorder %s7, 1
    %p50 = por %p48, %p49
    %p51 = scmp.ne.s32.totalorder %s43, %s46
    %p52 = scmp.eq.s32.totalorder %s7, 0
    %p53 = por %p51, %p52
    %p54 = scmp.ne.s32.totalorder %s43, %s46
    %p55 = scmp.eq.s32.totalorder %s12, 1
    %p56 = por %p54, %p55
    %p57 = scmp.ne.s32.totalorder %s46, %s47
    %p58 = scmp.eq.s32.totalorder %s12, 0
    %p59 = por %p57, %p58
    %p60 = scmp.ne.s32.totalorder %s46, %s47
    %p61 = scmp.eq.s32.totalorder %s13, 1
    %p62 = por %p60, %p61
    %p64 = scmp.ne.s32.totalorder %s47, %s63
    %p65 = scmp.eq.s32.totalorder %s13, 0
    %p66 = por %p64, %p65
    %p67 = scmp.le.s32.totalorder 1, %s7
    %p68 = scmp.lt.s32.totalorder %s7, 3
    %p69 = pnand %p67, %p68
    %p70 = pneg %p69
    // Predicated region
    $region9: #{alexnet_pre_forward.15} parent=5 // pred_check
      _
    $region10: #{alexnet_pre_forward.15} parent=5 // pred_check_branch
      %72 = sbr.rel (%p69) target = $region12
    $region11: #{alexnet_pre_forward.15} parent=5 // pred_region
      %s73 = ssub.s32 %s7, 1
    $region12: #{alexnet_pre_forward.15} parent=5 // pred_fallthru
      _
    %p74 = scmp.lt.s32.totalorder %s7, 2
    // Predicated region
    $region13: #{alexnet_pre_forward.15} parent=5 // pred_check
      %p75 = pneg %p74
    $region14: #{alexnet_pre_forward.15} parent=5 // pred_check_branch
      %77 = sbr.rel (%p75) target = $region16
    $region15: #{alexnet_pre_forward.15} parent=5 // pred_region
      // Predicated region
      $region17: #{alexnet_pre_forward.15} parent=15 // pred_check
        %p78 = pneg %p27
      $region18: #{alexnet_pre_forward.15} parent=15 // pred_check_branch
        %80 = sbr.rel (%p78) target = $region20
      $region19: #{alexnet_pre_forward.15} parent=15 // pred_region
        %p81 = scmp.lt.s32.totalorder %s7, 1
        %s82 = scalar_select %p81, %s7, 1
        %s83 = smul.addr %s82, 6
        %s84 = smul.addr %s83, 2
        %s85 = scalar_lea.vmem %s0, %s84
      $region20: #{alexnet_pre_forward.15} parent=15 // pred_fallthru
        _
    $region16: #{alexnet_pre_forward.15} parent=5 // pred_fallthru
      _
    %p86 = scmp.le.s32.totalorder 1, %s7
    %p87 = scmp.lt.s32.totalorder %s7, 3
    %p88 = pnand %p86, %p87
    %p89 = pneg %p88
    // Predicated region
    $region21: #{alexnet_pre_forward.15} parent=5 // pred_check
      _
    $region22: #{alexnet_pre_forward.15} parent=5 // pred_check_branch
      %91 = sbr.rel (%p88) target = $region24
    $region23: #{alexnet_pre_forward.15} parent=5 // pred_region
      %s92 = ssub.s32 %s7, 1
      %p93 = scmp.lt.s32.totalorder %s12, 1
      %s94 = scalar_select %p93, %s12, 1
      %s95 = smul.addr %s94, 6
      %s96 = smul.addr %s95, 2
      %s97 = scalar_lea.vmem %s0, %s96
      %p98 = pneg %p33
      %p99 = pneg %p30
      %p100 = pneg %p59
      %p101 = pneg %p56
      %p102 = scmp.lt.s32.totalorder %s12, 1
      %s103 = scalar_select %p102, %s12, 1
      %s104 = smul.addr %s103, 2
      %s105 = scalar_lea.vmem %s1, %s104
      %p106 = scmp.lt.s32.totalorder %s12, 1
      %s107 = scalar_select %p106, %s12, 1
      %s108 = smul.addr %s107, 6
      %s109 = smul.addr %s108, 2
      %s110 = scalar_lea.vmem %s0, %s109
      %p111 = scmp.lt.s32.totalorder %s12, 1
      %s112 = scalar_select %p111, %s12, 1
      %s113 = smul.addr %s112, 2
      %s114 = scalar_lea.vmem %s1, %s113
      %v115 = vld [vmem:[%s110] sm:$0xf]
      %v116 = vld [vmem:[%s110 + $0x4] sm:$0xf]
      %v117 = vld [vmem:[%s110 + $0x8] sm:$0xf]
      %v118 = vunpack.c.l.bf16 %v115
      %v119 = vunpack.c.l.bf16 %v116
      %v120 = vmax.f32 %v118, %v119
      %122 = vst [vmem:[#allocation1] ss:$2 sm:$0xff] %v120
      %v123 = vld.sshfl [vmem:[#allocation1] sm:$0xff pattern:$0x75316420]
      %v124 = vld.sshfl [vmem:[#allocation1 + $0x8] sm:$0xff pattern:$0x75316420]
      %v127 = vpack.c.bf16 %v124, %v123
      %v128 = vunpack.c.l.bf16 %v127
      %v129 = vunpack.c.h.bf16 %v127
      %v130 = vunpack.c.l.bf16 %v117
      %132 = vst [vmem:[#allocation1] ss:$2 sm:$0xff] %v130
      %v133 = vld.sshfl [vmem:[#allocation1] sm:$0xff pattern:$0x75316420]
      %v134 = vld.sshfl [vmem:[#allocation1 + $0x8] sm:$0xff pattern:$0x75316420]
      %v137 = vmax.f32 %v128, %v133
      %v138 = vmax.f32 %v129, %v134
      %v139 = vpack.c.bf16 %v138, %v137
      %v140 = vunpack.c.l.bf16 %v139
      %v141 = vunpack.c.h.bf16 %v139
      %v144 = vrot.slane %v140, 1
      %v145 = vrot.slane %v141, 1
      %v148 = vmax.f32 %v140, %v144
      %v149 = vmax.f32 %v141, %v145
      %v150 = vpack.c.bf16 %v149, %v148
      %v151 = vunpack.c.l.bf16 %v150
      %v152 = vunpack.c.h.bf16 %v150
      %v153 = vrot.slane %v140, 2
      %v154 = vrot.slane %v141, 2
      %v157 = vmax.f32 %v151, %v153
      %v158 = vmax.f32 %v152, %v154
      %v159 = vpack.c.bf16 %v158, %v157
      %v161 = vrot.slane %v159, 3
      %vm162 = vcmask 1040384
      %v165 = vsel %vm162, %v159, %v161
      %vm167 = vcmask 1040384
      %vm168 = vsmask.f32 256
      %vm169 = vmand %vm167, %vm168
      %vm170 = vcmask 1041409
      %vm171 = vsmask.f32 1280
      %vm172 = vmand %vm170, %vm171
      %vm173 = vmor %vm172, %vm169
      %v174 = vld [vmem:[%s114] sm:$0x3]
      %v175 = vsel %vm173, %v165, %v174
      %176 = vst [vmem:[%s114] sm:$0x3] %v175
      %p177 = scmp.lt.s32.totalorder %s12, 1
      %s178 = scalar_select %p177, %s12, 1
      %s179 = smul.addr %s178, 2
      %s180 = scalar_lea.vmem %s1, %s179
      // Predicated region
      $region25: #{alexnet_pre_forward.15} parent=23 // pred_check
        %p181 = pneg %p56
      $region26: #{alexnet_pre_forward.15} parent=23 // pred_check_branch
        %183 = sbr.rel (%p181) target = $region28
      $region27: #{alexnet_pre_forward.15} parent=23 // pred_region
        _
      $region28: #{alexnet_pre_forward.15} parent=23 // pred_fallthru
        _
    $region24: #{alexnet_pre_forward.15} parent=5 // pred_fallthru
      _
    %p184 = scmp.le.s32.totalorder 2, %s7
    // Predicated region
    $region29: #{alexnet_pre_forward.15} parent=5 // pred_check
      %p185 = pneg %p184
    $region30: #{alexnet_pre_forward.15} parent=5 // pred_check_branch
      %187 = sbr.rel (%p185) target = $region32
    $region31: #{alexnet_pre_forward.15} parent=5 // pred_region
      %s188 = ssub.s32 %s7, 2
      // Predicated region
      $region33: #{alexnet_pre_forward.15} parent=31 // pred_check
        %p189 = pneg %p62
      $region34: #{alexnet_pre_forward.15} parent=31 // pred_check_branch
        %191 = sbr.rel (%p189) target = $region36
      $region35: #{alexnet_pre_forward.15} parent=31 // pred_region
        %p192 = scmp.lt.s32.totalorder %s13, 1
        %s193 = scalar_select %p192, %s13, 1
        %s194 = smul.addr %s193, 2
        %s195 = scalar_lea.vmem %s1, %s194
      $region36: #{alexnet_pre_forward.15} parent=31 // pred_fallthru
        _
    $region32: #{alexnet_pre_forward.15} parent=5 // pred_fallthru
      _
  $region6: #{alexnet_pre_forward.15} parent=0 // loop_footer
    %s11 = sadd.s32 1, %s7
  $region7: #{alexnet_pre_forward.15} parent=0 // loop_footer_branch
    %6 = sbr.rel target = $region3
  $region8: #{alexnet_pre_forward.15} parent=0 // loop_exit
    _

// kernel: alexnet_pre_forward.14
$region0: #{alexnet_pre_forward.14}
  #allocation0 [shape = 'u32[]', space=smem, size = 0x4, offset = 0x4, fixed_abs, tag = 'smem constant byte address 0x4 - core index']
  #allocation1 [shape = 'u32[72,128]{1,0:T(1,128)}', space=vmem, size = 0x9000, scoped, tag = 'internal scratch']
  #allocation2 [shape = 'f32[32,128]{1,0:T(8,128)}', space=vmem, size = 0x4000, scoped, tag = 'scratch operand']
  %s0 = inlined_call_operand.vmem [shape: bf16[32,2560], index: 0, kind: input, shape index: {}]
  %s1 = inlined_call_operand.vmem [shape: bf16[2560,256], index: 1, kind: input, shape index: {}]
  %s2 = inlined_call_operand.vmem [shape: f32[1,256], index: 2, kind: input, shape index: {}]
  %s3 = inlined_call_operand.vmem [shape: bf16[32,256], index: 3, kind: output, shape index: {}]
  %s4 = sld [smem:[#allocation0]]
  $region154: #{alexnet_pre_forward.14} parent=0
    _
  %s6 = ssub.s32 1, %s4
  %s7 = scalar_select 0, %s6, %s4
  $region1: #{alexnet_pre_forward.14} parent=0
    #allocation3 [shape = 'u8[65536]{0}', space=vmem, size = 0x10000, scoped, tag = 'input window, operand 0']
    #allocation4 [shape = 'u8[262144]{0}', space=vmem, size = 0x40000, scoped, tag = 'input window, operand 1']
    #allocation5 [shape = 'u8[16384]{0}', space=vmem, size = 0x4000, scoped, tag = 'output window, operand 0']
    loop: start=0, step=1, limit=12
    $region2: #{alexnet_pre_forward.14} parent=1 // loop_pre_header
      _
    $region3: #{alexnet_pre_forward.14} parent=1 // loop_header
      %s9 = sphi 0, %s13
      %p10 = scmp.ge.s32.totalorder %s9, 12
      %s16 = sphi 0, %s35
      %s17 = sphi 0, %s31
      %s18 = sphi 0, %s27
      %s19 = sphi 0, %s16
      %s20 = sphi 0, %s17
      %s21 = sphi 0, %s18
      %s22 = sphi 0, %s19
      %s23 = sphi 0, %s20
      %s24 = sphi 0, %s21
      %s40 = sphi 0, %s42
      %s43 = sphi 0, %s40
      %s44 = sphi 0, %s43
      %s60 = sphi 0, %s44
      %s68 = sphi 0, %s70
      %s71 = sphi 0, %s68
      %s72 = sphi 0, %s71
      %s88 = sphi 0, %s72
      %s94 = sphi 0, %s96
      %s97 = sphi 0, %s94
      %s98 = sphi 0, %s97
      %s114 = sphi 0, %s98
      %s122 = sphi 0, %s124
      %s125 = sphi 0, %s122
      %s126 = sphi 0, %s125
      %s142 = sphi 0, %s126
    $region4: #{alexnet_pre_forward.14} parent=1 // loop_header_branch
      %12 = sbr.rel (%p10) target = $region8
    $region5: #{alexnet_pre_forward.14} parent=1 // loop_body
      %s14 = ssub.s32 %s9, 1
      %s15 = ssub.s32 %s9, 2
      %s25 = sadd.s32 1, %s18
      %p26 = scmp.ge.s32.totalorder %s25, 5
      %s27 = scalar_select %p26, 0, %s25
      %s28 = sadd.s32 1, %s17
      %s29 = scalar_select %p26, %s28, %s17
      %p30 = scmp.ge.s32.totalorder %s29, 2
      %s31 = scalar_select %p30, 0, %s29
      %s32 = sadd.s32 1, %s16
      %s33 = scalar_select %p30, %s32, %s16
      %p34 = scmp.ge.s32.totalorder %s33, 1
      %s35 = scalar_select %p34, 0, %s33
      %s36 = ssub.s32 %s16, %s35
      %s37 = ssub.s32 %s18, %s27
      %s38 = sor.u32 %s36, %s37
      %p39 = scmp.eq.s32.totalorder %s38, 0
      %s41 = sadd.s32 %s40, 1
      %s42 = scalar_select %p39, %s40, %s41
      %p45 = pneg %p39
      %p46 = scmp.eq.s32.totalorder %s9, 9
      %p47 = por %p45, %p46
      %p48 = scmp.ne.s32.totalorder %s40, %s43
      %p49 = scmp.eq.s32.totalorder %s9, 0
      %p50 = por %p48, %p49
      %p51 = scmp.ne.s32.totalorder %s40, %s43
      %p52 = scmp.eq.s32.totalorder %s14, 9
      %p53 = por %p51, %p52
      %p54 = scmp.ne.s32.totalorder %s43, %s44
      %p55 = scmp.eq.s32.totalorder %s14, 0
      %p56 = por %p54, %p55
      %p57 = scmp.ne.s32.totalorder %s43, %s44
      %p58 = scmp.eq.s32.totalorder %s15, 9
      %p59 = por %p57, %p58
      %p61 = scmp.ne.s32.totalorder %s44, %s60
      %p62 = scmp.eq.s32.totalorder %s15, 0
      %p63 = por %p61, %p62
      %s64 = ssub.s32 %s18, %s27
      %s65 = ssub.s32 %s17, %s31
      %s66 = sor.u32 %s64, %s65
      %p67 = scmp.eq.s32.totalorder %s66, 0
      %s69 = sadd.s32 %s68, 1
      %s70 = scalar_select %p67, %s68, %s69
      %p73 = pneg %p67
      %p74 = scmp.eq.s32.totalorder %s9, 9
      %p75 = por %p73, %p74
      %p76 = scmp.ne.s32.totalorder %s68, %s71
      %p77 = scmp.eq.s32.totalorder %s9, 0
      %p78 = por %p76, %p77
      %p79 = scmp.ne.s32.totalorder %s68, %s71
      %p80 = scmp.eq.s32.totalorder %s14, 9
      %p81 = por %p79, %p80
      %p82 = scmp.ne.s32.totalorder %s71, %s72
      %p83 = scmp.eq.s32.totalorder %s14, 0
      %p84 = por %p82, %p83
      %p85 = scmp.ne.s32.totalorder %s71, %s72
      %p86 = scmp.eq.s32.totalorder %s15, 9
      %p87 = por %p85, %p86
      %p89 = scmp.ne.s32.totalorder %s72, %s88
      %p90 = scmp.eq.s32.totalorder %s15, 0
      %p91 = por %p89, %p90
      %s92 = ssub.s32 %s17, %s31
      %p93 = scmp.eq.s32.totalorder %s92, 0
      %s95 = sadd.s32 %s94, 1
      %s96 = scalar_select %p93, %s94, %s95
      %p99 = pneg %p93
      %p100 = scmp.eq.s32.totalorder %s9, 9
      %p101 = por %p99, %p100
      %p102 = scmp.ne.s32.totalorder %s94, %s97
      %p103 = scmp.eq.s32.totalorder %s9, 0
      %p104 = por %p102, %p103
      %p105 = scmp.ne.s32.totalorder %s94, %s97
      %p106 = scmp.eq.s32.totalorder %s14, 9
      %p107 = por %p105, %p106
      %p108 = scmp.ne.s32.totalorder %s97, %s98
      %p109 = scmp.eq.s32.totalorder %s14, 0
      %p110 = por %p108, %p109
      %p111 = scmp.ne.s32.totalorder %s97, %s98
      %p112 = scmp.eq.s32.totalorder %s15, 9
      %p113 = por %p111, %p112
      %p115 = scmp.ne.s32.totalorder %s98, %s114
      %p116 = scmp.eq.s32.totalorder %s15, 0
      %p117 = por %p115, %p116
      %s118 = ssub.s32 %s16, %s35
      %s119 = ssub.s32 %s17, %s31
      %s120 = sor.u32 %s118, %s119
      %p121 = scmp.eq.s32.totalorder %s120, 0
      %s123 = sadd.s32 %s122, 1
      %s124 = scalar_select %p121, %s122, %s123
      %p127 = pneg %p121
      %p128 = scmp.eq.s32.totalorder %s9, 9
      %p129 = por %p127, %p128
      %p130 = scmp.ne.s32.totalorder %s122, %s125
      %p131 = scmp.eq.s32.totalorder %s9, 0
      %p132 = por %p130, %p131
      %p133 = scmp.ne.s32.totalorder %s122, %s125
      %p134 = scmp.eq.s32.totalorder %s14, 9
      %p135 = por %p133, %p134
      %p136 = scmp.ne.s32.totalorder %s125, %s126
      %p137 = scmp.eq.s32.totalorder %s14, 0
      %p138 = por %p136, %p137
      %p139 = scmp.ne.s32.totalorder %s125, %s126
      %p140 = scmp.eq.s32.totalorder %s15, 9
      %p141 = por %p139, %p140
      %p143 = scmp.ne.s32.totalorder %s126, %s142
      %p144 = scmp.eq.s32.totalorder %s15, 0
      %p145 = por %p143, %p144
      %p146 = scmp.le.s32.totalorder 1, %s9
      %p147 = scmp.lt.s32.totalorder %s9, 11
      %p148 = pnand %p146, %p147
      %p149 = pneg %p148
      // Predicated region
      $region9: #{alexnet_pre_forward.14} parent=5 // pred_check
        _
      $region10: #{alexnet_pre_forward.14} parent=5 // pred_check_branch
        %151 = sbr.rel (%p148) target = $region12
      $region11: #{alexnet_pre_forward.14} parent=5 // pred_region
        %s152 = ssub.s32 %s9, 1
      $region12: #{alexnet_pre_forward.14} parent=5 // pred_fallthru
        _
      %p153 = scmp.lt.s32.totalorder %s9, 10
      // Predicated region
      $region13: #{alexnet_pre_forward.14} parent=5 // pred_check
        %p154 = pneg %p153
      $region14: #{alexnet_pre_forward.14} parent=5 // pred_check_branch
        %156 = sbr.rel (%p154) target = $region16
      $region15: #{alexnet_pre_forward.14} parent=5 // pred_region
        // Predicated region
        $region17: #{alexnet_pre_forward.14} parent=15 // pred_check
          %p157 = pneg %p50
        $region18: #{alexnet_pre_forward.14} parent=15 // pred_check_branch
          %159 = sbr.rel (%p157) target = $region20
        $region19: #{alexnet_pre_forward.14} parent=15 // pred_region
          %s160 = sand.u32 %s40, 1
          %s161 = sand.u32 %s40, 1
          %s162 = smul.addr %s161, 64
          %s163 = scalar_lea.vmem [#allocation3], %s162
          %s164 = smul.u32 4, %s16
          %s165 = smul.u32 4, %s18
          %s166 = smul.addr %s164, 20
          %s167 = sadd.s32 %s165, %s166
          %s168 = smul.addr %s167, 4
          %s169 = scalar_lea.vmem %s0, %s168
          // Predicated region
          $region21: #{alexnet_pre_forward.14} parent=19 // pred_check
            _
          $region22: #{alexnet_pre_forward.14} parent=19 // pred_check_branch
            %171 = sbr.rel (0) target = $region24
          $region23: #{alexnet_pre_forward.14} parent=19 // pred_region
            // Predicated region
            $region25: #{alexnet_pre_forward.14} parent=23 // pred_check
              _
            $region26: #{alexnet_pre_forward.14} parent=23 // pred_check_branch
              %173 = sbr.rel (0) target = $region28
            $region27: #{alexnet_pre_forward.14} parent=23 // pred_region
              loop: start=0, step=1, limit=1
              $region29: #{alexnet_pre_forward.14} parent=27 // loop_pre_header
                _
              $region30: #{alexnet_pre_forward.14} parent=27 // loop_header
                %s175 = sphi 0, %s179
                %p176 = scmp.ge.s32.totalorder %s175, 1
                %s180 = sphi %s169, %s169
                %s181 = sphi %s163, %s163
              $region31: #{alexnet_pre_forward.14} parent=27 // loop_header_branch
                %178 = sbr.rel (%p176) target = $region35
              $region32: #{alexnet_pre_forward.14} parent=27 // loop_body
                %v182 = vld [vmem:[%s180] sm:$0xff]
                %183 = vst [vmem:[%s181] sm:$0xff] %v182
                %v184 = vld [vmem:[%s180 + $0x8] sm:$0xff]
                %185 = vst [vmem:[%s181 + $0x8] sm:$0xff] %v184
                %v186 = vld [vmem:[%s180 + $0x50] sm:$0xff]
                %187 = vst [vmem:[%s181 + $0x10] sm:$0xff] %v186
                %v188 = vld [vmem:[%s180 + $0x58] sm:$0xff]
                %189 = vst [vmem:[%s181 + $0x18] sm:$0xff] %v188
                %v190 = vld [vmem:[%s180 + $0xa0] sm:$0xff]
                %191 = vst [vmem:[%s181 + $0x20] sm:$0xff] %v190
                %v192 = vld [vmem:[%s180 + $0xa8] sm:$0xff]
                %193 = vst [vmem:[%s181 + $0x28] sm:$0xff] %v192
                %v194 = vld [vmem:[%s180 + $0xf0] sm:$0xff]
                %195 = vst [vmem:[%s181 + $0x30] sm:$0xff] %v194
                %v196 = vld [vmem:[%s180 + $0xf8] sm:$0xff]
                %197 = vst [vmem:[%s181 + $0x38] sm:$0xff] %v196
              $region33: #{alexnet_pre_forward.14} parent=27 // loop_footer
                %s179 = sadd.s32 1, %s175
              $region34: #{alexnet_pre_forward.14} parent=27 // loop_footer_branch
                %174 = sbr.rel target = $region30
              $region35: #{alexnet_pre_forward.14} parent=27 // loop_exit
                _
            $region28: #{alexnet_pre_forward.14} parent=23 // pred_fallthru
              _
            // Predicated region
            $region36: #{alexnet_pre_forward.14} parent=23 // pred_check
              _
            $region37: #{alexnet_pre_forward.14} parent=23 // pred_check_branch
              %199 = sbr.rel target = $region39
            $region38: #{alexnet_pre_forward.14} parent=23 // pred_region
              _
            $region39: #{alexnet_pre_forward.14} parent=23 // pred_fallthru
              _
          $region24: #{alexnet_pre_forward.14} parent=19 // pred_fallthru
            _
          %200 = vnop
        $region20: #{alexnet_pre_forward.14} parent=15 // pred_fallthru
          _
        // Predicated region
        $region40: #{alexnet_pre_forward.14} parent=15 // pred_check
          %p201 = pneg %p78
        $region41: #{alexnet_pre_forward.14} parent=15 // pred_check_branch
          %203 = sbr.rel (%p201) target = $region43
        $region42: #{alexnet_pre_forward.14} parent=15 // pred_region
          %s204 = sand.u32 %s68, 1
          %s205 = sand.u32 %s68, 1
          %s206 = smul.addr %s205, 256
          %s207 = scalar_lea.vmem [#allocation4], %s206
          %s208 = smul.u32 64, %s18
          %s209 = smul.addr %s208, 2
          %s210 = sadd.s32 %s17, %s209
          %s211 = smul.addr %s210, 4
          %s212 = scalar_lea.vmem %s1, %s211
          // Predicated region
          $region44: #{alexnet_pre_forward.14} parent=42 // pred_check
            _
          $region45: #{alexnet_pre_forward.14} parent=42 // pred_check_branch
            %214 = sbr.rel (0) target = $region47
          $region46: #{alexnet_pre_forward.14} parent=42 // pred_region
            // Predicated region
            $region48: #{alexnet_pre_forward.14} parent=46 // pred_check
              _
            $region49: #{alexnet_pre_forward.14} parent=46 // pred_check_branch
              %216 = sbr.rel target = $region51
            $region50: #{alexnet_pre_forward.14} parent=46 // pred_region
              // Predicated region
              $region63: #{alexnet_pre_forward.14} parent=50 // pred_check
                _
              $region64: #{alexnet_pre_forward.14} parent=50 // pred_check_branch
                %358 = sbr.rel (0) target = $region66
              $region65: #{alexnet_pre_forward.14} parent=50 // pred_region
                loop: start=0, step=1, limit=1
                $region67: #{alexnet_pre_forward.14} parent=65 // loop_pre_header
                  _
                $region68: #{alexnet_pre_forward.14} parent=65 // loop_header
                  %s360 = sphi 0, %s364
                  %p361 = scmp.ge.s32.totalorder %s360, 1
                  %s365 = sphi %s212, %s212
                  %s366 = sphi %s207, %s207
                $region69: #{alexnet_pre_forward.14} parent=65 // loop_header_branch
                  %363 = sbr.rel (%p361) target = $region73
                $region70: #{alexnet_pre_forward.14} parent=65 // loop_body
                  _
                $region71: #{alexnet_pre_forward.14} parent=65 // loop_footer
                  %s364 = sadd.s32 1, %s360
                $region72: #{alexnet_pre_forward.14} parent=65 // loop_footer_branch
                  %359 = sbr.rel target = $region68
                $region73: #{alexnet_pre_forward.14} parent=65 // loop_exit
                  _
                %s368 = ssub.s32 16, 1
                loop: start=0, step=1, limit=1
                $region74: #{alexnet_pre_forward.14} parent=65 // loop_pre_header
                  _
                $region75: #{alexnet_pre_forward.14} parent=65 // loop_header
                  %s370 = sphi 0, %s374
                  %p371 = scmp.ge.s32.totalorder %s370, 1
                  %s375 = sphi %s212, %s212
                  %s376 = sphi %s207, %s207
                $region76: #{alexnet_pre_forward.14} parent=65 // loop_header_branch
                  %373 = sbr.rel (%p371) target = $region80
                $region77: #{alexnet_pre_forward.14} parent=65 // loop_body
                  %v377 = vld [vmem:[%s375] sm:%s368]
                  %378 = vst [vmem:[%s376] sm:%s368] %v377
                  %v379 = vld [vmem:[%s375 + $0x8] sm:%s368]
                  %380 = vst [vmem:[%s376 + $0x4] sm:%s368] %v379
                  %v381 = vld [vmem:[%s375 + $0x10] sm:%s368]
                  %382 = vst [vmem:[%s376 + $0x8] sm:%s368] %v381
                  %v383 = vld [vmem:[%s375 + $0x18] sm:%s368]
                  %384 = vst [vmem:[%s376 + $0xc] sm:%s368] %v383
                  %v385 = vld [vmem:[%s375 + $0x20] sm:%s368]
                  %386 = vst [vmem:[%s376 + $0x10] sm:%s368] %v385
                  %v387 = vld [vmem:[%s375 + $0x28] sm:%s368]
                  %388 = vst [vmem:[%s376 + $0x14] sm:%s368] %v387
                  %v389 = vld [vmem:[%s375 + $0x30] sm:%s368]
                  %390 = vst [vmem:[%s376 + $0x18] sm:%s368] %v389
                  %v391 = vld [vmem:[%s375 + $0x38] sm:%s368]
                  %392 = vst [vmem:[%s376 + $0x1c] sm:%s368] %v391
                  %v393 = vld [vmem:[%s375 + $0x40] sm:%s368]
                  %394 = vst [vmem:[%s376 + $0x20] sm:%s368] %v393
                  %v395 = vld [vmem:[%s375 + $0x48] sm:%s368]
                  %396 = vst [vmem:[%s376 + $0x24] sm:%s368] %v395
                  %v397 = vld [vmem:[%s375 + $0x50] sm:%s368]
                  %398 = vst [vmem:[%s376 + $0x28] sm:%s368] %v397
                  %v399 = vld [vmem:[%s375 + $0x58] sm:%s368]
                  %400 = vst [vmem:[%s376 + $0x2c] sm:%s368] %v399
                  %v401 = vld [vmem:[%s375 + $0x60] sm:%s368]
                  %402 = vst [vmem:[%s376 + $0x30] sm:%s368] %v401
                  %v403 = vld [vmem:[%s375 + $0x68] sm:%s368]
                  %404 = vst [vmem:[%s376 + $0x34] sm:%s368] %v403
                  %v405 = vld [vmem:[%s375 + $0x70] sm:%s368]
                  %406 = vst [vmem:[%s376 + $0x38] sm:%s368] %v405
                  %v407 = vld [vmem:[%s375 + $0x78] sm:%s368]
                  %408 = vst [vmem:[%s376 + $0x3c] sm:%s368] %v407
                  %v409 = vld [vmem:[%s375 + $0x80] sm:%s368]
                  %410 = vst [vmem:[%s376 + $0x40] sm:%s368] %v409
                  %v411 = vld [vmem:[%s375 + $0x88] sm:%s368]
                  %412 = vst [vmem:[%s376 + $0x44] sm:%s368] %v411
                  %v413 = vld [vmem:[%s375 + $0x90] sm:%s368]
                  %414 = vst [vmem:[%s376 + $0x48] sm:%s368] %v413
                  %v415 = vld [vmem:[%s375 + $0x98] sm:%s368]
                  %416 = vst [vmem:[%s376 + $0x4c] sm:%s368] %v415
                  %v417 = vld [vmem:[%s375 + $0xa0] sm:%s368]
                  %418 = vst [vmem:[%s376 + $0x50] sm:%s368] %v417
                  %v419 = vld [vmem:[%s375 + $0xa8] sm:%s368]
                  %420 = vst [vmem:[%s376 + $0x54] sm:%s368] %v419
                  %v421 = vld [vmem:[%s375 + $0xb0] sm:%s368]
                  %422 = vst [vmem:[%s376 + $0x58] sm:%s368] %v421
                  %v423 = vld [vmem:[%s375 + $0xb8] sm:%s368]
                  %424 = vst [vmem:[%s376 + $0x5c] sm:%s368] %v423
                  %v425 = vld [vmem:[%s375 + $0xc0] sm:%s368]
                  %426 = vst [vmem:[%s376 + $0x60] sm:%s368] %v425
                  %v427 = vld [vmem:[%s375 + $0xc8] sm:%s368]
                  %428 = vst [vmem:[%s376 + $0x64] sm:%s368] %v427
                  %v429 = vld [vmem:[%s375 + $0xd0] sm:%s368]
                  %430 = vst [vmem:[%s376 + $0x68] sm:%s368] %v429
                  %v431 = vld [vmem:[%s375 + $0xd8] sm:%s368]
                  %432 = vst [vmem:[%s376 + $0x6c] sm:%s368] %v431
                  %v433 = vld [vmem:[%s375 + $0xe0] sm:%s368]
                  %434 = vst [vmem:[%s376 + $0x70] sm:%s368] %v433
                  %v435 = vld [vmem:[%s375 + $0xe8] sm:%s368]
                  %436 = vst [vmem:[%s376 + $0x74] sm:%s368] %v435
                  %v437 = vld [vmem:[%s375 + $0xf0] sm:%s368]
                  %438 = vst [vmem:[%s376 + $0x78] sm:%s368] %v437
                  %v439 = vld [vmem:[%s375 + $0xf8] sm:%s368]
                  %440 = vst [vmem:[%s376 + $0x7c] sm:%s368] %v439
                  %v441 = vld [vmem:[%s375 + $0x100] sm:%s368]
                  %442 = vst [vmem:[%s376 + $0x80] sm:%s368] %v441
                  %v443 = vld [vmem:[%s375 + $0x108] sm:%s368]
                  %444 = vst [vmem:[%s376 + $0x84] sm:%s368] %v443
                  %v445 = vld [vmem:[%s375 + $0x110] sm:%s368]
                  %446 = vst [vmem:[%s376 + $0x88] sm:%s368] %v445
                  %v447 = vld [vmem:[%s375 + $0x118] sm:%s368]
                  %448 = vst [vmem:[%s376 + $0x8c] sm:%s368] %v447
                  %v449 = vld [vmem:[%s375 + $0x120] sm:%s368]
                  %450 = vst [vmem:[%s376 + $0x90] sm:%s368] %v449
                  %v451 = vld [vmem:[%s375 + $0x128] sm:%s368]
                  %452 = vst [vmem:[%s376 + $0x94] sm:%s368] %v451
                  %v453 = vld [vmem:[%s375 + $0x130] sm:%s368]
                  %454 = vst [vmem:[%s376 + $0x98] sm:%s368] %v453
                  %v455 = vld [vmem:[%s375 + $0x138] sm:%s368]
                  %456 = vst [vmem:[%s376 + $0x9c] sm:%s368] %v455
                  %v457 = vld [vmem:[%s375 + $0x140] sm:%s368]
                  %458 = vst [vmem:[%s376 + $0xa0] sm:%s368] %v457
                  %v459 = vld [vmem:[%s375 + $0x148] sm:%s368]
                  %460 = vst [vmem:[%s376 + $0xa4] sm:%s368] %v459
                  %v461 = vld [vmem:[%s375 + $0x150] sm:%s368]
                  %462 = vst [vmem:[%s376 + $0xa8] sm:%s368] %v461
                  %v463 = vld [vmem:[%s375 + $0x158] sm:%s368]
                  %464 = vst [vmem:[%s376 + $0xac] sm:%s368] %v463
                  %v465 = vld [vmem:[%s375 + $0x160] sm:%s368]
                  %466 = vst [vmem:[%s376 + $0xb0] sm:%s368] %v465
                  %v467 = vld [vmem:[%s375 + $0x168] sm:%s368]
                  %468 = vst [vmem:[%s376 + $0xb4] sm:%s368] %v467
                  %v469 = vld [vmem:[%s375 + $0x170] sm:%s368]
                  %470 = vst [vmem:[%s376 + $0xb8] sm:%s368] %v469
                  %v471 = vld [vmem:[%s375 + $0x178] sm:%s368]
                  %472 = vst [vmem:[%s376 + $0xbc] sm:%s368] %v471
                  %v473 = vld [vmem:[%s375 + $0x180] sm:%s368]
                  %474 = vst [vmem:[%s376 + $0xc0] sm:%s368] %v473
                  %v475 = vld [vmem:[%s375 + $0x188] sm:%s368]
                  %476 = vst [vmem:[%s376 + $0xc4] sm:%s368] %v475
                  %v477 = vld [vmem:[%s375 + $0x190] sm:%s368]
                  %478 = vst [vmem:[%s376 + $0xc8] sm:%s368] %v477
                  %v479 = vld [vmem:[%s375 + $0x198] sm:%s368]
                  %480 = vst [vmem:[%s376 + $0xcc] sm:%s368] %v479
                  %v481 = vld [vmem:[%s375 + $0x1a0] sm:%s368]
                  %482 = vst [vmem:[%s376 + $0xd0] sm:%s368] %v481
                  %v483 = vld [vmem:[%s375 + $0x1a8] sm:%s368]
                  %484 = vst [vmem:[%s376 + $0xd4] sm:%s368] %v483
                  %v485 = vld [vmem:[%s375 + $0x1b0] sm:%s368]
                  %486 = vst [vmem:[%s376 + $0xd8] sm:%s368] %v485
                  %v487 = vld [vmem:[%s375 + $0x1b8] sm:%s368]
                  %488 = vst [vmem:[%s376 + $0xdc] sm:%s368] %v487
                  %v489 = vld [vmem:[%s375 + $0x1c0] sm:%s368]
                  %490 = vst [vmem:[%s376 + $0xe0] sm:%s368] %v489
                  %v491 = vld [vmem:[%s375 + $0x1c8] sm:%s368]
                  %492 = vst [vmem:[%s376 + $0xe4] sm:%s368] %v491
                  %v493 = vld [vmem:[%s375 + $0x1d0] sm:%s368]
                  %494 = vst [vmem:[%s376 + $0xe8] sm:%s368] %v493
                  %v495 = vld [vmem:[%s375 + $0x1d8] sm:%s368]
                  %496 = vst [vmem:[%s376 + $0xec] sm:%s368] %v495
                  %v497 = vld [vmem:[%s375 + $0x1e0] sm:%s368]
                  %498 = vst [vmem:[%s376 + $0xf0] sm:%s368] %v497
                  %v499 = vld [vmem:[%s375 + $0x1e8] sm:%s368]
                  %500 = vst [vmem:[%s376 + $0xf4] sm:%s368] %v499
                  %v501 = vld [vmem:[%s375 + $0x1f0] sm:%s368]
                  %502 = vst [vmem:[%s376 + $0xf8] sm:%s368] %v501
                  %v503 = vld [vmem:[%s375 + $0x1f8] sm:%s368]
                  %504 = vst [vmem:[%s376 + $0xfc] sm:%s368] %v503
                $region78: #{alexnet_pre_forward.14} parent=65 // loop_footer
                  %s374 = sadd.s32 1, %s370
                $region79: #{alexnet_pre_forward.14} parent=65 // loop_footer_branch
                  %369 = sbr.rel target = $region75
                $region80: #{alexnet_pre_forward.14} parent=65 // loop_exit
                  _
              $region66: #{alexnet_pre_forward.14} parent=50 // pred_fallthru
                _
            $region51: #{alexnet_pre_forward.14} parent=46 // pred_fallthru
              _
            // Predicated region
            $region52: #{alexnet_pre_forward.14} parent=46 // pred_check
              _
            $region53: #{alexnet_pre_forward.14} parent=46 // pred_check_branch
              %218 = sbr.rel (0) target = $region55
            $region54: #{alexnet_pre_forward.14} parent=46 // pred_region
              %s220 = ssub.s32 16, 1
              loop: start=0, step=1, limit=1
              $region56: #{alexnet_pre_forward.14} parent=54 // loop_pre_header
                _
              $region57: #{alexnet_pre_forward.14} parent=54 // loop_header
                %s222 = sphi 0, %s226
                %p223 = scmp.ge.s32.totalorder %s222, 1
                %s227 = sphi %s212, %s212
                %s228 = sphi %s207, %s207
              $region58: #{alexnet_pre_forward.14} parent=54 // loop_header_branch
                %225 = sbr.rel (%p223) target = $region62
              $region59: #{alexnet_pre_forward.14} parent=54 // loop_body
                %v229 = vld [vmem:[%s227] sm:%s220]
                %230 = vst [vmem:[%s228] sm:%s220] %v229
                %v231 = vld [vmem:[%s227 + $0x8] sm:%s220]
                %232 = vst [vmem:[%s228 + $0x4] sm:%s220] %v231
                %v233 = vld [vmem:[%s227 + $0x10] sm:%s220]
                %234 = vst [vmem:[%s228 + $0x8] sm:%s220] %v233
                %v235 = vld [vmem:[%s227 + $0x18] sm:%s220]
                %236 = vst [vmem:[%s228 + $0xc] sm:%s220] %v235
                %v237 = vld [vmem:[%s227 + $0x20] sm:%s220]
                %238 = vst [vmem:[%s228 + $0x10] sm:%s220] %v237
                %v239 = vld [vmem:[%s227 + $0x28] sm:%s220]
                %240 = vst [vmem:[%s228 + $0x14] sm:%s220] %v239
                %v241 = vld [vmem:[%s227 + $0x30] sm:%s220]
                %242 = vst [vmem:[%s228 + $0x18] sm:%s220] %v241
                %v243 = vld [vmem:[%s227 + $0x38] sm:%s220]
                %244 = vst [vmem:[%s228 + $0x1c] sm:%s220] %v243
                %v245 = vld [vmem:[%s227 + $0x40] sm:%s220]
                %246 = vst [vmem:[%s228 + $0x20] sm:%s220] %v245
                %v247 = vld [vmem:[%s227 + $0x48] sm:%s220]
                %248 = vst [vmem:[%s228 + $0x24] sm:%s220] %v247
                %v249 = vld [vmem:[%s227 + $0x50] sm:%s220]
                %250 = vst [vmem:[%s228 + $0x28] sm:%s220] %v249
                %v251 = vld [vmem:[%s227 + $0x58] sm:%s220]
                %252 = vst [vmem:[%s228 + $0x2c] sm:%s220] %v251
                %v253 = vld [vmem:[%s227 + $0x60] sm:%s220]
                %254 = vst [vmem:[%s228 + $0x30] sm:%s220] %v253
                %v255 = vld [vmem:[%s227 + $0x68] sm:%s220]
                %256 = vst [vmem:[%s228 + $0x34] sm:%s220] %v255
                %v257 = vld [vmem:[%s227 + $0x70] sm:%s220]
                %258 = vst [vmem:[%s228 + $0x38] sm:%s220] %v257
                %v259 = vld [vmem:[%s227 + $0x78] sm:%s220]
                %260 = vst [vmem:[%s228 + $0x3c] sm:%s220] %v259
                %v261 = vld [vmem:[%s227 + $0x80] sm:%s220]
                %262 = vst [vmem:[%s228 + $0x40] sm:%s220] %v261
                %v263 = vld [vmem:[%s227 + $0x88] sm:%s220]
                %264 = vst [vmem:[%s228 + $0x44] sm:%s220] %v263
                %v265 = vld [vmem:[%s227 + $0x90] sm:%s220]
                %266 = vst [vmem:[%s228 + $0x48] sm:%s220] %v265
                %v267 = vld [vmem:[%s227 + $0x98] sm:%s220]
                %268 = vst [vmem:[%s228 + $0x4c] sm:%s220] %v267
                %v269 = vld [vmem:[%s227 + $0xa0] sm:%s220]
                %270 = vst [vmem:[%s228 + $0x50] sm:%s220] %v269
                %v271 = vld [vmem:[%s227 + $0xa8] sm:%s220]
                %272 = vst [vmem:[%s228 + $0x54] sm:%s220] %v271
                %v273 = vld [vmem:[%s227 + $0xb0] sm:%s220]
                %274 = vst [vmem:[%s228 + $0x58] sm:%s220] %v273
                %v275 = vld [vmem:[%s227 + $0xb8] sm:%s220]
                %276 = vst [vmem:[%s228 + $0x5c] sm:%s220] %v275
                %v277 = vld [vmem:[%s227 + $0xc0] sm:%s220]
                %278 = vst [vmem:[%s228 + $0x60] sm:%s220] %v277
                %v279 = vld [vmem:[%s227 + $0xc8] sm:%s220]
                %280 = vst [vmem:[%s228 + $0x64] sm:%s220] %v279
                %v281 = vld [vmem:[%s227 + $0xd0] sm:%s220]
                %282 = vst [vmem:[%s228 + $0x68] sm:%s220] %v281
                %v283 = vld [vmem:[%s227 + $0xd8] sm:%s220]
                %284 = vst [vmem:[%s228 + $0x6c] sm:%s220] %v283
                %v285 = vld [vmem:[%s227 + $0xe0] sm:%s220]
                %286 = vst [vmem:[%s228 + $0x70] sm:%s220] %v285
                %v287 = vld [vmem:[%s227 + $0xe8] sm:%s220]
                %288 = vst [vmem:[%s228 + $0x74] sm:%s220] %v287
                %v289 = vld [vmem:[%s227 + $0xf0] sm:%s220]
                %290 = vst [vmem:[%s228 + $0x78] sm:%s220] %v289
                %v291 = vld [vmem:[%s227 + $0xf8] sm:%s220]
                %292 = vst [vmem:[%s228 + $0x7c] sm:%s220] %v291
                %v293 = vld [vmem:[%s227 + $0x100] sm:%s220]
                %294 = vst [vmem:[%s228 + $0x80] sm:%s220] %v293
                %v295 = vld [vmem:[%s227 + $0x108] sm:%s220]
                %296 = vst [vmem:[%s228 + $0x84] sm:%s220] %v295
                %v297 = vld [vmem:[%s227 + $0x110] sm:%s220]
                %298 = vst [vmem:[%s228 + $0x88] sm:%s220] %v297
                %v299 = vld [vmem:[%s227 + $0x118] sm:%s220]
                %300 = vst [vmem:[%s228 + $0x8c] sm:%s220] %v299
                %v301 = vld [vmem:[%s227 + $0x120] sm:%s220]
                %302 = vst [vmem:[%s228 + $0x90] sm:%s220] %v301
                %v303 = vld [vmem:[%s227 + $0x128] sm:%s220]
                %304 = vst [vmem:[%s228 + $0x94] sm:%s220] %v303
                %v305 = vld [vmem:[%s227 + $0x130] sm:%s220]
                %306 = vst [vmem:[%s228 + $0x98] sm:%s220] %v305
                %v307 = vld [vmem:[%s227 + $0x138] sm:%s220]
                %308 = vst [vmem:[%s228 + $0x9c] sm:%s220] %v307
                %v309 = vld [vmem:[%s227 + $0x140] sm:%s220]
                %310 = vst [vmem:[%s228 + $0xa0] sm:%s220] %v309
                %v311 = vld [vmem:[%s227 + $0x148] sm:%s220]
                %312 = vst [vmem:[%s228 + $0xa4] sm:%s220] %v311
                %v313 = vld [vmem:[%s227 + $0x150] sm:%s220]
                %314 = vst [vmem:[%s228 + $0xa8] sm:%s220] %v313
                %v315 = vld [vmem:[%s227 + $0x158] sm:%s220]
                %316 = vst [vmem:[%s228 + $0xac] sm:%s220] %v315
                %v317 = vld [vmem:[%s227 + $0x160] sm:%s220]
                %318 = vst [vmem:[%s228 + $0xb0] sm:%s220] %v317
                %v319 = vld [vmem:[%s227 + $0x168] sm:%s220]
                %320 = vst [vmem:[%s228 + $0xb4] sm:%s220] %v319
                %v321 = vld [vmem:[%s227 + $0x170] sm:%s220]
                %322 = vst [vmem:[%s228 + $0xb8] sm:%s220] %v321
                %v323 = vld [vmem:[%s227 + $0x178] sm:%s220]
                %324 = vst [vmem:[%s228 + $0xbc] sm:%s220] %v323
                %v325 = vld [vmem:[%s227 + $0x180] sm:%s220]
                %326 = vst [vmem:[%s228 + $0xc0] sm:%s220] %v325
                %v327 = vld [vmem:[%s227 + $0x188] sm:%s220]
                %328 = vst [vmem:[%s228 + $0xc4] sm:%s220] %v327
                %v329 = vld [vmem:[%s227 + $0x190] sm:%s220]
                %330 = vst [vmem:[%s228 + $0xc8] sm:%s220] %v329
                %v331 = vld [vmem:[%s227 + $0x198] sm:%s220]
                %332 = vst [vmem:[%s228 + $0xcc] sm:%s220] %v331
                %v333 = vld [vmem:[%s227 + $0x1a0] sm:%s220]
                %334 = vst [vmem:[%s228 + $0xd0] sm:%s220] %v333
                %v335 = vld [vmem:[%s227 + $0x1a8] sm:%s220]
                %336 = vst [vmem:[%s228 + $0xd4] sm:%s220] %v335
                %v337 = vld [vmem:[%s227 + $0x1b0] sm:%s220]
                %338 = vst [vmem:[%s228 + $0xd8] sm:%s220] %v337
                %v339 = vld [vmem:[%s227 + $0x1b8] sm:%s220]
                %340 = vst [vmem:[%s228 + $0xdc] sm:%s220] %v339
                %v341 = vld [vmem:[%s227 + $0x1c0] sm:%s220]
                %342 = vst [vmem:[%s228 + $0xe0] sm:%s220] %v341
                %v343 = vld [vmem:[%s227 + $0x1c8] sm:%s220]
                %344 = vst [vmem:[%s228 + $0xe4] sm:%s220] %v343
                %v345 = vld [vmem:[%s227 + $0x1d0] sm:%s220]
                %346 = vst [vmem:[%s228 + $0xe8] sm:%s220] %v345
                %v347 = vld [vmem:[%s227 + $0x1d8] sm:%s220]
                %348 = vst [vmem:[%s228 + $0xec] sm:%s220] %v347
                %v349 = vld [vmem:[%s227 + $0x1e0] sm:%s220]
                %350 = vst [vmem:[%s228 + $0xf0] sm:%s220] %v349
                %v351 = vld [vmem:[%s227 + $0x1e8] sm:%s220]
                %352 = vst [vmem:[%s228 + $0xf4] sm:%s220] %v351
                %v353 = vld [vmem:[%s227 + $0x1f0] sm:%s220]
                %354 = vst [vmem:[%s228 + $0xf8] sm:%s220] %v353
                %v355 = vld [vmem:[%s227 + $0x1f8] sm:%s220]
                %356 = vst [vmem:[%s228 + $0xfc] sm:%s220] %v355
              $region60: #{alexnet_pre_forward.14} parent=54 // loop_footer
                %s226 = sadd.s32 1, %s222
              $region61: #{alexnet_pre_forward.14} parent=54 // loop_footer_branch
                %221 = sbr.rel target = $region57
              $region62: #{alexnet_pre_forward.14} parent=54 // loop_exit
                _
            $region55: #{alexnet_pre_forward.14} parent=46 // pred_fallthru
              _
          $region47: #{alexnet_pre_forward.14} parent=42 // pred_fallthru
            _
          %505 = vnop
        $region43: #{alexnet_pre_forward.14} parent=15 // pred_fallthru
          _
        // Predicated region
        $region81: #{alexnet_pre_forward.14} parent=15 // pred_check
          %p506 = pneg %p104
        $region82: #{alexnet_pre_forward.14} parent=15 // pred_check_branch
          %508 = sbr.rel (%p506) target = $region84
        $region83: #{alexnet_pre_forward.14} parent=15 // pred_region
          %p509 = scmp.lt.s32.totalorder %s17, 1
          %s510 = scalar_select %p509, %s17, 1
          %s511 = scalar_lea.vmem %s2, %s510
        $region84: #{alexnet_pre_forward.14} parent=15 // pred_fallthru
          _
      $region16: #{alexnet_pre_forward.14} parent=5 // pred_fallthru
        _
      %p512 = scmp.le.s32.totalorder 1, %s9
      %p513 = scmp.lt.s32.totalorder %s9, 11
      %p514 = pnand %p512, %p513
      %p515 = pneg %p514
      // Predicated region
      $region85: #{alexnet_pre_forward.14} parent=5 // pred_check
        _
      $region86: #{alexnet_pre_forward.14} parent=5 // pred_check_branch
        %517 = sbr.rel (%p514) target = $region88
      $region87: #{alexnet_pre_forward.14} parent=5 // pred_region
        %s518 = ssub.s32 %s9, 1
        %s519 = sand.u32 %s43, 1
        %s520 = sand.u32 %s43, 1
        %s521 = smul.addr %s520, 64
        %s522 = scalar_lea.vmem [#allocation3], %s521
        // Predicated region
        $region89: #{alexnet_pre_forward.14} parent=87 // pred_check
          %p523 = pneg %p56
        $region90: #{alexnet_pre_forward.14} parent=87 // pred_check_branch
          %525 = sbr.rel (%p523) target = $region92
        $region91: #{alexnet_pre_forward.14} parent=87 // pred_region
          _
        $region92: #{alexnet_pre_forward.14} parent=87 // pred_fallthru
          _
        %s526 = sand.u32 %s71, 1
        %s527 = sand.u32 %s71, 1
        %s528 = smul.addr %s527, 256
        %s529 = scalar_lea.vmem [#allocation4], %s528
        // Predicated region
        $region93: #{alexnet_pre_forward.14} parent=87 // pred_check
          %p530 = pneg %p84
        $region94: #{alexnet_pre_forward.14} parent=87 // pred_check_branch
          %532 = sbr.rel (%p530) target = $region96
        $region95: #{alexnet_pre_forward.14} parent=87 // pred_region
          _
        $region96: #{alexnet_pre_forward.14} parent=87 // pred_fallthru
          _
        %s533 = sand.u32 %s43, 1
        %s534 = sand.u32 %s43, 1
        %s535 = smul.addr %s534, 64
        %s536 = scalar_lea.vmem [#allocation3], %s535
        %p537 = pneg %p56
        %p538 = pneg %p53
        %s539 = sand.u32 %s71, 1
        %s540 = sand.u32 %s71, 1
        %s541 = smul.addr %s540, 256
        %s542 = scalar_lea.vmem [#allocation4], %s541
        %p543 = pneg %p84
        %p544 = pneg %p81
        %p545 = scmp.lt.s32.totalorder %s20, 1
        %s546 = scalar_select %p545, %s20, 1
        %s547 = scalar_lea.vmem %s2, %s546
        %p548 = pneg %p110
        %p549 = pneg %p107
        %p550 = pneg %p138
        %p551 = pneg %p135
        %s552 = sand.u32 %s125, 1
        %s553 = sand.u32 %s125, 1
        %s554 = smul.addr %s553, 16
        %s555 = scalar_lea.vmem [#allocation5], %s554
        %s556 = smul.u32 4, %s19
        %s557 = smul.u32 4, %s21
        %s558 = smul.u32 64, %s21
        %p559 = scmp.lt.s32.totalorder %s20, 1
        %s560 = scalar_select %p559, %s20, 1
        %s561 = scalar_lea.vmem %s2, %s560
        %s562 = smul.u32 4, %s19
        %p563 = scmp.eq.s32.totalorder %s21, 0
        // Predicated region
        $region97: #{alexnet_pre_forward.14} parent=87 // pred_check
          %p564 = pneg %p563
        $region98: #{alexnet_pre_forward.14} parent=87 // pred_check_branch
          %566 = sbr.rel (%p564) target = $region100
        $region99: #{alexnet_pre_forward.14} parent=87 // pred_region
          %567 = vst [vmem:[#allocation2] sm:$0xff] 0.0
          %568 = vst [vmem:[#allocation2 + $0x8] sm:$0xff] 0.0
          %569 = vst [vmem:[#allocation2 + $0x10] sm:$0xff] 0.0
          %570 = vst [vmem:[#allocation2 + $0x18] sm:$0xff] 0.0
        $region100: #{alexnet_pre_forward.14} parent=87 // pred_fallthru
          _
        %v571 = vld [vmem:[#allocation2] sm:$0xff]
        %v572 = vld [vmem:[#allocation2 + $0x8] sm:$0xff]
        %v573 = vld [vmem:[#allocation2 + $0x10] sm:$0xff]
        %v574 = vld [vmem:[#allocation2 + $0x18] sm:$0xff]
        %v575 = vld [vmem:[%s522] sm:$0xff]
        %v576 = vld [vmem:[%s522 + $0x8] sm:$0xff]
        %v577 = vld [vmem:[%s522 + $0x10] sm:$0xff]
        %v578 = vld [vmem:[%s522 + $0x18] sm:$0xff]
        %v579 = vld [vmem:[%s522 + $0x20] sm:$0xff]
        %v580 = vld [vmem:[%s522 + $0x28] sm:$0xff]
        %v581 = vld [vmem:[%s522 + $0x30] sm:$0xff]
        %v582 = vld [vmem:[%s522 + $0x38] sm:$0xff]
        %v583 = vld [vmem:[%s529] sm:$0xf]
        %v584 = vld [vmem:[%s529 + $0x4] sm:$0xf]
        %v585 = vld [vmem:[%s529 + $0x8] sm:$0xf]
        %v586 = vld [vmem:[%s529 + $0xc] sm:$0xf]
        %v587 = vld [vmem:[%s529 + $0x10] sm:$0xf]
        %v588 = vld [vmem:[%s529 + $0x14] sm:$0xf]
        %v589 = vld [vmem:[%s529 + $0x18] sm:$0xf]
        %v590 = vld [vmem:[%s529 + $0x1c] sm:$0xf]
        %v591 = vld [vmem:[%s529 + $0x20] sm:$0xf]
        %v592 = vld [vmem:[%s529 + $0x24] sm:$0xf]
        %v593 = vld [vmem:[%s529 + $0x28] sm:$0xf]
        %v594 = vld [vmem:[%s529 + $0x2c] sm:$0xf]
        %v595 = vld [vmem:[%s529 + $0x30] sm:$0xf]
        %v596 = vld [vmem:[%s529 + $0x34] sm:$0xf]
        %v597 = vld [vmem:[%s529 + $0x38] sm:$0xf]
        %v598 = vld [vmem:[%s529 + $0x3c] sm:$0xf]
        %v599 = vld [vmem:[%s529 + $0x40] sm:$0xf]
        %v600 = vld [vmem:[%s529 + $0x44] sm:$0xf]
        %v601 = vld [vmem:[%s529 + $0x48] sm:$0xf]
        %v602 = vld [vmem:[%s529 + $0x4c] sm:$0xf]
        %v603 = vld [vmem:[%s529 + $0x50] sm:$0xf]
        %v604 = vld [vmem:[%s529 + $0x54] sm:$0xf]
        %v605 = vld [vmem:[%s529 + $0x58] sm:$0xf]
        %v606 = vld [vmem:[%s529 + $0x5c] sm:$0xf]
        %v607 = vld [vmem:[%s529 + $0x60] sm:$0xf]
        %v608 = vld [vmem:[%s529 + $0x64] sm:$0xf]
        %v609 = vld [vmem:[%s529 + $0x68] sm:$0xf]
        %v610 = vld [vmem:[%s529 + $0x6c] sm:$0xf]
        %v611 = vld [vmem:[%s529 + $0x70] sm:$0xf]
        %v612 = vld [vmem:[%s529 + $0x74] sm:$0xf]
        %v613 = vld [vmem:[%s529 + $0x78] sm:$0xf]
        %v614 = vld [vmem:[%s529 + $0x7c] sm:$0xf]
        %v615 = vld [vmem:[%s529 + $0x80] sm:$0xf]
        %v616 = vld [vmem:[%s529 + $0x84] sm:$0xf]
        %v617 = vld [vmem:[%s529 + $0x88] sm:$0xf]
        %v618 = vld [vmem:[%s529 + $0x8c] sm:$0xf]
        %v619 = vld [vmem:[%s529 + $0x90] sm:$0xf]
        %v620 = vld [vmem:[%s529 + $0x94] sm:$0xf]
        %v621 = vld [vmem:[%s529 + $0x98] sm:$0xf]
        %v622 = vld [vmem:[%s529 + $0x9c] sm:$0xf]
        %v623 = vld [vmem:[%s529 + $0xa0] sm:$0xf]
        %v624 = vld [vmem:[%s529 + $0xa4] sm:$0xf]
        %v625 = vld [vmem:[%s529 + $0xa8] sm:$0xf]
        %v626 = vld [vmem:[%s529 + $0xac] sm:$0xf]
        %v627 = vld [vmem:[%s529 + $0xb0] sm:$0xf]
        %v628 = vld [vmem:[%s529 + $0xb4] sm:$0xf]
        %v629 = vld [vmem:[%s529 + $0xb8] sm:$0xf]
        %v630 = vld [vmem:[%s529 + $0xbc] sm:$0xf]
        %v631 = vld [vmem:[%s529 + $0xc0] sm:$0xf]
        %v632 = vld [vmem:[%s529 + $0xc4] sm:$0xf]
        %v633 = vld [vmem:[%s529 + $0xc8] sm:$0xf]
        %v634 = vld [vmem:[%s529 + $0xcc] sm:$0xf]
        %v635 = vld [vmem:[%s529 + $0xd0] sm:$0xf]
        %v636 = vld [vmem:[%s529 + $0xd4] sm:$0xf]
        %v637 = vld [vmem:[%s529 + $0xd8] sm:$0xf]
        %v638 = vld [vmem:[%s529 + $0xdc] sm:$0xf]
        %v639 = vld [vmem:[%s529 + $0xe0] sm:$0xf]
        %v640 = vld [vmem:[%s529 + $0xe4] sm:$0xf]
        %v641 = vld [vmem:[%s529 + $0xe8] sm:$0xf]
        %v642 = vld [vmem:[%s529 + $0xec] sm:$0xf]
        %v643 = vld [vmem:[%s529 + $0xf0] sm:$0xf]
        %v644 = vld [vmem:[%s529 + $0xf4] sm:$0xf]
        %v645 = vld [vmem:[%s529 + $0xf8] sm:$0xf]
        %v646 = vld [vmem:[%s529 + $0xfc] sm:$0xf]
        %v655 = vunpack.c.l.b16 %v575
        %v656 = vunpack.c.h.b16 %v575
        %v657 = vunpack.c.l.b16 %v576
        %v658 = vunpack.c.h.b16 %v576
        %v659 = vunpack.c.l.b16 %v577
        %v660 = vunpack.c.h.b16 %v577
        %v661 = vunpack.c.l.b16 %v578
        %v662 = vunpack.c.h.b16 %v578
        %v663 = vunpack.c.l.b16 %v579
        %v664 = vunpack.c.h.b16 %v579
        %v665 = vunpack.c.l.b16 %v580
        %v666 = vunpack.c.h.b16 %v580
        %v667 = vunpack.c.l.b16 %v581
        %v668 = vunpack.c.h.b16 %v581
        %v669 = vunpack.c.l.b16 %v582
        %v670 = vunpack.c.h.b16 %v582
        %v671 = vpack.c.b16 %v659, %v655
        %v672 = vpack.c.b16 %v660, %v656
        %v673 = vpack.c.b16 %v661, %v657
        %v674 = vpack.c.b16 %v662, %v658
        %v675 = vpack.c.b16 %v667, %v663
        %v676 = vpack.c.b16 %v668, %v664
        %v677 = vpack.c.b16 %v669, %v665
        %v678 = vpack.c.b16 %v670, %v666
        %v751 = vunpack.c.l.b16 %v583
        %v752 = vunpack.c.l.b16 %v584
        %v753 = vunpack.c.l.b16 %v585
        %v754 = vunpack.c.l.b16 %v586
        %v755 = vunpack.c.l.b16 %v587
        %v756 = vunpack.c.l.b16 %v588
        %v757 = vunpack.c.l.b16 %v589
        %v758 = vunpack.c.l.b16 %v590
        %v759 = vunpack.c.l.b16 %v591
        %v760 = vunpack.c.l.b16 %v592
        %v761 = vunpack.c.l.b16 %v593
        %v762 = vunpack.c.l.b16 %v594
        %v763 = vunpack.c.l.b16 %v595
        %v764 = vunpack.c.l.b16 %v596
        %v765 = vunpack.c.l.b16 %v597
        %v766 = vunpack.c.l.b16 %v598
        %v767 = vunpack.c.l.b16 %v599
        %v768 = vunpack.c.l.b16 %v600
        %v769 = vunpack.c.l.b16 %v601
        %v770 = vunpack.c.l.b16 %v602
        %v771 = vunpack.c.l.b16 %v603
        %v772 = vunpack.c.l.b16 %v604
        %v773 = vunpack.c.l.b16 %v605
        %v774 = vunpack.c.l.b16 %v606
        %v775 = vunpack.c.l.b16 %v607
        %v776 = vunpack.c.l.b16 %v608
        %v777 = vunpack.c.l.b16 %v609
        %v778 = vunpack.c.l.b16 %v610
        %v779 = vunpack.c.l.b16 %v611
        %v780 = vunpack.c.l.b16 %v612
        %v781 = vunpack.c.l.b16 %v613
        %v782 = vunpack.c.l.b16 %v614
        %v783 = vunpack.c.l.b16 %v615
        %v784 = vunpack.c.l.b16 %v616
        %v785 = vunpack.c.l.b16 %v617
        %v786 = vunpack.c.l.b16 %v618
        %v787 = vunpack.c.l.b16 %v619
        %v788 = vunpack.c.l.b16 %v620
        %v789 = vunpack.c.l.b16 %v621
        %v790 = vunpack.c.l.b16 %v622
        %v791 = vunpack.c.l.b16 %v623
        %v792 = vunpack.c.l.b16 %v624
        %v793 = vunpack.c.l.b16 %v625
        %v794 = vunpack.c.l.b16 %v626
        %v795 = vunpack.c.l.b16 %v627
        %v796 = vunpack.c.l.b16 %v628
        %v797 = vunpack.c.l.b16 %v629
        %v798 = vunpack.c.l.b16 %v630
        %v799 = vunpack.c.l.b16 %v631
        %v800 = vunpack.c.l.b16 %v632
        %v801 = vunpack.c.l.b16 %v633
        %v802 = vunpack.c.l.b16 %v634
        %v803 = vunpack.c.l.b16 %v635
        %v804 = vunpack.c.l.b16 %v636
        %v805 = vunpack.c.l.b16 %v637
        %v806 = vunpack.c.l.b16 %v638
        %v807 = vunpack.c.l.b16 %v639
        %v808 = vunpack.c.l.b16 %v640
        %v809 = vunpack.c.l.b16 %v641
        %v810 = vunpack.c.l.b16 %v642
        %v811 = vunpack.c.l.b16 %v643
        %v812 = vunpack.c.l.b16 %v644
        %v813 = vunpack.c.l.b16 %v645
        %v814 = vunpack.c.l.b16 %v646
        %v815 = vpack.c.b16 %v752, %v751
        %v816 = vpack.c.b16 %v754, %v753
        %v817 = vpack.c.b16 %v756, %v755
        %v818 = vpack.c.b16 %v758, %v757
        %v819 = vpack.c.b16 %v760, %v759
        %v820 = vpack.c.b16 %v762, %v761
        %v821 = vpack.c.b16 %v764, %v763
        %v822 = vpack.c.b16 %v766, %v765
        %v823 = vpack.c.b16 %v768, %v767
        %v824 = vpack.c.b16 %v770, %v769
        %v825 = vpack.c.b16 %v772, %v771
        %v826 = vpack.c.b16 %v774, %v773
        %v827 = vpack.c.b16 %v776, %v775
        %v828 = vpack.c.b16 %v778, %v777
        %v829 = vpack.c.b16 %v780, %v779
        %v830 = vpack.c.b16 %v782, %v781
        %v831 = vpack.c.b16 %v784, %v783
        %v832 = vpack.c.b16 %v786, %v785
        %v833 = vpack.c.b16 %v788, %v787
        %v834 = vpack.c.b16 %v790, %v789
        %v835 = vpack.c.b16 %v792, %v791
        %v836 = vpack.c.b16 %v794, %v793
        %v837 = vpack.c.b16 %v796, %v795
        %v838 = vpack.c.b16 %v798, %v797
        %v839 = vpack.c.b16 %v800, %v799
        %v840 = vpack.c.b16 %v802, %v801
        %v841 = vpack.c.b16 %v804, %v803
        %v842 = vpack.c.b16 %v806, %v805
        %v843 = vpack.c.b16 %v808, %v807
        %v844 = vpack.c.b16 %v810, %v809
        %v845 = vpack.c.b16 %v812, %v811
        %v846 = vpack.c.b16 %v814, %v813
        %879 = vmatpush.bf16.msra.mxu0 %v822
        %880 = vmatpush.bf16.msra.mxu0 %v821
        %881 = vmatpush.bf16.msra.mxu0 %v820
        %882 = vmatpush.bf16.msra.mxu0 %v819
        %883 = vmatpush.bf16.msra.mxu0 %v818
        %884 = vmatpush.bf16.msra.mxu0 %v817
        %885 = vmatpush.bf16.msra.mxu0 %v816
        %886 = vmatpush.bf16.msra.mxu0 %v815
        %887 = vmatmul.bf16.gmra.mxu0 %v671
        %v888 = vpop.f32.mrf.mxu0
        %v889 = vadd.f32 0.0, %v888
        %v890 = vpop.f32.mrf.mxu0
        %v891 = vadd.f32 0.0, %v890
        %892 = vmatmul.bf16.gmra.mxu0 %v675
        %v893 = vpop.f32.mrf.mxu0
        %v894 = vadd.f32 0.0, %v893
        %v895 = vpop.f32.mrf.mxu0
        %v896 = vadd.f32 0.0, %v895
        %897 = vdwg.mxu0
        %898 = vmatpush.bf16.msra.mxu0 %v830
        %899 = vmatpush.bf16.msra.mxu0 %v829
        %900 = vmatpush.bf16.msra.mxu0 %v828
        %901 = vmatpush.bf16.msra.mxu0 %v827
        %902 = vmatpush.bf16.msra.mxu0 %v826
        %903 = vmatpush.bf16.msra.mxu0 %v825
        %904 = vmatpush.bf16.msra.mxu0 %v824
        %905 = vmatpush.bf16.msra.mxu0 %v823
        %906 = vmatmul.bf16.gmra.mxu0 %v672
        %v907 = vpop.f32.mrf.mxu0
        %v908 = vadd.f32 %v889, %v907
        %v909 = vpop.f32.mrf.mxu0
        %v910 = vadd.f32 %v891, %v909
        %911 = vmatmul.bf16.gmra.mxu0 %v676
        %v912 = vpop.f32.mrf.mxu0
        %v913 = vadd.f32 %v894, %v912
        %v914 = vpop.f32.mrf.mxu0
        %v915 = vadd.f32 %v896, %v914
        %916 = vdwg.mxu0
        %917 = vmatpush.bf16.msra.mxu0 %v838
        %918 = vmatpush.bf16.msra.mxu0 %v837
        %919 = vmatpush.bf16.msra.mxu0 %v836
        %920 = vmatpush.bf16.msra.mxu0 %v835
        %921 = vmatpush.bf16.msra.mxu0 %v834
        %922 = vmatpush.bf16.msra.mxu0 %v833
        %923 = vmatpush.bf16.msra.mxu0 %v832
        %924 = vmatpush.bf16.msra.mxu0 %v831
        %925 = vmatmul.bf16.gmra.mxu0 %v673
        %v926 = vpop.f32.mrf.mxu0
        %v927 = vadd.f32 %v908, %v926
        %v928 = vpop.f32.mrf.mxu0
        %v929 = vadd.f32 %v910, %v928
        %930 = vmatmul.bf16.gmra.mxu0 %v677
        %v931 = vpop.f32.mrf.mxu0
        %v932 = vadd.f32 %v913, %v931
        %v933 = vpop.f32.mrf.mxu0
        %v934 = vadd.f32 %v915, %v933
        %935 = vdwg.mxu0
        %936 = vmatpush.bf16.msra.mxu0 %v846
        %937 = vmatpush.bf16.msra.mxu0 %v845
        %938 = vmatpush.bf16.msra.mxu0 %v844
        %939 = vmatpush.bf16.msra.mxu0 %v843
        %940 = vmatpush.bf16.msra.mxu0 %v842
        %941 = vmatpush.bf16.msra.mxu0 %v841
        %942 = vmatpush.bf16.msra.mxu0 %v840
        %943 = vmatpush.bf16.msra.mxu0 %v839
        %944 = vmatmul.bf16.gmra.mxu0 %v674
        %v945 = vpop.f32.mrf.mxu0
        %v946 = vadd.f32 %v927, %v945
        %v947 = vpop.f32.mrf.mxu0
        %v948 = vadd.f32 %v929, %v947
        %949 = vmatmul.bf16.gmra.mxu0 %v678
        %v950 = vpop.f32.mrf.mxu0
        %v951 = vadd.f32 %v932, %v950
        %v952 = vpop.f32.mrf.mxu0
        %v953 = vadd.f32 %v934, %v952
        %954 = vdwg.mxu0
        %v955 = vadd.f32 %v571, %v946
        %v956 = vadd.f32 %v572, %v948
        %v957 = vadd.f32 %v573, %v951
        %v958 = vadd.f32 %v574, %v953
        %959 = vst [vmem:[#allocation2] sm:$0xff] %v955
        %960 = vst [vmem:[#allocation2 + $0x8] sm:$0xff] %v956
        %961 = vst [vmem:[#allocation2 + $0x10] sm:$0xff] %v957
        %962 = vst [vmem:[#allocation2 + $0x18] sm:$0xff] %v958
        %p963 = scmp.eq.s32.totalorder %s21, 4
        // Predicated region
        $region101: #{alexnet_pre_forward.14} parent=87 // pred_check
          %p964 = pneg %p963
        $region102: #{alexnet_pre_forward.14} parent=87 // pred_check_branch
          %966 = sbr.rel (%p964) target = $region104
        $region103: #{alexnet_pre_forward.14} parent=87 // pred_region
          %v967 = vld [vmem:[#allocation2] sm:$0xff]
          %v968 = vld [vmem:[#allocation2 + $0x8] sm:$0xff]
          %v969 = vld [vmem:[#allocation2 + $0x10] sm:$0xff]
          %v970 = vld [vmem:[#allocation2 + $0x18] sm:$0xff]
          %v971 = vld [vmem:[%s561] sm:$0x1]
          %v973 = vperm.slane %v971, 0
          %v975 = vadd.f32 %v967, %v973
          %v976 = vadd.f32 %v968, %v973
          %v977 = vadd.f32 %v969, %v973
          %v978 = vadd.f32 %v970, %v973
          %v979 = vmax.f32 %v975, 0.0
          %v980 = vmax.f32 %v976, 0.0
          %v981 = vmax.f32 %v977, 0.0
          %v982 = vmax.f32 %v978, 0.0
          %v983 = vpack.c.bf16 %v979, %v979
          %v984 = vpack.c.bf16 %v980, %v980
          %v985 = vpack.c.bf16 %v981, %v981
          %v986 = vpack.c.bf16 %v982, %v982
          %987 = vst [vmem:[%s555] sm:$0xf] %v983
          %988 = vst [vmem:[%s555 + $0x4] sm:$0xf] %v984
          %989 = vst [vmem:[%s555 + $0x8] sm:$0xf] %v985
          %990 = vst [vmem:[%s555 + $0xc] sm:$0xf] %v986
        $region104: #{alexnet_pre_forward.14} parent=87 // pred_fallthru
          _
        %s991 = sand.u32 %s125, 1
        %s992 = sand.u32 %s125, 1
        %s993 = smul.addr %s992, 16
        %s994 = scalar_lea.vmem [#allocation5], %s993
        // Predicated region
        $region105: #{alexnet_pre_forward.14} parent=87 // pred_check
          %p995 = pneg %p135
        $region106: #{alexnet_pre_forward.14} parent=87 // pred_check_branch
          %997 = sbr.rel (%p995) target = $region108
        $region107: #{alexnet_pre_forward.14} parent=87 // pred_region
          %s998 = smul.u32 4, %s19
          %s999 = smul.addr %s998, 2
          %s1000 = sadd.s32 %s20, %s999
          %s1001 = smul.addr %s1000, 4
          %s1002 = scalar_lea.vmem %s3, %s1001
          // Predicated region
          $region109: #{alexnet_pre_forward.14} parent=107 // pred_check
            _
          $region110: #{alexnet_pre_forward.14} parent=107 // pred_check_branch
            %1004 = sbr.rel (0) target = $region112
          $region111: #{alexnet_pre_forward.14} parent=107 // pred_region
            // Predicated region
            $region113: #{alexnet_pre_forward.14} parent=111 // pred_check
              _
            $region114: #{alexnet_pre_forward.14} parent=111 // pred_check_branch
              %1006 = sbr.rel target = $region116
            $region115: #{alexnet_pre_forward.14} parent=111 // pred_region
              // Predicated region
              $region128: #{alexnet_pre_forward.14} parent=115 // pred_check
                _
              $region129: #{alexnet_pre_forward.14} parent=115 // pred_check_branch
                %1028 = sbr.rel (0) target = $region131
              $region130: #{alexnet_pre_forward.14} parent=115 // pred_region
                loop: start=0, step=1, limit=1
                $region132: #{alexnet_pre_forward.14} parent=130 // loop_pre_header
                  _
                $region133: #{alexnet_pre_forward.14} parent=130 // loop_header
                  %s1030 = sphi 0, %s1034
                  %p1031 = scmp.ge.s32.totalorder %s1030, 1
                  %s1035 = sphi %s994, %s994
                  %s1036 = sphi %s1002, %s1002
                $region134: #{alexnet_pre_forward.14} parent=130 // loop_header_branch
                  %1033 = sbr.rel (%p1031) target = $region138
                $region135: #{alexnet_pre_forward.14} parent=130 // loop_body
                  _
                $region136: #{alexnet_pre_forward.14} parent=130 // loop_footer
                  %s1034 = sadd.s32 1, %s1030
                $region137: #{alexnet_pre_forward.14} parent=130 // loop_footer_branch
                  %1029 = sbr.rel target = $region133
                $region138: #{alexnet_pre_forward.14} parent=130 // loop_exit
                  _
                %s1038 = ssub.s32 16, 1
                loop: start=0, step=1, limit=1
                $region139: #{alexnet_pre_forward.14} parent=130 // loop_pre_header
                  _
                $region140: #{alexnet_pre_forward.14} parent=130 // loop_header
                  %s1040 = sphi 0, %s1044
                  %p1041 = scmp.ge.s32.totalorder %s1040, 1
                  %s1045 = sphi %s994, %s994
                  %s1046 = sphi %s1002, %s1002
                $region141: #{alexnet_pre_forward.14} parent=130 // loop_header_branch
                  %1043 = sbr.rel (%p1041) target = $region145
                $region142: #{alexnet_pre_forward.14} parent=130 // loop_body
                  %v1047 = vld [vmem:[%s1045] sm:%s1038]
                  %1048 = vst [vmem:[%s1046] sm:%s1038] %v1047
                  %v1049 = vld [vmem:[%s1045 + $0x4] sm:%s1038]
                  %1050 = vst [vmem:[%s1046 + $0x8] sm:%s1038] %v1049
                  %v1051 = vld [vmem:[%s1045 + $0x8] sm:%s1038]
                  %1052 = vst [vmem:[%s1046 + $0x10] sm:%s1038] %v1051
                  %v1053 = vld [vmem:[%s1045 + $0xc] sm:%s1038]
                  %1054 = vst [vmem:[%s1046 + $0x18] sm:%s1038] %v1053
                $region143: #{alexnet_pre_forward.14} parent=130 // loop_footer
                  %s1044 = sadd.s32 1, %s1040
                $region144: #{alexnet_pre_forward.14} parent=130 // loop_footer_branch
                  %1039 = sbr.rel target = $region140
                $region145: #{alexnet_pre_forward.14} parent=130 // loop_exit
                  _
              $region131: #{alexnet_pre_forward.14} parent=115 // pred_fallthru
                _
            $region116: #{alexnet_pre_forward.14} parent=111 // pred_fallthru
              _
            // Predicated region
            $region117: #{alexnet_pre_forward.14} parent=111 // pred_check
              _
            $region118: #{alexnet_pre_forward.14} parent=111 // pred_check_branch
              %1008 = sbr.rel (0) target = $region120
            $region119: #{alexnet_pre_forward.14} parent=111 // pred_region
              %s1010 = ssub.s32 16, 1
              loop: start=0, step=1, limit=1
              $region121: #{alexnet_pre_forward.14} parent=119 // loop_pre_header
                _
              $region122: #{alexnet_pre_forward.14} parent=119 // loop_header
                %s1012 = sphi 0, %s1016
                %p1013 = scmp.ge.s32.totalorder %s1012, 1
                %s1017 = sphi %s994, %s994
                %s1018 = sphi %s1002, %s1002
              $region123: #{alexnet_pre_forward.14} parent=119 // loop_header_branch
                %1015 = sbr.rel (%p1013) target = $region127
              $region124: #{alexnet_pre_forward.14} parent=119 // loop_body
                %v1019 = vld [vmem:[%s1017] sm:%s1010]
                %1020 = vst [vmem:[%s1018] sm:%s1010] %v1019
                %v1021 = vld [vmem:[%s1017 + $0x4] sm:%s1010]
                %1022 = vst [vmem:[%s1018 + $0x8] sm:%s1010] %v1021
                %v1023 = vld [vmem:[%s1017 + $0x8] sm:%s1010]
                %1024 = vst [vmem:[%s1018 + $0x10] sm:%s1010] %v1023
                %v1025 = vld [vmem:[%s1017 + $0xc] sm:%s1010]
                %1026 = vst [vmem:[%s1018 + $0x18] sm:%s1010] %v1025
              $region125: #{alexnet_pre_forward.14} parent=119 // loop_footer
                %s1016 = sadd.s32 1, %s1012
              $region126: #{alexnet_pre_forward.14} parent=119 // loop_footer_branch
                %1011 = sbr.rel target = $region122
              $region127: #{alexnet_pre_forward.14} parent=119 // loop_exit
                _
            $region120: #{alexnet_pre_forward.14} parent=111 // pred_fallthru
              _
          $region112: #{alexnet_pre_forward.14} parent=107 // pred_fallthru
            _
          %1055 = vnop
        $region108: #{alexnet_pre_forward.14} parent=87 // pred_fallthru
          _
      $region88: #{alexnet_pre_forward.14} parent=5 // pred_fallthru
        _
      %p1056 = scmp.le.s32.totalorder 2, %s9
      // Predicated region
      $region146: #{alexnet_pre_forward.14} parent=5 // pred_check
        %p1057 = pneg %p1056
      $region147: #{alexnet_pre_forward.14} parent=5 // pred_check_branch
        %1059 = sbr.rel (%p1057) target = $region149
      $region148: #{alexnet_pre_forward.14} parent=5 // pred_region
        %s1060 = ssub.s32 %s9, 2
        // Predicated region
        $region150: #{alexnet_pre_forward.14} parent=148 // pred_check
          %p1061 = pneg %p141
        $region151: #{alexnet_pre_forward.14} parent=148 // pred_check_branch
          %1063 = sbr.rel (%p1061) target = $region153
        $region152: #{alexnet_pre_forward.14} parent=148 // pred_region
          %s1064 = sand.u32 %s126, 1
          %s1065 = sand.u32 %s126, 1
          %s1066 = smul.addr %s1065, 16
          %s1067 = scalar_lea.vmem [#allocation5], %s1066
        $region153: #{alexnet_pre_forward.14} parent=148 // pred_fallthru
          _
      $region149: #{alexnet_pre_forward.14} parent=5 // pred_fallthru
        _
    $region6: #{alexnet_pre_forward.14} parent=1 // loop_footer
      %s13 = sadd.s32 1, %s9
    $region7: #{alexnet_pre_forward.14} parent=1 // loop_footer_branch
      %8 = sbr.rel target = $region3
    $region8: #{alexnet_pre_forward.14} parent=1 // loop_exit
      _

</llo_original>
